<compile_context>
chip_gen: v7x
topology: tpu7x:2x2x1
jax: 0.10.0
libtpu: 0.0.40
codegen_flags: <defaults>
</compile_context>

<pallas_src>
import jax
import jax.numpy as jnp
from jax.experimental import pallas as pl
from jax.experimental.pallas import tpu as pltpu

VMEM = pltpu.MemorySpace.VMEM

# ----------------------------------------------------------------------------
# Model configuration (small, deterministic, consistent with the module)
# ----------------------------------------------------------------------------
NGENE = 10                      # gene_dim
NDRUG = 12                      # drug_dim
JJH_SEQ = 44                    # forward() does .view(batch, 44, -1)
SEQ_PAD = 48                    # 44 padded to a multiple of 8 (aligned tiles)
D_MODEL = 32                    # encoder layer d_model=32 => jjh_dim = 44*32
JJH_DIM = JJH_SEQ * D_MODEL     # 1408
NHEAD = 4
HEAD_DIM = D_MODEL // NHEAD
DIM_FF = 2048                   # nn.TransformerEncoderLayer default
FF_CHUNK = 256                  # in-kernel chunking of the 2048 FFN dim
NUM_HIDDENS_GENO = 8
NUM_HIDDENS_DRUG = [16, 8]
NUM_HIDDENS_JJH = 8
NUM_HIDDENS_FINAL = 8
ROOT = "GO:root"

# Tiny ontology DAG (root -> {A, B}); leaf-peeling order as construct_NN_graph
TERM_DIRECT_GENE_MAP = {
    "GO:A": [0, 1, 2],
    "GO:B": [3, 4, 5, 6],
    "GO:root": [0, 7],
}
TERM_NEIGHBOR_MAP = {"GO:A": [], "GO:B": [], "GO:root": ["GO:A", "GO:B"]}
TERM_LAYER_LIST = [["GO:A", "GO:B"], ["GO:root"]]

# Column layout of the packed direct-gene linear layers
DG_COLS = {}
_off = 0
for _t, _g in TERM_DIRECT_GENE_MAP.items():
    DG_COLS[_t] = (_off, _off + len(_g))
    _off += len(_g)
DG_TOTAL = _off                 # 9


def _block_specs():
    """Static config of every small fused (linear+tanh+BN+aux) block."""
    names, ins, hids = [], [], []
    for layer in TERM_LAYER_LIST:
        for term in layer:
            k = NUM_HIDDENS_GENO * len(TERM_NEIGHBOR_MAP[term])
            if term in TERM_DIRECT_GENE_MAP:
                k += len(TERM_DIRECT_GENE_MAP[term])
            names.append(term)
            ins.append(k)
            hids.append(NUM_HIDDENS_GENO)
    names.append("jjh")
    ins.append(D_MODEL)
    hids.append(NUM_HIDDENS_JJH)
    in_size = NDRUG
    for i, h in enumerate(NUM_HIDDENS_DRUG, start=1):
        names.append(f"drug_{i}")
        ins.append(in_size)
        hids.append(h)
        in_size = h
    names.append("final1")
    ins.append(NUM_HIDDENS_GENO + NUM_HIDDENS_DRUG[-1])
    hids.append(NUM_HIDDENS_FINAL)
    names.append("final2")
    ins.append(NUM_HIDDENS_JJH + NUM_HIDDENS_DRUG[-1])
    hids.append(NUM_HIDDENS_FINAL)
    return tuple(names), tuple(ins), tuple(hids)


BLOCK_NAMES, BLOCK_IN, BLOCK_HID = _block_specs()
BLOCK_IDX = {n: i for i, n in enumerate(BLOCK_NAMES)}
NBLOCKS = len(BLOCK_NAMES)      # 8
K_MAX = max(BLOCK_IN)           # 32
H_MAX = max(BLOCK_HID)          # 16


# ----------------------------------------------------------------------------
# Kernel A: fused MyTransformerEncoderLayer (+ sequence mean pool)
# ----------------------------------------------------------------------------
def _encoder_kernel(src_ref, qkvw_ref, qkvb_ref, wo_ref, w1_ref, b1_ref,
                    w2_ref, vec_ref, att_ref, pooled_ref, qkv_scr, attn_scr):
    rows = src_ref.shape[0]                     # bblk * SEQ_PAD
    bblk = rows // SEQ_PAD

    src = src_ref[...]                          # (rows, 32) f32, pad rows = 0

    # fused, lane-dense QKV projection (bf16 MXU, f32 acc); 1/sqrt(d) folded
    qkv_scr[...] = (jnp.dot(src.astype(jnp.bfloat16), qkvw_ref[...],
                            preferred_element_type=jnp.float32)
                    + qkvb_ref[...])            # (rows, 96)

    # key mask for the 4 padded key positions (44..47)
    key_mask = jax.lax.broadcasted_iota(jnp.int32,
                                        (SEQ_PAD, SEQ_PAD), 1) < JJH_SEQ

    for b in range(bblk):                       # unrolled (<=2)
        r0 = b * SEQ_PAD
        p_sum = jnp.zeros((SEQ_PAD, SEQ_PAD), jnp.float32)
        attn_b = jnp.zeros((SEQ_PAD, D_MODEL), jnp.float32)
        for h in range(NHEAD):                  # unrolled (4)
            c = h * HEAD_DIM
            qh = qkv_scr[r0:r0 + SEQ_PAD, c:c + HEAD_DIM]
            kh = qkv_scr[r0:r0 + SEQ_PAD, D_MODEL + c:D_MODEL + c + HEAD_DIM]
            vh = qkv_scr[r0:r0 + SEQ_PAD,
                         2 * D_MODEL + c:2 * D_MODEL + c + HEAD_DIM]
            s = jax.lax.dot_general(qh, kh, (((1,), (1,)), ((), ())),
                                    preferred_element_type=jnp.float32)
            s = jnp.where(key_mask, s, -1e30)
            m = jnp.max(s, axis=-1, keepdims=True)
            e = jnp.exp(s - m)
            p = e / jnp.sum(e, axis=-1, keepdims=True)
            p_sum = p_sum + p
            oh = jnp.dot(p.astype(jnp.bfloat16), vh.astype(jnp.bfloat16),
                         preferred_element_type=jnp.float32)       # (48, 8)
            # out-projection folded per head: concat(heads) @ Wo == sum oh@Wo_h
            attn_b = attn_b + jnp.dot(
                oh.astype(jnp.bfloat16),
                wo_ref[h * HEAD_DIM:(h + 1) * HEAD_DIM, :],
                preferred_element_type=jnp.float32)
        # head-averaged attention weights (need_weights=True default)
        att_ref[b] = p_sum[:JJH_SEQ, :JJH_SEQ] * (1.0 / NHEAD)
        attn_scr[r0:r0 + SEQ_PAD, :] = attn_b

    vec = vec_ref[...]                          # (6, 32) packed small params
    bo, b2 = vec[0:1], vec[1:2]
    g1, be1, g2, be2 = vec[2:3], vec[3:4], vec[4:5], vec[5:6]

    # residual + LayerNorm1 (dropout1 = identity in eval)
    x = src + attn_scr[...] + bo
    mu = jnp.mean(x, axis=-1, keepdims=True)
    var = jnp.mean(jnp.square(x - mu), axis=-1, keepdims=True)
    x = (x - mu) * jax.lax.rsqrt(var + 1e-5) * g1 + be1

    # FFN: linear1 + ReLU + linear2, chunked over DIM_FF, bf16 MXU, f32 acc.
    # Batch folded into M => each (32, FF_CHUNK) weight push amortized over
    # bblk*48 rows.
    xb = x.astype(jnp.bfloat16)
    ff = jnp.zeros((rows, D_MODEL), jnp.float32)
    for cidx in range(DIM_FF // FF_CHUNK):      # unrolled (8)
        lo = cidx * FF_CHUNK
        h1 = (jnp.dot(xb, w1_ref[:, lo:lo + FF_CHUNK],
                      preferred_element_type=jnp.float32)
              + b1_ref[:, lo:lo + FF_CHUNK])
        h1 = jnp.maximum(h1, 0.0).astype(jnp.bfloat16)
        ff = ff + jnp.dot(h1, w2_ref[lo:lo + FF_CHUNK, :],
                          preferred_element_type=jnp.float32)

    # residual + LayerNorm2 (dropout2 = identity in eval)
    x = x + ff + b2
    mu = jnp.mean(x, axis=-1, keepdims=True)
    var = jnp.mean(jnp.square(x - mu), axis=-1, keepdims=True)
    x = (x - mu) * jax.lax.rsqrt(var + 1e-5) * g2 + be2

    # masked mean over the 44 valid rows of each padded 48-row segment,
    # expressed as one small (bblk, rows) @ (rows, 32) matmul.
    r_idx = jax.lax.broadcasted_iota(jnp.int32, (bblk, rows), 1)
    s_idx = jax.lax.broadcasted_iota(jnp.int32, (bblk, rows), 0)
    rel = r_idx - s_idx * SEQ_PAD
    pool_w = jnp.where((rel >= 0) & (rel < JJH_SEQ),
                       1.0 / JJH_SEQ, 0.0).astype(jnp.float32)
    pooled_ref[0] = jnp.dot(pool_w, x, preferred_element_type=jnp.float32)


def pallas_transformer_encoder(jjh_flat, p, batch):
    """jjh_flat: (batch*SEQ_PAD, 32) f32 -> (pooled (batch, 32), att (batch, 44, 44))."""
    bblk = 2 if batch % 2 == 0 else 1
    grid = batch // bblk
    rows = bblk * SEQ_PAD
    att, pooled = pl.pallas_call(
        _encoder_kernel,
        grid=(grid,),
        out_shape=(jax.ShapeDtypeStruct((batch, JJH_SEQ, JJH_SEQ), jnp.float32),
                   jax.ShapeDtypeStruct((grid, bblk, D_MODEL), jnp.float32)),
        in_specs=[
            pl.BlockSpec((rows, D_MODEL), lambda n: (n, 0)),            # src
            pl.BlockSpec((D_MODEL, 3 * D_MODEL), lambda n: (0, 0)),     # qkv w
            pl.BlockSpec((1, 3 * D_MODEL), lambda n: (0, 0)),           # qkv b
            pl.BlockSpec((D_MODEL, D_MODEL), lambda n: (0, 0)),         # wo
            pl.BlockSpec((D_MODEL, DIM_FF), lambda n: (0, 0)),          # ffn1 w
            pl.BlockSpec((1, DIM_FF), lambda n: (0, 0)),                # ffn1 b
            pl.BlockSpec((DIM_FF, D_MODEL), lambda n: (0, 0)),          # ffn2 w
            pl.BlockSpec((6, D_MODEL), lambda n: (0, 0)),               # packed
        ],
        out_specs=(pl.BlockSpec((bblk, JJH_SEQ, JJH_SEQ), lambda n: (n, 0, 0)),
                   pl.BlockSpec((1, bblk, D_MODEL), lambda n: (n, 0, 0))),
        scratch_shapes=[pltpu.VMEM((rows, 3 * D_MODEL), jnp.float32),
                        pltpu.VMEM((rows, D_MODEL), jnp.float32)],
        compiler_params=pltpu.CompilerParams(
            dimension_semantics=("parallel",)),
    )(jjh_flat, p["enc_qkv_wt"], p["enc_qkv_b"], p["enc_wo"],
      p["enc_ffn1_wt"], p["enc_ffn1_b"], p["enc_ffn2_wt"], p["enc_vec"])
    return pooled.reshape(batch, D_MODEL), att


# ----------------------------------------------------------------------------
# Kernel B: every tiny head (direct genes, ontology, jjh head, drug tower,
# final1/final2, all aux outputs) fused into a single call.
# ----------------------------------------------------------------------------
def _heads_kernel(gene_ref, drug_ref, pooled_ref, dgw_ref, dgb_ref,
                  wt_ref, vec_ref, term_ref, aux_ref):
    bsz = gene_ref.shape[0]
    gene = gene_ref[...]

    def gene_part(term):
        lo, hi = DG_COLS[term]
        return (jnp.dot(gene, dgw_ref[:, lo:hi],
                        preferred_element_type=jnp.float32)
                + dgb_ref[:, lo:hi])

    hmap = {}

    def run(name, parts):
        """linear(+tanh)+folded-BN, aux1(tanh)+aux2; padded to (K_MAX,H_MAX)."""
        i = BLOCK_IDX[name]
        vec = vec_ref[i]                                         # (5, H_MAX)
        z = jnp.zeros((bsz, H_MAX), jnp.float32)
        off = 0
        for part in parts:                                       # split matmul
            kp = part.shape[1]
            z = z + jnp.dot(part, wt_ref[i, off:off + kp, :],
                            preferred_element_type=jnp.float32)
            off += kp
        h = jnp.tanh(z + vec[0:1]) * vec[1:2] + vec[2:3]
        a1 = jnp.tanh(jnp.sum(h * vec[3:4], axis=-1, keepdims=True)
                      + vec[4:5, 0:1])
        aux = a1 * vec[4:5, 1:2] + vec[4:5, 2:3]
        term_ref[i] = h
        aux_ref[i] = aux
        hmap[name] = h[:, :BLOCK_HID[i]]
        return aux

    # ontology DAG, leaf-first (mirrors construct_NN_graph order)
    for layer in TERM_LAYER_LIST:
        for term in layer:
            parts = [hmap[c] for c in TERM_NEIGHBOR_MAP[term]]
            if term in TERM_DIRECT_GENE_MAP:
                parts.append(gene_part(term))
            run(term, parts)

    # jjh head on the pooled encoder output
    run("jjh", [pooled_ref[...]])

    # drug tower
    d = drug_ref[...]
    for di in range(1, len(NUM_HIDDENS_DRUG) + 1):
        run(f"drug_{di}", [d])
        d = hmap[f"drug_{di}"]

    # final heads
    a1 = run("final1", [hmap[ROOT], d])
    a2 = run("final2", [hmap["jjh"], d])
    aux_ref[NBLOCKS] = (a1 + a2) * 0.5


def pallas_heads(gene, drug, pooled, p):
    bsz = gene.shape[0]
    return pl.pallas_call(
        _heads_kernel,
        out_shape=(jax.ShapeDtypeStruct((NBLOCKS, bsz, H_MAX), jnp.float32),
                   jax.ShapeDtypeStruct((NBLOCKS + 1, bsz, 1), jnp.float32)),
        in_specs=[pl.BlockSpec(memory_space=VMEM)] * 7,
        out_specs=(pl.BlockSpec(memory_space=VMEM),
                   pl.BlockSpec(memory_space=VMEM)),
    )(gene, drug, pooled, p["dg_wt"], p["dg_b"], p["blk_wt"], p["blk_vec"])


# ----------------------------------------------------------------------------
# Deterministic parameter initialization (weights stored pre-transposed/packed)
# ----------------------------------------------------------------------------
class ParamFactory:
    def __init__(self, seed):
        self.key = jax.random.PRNGKey(seed)

    def _next(self):
        self.key, sub = jax.random.split(self.key)
        return sub

    def raw_linear(self, out_dim, in_dim):
        kw, kb = jax.random.split(self._next())
        bound = 1.0 / (in_dim ** 0.5)
        w = jax.random.uniform(kw, (out_dim, in_dim), jnp.float32, -bound, bound)
        b = jax.random.uniform(kb, (out_dim,), jnp.float32, -bound, bound)
        return w, b

    def batchnorm(self, dim, eps=1e-5):
        k1, k2, k3, k4 = jax.random.split(self._next(), 4)
        gamma = 1.0 + 0.1 * jax.random.normal(k1, (dim,), jnp.float32)
        beta = 0.1 * jax.random.normal(k2, (dim,), jnp.float32)
        mean = 0.1 * jax.random.normal(k3, (dim,), jnp.float32)
        var = 1.0 + 0.5 * jax.random.uniform(k4, (dim,), jnp.float32)
        scale = gamma / jnp.sqrt(var + eps)
        return {"scale": scale.reshape(1, -1),
                "shift": (beta - mean * scale).reshape(1, -1)}


def init_params(seed=0):
    pf = ParamFactory(seed)
    p = {}

    # direct gene layers packed along the output columns
    dgw, dgb = [], []
    for term, genes in TERM_DIRECT_GENE_MAP.items():
        w, b = pf.raw_linear(len(genes), NGENE)
        dgw.append(w.T)                         # (NGENE, n_genes)
        dgb.append(b.reshape(1, -1))
    p["dg_wt"] = jnp.concatenate(dgw, axis=1)   # (NGENE, 9)
    p["dg_b"] = jnp.concatenate(dgb, axis=1)    # (1, 9)

    # packed small fused blocks (ontology / jjh head / drug / finals)
    wt_all = jnp.zeros((NBLOCKS, K_MAX, H_MAX), jnp.float32)
    vec_all = jnp.zeros((NBLOCKS, 5, H_MAX), jnp.float32)
    for i, name in enumerate(BLOCK_NAMES):
        k, hdim = BLOCK_IN[i], BLOCK_HID[i]
        w, b = pf.raw_linear(hdim, k)
        bn = pf.batchnorm(hdim)
        a1w, a1b = pf.raw_linear(1, hdim)
        a2w, a2b = pf.raw_linear(1, 1)
        wt_all = wt_all.at[i, :k, :hdim].set(w.T)
        vec_all = vec_all.at[i, 0, :hdim].set(b)
        vec_all = vec_all.at[i, 1, :hdim].set(bn["scale"][0])
        vec_all = vec_all.at[i, 2, :hdim].set(bn["shift"][0])
        vec_all = vec_all.at[i, 3, :hdim].set(a1w[0])
        vec_all = vec_all.at[i, 4, 0].set(a1b[0])
        vec_all = vec_all.at[i, 4, 1].set(a2w[0, 0])
        vec_all = vec_all.at[i, 4, 2].set(a2b[0])
    p["blk_wt"] = wt_all
    p["blk_vec"] = vec_all

    # jjh transformer encoder layer (MyTransformerEncoderLayer, d_model=32)
    w_in, b_in = pf.raw_linear(3 * D_MODEL, D_MODEL)        # torch in_proj
    s = 1.0 / (HEAD_DIM ** 0.5)                             # fold scale into Q
    wq = w_in[:D_MODEL] * s
    wk = w_in[D_MODEL:2 * D_MODEL]
    wv = w_in[2 * D_MODEL:]
    bq = b_in[:D_MODEL] * s
    bk = b_in[D_MODEL:2 * D_MODEL]
    bv = b_in[2 * D_MODEL:]
    p["enc_qkv_wt"] = jnp.concatenate([wq.T, wk.T, wv.T],
                                      axis=1).astype(jnp.bfloat16)   # (32, 96)
    p["enc_qkv_b"] = jnp.concatenate([bq, bk, bv]).reshape(1, -1)    # (1, 96)
    w_out, b_out = pf.raw_linear(D_MODEL, D_MODEL)
    p["enc_wo"] = w_out.T.astype(jnp.bfloat16)                       # (32, 32)
    w1, b1 = pf.raw_linear(DIM_FF, D_MODEL)
    w2, b2 = pf.raw_linear(D_MODEL, DIM_FF)
    p["enc_ffn1_wt"] = w1.T.astype(jnp.bfloat16)                     # (32, 2048)
    p["enc_ffn1_b"] = b1.reshape(1, -1)
    p["enc_ffn2_wt"] = w2.T.astype(jnp.bfloat16)                     # (2048, 32)
    # packed small encoder params: [bo, ffn2_b, ln1_g, ln1_b, ln2_g, ln2_b]
    p["enc_vec"] = jnp.stack(
        [b_out, b2,
         jnp.ones((D_MODEL,), jnp.float32), jnp.zeros((D_MODEL,), jnp.float32),
         jnp.ones((D_MODEL,), jnp.float32), jnp.zeros((D_MODEL,), jnp.float32)],
        axis=0)                                                      # (6, 32)
    return p


# ----------------------------------------------------------------------------
# Forward pass (mirrors IDLMM_nn.forward, inference mode)
# ----------------------------------------------------------------------------
def idlmm_forward(params, x):
    B = x.shape[0]
    gene_input = x[:, :NGENE]
    jjh_input = x[:, NGENE:NGENE + JJH_DIM]
    drug_input = x[:, NGENE + JJH_DIM:NGENE + JJH_DIM + NDRUG]

    # jjh branch: pad the 44-token sequence to 48 rows (zeros) and fold the
    # batch into the matmul M dimension; everything else happens in kernel A.
    jjh_src = jjh_input.reshape(B, JJH_SEQ, D_MODEL)
    jjh_src = jnp.pad(jjh_src, ((0, 0), (0, SEQ_PAD - JJH_SEQ), (0, 0)))
    jjh_flat = jjh_src.reshape(B * SEQ_PAD, D_MODEL)
    pooled, att = pallas_transformer_encoder(jjh_flat, params, B)

    # all remaining tiny heads in one fused call (kernel B)
    term_pack, aux_pack = pallas_heads(gene_input, drug_input, pooled, params)

    term_out, aux_out = {}, {}
    for i, name in enumerate(BLOCK_NAMES):
        term_out[name] = term_pack[i, :, :BLOCK_HID[i]]
        aux_out[name] = aux_pack[i]
    aux_out["final"] = aux_pack[NBLOCKS]
    return aux_out, term_out, att


# ----------------------------------------------------------------------------
if __name__ == "__main__":
    batch = 4
    total_dim = NGENE + JJH_DIM + NDRUG   # 10 + 1408 + 12 = 1430
    key = jax.random.PRNGKey(0)
    x = jax.random.normal(key, (batch, total_dim), jnp.float32)

    params = init_params(seed=0)
    fwd = jax.jit(idlmm_forward)
    aux_out, term_out, att = fwd(params, x)
    jax.block_until_ready((aux_out, term_out, att))

    assert aux_out["final"].shape == (batch, 1)
    assert term_out[ROOT].shape == (batch, NUM_HIDDENS_GENO)
    assert term_out["jjh"].shape == (batch, NUM_HIDDENS_JJH)
    assert term_out["drug_1"].shape == (batch, NUM_HIDDENS_DRUG[0])
    assert term_out["final2"].shape == (batch, NUM_HIDDENS_FINAL)
    assert att.shape == (batch, JJH_SEQ, JJH_SEQ)
    print("KERNEL_OK")
</pallas_src>

<mosaic_0001>
module attributes {stable_mosaic.version = 11 : i64} {
  func.func @_heads_kernel(%arg0: memref<4x10xf32, #tpu.memory_space<vmem>>, %arg1: memref<4x12xf32, #tpu.memory_space<vmem>>, %arg2: memref<4x32xf32, #tpu.memory_space<vmem>>, %arg3: memref<10x9xf32, #tpu.memory_space<vmem>>, %arg4: memref<1x9xf32, #tpu.memory_space<vmem>>, %arg5: memref<8x32x16xf32, #tpu.memory_space<vmem>>, %arg6: memref<8x5x16xf32, #tpu.memory_space<vmem>>, %arg7: memref<8x4x16xf32, #tpu.memory_space<vmem>>, %arg8: memref<9x4x1xf32, #tpu.memory_space<vmem>>) attributes {dimension_semantics = [], scalar_prefetch = 0 : i64, scratch_operands = 0 : i64, tpu.core_type = #tpu.core_type<tc>} {
    %c0 = arith.constant 0 : index
    %c0_0 = arith.constant 0 : index
    %0 = vector.load %arg0[%c0, %c0_0] : memref<4x10xf32, #tpu.memory_space<vmem>>, vector<4x10xf32>
    %c0_1 = arith.constant 0 : index
    %c0_2 = arith.constant 0 : index
    %1 = vector.load %arg3[%c0_1, %c0_2] : memref<10x9xf32, #tpu.memory_space<vmem>>, vector<10x3xf32>
    %cst = arith.constant dense<0.000000e+00> : vector<4x3xf32>
    %2 = tpu.matmul %0, %1, %cst {dimension_numbers = #tpu.dot_dimension_numbers<[1], [0], [0], [1], [0, 0, 1, 1], [], []>} : vector<4x10xf32>, vector<10x3xf32>, vector<4x3xf32> -> vector<4x3xf32>
    %c0_3 = arith.constant 0 : index
    %c0_4 = arith.constant 0 : index
    %3 = vector.load %arg4[%c0_3, %c0_4] : memref<1x9xf32, #tpu.memory_space<vmem>>, vector<1x3xf32>
    %4 = vector.broadcast %3 : vector<1x3xf32> to vector<4x3xf32>
    %5 = arith.addf %2, %4 : vector<4x3xf32>
    %c0_5 = arith.constant 0 : index
    %c0_6 = arith.constant 0 : index
    %c0_7 = arith.constant 0 : index
    %6 = vector.load %arg6[%c0_5, %c0_6, %c0_7] : memref<8x5x16xf32, #tpu.memory_space<vmem>>, vector<1x5x16xf32>
    %7 = vector.shape_cast %6 : vector<1x5x16xf32> to vector<5x16xf32>
    %cst_8 = arith.constant 0.000000e+00 : f32
    %8 = vector.broadcast %cst_8 : f32 to vector<4x16xf32>
    %c0_9 = arith.constant 0 : index
    %c0_10 = arith.constant 0 : index
    %c0_11 = arith.constant 0 : index
    %9 = vector.load %arg5[%c0_9, %c0_10, %c0_11] : memref<8x32x16xf32, #tpu.memory_space<vmem>>, vector<1x3x16xf32>
    %10 = vector.shape_cast %9 : vector<1x3x16xf32> to vector<3x16xf32>
    %cst_12 = arith.constant dense<0.000000e+00> : vector<4x16xf32>
    %11 = tpu.matmul %5, %10, %cst_12 {dimension_numbers = #tpu.dot_dimension_numbers<[1], [0], [0], [1], [0, 0, 1, 1], [], []>} : vector<4x3xf32>, vector<3x16xf32>, vector<4x16xf32> -> vector<4x16xf32>
    %12 = arith.addf %8, %11 : vector<4x16xf32>
    %13 = vector.extract_strided_slice %7 {offsets = [0, 0], sizes = [1, 16], strides = [1, 1]} : vector<5x16xf32> to vector<1x16xf32>
    %14 = vector.broadcast %13 : vector<1x16xf32> to vector<4x16xf32>
    %15 = arith.addf %12, %14 : vector<4x16xf32>
    %16 = math.tanh %15 : vector<4x16xf32>
    %17 = vector.extract_strided_slice %7 {offsets = [1, 0], sizes = [1, 16], strides = [1, 1]} : vector<5x16xf32> to vector<1x16xf32>
    %18 = vector.broadcast %17 : vector<1x16xf32> to vector<4x16xf32>
    %19 = arith.mulf %16, %18 : vector<4x16xf32>
    %20 = vector.extract_strided_slice %7 {offsets = [2, 0], sizes = [1, 16], strides = [1, 1]} : vector<5x16xf32> to vector<1x16xf32>
    %21 = vector.broadcast %20 : vector<1x16xf32> to vector<4x16xf32>
    %22 = arith.addf %19, %21 : vector<4x16xf32>
    %23 = vector.extract_strided_slice %7 {offsets = [3, 0], sizes = [1, 16], strides = [1, 1]} : vector<5x16xf32> to vector<1x16xf32>
    %24 = vector.broadcast %23 : vector<1x16xf32> to vector<4x16xf32>
    %25 = arith.mulf %22, %24 : vector<4x16xf32>
    %cst_13 = arith.constant dense<0.000000e+00> : vector<4xf32>
    %26 = vector.multi_reduction <add>, %25, %cst_13 [1] : vector<4x16xf32> to vector<4xf32>
    %27 = vector.shape_cast %26 : vector<4xf32> to vector<4x1xf32>
    %28 = vector.extract_strided_slice %7 {offsets = [4, 0], sizes = [1, 1], strides = [1, 1]} : vector<5x16xf32> to vector<1x1xf32>
    %29 = vector.broadcast %28 : vector<1x1xf32> to vector<4x1xf32>
    %30 = arith.addf %27, %29 : vector<4x1xf32>
    %31 = math.tanh %30 : vector<4x1xf32>
    %32 = vector.extract_strided_slice %7 {offsets = [4, 1], sizes = [1, 1], strides = [1, 1]} : vector<5x16xf32> to vector<1x1xf32>
    %33 = vector.broadcast %32 : vector<1x1xf32> to vector<4x1xf32>
    %34 = arith.mulf %31, %33 : vector<4x1xf32>
    %35 = vector.extract_strided_slice %7 {offsets = [4, 2], sizes = [1, 1], strides = [1, 1]} : vector<5x16xf32> to vector<1x1xf32>
    %36 = vector.broadcast %35 : vector<1x1xf32> to vector<4x1xf32>
    %37 = arith.addf %34, %36 : vector<4x1xf32>
    %c0_14 = arith.constant 0 : index
    %c0_15 = arith.constant 0 : index
    %c0_16 = arith.constant 0 : index
    %38 = vector.load %arg7[%c0_14, %c0_15, %c0_16] : memref<8x4x16xf32, #tpu.memory_space<vmem>>, vector<1x4x16xf32>
    %39 = vector.shape_cast %38 : vector<1x4x16xf32> to vector<4x16xf32>
    %40 = vector.shape_cast %22 : vector<4x16xf32> to vector<1x4x16xf32>
    tpu.vector_store %arg7[%c0_14, %c0_15, %c0_16], %40 {strides = array<i32>} : memref<8x4x16xf32, #tpu.memory_space<vmem>>, vector<1x4x16xf32>,
    %c0_17 = arith.constant 0 : index
    %c0_18 = arith.constant 0 : index
    %c0_19 = arith.constant 0 : index
    %41 = vector.load %arg8[%c0_17, %c0_18, %c0_19] : memref<9x4x1xf32, #tpu.memory_space<vmem>>, vector<1x4x1xf32>
    %42 = vector.shape_cast %41 : vector<1x4x1xf32> to vector<4x1xf32>
    %43 = vector.shape_cast %37 : vector<4x1xf32> to vector<1x4x1xf32>
    tpu.vector_store %arg8[%c0_17, %c0_18, %c0_19], %43 {strides = array<i32>} : memref<9x4x1xf32, #tpu.memory_space<vmem>>, vector<1x4x1xf32>,
    %44 = vector.extract_strided_slice %22 {offsets = [0, 0], sizes = [4, 8], strides = [1, 1]} : vector<4x16xf32> to vector<4x8xf32>
    %c0_20 = arith.constant 0 : index
    %c3 = arith.constant 3 : index
    %45 = vector.load %arg3[%c0_20, %c3] : memref<10x9xf32, #tpu.memory_space<vmem>>, vector<10x4xf32>
    %cst_21 = arith.constant dense<0.000000e+00> : vector<4x4xf32>
    %46 = tpu.matmul %0, %45, %cst_21 {dimension_numbers = #tpu.dot_dimension_numbers<[1], [0], [0], [1], [0, 0, 1, 1], [], []>} : vector<4x10xf32>, vector<10x4xf32>, vector<4x4xf32> -> vector<4x4xf32>
    %c0_22 = arith.constant 0 : index
    %c3_23 = arith.constant 3 : index
    %47 = vector.load %arg4[%c0_22, %c3_23] : memref<1x9xf32, #tpu.memory_space<vmem>>, vector<1x4xf32>
    %48 = vector.broadcast %47 : vector<1x4xf32> to vector<4x4xf32>
    %49 = arith.addf %46, %48 : vector<4x4xf32>
    %c1 = arith.constant 1 : index
    %c0_24 = arith.constant 0 : index
    %c0_25 = arith.constant 0 : index
    %50 = vector.load %arg6[%c1, %c0_24, %c0_25] : memref<8x5x16xf32, #tpu.memory_space<vmem>>, vector<1x5x16xf32>
    %51 = vector.shape_cast %50 : vector<1x5x16xf32> to vector<5x16xf32>
    %cst_26 = arith.constant 0.000000e+00 : f32
    %52 = vector.broadcast %cst_26 : f32 to vector<4x16xf32>
    %c1_27 = arith.constant 1 : index
    %c0_28 = arith.constant 0 : index
    %c0_29 = arith.constant 0 : index
    %53 = vector.load %arg5[%c1_27, %c0_28, %c0_29] : memref<8x32x16xf32, #tpu.memory_space<vmem>>, vector<1x4x16xf32>
    %54 = vector.shape_cast %53 : vector<1x4x16xf32> to vector<4x16xf32>
    %cst_30 = arith.constant dense<0.000000e+00> : vector<4x16xf32>
    %55 = tpu.matmul %49, %54, %cst_30 {dimension_numbers = #tpu.dot_dimension_numbers<[1], [0], [0], [1], [0, 0, 1, 1], [], []>} : vector<4x4xf32>, vector<4x16xf32>, vector<4x16xf32> -> vector<4x16xf32>
    %56 = arith.addf %52, %55 : vector<4x16xf32>
    %57 = vector.extract_strided_slice %51 {offsets = [0, 0], sizes = [1, 16], strides = [1, 1]} : vector<5x16xf32> to vector<1x16xf32>
    %58 = vector.broadcast %57 : vector<1x16xf32> to vector<4x16xf32>
    %59 = arith.addf %56, %58 : vector<4x16xf32>
    %60 = math.tanh %59 : vector<4x16xf32>
    %61 = vector.extract_strided_slice %51 {offsets = [1, 0], sizes = [1, 16], strides = [1, 1]} : vector<5x16xf32> to vector<1x16xf32>
    %62 = vector.broadcast %61 : vector<1x16xf32> to vector<4x16xf32>
    %63 = arith.mulf %60, %62 : vector<4x16xf32>
    %64 = vector.extract_strided_slice %51 {offsets = [2, 0], sizes = [1, 16], strides = [1, 1]} : vector<5x16xf32> to vector<1x16xf32>
    %65 = vector.broadcast %64 : vector<1x16xf32> to vector<4x16xf32>
    %66 = arith.addf %63, %65 : vector<4x16xf32>
    %67 = vector.extract_strided_slice %51 {offsets = [3, 0], sizes = [1, 16], strides = [1, 1]} : vector<5x16xf32> to vector<1x16xf32>
    %68 = vector.broadcast %67 : vector<1x16xf32> to vector<4x16xf32>
    %69 = arith.mulf %66, %68 : vector<4x16xf32>
    %cst_31 = arith.constant dense<0.000000e+00> : vector<4xf32>
    %70 = vector.multi_reduction <add>, %69, %cst_31 [1] : vector<4x16xf32> to vector<4xf32>
    %71 = vector.shape_cast %70 : vector<4xf32> to vector<4x1xf32>
    %72 = vector.extract_strided_slice %51 {offsets = [4, 0], sizes = [1, 1], strides = [1, 1]} : vector<5x16xf32> to vector<1x1xf32>
    %73 = vector.broadcast %72 : vector<1x1xf32> to vector<4x1xf32>
    %74 = arith.addf %71, %73 : vector<4x1xf32>
    %75 = math.tanh %74 : vector<4x1xf32>
    %76 = vector.extract_strided_slice %51 {offsets = [4, 1], sizes = [1, 1], strides = [1, 1]} : vector<5x16xf32> to vector<1x1xf32>
    %77 = vector.broadcast %76 : vector<1x1xf32> to vector<4x1xf32>
    %78 = arith.mulf %75, %77 : vector<4x1xf32>
    %79 = vector.extract_strided_slice %51 {offsets = [4, 2], sizes = [1, 1], strides = [1, 1]} : vector<5x16xf32> to vector<1x1xf32>
    %80 = vector.broadcast %79 : vector<1x1xf32> to vector<4x1xf32>
    %81 = arith.addf %78, %80 : vector<4x1xf32>
    %c1_32 = arith.constant 1 : index
    %c0_33 = arith.constant 0 : index
    %c0_34 = arith.constant 0 : index
    %82 = vector.load %arg7[%c1_32, %c0_33, %c0_34] : memref<8x4x16xf32, #tpu.memory_space<vmem>>, vector<1x4x16xf32>
    %83 = vector.shape_cast %82 : vector<1x4x16xf32> to vector<4x16xf32>
    %84 = vector.shape_cast %66 : vector<4x16xf32> to vector<1x4x16xf32>
    tpu.vector_store %arg7[%c1_32, %c0_33, %c0_34], %84 {strides = array<i32>} : memref<8x4x16xf32, #tpu.memory_space<vmem>>, vector<1x4x16xf32>,
    %c1_35 = arith.constant 1 : index
    %c0_36 = arith.constant 0 : index
    %c0_37 = arith.constant 0 : index
    %85 = vector.load %arg8[%c1_35, %c0_36, %c0_37] : memref<9x4x1xf32, #tpu.memory_space<vmem>>, vector<1x4x1xf32>
    %86 = vector.shape_cast %85 : vector<1x4x1xf32> to vector<4x1xf32>
    %87 = vector.shape_cast %81 : vector<4x1xf32> to vector<1x4x1xf32>
    tpu.vector_store %arg8[%c1_35, %c0_36, %c0_37], %87 {strides = array<i32>} : memref<9x4x1xf32, #tpu.memory_space<vmem>>, vector<1x4x1xf32>,
    %88 = vector.extract_strided_slice %66 {offsets = [0, 0], sizes = [4, 8], strides = [1, 1]} : vector<4x16xf32> to vector<4x8xf32>
    %c0_38 = arith.constant 0 : index
    %c7 = arith.constant 7 : index
    %89 = vector.load %arg3[%c0_38, %c7] : memref<10x9xf32, #tpu.memory_space<vmem>>, vector<10x2xf32>
    %cst_39 = arith.constant dense<0.000000e+00> : vector<4x2xf32>
    %90 = tpu.matmul %0, %89, %cst_39 {dimension_numbers = #tpu.dot_dimension_numbers<[1], [0], [0], [1], [0, 0, 1, 1], [], []>} : vector<4x10xf32>, vector<10x2xf32>, vector<4x2xf32> -> vector<4x2xf32>
    %c0_40 = arith.constant 0 : index
    %c7_41 = arith.constant 7 : index
    %91 = vector.load %arg4[%c0_40, %c7_41] : memref<1x9xf32, #tpu.memory_space<vmem>>, vector<1x2xf32>
    %92 = vector.broadcast %91 : vector<1x2xf32> to vector<4x2xf32>
    %93 = arith.addf %90, %92 : vector<4x2xf32>
    %c2 = arith.constant 2 : index
    %c0_42 = arith.constant 0 : index
    %c0_43 = arith.constant 0 : index
    %94 = vector.load %arg6[%c2, %c0_42, %c0_43] : memref<8x5x16xf32, #tpu.memory_space<vmem>>, vector<1x5x16xf32>
    %95 = vector.shape_cast %94 : vector<1x5x16xf32> to vector<5x16xf32>
    %cst_44 = arith.constant 0.000000e+00 : f32
    %96 = vector.broadcast %cst_44 : f32 to vector<4x16xf32>
    %c2_45 = arith.constant 2 : index
    %c0_46 = arith.constant 0 : index
    %c0_47 = arith.constant 0 : index
    %97 = vector.load %arg5[%c2_45, %c0_46, %c0_47] : memref<8x32x16xf32, #tpu.memory_space<vmem>>, vector<1x8x16xf32>
    %98 = vector.shape_cast %97 : vector<1x8x16xf32> to vector<8x16xf32>
    %cst_48 = arith.constant dense<0.000000e+00> : vector<4x16xf32>
    %99 = tpu.matmul %44, %98, %cst_48 {dimension_numbers = #tpu.dot_dimension_numbers<[1], [0], [0], [1], [0, 0, 1, 1], [], []>} : vector<4x8xf32>, vector<8x16xf32>, vector<4x16xf32> -> vector<4x16xf32>
    %100 = arith.addf %96, %99 : vector<4x16xf32>
    %c2_49 = arith.constant 2 : index
    %c8 = arith.constant 8 : index
    %c0_50 = arith.constant 0 : index
    %101 = vector.load %arg5[%c2_49, %c8, %c0_50] : memref<8x32x16xf32, #tpu.memory_space<vmem>>, vector<1x8x16xf32>
    %102 = vector.shape_cast %101 : vector<1x8x16xf32> to vector<8x16xf32>
    %cst_51 = arith.constant dense<0.000000e+00> : vector<4x16xf32>
    %103 = tpu.matmul %88, %102, %cst_51 {dimension_numbers = #tpu.dot_dimension_numbers<[1], [0], [0], [1], [0, 0, 1, 1], [], []>} : vector<4x8xf32>, vector<8x16xf32>, vector<4x16xf32> -> vector<4x16xf32>
    %104 = arith.addf %100, %103 : vector<4x16xf32>
    %c2_52 = arith.constant 2 : index
    %c16 = arith.constant 16 : index
    %c0_53 = arith.constant 0 : index
    %105 = vector.load %arg5[%c2_52, %c16, %c0_53] : memref<8x32x16xf32, #tpu.memory_space<vmem>>, vector<1x2x16xf32>
    %106 = vector.shape_cast %105 : vector<1x2x16xf32> to vector<2x16xf32>
    %cst_54 = arith.constant dense<0.000000e+00> : vector<4x16xf32>
    %107 = tpu.matmul %93, %106, %cst_54 {dimension_numbers = #tpu.dot_dimension_numbers<[1], [0], [0], [1], [0, 0, 1, 1], [], []>} : vector<4x2xf32>, vector<2x16xf32>, vector<4x16xf32> -> vector<4x16xf32>
    %108 = arith.addf %104, %107 : vector<4x16xf32>
    %109 = vector.extract_strided_slice %95 {offsets = [0, 0], sizes = [1, 16], strides = [1, 1]} : vector<5x16xf32> to vector<1x16xf32>
    %110 = vector.broadcast %109 : vector<1x16xf32> to vector<4x16xf32>
    %111 = arith.addf %108, %110 : vector<4x16xf32>
    %112 = math.tanh %111 : vector<4x16xf32>
    %113 = vector.extract_strided_slice %95 {offsets = [1, 0], sizes = [1, 16], strides = [1, 1]} : vector<5x16xf32> to vector<1x16xf32>
    %114 = vector.broadcast %113 : vector<1x16xf32> to vector<4x16xf32>
    %115 = arith.mulf %112, %114 : vector<4x16xf32>
    %116 = vector.extract_strided_slice %95 {offsets = [2, 0], sizes = [1, 16], strides = [1, 1]} : vector<5x16xf32> to vector<1x16xf32>
    %117 = vector.broadcast %116 : vector<1x16xf32> to vector<4x16xf32>
    %118 = arith.addf %115, %117 : vector<4x16xf32>
    %119 = vector.extract_strided_slice %95 {offsets = [3, 0], sizes = [1, 16], strides = [1, 1]} : vector<5x16xf32> to vector<1x16xf32>
    %120 = vector.broadcast %119 : vector<1x16xf32> to vector<4x16xf32>
    %121 = arith.mulf %118, %120 : vector<4x16xf32>
    %cst_55 = arith.constant dense<0.000000e+00> : vector<4xf32>
    %122 = vector.multi_reduction <add>, %121, %cst_55 [1] : vector<4x16xf32> to vector<4xf32>
    %123 = vector.shape_cast %122 : vector<4xf32> to vector<4x1xf32>
    %124 = vector.extract_strided_slice %95 {offsets = [4, 0], sizes = [1, 1], strides = [1, 1]} : vector<5x16xf32> to vector<1x1xf32>
    %125 = vector.broadcast %124 : vector<1x1xf32> to vector<4x1xf32>
    %126 = arith.addf %123, %125 : vector<4x1xf32>
    %127 = math.tanh %126 : vector<4x1xf32>
    %128 = vector.extract_strided_slice %95 {offsets = [4, 1], sizes = [1, 1], strides = [1, 1]} : vector<5x16xf32> to vector<1x1xf32>
    %129 = vector.broadcast %128 : vector<1x1xf32> to vector<4x1xf32>
    %130 = arith.mulf %127, %129 : vector<4x1xf32>
    %131 = vector.extract_strided_slice %95 {offsets = [4, 2], sizes = [1, 1], strides = [1, 1]} : vector<5x16xf32> to vector<1x1xf32>
    %132 = vector.broadcast %131 : vector<1x1xf32> to vector<4x1xf32>
    %133 = arith.addf %130, %132 : vector<4x1xf32>
    %c2_56 = arith.constant 2 : index
    %c0_57 = arith.constant 0 : index
    %c0_58 = arith.constant 0 : index
    %134 = vector.load %arg7[%c2_56, %c0_57, %c0_58] : memref<8x4x16xf32, #tpu.memory_space<vmem>>, vector<1x4x16xf32>
    %135 = vector.shape_cast %134 : vector<1x4x16xf32> to vector<4x16xf32>
    %136 = vector.shape_cast %118 : vector<4x16xf32> to vector<1x4x16xf32>
    tpu.vector_store %arg7[%c2_56, %c0_57, %c0_58], %136 {strides = array<i32>} : memref<8x4x16xf32, #tpu.memory_space<vmem>>, vector<1x4x16xf32>,
    %c2_59 = arith.constant 2 : index
    %c0_60 = arith.constant 0 : index
    %c0_61 = arith.constant 0 : index
    %137 = vector.load %arg8[%c2_59, %c0_60, %c0_61] : memref<9x4x1xf32, #tpu.memory_space<vmem>>, vector<1x4x1xf32>
    %138 = vector.shape_cast %137 : vector<1x4x1xf32> to vector<4x1xf32>
    %139 = vector.shape_cast %133 : vector<4x1xf32> to vector<1x4x1xf32>
    tpu.vector_store %arg8[%c2_59, %c0_60, %c0_61], %139 {strides = array<i32>} : memref<9x4x1xf32, #tpu.memory_space<vmem>>, vector<1x4x1xf32>,
    %140 = vector.extract_strided_slice %118 {offsets = [0, 0], sizes = [4, 8], strides = [1, 1]} : vector<4x16xf32> to vector<4x8xf32>
    %c0_62 = arith.constant 0 : index
    %c0_63 = arith.constant 0 : index
    %141 = vector.load %arg2[%c0_62, %c0_63] : memref<4x32xf32, #tpu.memory_space<vmem>>, vector<4x32xf32>
    %c3_64 = arith.constant 3 : index
    %c0_65 = arith.constant 0 : index
    %c0_66 = arith.constant 0 : index
    %142 = vector.load %arg6[%c3_64, %c0_65, %c0_66] : memref<8x5x16xf32, #tpu.memory_space<vmem>>, vector<1x5x16xf32>
    %143 = vector.shape_cast %142 : vector<1x5x16xf32> to vector<5x16xf32>
    %cst_67 = arith.constant 0.000000e+00 : f32
    %144 = vector.broadcast %cst_67 : f32 to vector<4x16xf32>
    %c3_68 = arith.constant 3 : index
    %c0_69 = arith.constant 0 : index
    %c0_70 = arith.constant 0 : index
    %145 = vector.load %arg5[%c3_68, %c0_69, %c0_70] : memref<8x32x16xf32, #tpu.memory_space<vmem>>, vector<1x32x16xf32>
    %146 = vector.shape_cast %145 : vector<1x32x16xf32> to vector<32x16xf32>
    %cst_71 = arith.constant dense<0.000000e+00> : vector<4x16xf32>
    %147 = tpu.matmul %141, %146, %cst_71 {dimension_numbers = #tpu.dot_dimension_numbers<[1], [0], [0], [1], [0, 0, 1, 1], [], []>} : vector<4x32xf32>, vector<32x16xf32>, vector<4x16xf32> -> vector<4x16xf32>
    %148 = arith.addf %144, %147 : vector<4x16xf32>
    %149 = vector.extract_strided_slice %143 {offsets = [0, 0], sizes = [1, 16], strides = [1, 1]} : vector<5x16xf32> to vector<1x16xf32>
    %150 = vector.broadcast %149 : vector<1x16xf32> to vector<4x16xf32>
    %151 = arith.addf %148, %150 : vector<4x16xf32>
    %152 = math.tanh %151 : vector<4x16xf32>
    %153 = vector.extract_strided_slice %143 {offsets = [1, 0], sizes = [1, 16], strides = [1, 1]} : vector<5x16xf32> to vector<1x16xf32>
    %154 = vector.broadcast %153 : vector<1x16xf32> to vector<4x16xf32>
    %155 = arith.mulf %152, %154 : vector<4x16xf32>
    %156 = vector.extract_strided_slice %143 {offsets = [2, 0], sizes = [1, 16], strides = [1, 1]} : vector<5x16xf32> to vector<1x16xf32>
    %157 = vector.broadcast %156 : vector<1x16xf32> to vector<4x16xf32>
    %158 = arith.addf %155, %157 : vector<4x16xf32>
    %159 = vector.extract_strided_slice %143 {offsets = [3, 0], sizes = [1, 16], strides = [1, 1]} : vector<5x16xf32> to vector<1x16xf32>
    %160 = vector.broadcast %159 : vector<1x16xf32> to vector<4x16xf32>
    %161 = arith.mulf %158, %160 : vector<4x16xf32>
    %cst_72 = arith.constant dense<0.000000e+00> : vector<4xf32>
    %162 = vector.multi_reduction <add>, %161, %cst_72 [1] : vector<4x16xf32> to vector<4xf32>
    %163 = vector.shape_cast %162 : vector<4xf32> to vector<4x1xf32>
    %164 = vector.extract_strided_slice %143 {offsets = [4, 0], sizes = [1, 1], strides = [1, 1]} : vector<5x16xf32> to vector<1x1xf32>
    %165 = vector.broadcast %164 : vector<1x1xf32> to vector<4x1xf32>
    %166 = arith.addf %163, %165 : vector<4x1xf32>
    %167 = math.tanh %166 : vector<4x1xf32>
    %168 = vector.extract_strided_slice %143 {offsets = [4, 1], sizes = [1, 1], strides = [1, 1]} : vector<5x16xf32> to vector<1x1xf32>
    %169 = vector.broadcast %168 : vector<1x1xf32> to vector<4x1xf32>
    %170 = arith.mulf %167, %169 : vector<4x1xf32>
    %171 = vector.extract_strided_slice %143 {offsets = [4, 2], sizes = [1, 1], strides = [1, 1]} : vector<5x16xf32> to vector<1x1xf32>
    %172 = vector.broadcast %171 : vector<1x1xf32> to vector<4x1xf32>
    %173 = arith.addf %170, %172 : vector<4x1xf32>
    %c3_73 = arith.constant 3 : index
    %c0_74 = arith.constant 0 : index
    %c0_75 = arith.constant 0 : index
    %174 = vector.load %arg7[%c3_73, %c0_74, %c0_75] : memref<8x4x16xf32, #tpu.memory_space<vmem>>, vector<1x4x16xf32>
    %175 = vector.shape_cast %174 : vector<1x4x16xf32> to vector<4x16xf32>
    %176 = vector.shape_cast %158 : vector<4x16xf32> to vector<1x4x16xf32>
    tpu.vector_store %arg7[%c3_73, %c0_74, %c0_75], %176 {strides = array<i32>} : memref<8x4x16xf32, #tpu.memory_space<vmem>>, vector<1x4x16xf32>,
    %c3_76 = arith.constant 3 : index
    %c0_77 = arith.constant 0 : index
    %c0_78 = arith.constant 0 : index
    %177 = vector.load %arg8[%c3_76, %c0_77, %c0_78] : memref<9x4x1xf32, #tpu.memory_space<vmem>>, vector<1x4x1xf32>
    %178 = vector.shape_cast %177 : vector<1x4x1xf32> to vector<4x1xf32>
    %179 = vector.shape_cast %173 : vector<4x1xf32> to vector<1x4x1xf32>
    tpu.vector_store %arg8[%c3_76, %c0_77, %c0_78], %179 {strides = array<i32>} : memref<9x4x1xf32, #tpu.memory_space<vmem>>, vector<1x4x1xf32>,
    %180 = vector.extract_strided_slice %158 {offsets = [0, 0], sizes = [4, 8], strides = [1, 1]} : vector<4x16xf32> to vector<4x8xf32>
    %c0_79 = arith.constant 0 : index
    %c0_80 = arith.constant 0 : index
    %181 = vector.load %arg1[%c0_79, %c0_80] : memref<4x12xf32, #tpu.memory_space<vmem>>, vector<4x12xf32>
    %c4 = arith.constant 4 : index
    %c0_81 = arith.constant 0 : index
    %c0_82 = arith.constant 0 : index
    %182 = vector.load %arg6[%c4, %c0_81, %c0_82] : memref<8x5x16xf32, #tpu.memory_space<vmem>>, vector<1x5x16xf32>
    %183 = vector.shape_cast %182 : vector<1x5x16xf32> to vector<5x16xf32>
    %cst_83 = arith.constant 0.000000e+00 : f32
    %184 = vector.broadcast %cst_83 : f32 to vector<4x16xf32>
    %c4_84 = arith.constant 4 : index
    %c0_85 = arith.constant 0 : index
    %c0_86 = arith.constant 0 : index
    %185 = vector.load %arg5[%c4_84, %c0_85, %c0_86] : memref<8x32x16xf32, #tpu.memory_space<vmem>>, vector<1x12x16xf32>
    %186 = vector.shape_cast %185 : vector<1x12x16xf32> to vector<12x16xf32>
    %cst_87 = arith.constant dense<0.000000e+00> : vector<4x16xf32>
    %187 = tpu.matmul %181, %186, %cst_87 {dimension_numbers = #tpu.dot_dimension_numbers<[1], [0], [0], [1], [0, 0, 1, 1], [], []>} : vector<4x12xf32>, vector<12x16xf32>, vector<4x16xf32> -> vector<4x16xf32>
    %188 = arith.addf %184, %187 : vector<4x16xf32>
    %189 = vector.extract_strided_slice %183 {offsets = [0, 0], sizes = [1, 16], strides = [1, 1]} : vector<5x16xf32> to vector<1x16xf32>
    %190 = vector.broadcast %189 : vector<1x16xf32> to vector<4x16xf32>
    %191 = arith.addf %188, %190 : vector<4x16xf32>
    %192 = math.tanh %191 : vector<4x16xf32>
    %193 = vector.extract_strided_slice %183 {offsets = [1, 0], sizes = [1, 16], strides = [1, 1]} : vector<5x16xf32> to vector<1x16xf32>
    %194 = vector.broadcast %193 : vector<1x16xf32> to vector<4x16xf32>
    %195 = arith.mulf %192, %194 : vector<4x16xf32>
    %196 = vector.extract_strided_slice %183 {offsets = [2, 0], sizes = [1, 16], strides = [1, 1]} : vector<5x16xf32> to vector<1x16xf32>
    %197 = vector.broadcast %196 : vector<1x16xf32> to vector<4x16xf32>
    %198 = arith.addf %195, %197 : vector<4x16xf32>
    %199 = vector.extract_strided_slice %183 {offsets = [3, 0], sizes = [1, 16], strides = [1, 1]} : vector<5x16xf32> to vector<1x16xf32>
    %200 = vector.broadcast %199 : vector<1x16xf32> to vector<4x16xf32>
    %201 = arith.mulf %198, %200 : vector<4x16xf32>
    %cst_88 = arith.constant dense<0.000000e+00> : vector<4xf32>
    %202 = vector.multi_reduction <add>, %201, %cst_88 [1] : vector<4x16xf32> to vector<4xf32>
    %203 = vector.shape_cast %202 : vector<4xf32> to vector<4x1xf32>
    %204 = vector.extract_strided_slice %183 {offsets = [4, 0], sizes = [1, 1], strides = [1, 1]} : vector<5x16xf32> to vector<1x1xf32>
    %205 = vector.broadcast %204 : vector<1x1xf32> to vector<4x1xf32>
    %206 = arith.addf %203, %205 : vector<4x1xf32>
    %207 = math.tanh %206 : vector<4x1xf32>
    %208 = vector.extract_strided_slice %183 {offsets = [4, 1], sizes = [1, 1], strides = [1, 1]} : vector<5x16xf32> to vector<1x1xf32>
    %209 = vector.broadcast %208 : vector<1x1xf32> to vector<4x1xf32>
    %210 = arith.mulf %207, %209 : vector<4x1xf32>
    %211 = vector.extract_strided_slice %183 {offsets = [4, 2], sizes = [1, 1], strides = [1, 1]} : vector<5x16xf32> to vector<1x1xf32>
    %212 = vector.broadcast %211 : vector<1x1xf32> to vector<4x1xf32>
    %213 = arith.addf %210, %212 : vector<4x1xf32>
    %c4_89 = arith.constant 4 : index
    %c0_90 = arith.constant 0 : index
    %c0_91 = arith.constant 0 : index
    %214 = vector.load %arg7[%c4_89, %c0_90, %c0_91] : memref<8x4x16xf32, #tpu.memory_space<vmem>>, vector<1x4x16xf32>
    %215 = vector.shape_cast %214 : vector<1x4x16xf32> to vector<4x16xf32>
    %216 = vector.shape_cast %198 : vector<4x16xf32> to vector<1x4x16xf32>
    tpu.vector_store %arg7[%c4_89, %c0_90, %c0_91], %216 {strides = array<i32>} : memref<8x4x16xf32, #tpu.memory_space<vmem>>, vector<1x4x16xf32>,
    %c4_92 = arith.constant 4 : index
    %c0_93 = arith.constant 0 : index
    %c0_94 = arith.constant 0 : index
    %217 = vector.load %arg8[%c4_92, %c0_93, %c0_94] : memref<9x4x1xf32, #tpu.memory_space<vmem>>, vector<1x4x1xf32>
    %218 = vector.shape_cast %217 : vector<1x4x1xf32> to vector<4x1xf32>
    %219 = vector.shape_cast %213 : vector<4x1xf32> to vector<1x4x1xf32>
    tpu.vector_store %arg8[%c4_92, %c0_93, %c0_94], %219 {strides = array<i32>} : memref<9x4x1xf32, #tpu.memory_space<vmem>>, vector<1x4x1xf32>,
    %c5 = arith.constant 5 : index
    %c0_95 = arith.constant 0 : index
    %c0_96 = arith.constant 0 : index
    %220 = vector.load %arg6[%c5, %c0_95, %c0_96] : memref<8x5x16xf32, #tpu.memory_space<vmem>>, vector<1x5x16xf32>
    %221 = vector.shape_cast %220 : vector<1x5x16xf32> to vector<5x16xf32>
    %cst_97 = arith.constant 0.000000e+00 : f32
    %222 = vector.broadcast %cst_97 : f32 to vector<4x16xf32>
    %c5_98 = arith.constant 5 : index
    %c0_99 = arith.constant 0 : index
    %c0_100 = arith.constant 0 : index
    %223 = vector.load %arg5[%c5_98, %c0_99, %c0_100] : memref<8x32x16xf32, #tpu.memory_space<vmem>>, vector<1x16x16xf32>
    %224 = vector.shape_cast %223 : vector<1x16x16xf32> to vector<16x16xf32>
    %cst_101 = arith.constant dense<0.000000e+00> : vector<4x16xf32>
    %225 = tpu.matmul %198, %224, %cst_101 {dimension_numbers = #tpu.dot_dimension_numbers<[1], [0], [0], [1], [0, 0, 1, 1], [], []>} : vector<4x16xf32>, vector<16x16xf32>, vector<4x16xf32> -> vector<4x16xf32>
    %226 = arith.addf %222, %225 : vector<4x16xf32>
    %227 = vector.extract_strided_slice %221 {offsets = [0, 0], sizes = [1, 16], strides = [1, 1]} : vector<5x16xf32> to vector<1x16xf32>
    %228 = vector.broadcast %227 : vector<1x16xf32> to vector<4x16xf32>
    %229 = arith.addf %226, %228 : vector<4x16xf32>
    %230 = math.tanh %229 : vector<4x16xf32>
    %231 = vector.extract_strided_slice %221 {offsets = [1, 0], sizes = [1, 16], strides = [1, 1]} : vector<5x16xf32> to vector<1x16xf32>
    %232 = vector.broadcast %231 : vector<1x16xf32> to vector<4x16xf32>
    %233 = arith.mulf %230, %232 : vector<4x16xf32>
    %234 = vector.extract_strided_slice %221 {offsets = [2, 0], sizes = [1, 16], strides = [1, 1]} : vector<5x16xf32> to vector<1x16xf32>
    %235 = vector.broadcast %234 : vector<1x16xf32> to vector<4x16xf32>
    %236 = arith.addf %233, %235 : vector<4x16xf32>
    %237 = vector.extract_strided_slice %221 {offsets = [3, 0], sizes = [1, 16], strides = [1, 1]} : vector<5x16xf32> to vector<1x16xf32>
    %238 = vector.broadcast %237 : vector<1x16xf32> to vector<4x16xf32>
    %239 = arith.mulf %236, %238 : vector<4x16xf32>
    %cst_102 = arith.constant dense<0.000000e+00> : vector<4xf32>
    %240 = vector.multi_reduction <add>, %239, %cst_102 [1] : vector<4x16xf32> to vector<4xf32>
    %241 = vector.shape_cast %240 : vector<4xf32> to vector<4x1xf32>
    %242 = vector.extract_strided_slice %221 {offsets = [4, 0], sizes = [1, 1], strides = [1, 1]} : vector<5x16xf32> to vector<1x1xf32>
    %243 = vector.broadcast %242 : vector<1x1xf32> to vector<4x1xf32>
    %244 = arith.addf %241, %243 : vector<4x1xf32>
    %245 = math.tanh %244 : vector<4x1xf32>
    %246 = vector.extract_strided_slice %221 {offsets = [4, 1], sizes = [1, 1], strides = [1, 1]} : vector<5x16xf32> to vector<1x1xf32>
    %247 = vector.broadcast %246 : vector<1x1xf32> to vector<4x1xf32>
    %248 = arith.mulf %245, %247 : vector<4x1xf32>
    %249 = vector.extract_strided_slice %221 {offsets = [4, 2], sizes = [1, 1], strides = [1, 1]} : vector<5x16xf32> to vector<1x1xf32>
    %250 = vector.broadcast %249 : vector<1x1xf32> to vector<4x1xf32>
    %251 = arith.addf %248, %250 : vector<4x1xf32>
    %c5_103 = arith.constant 5 : index
    %c0_104 = arith.constant 0 : index
    %c0_105 = arith.constant 0 : index
    %252 = vector.load %arg7[%c5_103, %c0_104, %c0_105] : memref<8x4x16xf32, #tpu.memory_space<vmem>>, vector<1x4x16xf32>
    %253 = vector.shape_cast %252 : vector<1x4x16xf32> to vector<4x16xf32>
    %254 = vector.shape_cast %236 : vector<4x16xf32> to vector<1x4x16xf32>
    tpu.vector_store %arg7[%c5_103, %c0_104, %c0_105], %254 {strides = array<i32>} : memref<8x4x16xf32, #tpu.memory_space<vmem>>, vector<1x4x16xf32>,
    %c5_106 = arith.constant 5 : index
    %c0_107 = arith.constant 0 : index
    %c0_108 = arith.constant 0 : index
    %255 = vector.load %arg8[%c5_106, %c0_107, %c0_108] : memref<9x4x1xf32, #tpu.memory_space<vmem>>, vector<1x4x1xf32>
    %256 = vector.shape_cast %255 : vector<1x4x1xf32> to vector<4x1xf32>
    %257 = vector.shape_cast %251 : vector<4x1xf32> to vector<1x4x1xf32>
    tpu.vector_store %arg8[%c5_106, %c0_107, %c0_108], %257 {strides = array<i32>} : memref<9x4x1xf32, #tpu.memory_space<vmem>>, vector<1x4x1xf32>,
    %258 = vector.extract_strided_slice %236 {offsets = [0, 0], sizes = [4, 8], strides = [1, 1]} : vector<4x16xf32> to vector<4x8xf32>
    %c6 = arith.constant 6 : index
    %c0_109 = arith.constant 0 : index
    %c0_110 = arith.constant 0 : index
    %259 = vector.load %arg6[%c6, %c0_109, %c0_110] : memref<8x5x16xf32, #tpu.memory_space<vmem>>, vector<1x5x16xf32>
    %260 = vector.shape_cast %259 : vector<1x5x16xf32> to vector<5x16xf32>
    %cst_111 = arith.constant 0.000000e+00 : f32
    %261 = vector.broadcast %cst_111 : f32 to vector<4x16xf32>
    %c6_112 = arith.constant 6 : index
    %c0_113 = arith.constant 0 : index
    %c0_114 = arith.constant 0 : index
    %262 = vector.load %arg5[%c6_112, %c0_113, %c0_114] : memref<8x32x16xf32, #tpu.memory_space<vmem>>, vector<1x8x16xf32>
    %263 = vector.shape_cast %262 : vector<1x8x16xf32> to vector<8x16xf32>
    %cst_115 = arith.constant dense<0.000000e+00> : vector<4x16xf32>
    %264 = tpu.matmul %140, %263, %cst_115 {dimension_numbers = #tpu.dot_dimension_numbers<[1], [0], [0], [1], [0, 0, 1, 1], [], []>} : vector<4x8xf32>, vector<8x16xf32>, vector<4x16xf32> -> vector<4x16xf32>
    %265 = arith.addf %261, %264 : vector<4x16xf32>
    %c6_116 = arith.constant 6 : index
    %c8_117 = arith.constant 8 : index
    %c0_118 = arith.constant 0 : index
    %266 = vector.load %arg5[%c6_116, %c8_117, %c0_118] : memref<8x32x16xf32, #tpu.memory_space<vmem>>, vector<1x8x16xf32>
    %267 = vector.shape_cast %266 : vector<1x8x16xf32> to vector<8x16xf32>
    %cst_119 = arith.constant dense<0.000000e+00> : vector<4x16xf32>
    %268 = tpu.matmul %258, %267, %cst_119 {dimension_numbers = #tpu.dot_dimension_numbers<[1], [0], [0], [1], [0, 0, 1, 1], [], []>} : vector<4x8xf32>, vector<8x16xf32>, vector<4x16xf32> -> vector<4x16xf32>
    %269 = arith.addf %265, %268 : vector<4x16xf32>
    %270 = vector.extract_strided_slice %260 {offsets = [0, 0], sizes = [1, 16], strides = [1, 1]} : vector<5x16xf32> to vector<1x16xf32>
    %271 = vector.broadcast %270 : vector<1x16xf32> to vector<4x16xf32>
    %272 = arith.addf %269, %271 : vector<4x16xf32>
    %273 = math.tanh %272 : vector<4x16xf32>
    %274 = vector.extract_strided_slice %260 {offsets = [1, 0], sizes = [1, 16], strides = [1, 1]} : vector<5x16xf32> to vector<1x16xf32>
    %275 = vector.broadcast %274 : vector<1x16xf32> to vector<4x16xf32>
    %276 = arith.mulf %273, %275 : vector<4x16xf32>
    %277 = vector.extract_strided_slice %260 {offsets = [2, 0], sizes = [1, 16], strides = [1, 1]} : vector<5x16xf32> to vector<1x16xf32>
    %278 = vector.broadcast %277 : vector<1x16xf32> to vector<4x16xf32>
    %279 = arith.addf %276, %278 : vector<4x16xf32>
    %280 = vector.extract_strided_slice %260 {offsets = [3, 0], sizes = [1, 16], strides = [1, 1]} : vector<5x16xf32> to vector<1x16xf32>
    %281 = vector.broadcast %280 : vector<1x16xf32> to vector<4x16xf32>
    %282 = arith.mulf %279, %281 : vector<4x16xf32>
    %cst_120 = arith.constant dense<0.000000e+00> : vector<4xf32>
    %283 = vector.multi_reduction <add>, %282, %cst_120 [1] : vector<4x16xf32> to vector<4xf32>
    %284 = vector.shape_cast %283 : vector<4xf32> to vector<4x1xf32>
    %285 = vector.extract_strided_slice %260 {offsets = [4, 0], sizes = [1, 1], strides = [1, 1]} : vector<5x16xf32> to vector<1x1xf32>
    %286 = vector.broadcast %285 : vector<1x1xf32> to vector<4x1xf32>
    %287 = arith.addf %284, %286 : vector<4x1xf32>
    %288 = math.tanh %287 : vector<4x1xf32>
    %289 = vector.extract_strided_slice %260 {offsets = [4, 1], sizes = [1, 1], strides = [1, 1]} : vector<5x16xf32> to vector<1x1xf32>
    %290 = vector.broadcast %289 : vector<1x1xf32> to vector<4x1xf32>
    %291 = arith.mulf %288, %290 : vector<4x1xf32>
    %292 = vector.extract_strided_slice %260 {offsets = [4, 2], sizes = [1, 1], strides = [1, 1]} : vector<5x16xf32> to vector<1x1xf32>
    %293 = vector.broadcast %292 : vector<1x1xf32> to vector<4x1xf32>
    %294 = arith.addf %291, %293 : vector<4x1xf32>
    %c6_121 = arith.constant 6 : index
    %c0_122 = arith.constant 0 : index
    %c0_123 = arith.constant 0 : index
    %295 = vector.load %arg7[%c6_121, %c0_122, %c0_123] : memref<8x4x16xf32, #tpu.memory_space<vmem>>, vector<1x4x16xf32>
    %296 = vector.shape_cast %295 : vector<1x4x16xf32> to vector<4x16xf32>
    %297 = vector.shape_cast %279 : vector<4x16xf32> to vector<1x4x16xf32>
    tpu.vector_store %arg7[%c6_121, %c0_122, %c0_123], %297 {strides = array<i32>} : memref<8x4x16xf32, #tpu.memory_space<vmem>>, vector<1x4x16xf32>,
    %c6_124 = arith.constant 6 : index
    %c0_125 = arith.constant 0 : index
    %c0_126 = arith.constant 0 : index
    %298 = vector.load %arg8[%c6_124, %c0_125, %c0_126] : memref<9x4x1xf32, #tpu.memory_space<vmem>>, vector<1x4x1xf32>
    %299 = vector.shape_cast %298 : vector<1x4x1xf32> to vector<4x1xf32>
    %300 = vector.shape_cast %294 : vector<4x1xf32> to vector<1x4x1xf32>
    tpu.vector_store %arg8[%c6_124, %c0_125, %c0_126], %300 {strides = array<i32>} : memref<9x4x1xf32, #tpu.memory_space<vmem>>, vector<1x4x1xf32>,
    %c7_127 = arith.constant 7 : index
    %c0_128 = arith.constant 0 : index
    %c0_129 = arith.constant 0 : index
    %301 = vector.load %arg6[%c7_127, %c0_128, %c0_129] : memref<8x5x16xf32, #tpu.memory_space<vmem>>, vector<1x5x16xf32>
    %302 = vector.shape_cast %301 : vector<1x5x16xf32> to vector<5x16xf32>
    %cst_130 = arith.constant 0.000000e+00 : f32
    %303 = vector.broadcast %cst_130 : f32 to vector<4x16xf32>
    %c7_131 = arith.constant 7 : index
    %c0_132 = arith.constant 0 : index
    %c0_133 = arith.constant 0 : index
    %304 = vector.load %arg5[%c7_131, %c0_132, %c0_133] : memref<8x32x16xf32, #tpu.memory_space<vmem>>, vector<1x8x16xf32>
    %305 = vector.shape_cast %304 : vector<1x8x16xf32> to vector<8x16xf32>
    %cst_134 = arith.constant dense<0.000000e+00> : vector<4x16xf32>
    %306 = tpu.matmul %180, %305, %cst_134 {dimension_numbers = #tpu.dot_dimension_numbers<[1], [0], [0], [1], [0, 0, 1, 1], [], []>} : vector<4x8xf32>, vector<8x16xf32>, vector<4x16xf32> -> vector<4x16xf32>
    %307 = arith.addf %303, %306 : vector<4x16xf32>
    %c7_135 = arith.constant 7 : index
    %c8_136 = arith.constant 8 : index
    %c0_137 = arith.constant 0 : index
    %308 = vector.load %arg5[%c7_135, %c8_136, %c0_137] : memref<8x32x16xf32, #tpu.memory_space<vmem>>, vector<1x8x16xf32>
    %309 = vector.shape_cast %308 : vector<1x8x16xf32> to vector<8x16xf32>
    %cst_138 = arith.constant dense<0.000000e+00> : vector<4x16xf32>
    %310 = tpu.matmul %258, %309, %cst_138 {dimension_numbers = #tpu.dot_dimension_numbers<[1], [0], [0], [1], [0, 0, 1, 1], [], []>} : vector<4x8xf32>, vector<8x16xf32>, vector<4x16xf32> -> vector<4x16xf32>
    %311 = arith.addf %307, %310 : vector<4x16xf32>
    %312 = vector.extract_strided_slice %302 {offsets = [0, 0], sizes = [1, 16], strides = [1, 1]} : vector<5x16xf32> to vector<1x16xf32>
    %313 = vector.broadcast %312 : vector<1x16xf32> to vector<4x16xf32>
    %314 = arith.addf %311, %313 : vector<4x16xf32>
    %315 = math.tanh %314 : vector<4x16xf32>
    %316 = vector.extract_strided_slice %302 {offsets = [1, 0], sizes = [1, 16], strides = [1, 1]} : vector<5x16xf32> to vector<1x16xf32>
    %317 = vector.broadcast %316 : vector<1x16xf32> to vector<4x16xf32>
    %318 = arith.mulf %315, %317 : vector<4x16xf32>
    %319 = vector.extract_strided_slice %302 {offsets = [2, 0], sizes = [1, 16], strides = [1, 1]} : vector<5x16xf32> to vector<1x16xf32>
    %320 = vector.broadcast %319 : vector<1x16xf32> to vector<4x16xf32>
    %321 = arith.addf %318, %320 : vector<4x16xf32>
    %322 = vector.extract_strided_slice %302 {offsets = [3, 0], sizes = [1, 16], strides = [1, 1]} : vector<5x16xf32> to vector<1x16xf32>
    %323 = vector.broadcast %322 : vector<1x16xf32> to vector<4x16xf32>
    %324 = arith.mulf %321, %323 : vector<4x16xf32>
    %cst_139 = arith.constant dense<0.000000e+00> : vector<4xf32>
    %325 = vector.multi_reduction <add>, %324, %cst_139 [1] : vector<4x16xf32> to vector<4xf32>
    %326 = vector.shape_cast %325 : vector<4xf32> to vector<4x1xf32>
    %327 = vector.extract_strided_slice %302 {offsets = [4, 0], sizes = [1, 1], strides = [1, 1]} : vector<5x16xf32> to vector<1x1xf32>
    %328 = vector.broadcast %327 : vector<1x1xf32> to vector<4x1xf32>
    %329 = arith.addf %326, %328 : vector<4x1xf32>
    %330 = math.tanh %329 : vector<4x1xf32>
    %331 = vector.extract_strided_slice %302 {offsets = [4, 1], sizes = [1, 1], strides = [1, 1]} : vector<5x16xf32> to vector<1x1xf32>
    %332 = vector.broadcast %331 : vector<1x1xf32> to vector<4x1xf32>
    %333 = arith.mulf %330, %332 : vector<4x1xf32>
    %334 = vector.extract_strided_slice %302 {offsets = [4, 2], sizes = [1, 1], strides = [1, 1]} : vector<5x16xf32> to vector<1x1xf32>
    %335 = vector.broadcast %334 : vector<1x1xf32> to vector<4x1xf32>
    %336 = arith.addf %333, %335 : vector<4x1xf32>
    %c7_140 = arith.constant 7 : index
    %c0_141 = arith.constant 0 : index
    %c0_142 = arith.constant 0 : index
    %337 = vector.load %arg7[%c7_140, %c0_141, %c0_142] : memref<8x4x16xf32, #tpu.memory_space<vmem>>, vector<1x4x16xf32>
    %338 = vector.shape_cast %337 : vector<1x4x16xf32> to vector<4x16xf32>
    %339 = vector.shape_cast %321 : vector<4x16xf32> to vector<1x4x16xf32>
    tpu.vector_store %arg7[%c7_140, %c0_141, %c0_142], %339 {strides = array<i32>} : memref<8x4x16xf32, #tpu.memory_space<vmem>>, vector<1x4x16xf32>,
    %c7_143 = arith.constant 7 : index
    %c0_144 = arith.constant 0 : index
    %c0_145 = arith.constant 0 : index
    %340 = vector.load %arg8[%c7_143, %c0_144, %c0_145] : memref<9x4x1xf32, #tpu.memory_space<vmem>>, vector<1x4x1xf32>
    %341 = vector.shape_cast %340 : vector<1x4x1xf32> to vector<4x1xf32>
    %342 = vector.shape_cast %336 : vector<4x1xf32> to vector<1x4x1xf32>
    tpu.vector_store %arg8[%c7_143, %c0_144, %c0_145], %342 {strides = array<i32>} : memref<9x4x1xf32, #tpu.memory_space<vmem>>, vector<1x4x1xf32>,
    %343 = arith.addf %294, %336 : vector<4x1xf32>
    %cst_146 = arith.constant 5.000000e-01 : f32
    %344 = vector.broadcast %cst_146 : f32 to vector<4x1xf32>
    %345 = arith.mulf %343, %344 : vector<4x1xf32>
    %c8_147 = arith.constant 8 : index
    %c0_148 = arith.constant 0 : index
    %c0_149 = arith.constant 0 : index
    %346 = vector.load %arg8[%c8_147, %c0_148, %c0_149] : memref<9x4x1xf32, #tpu.memory_space<vmem>>, vector<1x4x1xf32>
    %347 = vector.shape_cast %346 : vector<1x4x1xf32> to vector<4x1xf32>
    %348 = vector.shape_cast %345 : vector<4x1xf32> to vector<1x4x1xf32>
    tpu.vector_store %arg8[%c8_147, %c0_148, %c0_149], %348 {strides = array<i32>} : memref<9x4x1xf32, #tpu.memory_space<vmem>>, vector<1x4x1xf32>,
    return
  }
}

module attributes {stable_mosaic.version = 11 : i64} {
  func.func @_encoder_kernel(%arg0: i32, %arg1: memref<96x32xf32, #tpu.memory_space<vmem>>, %arg2: memref<32x96xbf16, #tpu.memory_space<vmem>>, %arg3: memref<1x96xf32, #tpu.memory_space<vmem>>, %arg4: memref<32x32xbf16, #tpu.memory_space<vmem>>, %arg5: memref<32x2048xbf16, #tpu.memory_space<vmem>>, %arg6: memref<1x2048xf32, #tpu.memory_space<vmem>>, %arg7: memref<2048x32xbf16, #tpu.memory_space<vmem>>, %arg8: memref<6x32xf32, #tpu.memory_space<vmem>>, %arg9: memref<2x44x44xf32, #tpu.memory_space<vmem>>, %arg10: memref<1x2x32xf32, #tpu.memory_space<vmem>>, %arg11: memref<96x96xf32, #tpu.memory_space<vmem>>, %arg12: memref<96x32xf32, #tpu.memory_space<vmem>>) attributes {dimension_semantics = [#tpu.dimension_semantics<parallel>], iteration_bounds = array<i64: 2>, scalar_prefetch = 0 : i64, scratch_operands = 2 : i64, tpu.core_type = #tpu.core_type<tc>, window_params = [{transform_indices = @transform_0, window_bounds = array<i64: 96, 32>}, {pipeline_mode = #tpu.pipeline_mode<synchronous>, transform_indices = @transform_1, window_bounds = array<i64: 32, 96>}, {pipeline_mode = #tpu.pipeline_mode<synchronous>, transform_indices = @transform_2, window_bounds = array<i64: 1, 96>}, {pipeline_mode = #tpu.pipeline_mode<synchronous>, transform_indices = @transform_3, window_bounds = array<i64: 32, 32>}, {pipeline_mode = #tpu.pipeline_mode<synchronous>, transform_indices = @transform_4, window_bounds = array<i64: 32, 2048>}, {pipeline_mode = #tpu.pipeline_mode<synchronous>, transform_indices = @transform_5, window_bounds = array<i64: 1, 2048>}, {pipeline_mode = #tpu.pipeline_mode<synchronous>, transform_indices = @transform_6, window_bounds = array<i64: 2048, 32>}, {pipeline_mode = #tpu.pipeline_mode<synchronous>, transform_indices = @transform_7, window_bounds = array<i64: 6, 32>}, {transform_indices = @transform_8, window_bounds = array<i64: 2, 44, 44>}, {transform_indices = @transform_9, window_bounds = array<i64: 1, 2, 32>}]} {
    %c0 = arith.constant 0 : index
    %c0_0 = arith.constant 0 : index
    %0 = vector.load %arg1[%c0, %c0_0] : memref<96x32xf32, #tpu.memory_space<vmem>>, vector<96x32xf32>
    %1 = arith.truncf %0 : vector<96x32xf32> to vector<96x32xbf16>
    %c0_1 = arith.constant 0 : index
    %c0_2 = arith.constant 0 : index
    %2 = vector.load %arg2[%c0_1, %c0_2] : memref<32x96xbf16, #tpu.memory_space<vmem>>, vector<32x96xbf16>
    %cst = arith.constant dense<0.000000e+00> : vector<96x96xf32>
    %3 = tpu.matmul %1, %2, %cst {dimension_numbers = #tpu.dot_dimension_numbers<[1], [0], [0], [1], [0, 0, 1, 1], [], []>} : vector<96x32xbf16>, vector<32x96xbf16>, vector<96x96xf32> -> vector<96x96xf32>
    %c0_3 = arith.constant 0 : index
    %c0_4 = arith.constant 0 : index
    %4 = vector.load %arg3[%c0_3, %c0_4] : memref<1x96xf32, #tpu.memory_space<vmem>>, vector<1x96xf32>
    %5 = vector.broadcast %4 : vector<1x96xf32> to vector<96x96xf32>
    %6 = arith.addf %3, %5 : vector<96x96xf32>
    %c0_5 = arith.constant 0 : index
    %c0_6 = arith.constant 0 : index
    %7 = vector.load %arg11[%c0_5, %c0_6] : memref<96x96xf32, #tpu.memory_space<vmem>>, vector<96x96xf32>
    tpu.vector_store %arg11[%c0_5, %c0_6], %6 {strides = array<i32>} : memref<96x96xf32, #tpu.memory_space<vmem>>, vector<96x96xf32>,
    %8 = tpu.iota {dimensions = array<i32: 1>} : vector<48x48xi32>
    %c44_i32 = arith.constant 44 : i32
    %9 = vector.broadcast %c44_i32 : i32 to vector<48x48xi32>
    %10 = arith.cmpi slt, %8, %9 : vector<48x48xi32>
    %cst_7 = arith.constant 0.000000e+00 : f32
    %11 = vector.broadcast %cst_7 : f32 to vector<48x48xf32>
    %cst_8 = arith.constant 0.000000e+00 : f32
    %12 = vector.broadcast %cst_8 : f32 to vector<48x32xf32>
    %c0_9 = arith.constant 0 : index
    %c0_10 = arith.constant 0 : index
    %13 = vector.load %arg11[%c0_9, %c0_10] : memref<96x96xf32, #tpu.memory_space<vmem>>, vector<48x8xf32>
    %c0_11 = arith.constant 0 : index
    %c32 = arith.constant 32 : index
    %14 = vector.load %arg11[%c0_11, %c32] : memref<96x96xf32, #tpu.memory_space<vmem>>, vector<48x8xf32>
    %c0_12 = arith.constant 0 : index
    %c64 = arith.constant 64 : index
    %15 = vector.load %arg11[%c0_12, %c64] : memref<96x96xf32, #tpu.memory_space<vmem>>, vector<48x8xf32>
    %cst_13 = arith.constant dense<0.000000e+00> : vector<48x48xf32>
    %16 = tpu.matmul %13, %14, %cst_13 {dimension_numbers = #tpu.dot_dimension_numbers<[1], [1], [0], [0], [0, 0, 1, 0], [], []>} : vector<48x8xf32>, vector<48x8xf32>, vector<48x48xf32> -> vector<48x48xf32>
    %cst_14 = arith.constant -1.000000e+30 : f32
    %17 = vector.broadcast %cst_14 : f32 to vector<48x48xf32>
    %18 = arith.select %10, %16, %17 : vector<48x48xi1>, vector<48x48xf32>
    %cst_15 = arith.constant dense<0xFF800000> : vector<48xf32>
    %19 = vector.multi_reduction <maximumf>, %18, %cst_15 [1] : vector<48x48xf32> to vector<48xf32>
    %20 = vector.shape_cast %19 : vector<48xf32> to vector<48x1xf32>
    %21 = vector.broadcast %20 : vector<48x1xf32> to vector<48x48xf32>
    %22 = arith.subf %18, %21 : vector<48x48xf32>
    %23 = math.exp %22 : vector<48x48xf32>
    %cst_16 = arith.constant dense<0.000000e+00> : vector<48xf32>
    %24 = vector.multi_reduction <add>, %23, %cst_16 [1] : vector<48x48xf32> to vector<48xf32>
    %25 = vector.shape_cast %24 : vector<48xf32> to vector<48x1xf32>
    %26 = vector.broadcast %25 : vector<48x1xf32> to vector<48x48xf32>
    %27 = arith.divf %23, %26 : vector<48x48xf32>
    %28 = arith.addf %11, %27 : vector<48x48xf32>
    %29 = arith.truncf %27 : vector<48x48xf32> to vector<48x48xbf16>
    %30 = arith.truncf %15 : vector<48x8xf32> to vector<48x8xbf16>
    %cst_17 = arith.constant dense<0.000000e+00> : vector<48x8xf32>
    %31 = tpu.matmul %29, %30, %cst_17 {dimension_numbers = #tpu.dot_dimension_numbers<[1], [0], [0], [1], [0, 0, 1, 1], [], []>} : vector<48x48xbf16>, vector<48x8xbf16>, vector<48x8xf32> -> vector<48x8xf32>
    %32 = arith.truncf %31 : vector<48x8xf32> to vector<48x8xbf16>
    %c0_18 = arith.constant 0 : index
    %c0_19 = arith.constant 0 : index
    %33 = vector.load %arg4[%c0_18, %c0_19] : memref<32x32xbf16, #tpu.memory_space<vmem>>, vector<8x32xbf16>
    %cst_20 = arith.constant dense<0.000000e+00> : vector<48x32xf32>
    %34 = tpu.matmul %32, %33, %cst_20 {dimension_numbers = #tpu.dot_dimension_numbers<[1], [0], [0], [1], [0, 0, 1, 1], [], []>} : vector<48x8xbf16>, vector<8x32xbf16>, vector<48x32xf32> -> vector<48x32xf32>
    %35 = arith.addf %12, %34 : vector<48x32xf32>
    %c0_21 = arith.constant 0 : index
    %c8 = arith.constant 8 : index
    %36 = vector.load %arg11[%c0_21, %c8] : memref<96x96xf32, #tpu.memory_space<vmem>>, vector<48x8xf32>
    %c0_22 = arith.constant 0 : index
    %c40 = arith.constant 40 : index
    %37 = vector.load %arg11[%c0_22, %c40] : memref<96x96xf32, #tpu.memory_space<vmem>>, vector<48x8xf32>
    %c0_23 = arith.constant 0 : index
    %c72 = arith.constant 72 : index
    %38 = vector.load %arg11[%c0_23, %c72] : memref<96x96xf32, #tpu.memory_space<vmem>>, vector<48x8xf32>
    %cst_24 = arith.constant dense<0.000000e+00> : vector<48x48xf32>
    %39 = tpu.matmul %36, %37, %cst_24 {dimension_numbers = #tpu.dot_dimension_numbers<[1], [1], [0], [0], [0, 0, 1, 0], [], []>} : vector<48x8xf32>, vector<48x8xf32>, vector<48x48xf32> -> vector<48x48xf32>
    %cst_25 = arith.constant -1.000000e+30 : f32
    %40 = vector.broadcast %cst_25 : f32 to vector<48x48xf32>
    %41 = arith.select %10, %39, %40 : vector<48x48xi1>, vector<48x48xf32>
    %cst_26 = arith.constant dense<0xFF800000> : vector<48xf32>
    %42 = vector.multi_reduction <maximumf>, %41, %cst_26 [1] : vector<48x48xf32> to vector<48xf32>
    %43 = vector.shape_cast %42 : vector<48xf32> to vector<48x1xf32>
    %44 = vector.broadcast %43 : vector<48x1xf32> to vector<48x48xf32>
    %45 = arith.subf %41, %44 : vector<48x48xf32>
    %46 = math.exp %45 : vector<48x48xf32>
    %cst_27 = arith.constant dense<0.000000e+00> : vector<48xf32>
    %47 = vector.multi_reduction <add>, %46, %cst_27 [1] : vector<48x48xf32> to vector<48xf32>
    %48 = vector.shape_cast %47 : vector<48xf32> to vector<48x1xf32>
    %49 = vector.broadcast %48 : vector<48x1xf32> to vector<48x48xf32>
    %50 = arith.divf %46, %49 : vector<48x48xf32>
    %51 = arith.addf %28, %50 : vector<48x48xf32>
    %52 = arith.truncf %50 : vector<48x48xf32> to vector<48x48xbf16>
    %53 = arith.truncf %38 : vector<48x8xf32> to vector<48x8xbf16>
    %cst_28 = arith.constant dense<0.000000e+00> : vector<48x8xf32>
    %54 = tpu.matmul %52, %53, %cst_28 {dimension_numbers = #tpu.dot_dimension_numbers<[1], [0], [0], [1], [0, 0, 1, 1], [], []>} : vector<48x48xbf16>, vector<48x8xbf16>, vector<48x8xf32> -> vector<48x8xf32>
    %55 = arith.truncf %54 : vector<48x8xf32> to vector<48x8xbf16>
    %c8_29 = arith.constant 8 : index
    %c0_30 = arith.constant 0 : index
    %56 = vector.load %arg4[%c8_29, %c0_30] : memref<32x32xbf16, #tpu.memory_space<vmem>>, vector<8x32xbf16>
    %cst_31 = arith.constant dense<0.000000e+00> : vector<48x32xf32>
    %57 = tpu.matmul %55, %56, %cst_31 {dimension_numbers = #tpu.dot_dimension_numbers<[1], [0], [0], [1], [0, 0, 1, 1], [], []>} : vector<48x8xbf16>, vector<8x32xbf16>, vector<48x32xf32> -> vector<48x32xf32>
    %58 = arith.addf %35, %57 : vector<48x32xf32>
    %c0_32 = arith.constant 0 : index
    %c16 = arith.constant 16 : index
    %59 = vector.load %arg11[%c0_32, %c16] : memref<96x96xf32, #tpu.memory_space<vmem>>, vector<48x8xf32>
    %c0_33 = arith.constant 0 : index
    %c48 = arith.constant 48 : index
    %60 = vector.load %arg11[%c0_33, %c48] : memref<96x96xf32, #tpu.memory_space<vmem>>, vector<48x8xf32>
    %c0_34 = arith.constant 0 : index
    %c80 = arith.constant 80 : index
    %61 = vector.load %arg11[%c0_34, %c80] : memref<96x96xf32, #tpu.memory_space<vmem>>, vector<48x8xf32>
    %cst_35 = arith.constant dense<0.000000e+00> : vector<48x48xf32>
    %62 = tpu.matmul %59, %60, %cst_35 {dimension_numbers = #tpu.dot_dimension_numbers<[1], [1], [0], [0], [0, 0, 1, 0], [], []>} : vector<48x8xf32>, vector<48x8xf32>, vector<48x48xf32> -> vector<48x48xf32>
    %cst_36 = arith.constant -1.000000e+30 : f32
    %63 = vector.broadcast %cst_36 : f32 to vector<48x48xf32>
    %64 = arith.select %10, %62, %63 : vector<48x48xi1>, vector<48x48xf32>
    %cst_37 = arith.constant dense<0xFF800000> : vector<48xf32>
    %65 = vector.multi_reduction <maximumf>, %64, %cst_37 [1] : vector<48x48xf32> to vector<48xf32>
    %66 = vector.shape_cast %65 : vector<48xf32> to vector<48x1xf32>
    %67 = vector.broadcast %66 : vector<48x1xf32> to vector<48x48xf32>
    %68 = arith.subf %64, %67 : vector<48x48xf32>
    %69 = math.exp %68 : vector<48x48xf32>
    %cst_38 = arith.constant dense<0.000000e+00> : vector<48xf32>
    %70 = vector.multi_reduction <add>, %69, %cst_38 [1] : vector<48x48xf32> to vector<48xf32>
    %71 = vector.shape_cast %70 : vector<48xf32> to vector<48x1xf32>
    %72 = vector.broadcast %71 : vector<48x1xf32> to vector<48x48xf32>
    %73 = arith.divf %69, %72 : vector<48x48xf32>
    %74 = arith.addf %51, %73 : vector<48x48xf32>
    %75 = arith.truncf %73 : vector<48x48xf32> to vector<48x48xbf16>
    %76 = arith.truncf %61 : vector<48x8xf32> to vector<48x8xbf16>
    %cst_39 = arith.constant dense<0.000000e+00> : vector<48x8xf32>
    %77 = tpu.matmul %75, %76, %cst_39 {dimension_numbers = #tpu.dot_dimension_numbers<[1], [0], [0], [1], [0, 0, 1, 1], [], []>} : vector<48x48xbf16>, vector<48x8xbf16>, vector<48x8xf32> -> vector<48x8xf32>
    %78 = arith.truncf %77 : vector<48x8xf32> to vector<48x8xbf16>
    %c16_40 = arith.constant 16 : index
    %c0_41 = arith.constant 0 : index
    %79 = vector.load %arg4[%c16_40, %c0_41] : memref<32x32xbf16, #tpu.memory_space<vmem>>, vector<8x32xbf16>
    %cst_42 = arith.constant dense<0.000000e+00> : vector<48x32xf32>
    %80 = tpu.matmul %78, %79, %cst_42 {dimension_numbers = #tpu.dot_dimension_numbers<[1], [0], [0], [1], [0, 0, 1, 1], [], []>} : vector<48x8xbf16>, vector<8x32xbf16>, vector<48x32xf32> -> vector<48x32xf32>
    %81 = arith.addf %58, %80 : vector<48x32xf32>
    %c0_43 = arith.constant 0 : index
    %c24 = arith.constant 24 : index
    %82 = vector.load %arg11[%c0_43, %c24] : memref<96x96xf32, #tpu.memory_space<vmem>>, vector<48x8xf32>
    %c0_44 = arith.constant 0 : index
    %c56 = arith.constant 56 : index
    %83 = vector.load %arg11[%c0_44, %c56] : memref<96x96xf32, #tpu.memory_space<vmem>>, vector<48x8xf32>
    %c0_45 = arith.constant 0 : index
    %c88 = arith.constant 88 : index
    %84 = vector.load %arg11[%c0_45, %c88] : memref<96x96xf32, #tpu.memory_space<vmem>>, vector<48x8xf32>
    %cst_46 = arith.constant dense<0.000000e+00> : vector<48x48xf32>
    %85 = tpu.matmul %82, %83, %cst_46 {dimension_numbers = #tpu.dot_dimension_numbers<[1], [1], [0], [0], [0, 0, 1, 0], [], []>} : vector<48x8xf32>, vector<48x8xf32>, vector<48x48xf32> -> vector<48x48xf32>
    %cst_47 = arith.constant -1.000000e+30 : f32
    %86 = vector.broadcast %cst_47 : f32 to vector<48x48xf32>
    %87 = arith.select %10, %85, %86 : vector<48x48xi1>, vector<48x48xf32>
    %cst_48 = arith.constant dense<0xFF800000> : vector<48xf32>
    %88 = vector.multi_reduction <maximumf>, %87, %cst_48 [1] : vector<48x48xf32> to vector<48xf32>
    %89 = vector.shape_cast %88 : vector<48xf32> to vector<48x1xf32>
    %90 = vector.broadcast %89 : vector<48x1xf32> to vector<48x48xf32>
    %91 = arith.subf %87, %90 : vector<48x48xf32>
    %92 = math.exp %91 : vector<48x48xf32>
    %cst_49 = arith.constant dense<0.000000e+00> : vector<48xf32>
    %93 = vector.multi_reduction <add>, %92, %cst_49 [1] : vector<48x48xf32> to vector<48xf32>
    %94 = vector.shape_cast %93 : vector<48xf32> to vector<48x1xf32>
    %95 = vector.broadcast %94 : vector<48x1xf32> to vector<48x48xf32>
    %96 = arith.divf %92, %95 : vector<48x48xf32>
    %97 = arith.addf %74, %96 : vector<48x48xf32>
    %98 = arith.truncf %96 : vector<48x48xf32> to vector<48x48xbf16>
    %99 = arith.truncf %84 : vector<48x8xf32> to vector<48x8xbf16>
    %cst_50 = arith.constant dense<0.000000e+00> : vector<48x8xf32>
    %100 = tpu.matmul %98, %99, %cst_50 {dimension_numbers = #tpu.dot_dimension_numbers<[1], [0], [0], [1], [0, 0, 1, 1], [], []>} : vector<48x48xbf16>, vector<48x8xbf16>, vector<48x8xf32> -> vector<48x8xf32>
    %101 = arith.truncf %100 : vector<48x8xf32> to vector<48x8xbf16>
    %c24_51 = arith.constant 24 : index
    %c0_52 = arith.constant 0 : index
    %102 = vector.load %arg4[%c24_51, %c0_52] : memref<32x32xbf16, #tpu.memory_space<vmem>>, vector<8x32xbf16>
    %cst_53 = arith.constant dense<0.000000e+00> : vector<48x32xf32>
    %103 = tpu.matmul %101, %102, %cst_53 {dimension_numbers = #tpu.dot_dimension_numbers<[1], [0], [0], [1], [0, 0, 1, 1], [], []>} : vector<48x8xbf16>, vector<8x32xbf16>, vector<48x32xf32> -> vector<48x32xf32>
    %104 = arith.addf %81, %103 : vector<48x32xf32>
    %105 = vector.extract_strided_slice %97 {offsets = [0, 0], sizes = [44, 44], strides = [1, 1]} : vector<48x48xf32> to vector<44x44xf32>
    %cst_54 = arith.constant 2.500000e-01 : f32
    %106 = vector.broadcast %cst_54 : f32 to vector<44x44xf32>
    %107 = arith.mulf %105, %106 : vector<44x44xf32>
    %c0_55 = arith.constant 0 : index
    %c0_56 = arith.constant 0 : index
    %c0_57 = arith.constant 0 : index
    %108 = vector.load %arg9[%c0_55, %c0_56, %c0_57] : memref<2x44x44xf32, #tpu.memory_space<vmem>>, vector<1x44x44xf32>
    %109 = vector.shape_cast %108 : vector<1x44x44xf32> to vector<44x44xf32>
    %110 = vector.shape_cast %107 : vector<44x44xf32> to vector<1x44x44xf32>
    tpu.vector_store %arg9[%c0_55, %c0_56, %c0_57], %110 {strides = array<i32>} : memref<2x44x44xf32, #tpu.memory_space<vmem>>, vector<1x44x44xf32>,
    %c0_58 = arith.constant 0 : index
    %c0_59 = arith.constant 0 : index
    %111 = vector.load %arg12[%c0_58, %c0_59] : memref<96x32xf32, #tpu.memory_space<vmem>>, vector<48x32xf32>
    tpu.vector_store %arg12[%c0_58, %c0_59], %104 {strides = array<i32>} : memref<96x32xf32, #tpu.memory_space<vmem>>, vector<48x32xf32>,
    %cst_60 = arith.constant 0.000000e+00 : f32
    %112 = vector.broadcast %cst_60 : f32 to vector<48x48xf32>
    %cst_61 = arith.constant 0.000000e+00 : f32
    %113 = vector.broadcast %cst_61 : f32 to vector<48x32xf32>
    %c48_62 = arith.constant 48 : index
    %c0_63 = arith.constant 0 : index
    %114 = vector.load %arg11[%c48_62, %c0_63] : memref<96x96xf32, #tpu.memory_space<vmem>>, vector<48x8xf32>
    %c48_64 = arith.constant 48 : index
    %c32_65 = arith.constant 32 : index
    %115 = vector.load %arg11[%c48_64, %c32_65] : memref<96x96xf32, #tpu.memory_space<vmem>>, vector<48x8xf32>
    %c48_66 = arith.constant 48 : index
    %c64_67 = arith.constant 64 : index
    %116 = vector.load %arg11[%c48_66, %c64_67] : memref<96x96xf32, #tpu.memory_space<vmem>>, vector<48x8xf32>
    %cst_68 = arith.constant dense<0.000000e+00> : vector<48x48xf32>
    %117 = tpu.matmul %114, %115, %cst_68 {dimension_numbers = #tpu.dot_dimension_numbers<[1], [1], [0], [0], [0, 0, 1, 0], [], []>} : vector<48x8xf32>, vector<48x8xf32>, vector<48x48xf32> -> vector<48x48xf32>
    %cst_69 = arith.constant -1.000000e+30 : f32
    %118 = vector.broadcast %cst_69 : f32 to vector<48x48xf32>
    %119 = arith.select %10, %117, %118 : vector<48x48xi1>, vector<48x48xf32>
    %cst_70 = arith.constant dense<0xFF800000> : vector<48xf32>
    %120 = vector.multi_reduction <maximumf>, %119, %cst_70 [1] : vector<48x48xf32> to vector<48xf32>
    %121 = vector.shape_cast %120 : vector<48xf32> to vector<48x1xf32>
    %122 = vector.broadcast %121 : vector<48x1xf32> to vector<48x48xf32>
    %123 = arith.subf %119, %122 : vector<48x48xf32>
    %124 = math.exp %123 : vector<48x48xf32>
    %cst_71 = arith.constant dense<0.000000e+00> : vector<48xf32>
    %125 = vector.multi_reduction <add>, %124, %cst_71 [1] : vector<48x48xf32> to vector<48xf32>
    %126 = vector.shape_cast %125 : vector<48xf32> to vector<48x1xf32>
    %127 = vector.broadcast %126 : vector<48x1xf32> to vector<48x48xf32>
    %128 = arith.divf %124, %127 : vector<48x48xf32>
    %129 = arith.addf %112, %128 : vector<48x48xf32>
    %130 = arith.truncf %128 : vector<48x48xf32> to vector<48x48xbf16>
    %131 = arith.truncf %116 : vector<48x8xf32> to vector<48x8xbf16>
    %cst_72 = arith.constant dense<0.000000e+00> : vector<48x8xf32>
    %132 = tpu.matmul %130, %131, %cst_72 {dimension_numbers = #tpu.dot_dimension_numbers<[1], [0], [0], [1], [0, 0, 1, 1], [], []>} : vector<48x48xbf16>, vector<48x8xbf16>, vector<48x8xf32> -> vector<48x8xf32>
    %133 = arith.truncf %132 : vector<48x8xf32> to vector<48x8xbf16>
    %c0_73 = arith.constant 0 : index
    %c0_74 = arith.constant 0 : index
    %134 = vector.load %arg4[%c0_73, %c0_74] : memref<32x32xbf16, #tpu.memory_space<vmem>>, vector<8x32xbf16>
    %cst_75 = arith.constant dense<0.000000e+00> : vector<48x32xf32>
    %135 = tpu.matmul %133, %134, %cst_75 {dimension_numbers = #tpu.dot_dimension_numbers<[1], [0], [0], [1], [0, 0, 1, 1], [], []>} : vector<48x8xbf16>, vector<8x32xbf16>, vector<48x32xf32> -> vector<48x32xf32>
    %136 = arith.addf %113, %135 : vector<48x32xf32>
    %c48_76 = arith.constant 48 : index
    %c8_77 = arith.constant 8 : index
    %137 = vector.load %arg11[%c48_76, %c8_77] : memref<96x96xf32, #tpu.memory_space<vmem>>, vector<48x8xf32>
    %c48_78 = arith.constant 48 : index
    %c40_79 = arith.constant 40 : index
    %138 = vector.load %arg11[%c48_78, %c40_79] : memref<96x96xf32, #tpu.memory_space<vmem>>, vector<48x8xf32>
    %c48_80 = arith.constant 48 : index
    %c72_81 = arith.constant 72 : index
    %139 = vector.load %arg11[%c48_80, %c72_81] : memref<96x96xf32, #tpu.memory_space<vmem>>, vector<48x8xf32>
    %cst_82 = arith.constant dense<0.000000e+00> : vector<48x48xf32>
    %140 = tpu.matmul %137, %138, %cst_82 {dimension_numbers = #tpu.dot_dimension_numbers<[1], [1], [0], [0], [0, 0, 1, 0], [], []>} : vector<48x8xf32>, vector<48x8xf32>, vector<48x48xf32> -> vector<48x48xf32>
    %cst_83 = arith.constant -1.000000e+30 : f32
    %141 = vector.broadcast %cst_83 : f32 to vector<48x48xf32>
    %142 = arith.select %10, %140, %141 : vector<48x48xi1>, vector<48x48xf32>
    %cst_84 = arith.constant dense<0xFF800000> : vector<48xf32>
    %143 = vector.multi_reduction <maximumf>, %142, %cst_84 [1] : vector<48x48xf32> to vector<48xf32>
    %144 = vector.shape_cast %143 : vector<48xf32> to vector<48x1xf32>
    %145 = vector.broadcast %144 : vector<48x1xf32> to vector<48x48xf32>
    %146 = arith.subf %142, %145 : vector<48x48xf32>
    %147 = math.exp %146 : vector<48x48xf32>
    %cst_85 = arith.constant dense<0.000000e+00> : vector<48xf32>
    %148 = vector.multi_reduction <add>, %147, %cst_85 [1] : vector<48x48xf32> to vector<48xf32>
    %149 = vector.shape_cast %148 : vector<48xf32> to vector<48x1xf32>
    %150 = vector.broadcast %149 : vector<48x1xf32> to vector<48x48xf32>
    %151 = arith.divf %147, %150 : vector<48x48xf32>
    %152 = arith.addf %129, %151 : vector<48x48xf32>
    %153 = arith.truncf %151 : vector<48x48xf32> to vector<48x48xbf16>
    %154 = arith.truncf %139 : vector<48x8xf32> to vector<48x8xbf16>
    %cst_86 = arith.constant dense<0.000000e+00> : vector<48x8xf32>
    %155 = tpu.matmul %153, %154, %cst_86 {dimension_numbers = #tpu.dot_dimension_numbers<[1], [0], [0], [1], [0, 0, 1, 1], [], []>} : vector<48x48xbf16>, vector<48x8xbf16>, vector<48x8xf32> -> vector<48x8xf32>
    %156 = arith.truncf %155 : vector<48x8xf32> to vector<48x8xbf16>
    %c8_87 = arith.constant 8 : index
    %c0_88 = arith.constant 0 : index
    %157 = vector.load %arg4[%c8_87, %c0_88] : memref<32x32xbf16, #tpu.memory_space<vmem>>, vector<8x32xbf16>
    %cst_89 = arith.constant dense<0.000000e+00> : vector<48x32xf32>
    %158 = tpu.matmul %156, %157, %cst_89 {dimension_numbers = #tpu.dot_dimension_numbers<[1], [0], [0], [1], [0, 0, 1, 1], [], []>} : vector<48x8xbf16>, vector<8x32xbf16>, vector<48x32xf32> -> vector<48x32xf32>
    %159 = arith.addf %136, %158 : vector<48x32xf32>
    %c48_90 = arith.constant 48 : index
    %c16_91 = arith.constant 16 : index
    %160 = vector.load %arg11[%c48_90, %c16_91] : memref<96x96xf32, #tpu.memory_space<vmem>>, vector<48x8xf32>
    %c48_92 = arith.constant 48 : index
    %c48_93 = arith.constant 48 : index
    %161 = vector.load %arg11[%c48_92, %c48_93] : memref<96x96xf32, #tpu.memory_space<vmem>>, vector<48x8xf32>
    %c48_94 = arith.constant 48 : index
    %c80_95 = arith.constant 80 : index
    %162 = vector.load %arg11[%c48_94, %c80_95] : memref<96x96xf32, #tpu.memory_space<vmem>>, vector<48x8xf32>
    %cst_96 = arith.constant dense<0.000000e+00> : vector<48x48xf32>
    %163 = tpu.matmul %160, %161, %cst_96 {dimension_numbers = #tpu.dot_dimension_numbers<[1], [1], [0], [0], [0, 0, 1, 0], [], []>} : vector<48x8xf32>, vector<48x8xf32>, vector<48x48xf32> -> vector<48x48xf32>
    %cst_97 = arith.constant -1.000000e+30 : f32
    %164 = vector.broadcast %cst_97 : f32 to vector<48x48xf32>
    %165 = arith.select %10, %163, %164 : vector<48x48xi1>, vector<48x48xf32>
    %cst_98 = arith.constant dense<0xFF800000> : vector<48xf32>
    %166 = vector.multi_reduction <maximumf>, %165, %cst_98 [1] : vector<48x48xf32> to vector<48xf32>
    %167 = vector.shape_cast %166 : vector<48xf32> to vector<48x1xf32>
    %168 = vector.broadcast %167 : vector<48x1xf32> to vector<48x48xf32>
    %169 = arith.subf %165, %168 : vector<48x48xf32>
    %170 = math.exp %169 : vector<48x48xf32>
    %cst_99 = arith.constant dense<0.000000e+00> : vector<48xf32>
    %171 = vector.multi_reduction <add>, %170, %cst_99 [1] : vector<48x48xf32> to vector<48xf32>
    %172 = vector.shape_cast %171 : vector<48xf32> to vector<48x1xf32>
    %173 = vector.broadcast %172 : vector<48x1xf32> to vector<48x48xf32>
    %174 = arith.divf %170, %173 : vector<48x48xf32>
    %175 = arith.addf %152, %174 : vector<48x48xf32>
    %176 = arith.truncf %174 : vector<48x48xf32> to vector<48x48xbf16>
    %177 = arith.truncf %162 : vector<48x8xf32> to vector<48x8xbf16>
    %cst_100 = arith.constant dense<0.000000e+00> : vector<48x8xf32>
    %178 = tpu.matmul %176, %177, %cst_100 {dimension_numbers = #tpu.dot_dimension_numbers<[1], [0], [0], [1], [0, 0, 1, 1], [], []>} : vector<48x48xbf16>, vector<48x8xbf16>, vector<48x8xf32> -> vector<48x8xf32>
    %179 = arith.truncf %178 : vector<48x8xf32> to vector<48x8xbf16>
    %c16_101 = arith.constant 16 : index
    %c0_102 = arith.constant 0 : index
    %180 = vector.load %arg4[%c16_101, %c0_102] : memref<32x32xbf16, #tpu.memory_space<vmem>>, vector<8x32xbf16>
    %cst_103 = arith.constant dense<0.000000e+00> : vector<48x32xf32>
    %181 = tpu.matmul %179, %180, %cst_103 {dimension_numbers = #tpu.dot_dimension_numbers<[1], [0], [0], [1], [0, 0, 1, 1], [], []>} : vector<48x8xbf16>, vector<8x32xbf16>, vector<48x32xf32> -> vector<48x32xf32>
    %182 = arith.addf %159, %181 : vector<48x32xf32>
    %c48_104 = arith.constant 48 : index
    %c24_105 = arith.constant 24 : index
    %183 = vector.load %arg11[%c48_104, %c24_105] : memref<96x96xf32, #tpu.memory_space<vmem>>, vector<48x8xf32>
    %c48_106 = arith.constant 48 : index
    %c56_107 = arith.constant 56 : index
    %184 = vector.load %arg11[%c48_106, %c56_107] : memref<96x96xf32, #tpu.memory_space<vmem>>, vector<48x8xf32>
    %c48_108 = arith.constant 48 : index
    %c88_109 = arith.constant 88 : index
    %185 = vector.load %arg11[%c48_108, %c88_109] : memref<96x96xf32, #tpu.memory_space<vmem>>, vector<48x8xf32>
    %cst_110 = arith.constant dense<0.000000e+00> : vector<48x48xf32>
    %186 = tpu.matmul %183, %184, %cst_110 {dimension_numbers = #tpu.dot_dimension_numbers<[1], [1], [0], [0], [0, 0, 1, 0], [], []>} : vector<48x8xf32>, vector<48x8xf32>, vector<48x48xf32> -> vector<48x48xf32>
    %cst_111 = arith.constant -1.000000e+30 : f32
    %187 = vector.broadcast %cst_111 : f32 to vector<48x48xf32>
    %188 = arith.select %10, %186, %187 : vector<48x48xi1>, vector<48x48xf32>
    %cst_112 = arith.constant dense<0xFF800000> : vector<48xf32>
    %189 = vector.multi_reduction <maximumf>, %188, %cst_112 [1] : vector<48x48xf32> to vector<48xf32>
    %190 = vector.shape_cast %189 : vector<48xf32> to vector<48x1xf32>
    %191 = vector.broadcast %190 : vector<48x1xf32> to vector<48x48xf32>
    %192 = arith.subf %188, %191 : vector<48x48xf32>
    %193 = math.exp %192 : vector<48x48xf32>
    %cst_113 = arith.constant dense<0.000000e+00> : vector<48xf32>
    %194 = vector.multi_reduction <add>, %193, %cst_113 [1] : vector<48x48xf32> to vector<48xf32>
    %195 = vector.shape_cast %194 : vector<48xf32> to vector<48x1xf32>
    %196 = vector.broadcast %195 : vector<48x1xf32> to vector<48x48xf32>
    %197 = arith.divf %193, %196 : vector<48x48xf32>
    %198 = arith.addf %175, %197 : vector<48x48xf32>
    %199 = arith.truncf %197 : vector<48x48xf32> to vector<48x48xbf16>
    %200 = arith.truncf %185 : vector<48x8xf32> to vector<48x8xbf16>
    %cst_114 = arith.constant dense<0.000000e+00> : vector<48x8xf32>
    %201 = tpu.matmul %199, %200, %cst_114 {dimension_numbers = #tpu.dot_dimension_numbers<[1], [0], [0], [1], [0, 0, 1, 1], [], []>} : vector<48x48xbf16>, vector<48x8xbf16>, vector<48x8xf32> -> vector<48x8xf32>
    %202 = arith.truncf %201 : vector<48x8xf32> to vector<48x8xbf16>
    %c24_115 = arith.constant 24 : index
    %c0_116 = arith.constant 0 : index
    %203 = vector.load %arg4[%c24_115, %c0_116] : memref<32x32xbf16, #tpu.memory_space<vmem>>, vector<8x32xbf16>
    %cst_117 = arith.constant dense<0.000000e+00> : vector<48x32xf32>
    %204 = tpu.matmul %202, %203, %cst_117 {dimension_numbers = #tpu.dot_dimension_numbers<[1], [0], [0], [1], [0, 0, 1, 1], [], []>} : vector<48x8xbf16>, vector<8x32xbf16>, vector<48x32xf32> -> vector<48x32xf32>
    %205 = arith.addf %182, %204 : vector<48x32xf32>
    %206 = vector.extract_strided_slice %198 {offsets = [0, 0], sizes = [44, 44], strides = [1, 1]} : vector<48x48xf32> to vector<44x44xf32>
    %cst_118 = arith.constant 2.500000e-01 : f32
    %207 = vector.broadcast %cst_118 : f32 to vector<44x44xf32>
    %208 = arith.mulf %206, %207 : vector<44x44xf32>
    %c1 = arith.constant 1 : index
    %c0_119 = arith.constant 0 : index
    %c0_120 = arith.constant 0 : index
    %209 = vector.load %arg9[%c1, %c0_119, %c0_120] : memref<2x44x44xf32, #tpu.memory_space<vmem>>, vector<1x44x44xf32>
    %210 = vector.shape_cast %209 : vector<1x44x44xf32> to vector<44x44xf32>
    %211 = vector.shape_cast %208 : vector<44x44xf32> to vector<1x44x44xf32>
    tpu.vector_store %arg9[%c1, %c0_119, %c0_120], %211 {strides = array<i32>} : memref<2x44x44xf32, #tpu.memory_space<vmem>>, vector<1x44x44xf32>,
    %c48_121 = arith.constant 48 : index
    %c0_122 = arith.constant 0 : index
    %212 = vector.load %arg12[%c48_121, %c0_122] : memref<96x32xf32, #tpu.memory_space<vmem>>, vector<48x32xf32>
    tpu.vector_store %arg12[%c48_121, %c0_122], %205 {strides = array<i32>} : memref<96x32xf32, #tpu.memory_space<vmem>>, vector<48x32xf32>,
    %c0_123 = arith.constant 0 : index
    %c0_124 = arith.constant 0 : index
    %213 = vector.load %arg8[%c0_123, %c0_124] : memref<6x32xf32, #tpu.memory_space<vmem>>, vector<6x32xf32>
    %214 = vector.extract_strided_slice %213 {offsets = [0, 0], sizes = [1, 32], strides = [1, 1]} : vector<6x32xf32> to vector<1x32xf32>
    %215 = vector.extract_strided_slice %213 {offsets = [1, 0], sizes = [1, 32], strides = [1, 1]} : vector<6x32xf32> to vector<1x32xf32>
    %216 = vector.extract_strided_slice %213 {offsets = [2, 0], sizes = [1, 32], strides = [1, 1]} : vector<6x32xf32> to vector<1x32xf32>
    %217 = vector.extract_strided_slice %213 {offsets = [3, 0], sizes = [1, 32], strides = [1, 1]} : vector<6x32xf32> to vector<1x32xf32>
    %218 = vector.extract_strided_slice %213 {offsets = [4, 0], sizes = [1, 32], strides = [1, 1]} : vector<6x32xf32> to vector<1x32xf32>
    %219 = vector.extract_strided_slice %213 {offsets = [5, 0], sizes = [1, 32], strides = [1, 1]} : vector<6x32xf32> to vector<1x32xf32>
    %c0_125 = arith.constant 0 : index
    %c0_126 = arith.constant 0 : index
    %220 = vector.load %arg12[%c0_125, %c0_126] : memref<96x32xf32, #tpu.memory_space<vmem>>, vector<96x32xf32>
    %221 = arith.addf %0, %220 : vector<96x32xf32>
    %222 = vector.broadcast %214 : vector<1x32xf32> to vector<96x32xf32>
    %223 = arith.addf %221, %222 : vector<96x32xf32>
    %cst_127 = arith.constant dense<0.000000e+00> : vector<96xf32>
    %224 = vector.multi_reduction <add>, %223, %cst_127 [1] : vector<96x32xf32> to vector<96xf32>
    %225 = vector.shape_cast %224 : vector<96xf32> to vector<96x1xf32>
    %cst_128 = arith.constant 3.200000e+01 : f32
    %226 = vector.broadcast %cst_128 : f32 to vector<96x1xf32>
    %227 = arith.divf %225, %226 : vector<96x1xf32>
    %228 = vector.broadcast %227 : vector<96x1xf32> to vector<96x32xf32>
    %229 = arith.subf %223, %228 : vector<96x32xf32>
    %230 = arith.mulf %229, %229 : vector<96x32xf32>
    %cst_129 = arith.constant dense<0.000000e+00> : vector<96xf32>
    %231 = vector.multi_reduction <add>, %230, %cst_129 [1] : vector<96x32xf32> to vector<96xf32>
    %232 = vector.shape_cast %231 : vector<96xf32> to vector<96x1xf32>
    %cst_130 = arith.constant 3.200000e+01 : f32
    %233 = vector.broadcast %cst_130 : f32 to vector<96x1xf32>
    %234 = arith.divf %232, %233 : vector<96x1xf32>
    %235 = vector.broadcast %227 : vector<96x1xf32> to vector<96x32xf32>
    %236 = arith.subf %223, %235 : vector<96x32xf32>
    %cst_131 = arith.constant 9.99999974E-6 : f32
    %237 = vector.broadcast %cst_131 : f32 to vector<96x1xf32>
    %238 = arith.addf %234, %237 : vector<96x1xf32>
    %239 = math.rsqrt %238 : vector<96x1xf32>
    %240 = vector.broadcast %239 : vector<96x1xf32> to vector<96x32xf32>
    %241 = arith.mulf %236, %240 : vector<96x32xf32>
    %242 = vector.broadcast %216 : vector<1x32xf32> to vector<96x32xf32>
    %243 = arith.mulf %241, %242 : vector<96x32xf32>
    %244 = vector.broadcast %217 : vector<1x32xf32> to vector<96x32xf32>
    %245 = arith.addf %243, %244 : vector<96x32xf32>
    %246 = arith.truncf %245 : vector<96x32xf32> to vector<96x32xbf16>
    %cst_132 = arith.constant 0.000000e+00 : f32
    %247 = vector.broadcast %cst_132 : f32 to vector<96x32xf32>
    %c0_133 = arith.constant 0 : index
    %c0_134 = arith.constant 0 : index
    %248 = vector.load %arg5[%c0_133, %c0_134] : memref<32x2048xbf16, #tpu.memory_space<vmem>>, vector<32x256xbf16>
    %cst_135 = arith.constant dense<0.000000e+00> : vector<96x256xf32>
    %249 = tpu.matmul %246, %248, %cst_135 {dimension_numbers = #tpu.dot_dimension_numbers<[1], [0], [0], [1], [0, 0, 1, 1], [], []>} : vector<96x32xbf16>, vector<32x256xbf16>, vector<96x256xf32> -> vector<96x256xf32>
    %c0_136 = arith.constant 0 : index
    %c0_137 = arith.constant 0 : index
    %250 = vector.load %arg6[%c0_136, %c0_137] : memref<1x2048xf32, #tpu.memory_space<vmem>>, vector<1x256xf32>
    %251 = vector.broadcast %250 : vector<1x256xf32> to vector<96x256xf32>
    %252 = arith.addf %249, %251 : vector<96x256xf32>
    %cst_138 = arith.constant 0.000000e+00 : f32
    %253 = vector.broadcast %cst_138 : f32 to vector<96x256xf32>
    %254 = arith.maximumf %252, %253 : vector<96x256xf32>
    %255 = arith.truncf %254 : vector<96x256xf32> to vector<96x256xbf16>
    %c0_139 = arith.constant 0 : index
    %c0_140 = arith.constant 0 : index
    %256 = vector.load %arg7[%c0_139, %c0_140] : memref<2048x32xbf16, #tpu.memory_space<vmem>>, vector<256x32xbf16>
    %cst_141 = arith.constant dense<0.000000e+00> : vector<96x32xf32>
    %257 = tpu.matmul %255, %256, %cst_141 {dimension_numbers = #tpu.dot_dimension_numbers<[1], [0], [0], [1], [0, 0, 1, 1], [], []>} : vector<96x256xbf16>, vector<256x32xbf16>, vector<96x32xf32> -> vector<96x32xf32>
    %258 = arith.addf %247, %257 : vector<96x32xf32>
    %c0_142 = arith.constant 0 : index
    %c256 = arith.constant 256 : index
    %259 = vector.load %arg5[%c0_142, %c256] : memref<32x2048xbf16, #tpu.memory_space<vmem>>, vector<32x256xbf16>
    %cst_143 = arith.constant dense<0.000000e+00> : vector<96x256xf32>
    %260 = tpu.matmul %246, %259, %cst_143 {dimension_numbers = #tpu.dot_dimension_numbers<[1], [0], [0], [1], [0, 0, 1, 1], [], []>} : vector<96x32xbf16>, vector<32x256xbf16>, vector<96x256xf32> -> vector<96x256xf32>
    %c0_144 = arith.constant 0 : index
    %c256_145 = arith.constant 256 : index
    %261 = vector.load %arg6[%c0_144, %c256_145] : memref<1x2048xf32, #tpu.memory_space<vmem>>, vector<1x256xf32>
    %262 = vector.broadcast %261 : vector<1x256xf32> to vector<96x256xf32>
    %263 = arith.addf %260, %262 : vector<96x256xf32>
    %cst_146 = arith.constant 0.000000e+00 : f32
    %264 = vector.broadcast %cst_146 : f32 to vector<96x256xf32>
    %265 = arith.maximumf %263, %264 : vector<96x256xf32>
    %266 = arith.truncf %265 : vector<96x256xf32> to vector<96x256xbf16>
    %c256_147 = arith.constant 256 : index
    %c0_148 = arith.constant 0 : index
    %267 = vector.load %arg7[%c256_147, %c0_148] : memref<2048x32xbf16, #tpu.memory_space<vmem>>, vector<256x32xbf16>
    %cst_149 = arith.constant dense<0.000000e+00> : vector<96x32xf32>
    %268 = tpu.matmul %266, %267, %cst_149 {dimension_numbers = #tpu.dot_dimension_numbers<[1], [0], [0], [1], [0, 0, 1, 1], [], []>} : vector<96x256xbf16>, vector<256x32xbf16>, vector<96x32xf32> -> vector<96x32xf32>
    %269 = arith.addf %258, %268 : vector<96x32xf32>
    %c0_150 = arith.constant 0 : index
    %c512 = arith.constant 512 : index
    %270 = vector.load %arg5[%c0_150, %c512] : memref<32x2048xbf16, #tpu.memory_space<vmem>>, vector<32x256xbf16>
    %cst_151 = arith.constant dense<0.000000e+00> : vector<96x256xf32>
    %271 = tpu.matmul %246, %270, %cst_151 {dimension_numbers = #tpu.dot_dimension_numbers<[1], [0], [0], [1], [0, 0, 1, 1], [], []>} : vector<96x32xbf16>, vector<32x256xbf16>, vector<96x256xf32> -> vector<96x256xf32>
    %c0_152 = arith.constant 0 : index
    %c512_153 = arith.constant 512 : index
    %272 = vector.load %arg6[%c0_152, %c512_153] : memref<1x2048xf32, #tpu.memory_space<vmem>>, vector<1x256xf32>
    %273 = vector.broadcast %272 : vector<1x256xf32> to vector<96x256xf32>
    %274 = arith.addf %271, %273 : vector<96x256xf32>
    %cst_154 = arith.constant 0.000000e+00 : f32
    %275 = vector.broadcast %cst_154 : f32 to vector<96x256xf32>
    %276 = arith.maximumf %274, %275 : vector<96x256xf32>
    %277 = arith.truncf %276 : vector<96x256xf32> to vector<96x256xbf16>
    %c512_155 = arith.constant 512 : index
    %c0_156 = arith.constant 0 : index
    %278 = vector.load %arg7[%c512_155, %c0_156] : memref<2048x32xbf16, #tpu.memory_space<vmem>>, vector<256x32xbf16>
    %cst_157 = arith.constant dense<0.000000e+00> : vector<96x32xf32>
    %279 = tpu.matmul %277, %278, %cst_157 {dimension_numbers = #tpu.dot_dimension_numbers<[1], [0], [0], [1], [0, 0, 1, 1], [], []>} : vector<96x256xbf16>, vector<256x32xbf16>, vector<96x32xf32> -> vector<96x32xf32>
    %280 = arith.addf %269, %279 : vector<96x32xf32>
    %c0_158 = arith.constant 0 : index
    %c768 = arith.constant 768 : index
    %281 = vector.load %arg5[%c0_158, %c768] : memref<32x2048xbf16, #tpu.memory_space<vmem>>, vector<32x256xbf16>
    %cst_159 = arith.constant dense<0.000000e+00> : vector<96x256xf32>
    %282 = tpu.matmul %246, %281, %cst_159 {dimension_numbers = #tpu.dot_dimension_numbers<[1], [0], [0], [1], [0, 0, 1, 1], [], []>} : vector<96x32xbf16>, vector<32x256xbf16>, vector<96x256xf32> -> vector<96x256xf32>
    %c0_160 = arith.constant 0 : index
    %c768_161 = arith.constant 768 : index
    %283 = vector.load %arg6[%c0_160, %c768_161] : memref<1x2048xf32, #tpu.memory_space<vmem>>, vector<1x256xf32>
    %284 = vector.broadcast %283 : vector<1x256xf32> to vector<96x256xf32>
    %285 = arith.addf %282, %284 : vector<96x256xf32>
    %cst_162 = arith.constant 0.000000e+00 : f32
    %286 = vector.broadcast %cst_162 : f32 to vector<96x256xf32>
    %287 = arith.maximumf %285, %286 : vector<96x256xf32>
    %288 = arith.truncf %287 : vector<96x256xf32> to vector<96x256xbf16>
    %c768_163 = arith.constant 768 : index
    %c0_164 = arith.constant 0 : index
    %289 = vector.load %arg7[%c768_163, %c0_164] : memref<2048x32xbf16, #tpu.memory_space<vmem>>, vector<256x32xbf16>
    %cst_165 = arith.constant dense<0.000000e+00> : vector<96x32xf32>
    %290 = tpu.matmul %288, %289, %cst_165 {dimension_numbers = #tpu.dot_dimension_numbers<[1], [0], [0], [1], [0, 0, 1, 1], [], []>} : vector<96x256xbf16>, vector<256x32xbf16>, vector<96x32xf32> -> vector<96x32xf32>
    %291 = arith.addf %280, %290 : vector<96x32xf32>
    %c0_166 = arith.constant 0 : index
    %c1024 = arith.constant 1024 : index
    %292 = vector.load %arg5[%c0_166, %c1024] : memref<32x2048xbf16, #tpu.memory_space<vmem>>, vector<32x256xbf16>
    %cst_167 = arith.constant dense<0.000000e+00> : vector<96x256xf32>
    %293 = tpu.matmul %246, %292, %cst_167 {dimension_numbers = #tpu.dot_dimension_numbers<[1], [0], [0], [1], [0, 0, 1, 1], [], []>} : vector<96x32xbf16>, vector<32x256xbf16>, vector<96x256xf32> -> vector<96x256xf32>
    %c0_168 = arith.constant 0 : index
    %c1024_169 = arith.constant 1024 : index
    %294 = vector.load %arg6[%c0_168, %c1024_169] : memref<1x2048xf32, #tpu.memory_space<vmem>>, vector<1x256xf32>
    %295 = vector.broadcast %294 : vector<1x256xf32> to vector<96x256xf32>
    %296 = arith.addf %293, %295 : vector<96x256xf32>
    %cst_170 = arith.constant 0.000000e+00 : f32
    %297 = vector.broadcast %cst_170 : f32 to vector<96x256xf32>
    %298 = arith.maximumf %296, %297 : vector<96x256xf32>
    %299 = arith.truncf %298 : vector<96x256xf32> to vector<96x256xbf16>
    %c1024_171 = arith.constant 1024 : index
    %c0_172 = arith.constant 0 : index
    %300 = vector.load %arg7[%c1024_171, %c0_172] : memref<2048x32xbf16, #tpu.memory_space<vmem>>, vector<256x32xbf16>
    %cst_173 = arith.constant dense<0.000000e+00> : vector<96x32xf32>
    %301 = tpu.matmul %299, %300, %cst_173 {dimension_numbers = #tpu.dot_dimension_numbers<[1], [0], [0], [1], [0, 0, 1, 1], [], []>} : vector<96x256xbf16>, vector<256x32xbf16>, vector<96x32xf32> -> vector<96x32xf32>
    %302 = arith.addf %291, %301 : vector<96x32xf32>
    %c0_174 = arith.constant 0 : index
    %c1280 = arith.constant 1280 : index
    %303 = vector.load %arg5[%c0_174, %c1280] : memref<32x2048xbf16, #tpu.memory_space<vmem>>, vector<32x256xbf16>
    %cst_175 = arith.constant dense<0.000000e+00> : vector<96x256xf32>
    %304 = tpu.matmul %246, %303, %cst_175 {dimension_numbers = #tpu.dot_dimension_numbers<[1], [0], [0], [1], [0, 0, 1, 1], [], []>} : vector<96x32xbf16>, vector<32x256xbf16>, vector<96x256xf32> -> vector<96x256xf32>
    %c0_176 = arith.constant 0 : index
    %c1280_177 = arith.constant 1280 : index
    %305 = vector.load %arg6[%c0_176, %c1280_177] : memref<1x2048xf32, #tpu.memory_space<vmem>>, vector<1x256xf32>
    %306 = vector.broadcast %305 : vector<1x256xf32> to vector<96x256xf32>
    %307 = arith.addf %304, %306 : vector<96x256xf32>
    %cst_178 = arith.constant 0.000000e+00 : f32
    %308 = vector.broadcast %cst_178 : f32 to vector<96x256xf32>
    %309 = arith.maximumf %307, %308 : vector<96x256xf32>
    %310 = arith.truncf %309 : vector<96x256xf32> to vector<96x256xbf16>
    %c1280_179 = arith.constant 1280 : index
    %c0_180 = arith.constant 0 : index
    %311 = vector.load %arg7[%c1280_179, %c0_180] : memref<2048x32xbf16, #tpu.memory_space<vmem>>, vector<256x32xbf16>
    %cst_181 = arith.constant dense<0.000000e+00> : vector<96x32xf32>
    %312 = tpu.matmul %310, %311, %cst_181 {dimension_numbers = #tpu.dot_dimension_numbers<[1], [0], [0], [1], [0, 0, 1, 1], [], []>} : vector<96x256xbf16>, vector<256x32xbf16>, vector<96x32xf32> -> vector<96x32xf32>
    %313 = arith.addf %302, %312 : vector<96x32xf32>
    %c0_182 = arith.constant 0 : index
    %c1536 = arith.constant 1536 : index
    %314 = vector.load %arg5[%c0_182, %c1536] : memref<32x2048xbf16, #tpu.memory_space<vmem>>, vector<32x256xbf16>
    %cst_183 = arith.constant dense<0.000000e+00> : vector<96x256xf32>
    %315 = tpu.matmul %246, %314, %cst_183 {dimension_numbers = #tpu.dot_dimension_numbers<[1], [0], [0], [1], [0, 0, 1, 1], [], []>} : vector<96x32xbf16>, vector<32x256xbf16>, vector<96x256xf32> -> vector<96x256xf32>
    %c0_184 = arith.constant 0 : index
    %c1536_185 = arith.constant 1536 : index
    %316 = vector.load %arg6[%c0_184, %c1536_185] : memref<1x2048xf32, #tpu.memory_space<vmem>>, vector<1x256xf32>
    %317 = vector.broadcast %316 : vector<1x256xf32> to vector<96x256xf32>
    %318 = arith.addf %315, %317 : vector<96x256xf32>
    %cst_186 = arith.constant 0.000000e+00 : f32
    %319 = vector.broadcast %cst_186 : f32 to vector<96x256xf32>
    %320 = arith.maximumf %318, %319 : vector<96x256xf32>
    %321 = arith.truncf %320 : vector<96x256xf32> to vector<96x256xbf16>
    %c1536_187 = arith.constant 1536 : index
    %c0_188 = arith.constant 0 : index
    %322 = vector.load %arg7[%c1536_187, %c0_188] : memref<2048x32xbf16, #tpu.memory_space<vmem>>, vector<256x32xbf16>
    %cst_189 = arith.constant dense<0.000000e+00> : vector<96x32xf32>
    %323 = tpu.matmul %321, %322, %cst_189 {dimension_numbers = #tpu.dot_dimension_numbers<[1], [0], [0], [1], [0, 0, 1, 1], [], []>} : vector<96x256xbf16>, vector<256x32xbf16>, vector<96x32xf32> -> vector<96x32xf32>
    %324 = arith.addf %313, %323 : vector<96x32xf32>
    %c0_190 = arith.constant 0 : index
    %c1792 = arith.constant 1792 : index
    %325 = vector.load %arg5[%c0_190, %c1792] : memref<32x2048xbf16, #tpu.memory_space<vmem>>, vector<32x256xbf16>
    %cst_191 = arith.constant dense<0.000000e+00> : vector<96x256xf32>
    %326 = tpu.matmul %246, %325, %cst_191 {dimension_numbers = #tpu.dot_dimension_numbers<[1], [0], [0], [1], [0, 0, 1, 1], [], []>} : vector<96x32xbf16>, vector<32x256xbf16>, vector<96x256xf32> -> vector<96x256xf32>
    %c0_192 = arith.constant 0 : index
    %c1792_193 = arith.constant 1792 : index
    %327 = vector.load %arg6[%c0_192, %c1792_193] : memref<1x2048xf32, #tpu.memory_space<vmem>>, vector<1x256xf32>
    %328 = vector.broadcast %327 : vector<1x256xf32> to vector<96x256xf32>
    %329 = arith.addf %326, %328 : vector<96x256xf32>
    %cst_194 = arith.constant 0.000000e+00 : f32
    %330 = vector.broadcast %cst_194 : f32 to vector<96x256xf32>
    %331 = arith.maximumf %329, %330 : vector<96x256xf32>
    %332 = arith.truncf %331 : vector<96x256xf32> to vector<96x256xbf16>
    %c1792_195 = arith.constant 1792 : index
    %c0_196 = arith.constant 0 : index
    %333 = vector.load %arg7[%c1792_195, %c0_196] : memref<2048x32xbf16, #tpu.memory_space<vmem>>, vector<256x32xbf16>
    %cst_197 = arith.constant dense<0.000000e+00> : vector<96x32xf32>
    %334 = tpu.matmul %332, %333, %cst_197 {dimension_numbers = #tpu.dot_dimension_numbers<[1], [0], [0], [1], [0, 0, 1, 1], [], []>} : vector<96x256xbf16>, vector<256x32xbf16>, vector<96x32xf32> -> vector<96x32xf32>
    %335 = arith.addf %324, %334 : vector<96x32xf32>
    %336 = arith.addf %245, %335 : vector<96x32xf32>
    %337 = vector.broadcast %215 : vector<1x32xf32> to vector<96x32xf32>
    %338 = arith.addf %336, %337 : vector<96x32xf32>
    %cst_198 = arith.constant dense<0.000000e+00> : vector<96xf32>
    %339 = vector.multi_reduction <add>, %338, %cst_198 [1] : vector<96x32xf32> to vector<96xf32>
    %340 = vector.shape_cast %339 : vector<96xf32> to vector<96x1xf32>
    %cst_199 = arith.constant 3.200000e+01 : f32
    %341 = vector.broadcast %cst_199 : f32 to vector<96x1xf32>
    %342 = arith.divf %340, %341 : vector<96x1xf32>
    %343 = vector.broadcast %342 : vector<96x1xf32> to vector<96x32xf32>
    %344 = arith.subf %338, %343 : vector<96x32xf32>
    %345 = arith.mulf %344, %344 : vector<96x32xf32>
    %cst_200 = arith.constant dense<0.000000e+00> : vector<96xf32>
    %346 = vector.multi_reduction <add>, %345, %cst_200 [1] : vector<96x32xf32> to vector<96xf32>
    %347 = vector.shape_cast %346 : vector<96xf32> to vector<96x1xf32>
    %cst_201 = arith.constant 3.200000e+01 : f32
    %348 = vector.broadcast %cst_201 : f32 to vector<96x1xf32>
    %349 = arith.divf %347, %348 : vector<96x1xf32>
    %350 = vector.broadcast %342 : vector<96x1xf32> to vector<96x32xf32>
    %351 = arith.subf %338, %350 : vector<96x32xf32>
    %cst_202 = arith.constant 9.99999974E-6 : f32
    %352 = vector.broadcast %cst_202 : f32 to vector<96x1xf32>
    %353 = arith.addf %349, %352 : vector<96x1xf32>
    %354 = math.rsqrt %353 : vector<96x1xf32>
    %355 = vector.broadcast %354 : vector<96x1xf32> to vector<96x32xf32>
    %356 = arith.mulf %351, %355 : vector<96x32xf32>
    %357 = vector.broadcast %218 : vector<1x32xf32> to vector<96x32xf32>
    %358 = arith.mulf %356, %357 : vector<96x32xf32>
    %359 = vector.broadcast %219 : vector<1x32xf32> to vector<96x32xf32>
    %360 = arith.addf %358, %359 : vector<96x32xf32>
    %361 = tpu.iota {dimensions = array<i32: 1>} : vector<2x96xi32>
    %362 = tpu.iota {dimensions = array<i32: 0>} : vector<2x96xi32>
    %c48_i32 = arith.constant 48 : i32
    %363 = vector.broadcast %c48_i32 : i32 to vector<2x96xi32>
    %364 = arith.muli %362, %363 : vector<2x96xi32>
    %365 = arith.subi %361, %364 : vector<2x96xi32>
    %c0_i32 = arith.constant 0 : i32
    %366 = vector.broadcast %c0_i32 : i32 to vector<2x96xi32>
    %367 = arith.cmpi sge, %365, %366 : vector<2x96xi32>
    %c44_i32_203 = arith.constant 44 : i32
    %368 = vector.broadcast %c44_i32_203 : i32 to vector<2x96xi32>
    %369 = arith.cmpi slt, %365, %368 : vector<2x96xi32>
    %370 = arith.andi %367, %369 : vector<2x96xi1>
    %cst_204 = arith.constant 0.0227272734 : f32
    %cst_205 = arith.constant 0.000000e+00 : f32
    %371 = vector.broadcast %cst_204 : f32 to vector<2x96xf32>
    %372 = vector.broadcast %cst_205 : f32 to vector<2x96xf32>
    %373 = arith.select %370, %371, %372 : vector<2x96xi1>, vector<2x96xf32>
    %cst_206 = arith.constant dense<0.000000e+00> : vector<2x32xf32>
    %374 = tpu.matmul %373, %360, %cst_206 {dimension_numbers = #tpu.dot_dimension_numbers<[1], [0], [0], [1], [0, 0, 1, 1], [], []>} : vector<2x96xf32>, vector<96x32xf32>, vector<2x32xf32> -> vector<2x32xf32>
    %c0_207 = arith.constant 0 : index
    %c0_208 = arith.constant 0 : index
    %c0_209 = arith.constant 0 : index
    %375 = vector.load %arg10[%c0_207, %c0_208, %c0_209] : memref<1x2x32xf32, #tpu.memory_space<vmem>>, vector<1x2x32xf32>
    %376 = vector.shape_cast %375 : vector<1x2x32xf32> to vector<2x32xf32>
    %377 = vector.shape_cast %374 : vector<2x32xf32> to vector<1x2x32xf32>
    tpu.vector_store %arg10[%c0_207, %c0_208, %c0_209], %377 {strides = array<i32>} : memref<1x2x32xf32, #tpu.memory_space<vmem>>, vector<1x2x32xf32>,
    return
  }
  func.func @transform_0(%arg0: i32) -> (i32, i32) {
    %c0_i32 = arith.constant 0 : i32
    %c0_i32_0 = arith.constant 0 : i32
    return %arg0, %c0_i32 : i32, i32
  }
  func.func @transform_1(%arg0: i32) -> (i32, i32) {
    %c0_i32 = arith.constant 0 : i32
    %c0_i32_0 = arith.constant 0 : i32
    %c0_i32_1 = arith.constant 0 : i32
    return %c0_i32, %c0_i32_0 : i32, i32
  }
  func.func @transform_2(%arg0: i32) -> (i32, i32) {
    %c0_i32 = arith.constant 0 : i32
    %c0_i32_0 = arith.constant 0 : i32
    %c0_i32_1 = arith.constant 0 : i32
    return %c0_i32, %c0_i32_0 : i32, i32
  }
  func.func @transform_3(%arg0: i32) -> (i32, i32) {
    %c0_i32 = arith.constant 0 : i32
    %c0_i32_0 = arith.constant 0 : i32
    %c0_i32_1 = arith.constant 0 : i32
    return %c0_i32, %c0_i32_0 : i32, i32
  }
  func.func @transform_4(%arg0: i32) -> (i32, i32) {
    %c0_i32 = arith.constant 0 : i32
    %c0_i32_0 = arith.constant 0 : i32
    %c0_i32_1 = arith.constant 0 : i32
    return %c0_i32, %c0_i32_0 : i32, i32
  }
  func.func @transform_5(%arg0: i32) -> (i32, i32) {
    %c0_i32 = arith.constant 0 : i32
    %c0_i32_0 = arith.constant 0 : i32
    %c0_i32_1 = arith.constant 0 : i32
    return %c0_i32, %c0_i32_0 : i32, i32
  }
  func.func @transform_6(%arg0: i32) -> (i32, i32) {
    %c0_i32 = arith.constant 0 : i32
    %c0_i32_0 = arith.constant 0 : i32
    %c0_i32_1 = arith.constant 0 : i32
    return %c0_i32, %c0_i32_0 : i32, i32
  }
  func.func @transform_7(%arg0: i32) -> (i32, i32) {
    %c0_i32 = arith.constant 0 : i32
    %c0_i32_0 = arith.constant 0 : i32
    %c0_i32_1 = arith.constant 0 : i32
    return %c0_i32, %c0_i32_0 : i32, i32
  }
  func.func @transform_8(%arg0: i32) -> (i32, i32, i32) {
    %c0_i32 = arith.constant 0 : i32
    %c0_i32_0 = arith.constant 0 : i32
    %c0_i32_1 = arith.constant 0 : i32
    return %arg0, %c0_i32, %c0_i32_0 : i32, i32, i32
  }
  func.func @transform_9(%arg0: i32) -> (i32, i32, i32) {
    %c0_i32 = arith.constant 0 : i32
    %c0_i32_0 = arith.constant 0 : i32
    %c0_i32_1 = arith.constant 0 : i32
    return %arg0, %c0_i32, %c0_i32_0 : i32, i32, i32
  }
}

</mosaic_0001>

<llo_original>
// kernel: idlmm_forward.3
$region0: #{idlmm_forward.3}
  #allocation0 [shape = 'u32[]', space=smem, size = 0x4, offset = 0x4, fixed_abs, tag = 'smem constant byte address 0x4 - core index']
  #allocation1 [shape = 'u32[144,128]{1,0:T(1,128)}', space=vmem, size = 0x12000, scoped, tag = 'internal scratch']
  %s0 = inlined_call_operand.vmem [shape: f32[4,10], index: 0, kind: input, shape index: {}]
  %s1 = inlined_call_operand.vmem [shape: f32[4,12], index: 1, kind: input, shape index: {}]
  %s2 = inlined_call_operand.vmem [shape: f32[4,32], index: 2, kind: input, shape index: {}]
  %s3 = inlined_call_operand.vmem [shape: f32[10,9], index: 3, kind: input, shape index: {}]
  %s4 = inlined_call_operand.vmem [shape: f32[1,9], index: 4, kind: input, shape index: {}]
  %s5 = inlined_call_operand.vmem [shape: f32[8,32,16], index: 5, kind: input, shape index: {}]
  %s6 = inlined_call_operand.vmem [shape: f32[8,5,16], index: 6, kind: input, shape index: {}]
  %s7 = inlined_call_operand.vmem [shape: f32[8,4,16], index: 7, kind: output, shape index: {0}]
  %s8 = inlined_call_operand.vmem [shape: f32[9,4,1], index: 8, kind: output, shape index: {1}]
  %9 = xla_tuple %s7, %s8
  %s10 = sld [smem:[#allocation0]]
  $region46: #{idlmm_forward.3} parent=0
    _
  %s12 = ssub.s32 1, %s10
  %s13 = scalar_select 0, %s12, %s10
  // Predicated region
  $region2: #{idlmm_forward.3} parent=0 // pred_check
    _
  $region3: #{idlmm_forward.3} parent=0 // pred_check_branch
    %15 = sbr.rel (0) target = $region5
  $region4: #{idlmm_forward.3} parent=0 // pred_region
    _
  $region5: #{idlmm_forward.3} parent=0 // pred_fallthru
    _
  // Predicated region
  $region6: #{idlmm_forward.3} parent=0 // pred_check
    _
  $region7: #{idlmm_forward.3} parent=0 // pred_check_branch
    %17 = sbr.rel (0) target = $region9
  $region8: #{idlmm_forward.3} parent=0 // pred_region
    _
  $region9: #{idlmm_forward.3} parent=0 // pred_fallthru
    _
  // Predicated region
  $region10: #{idlmm_forward.3} parent=0 // pred_check
    _
  $region11: #{idlmm_forward.3} parent=0 // pred_check_branch
    %19 = sbr.rel (0) target = $region13
  $region12: #{idlmm_forward.3} parent=0 // pred_region
    _
  $region13: #{idlmm_forward.3} parent=0 // pred_fallthru
    _
  // Predicated region
  $region14: #{idlmm_forward.3} parent=0 // pred_check
    _
  $region15: #{idlmm_forward.3} parent=0 // pred_check_branch
    %21 = sbr.rel (0) target = $region17
  $region16: #{idlmm_forward.3} parent=0 // pred_region
    _
  $region17: #{idlmm_forward.3} parent=0 // pred_fallthru
    _
  // Predicated region
  $region18: #{idlmm_forward.3} parent=0 // pred_check
    _
  $region19: #{idlmm_forward.3} parent=0 // pred_check_branch
    %23 = sbr.rel (0) target = $region21
  $region20: #{idlmm_forward.3} parent=0 // pred_region
    _
  $region21: #{idlmm_forward.3} parent=0 // pred_fallthru
    _
  // Predicated region
  $region22: #{idlmm_forward.3} parent=0 // pred_check
    _
  $region23: #{idlmm_forward.3} parent=0 // pred_check_branch
    %25 = sbr.rel (0) target = $region25
  $region24: #{idlmm_forward.3} parent=0 // pred_region
    _
  $region25: #{idlmm_forward.3} parent=0 // pred_fallthru
    _
  // Predicated region
  $region26: #{idlmm_forward.3} parent=0 // pred_check
    _
  $region27: #{idlmm_forward.3} parent=0 // pred_check_branch
    %27 = sbr.rel (0) target = $region29
  $region28: #{idlmm_forward.3} parent=0 // pred_region
    _
  $region29: #{idlmm_forward.3} parent=0 // pred_fallthru
    _
  %v28 = vld [vmem:[%s0] sm:$0xf]
  %v29 = vld [vmem:[%s3] sm:$0xff]
  %v30 = vld [vmem:[%s3 + $0x8] sm:$0x3]
  %v31 = vld [vmem:[%s4] sm:$0x1]
  %v33 = vlaneseq
  %v34 = vshrl.u32 %v33, 7
  %v35 = vsub.s32 0, %v34
  %v36 = vrot.slane %v31, %v35
  %vm38 = vcmask 80896
  %v40 = vsel %vm38, %v28, 0
  %vm42 = vcmask 1041408
  %v44 = vsel %vm42, %v30, 0
  %46 = vmatprep.subr.mxu0 0.0
  %47 = vmatpush1.msra.mxu0 %v29
  %48 = vmatprep.subr.mxu0 0.0
  %49 = vmatpush1.msra.mxu0 %v44
  %50 = vmatprep.subr.mxu0 0.0
  %51 = vmatpush1.msra.mxu0 0.0
  %52 = vmatprep.subr.mxu0 0.0
  %53 = vmatpush1.msra.mxu0 0.0
  %54 = vmatprep.subr.mxu0 0.0
  %55 = vmatpush1.msra.mxu0 0.0
  %56 = vmatprep.subr.mxu0 0.0
  %57 = vmatpush1.msra.mxu0 0.0
  %58 = vmatprep.subr.mxu0 0.0
  %59 = vmatpush1.msra.mxu0 0.0
  %60 = vmatprep.subr.mxu0 0.0
  %61 = vmatpush1.msra.mxu0 0.0
  %62 = vmatprep.subr.mxu0 0.0
  %63 = vmatpush1.msra.mxu0 0.0
  %64 = vmatprep.subr.mxu0 0.0
  %65 = vmatpush1.msra.mxu0 0.0
  %66 = vmatprep.subr.mxu0 0.0
  %67 = vmatpush1.msra.mxu0 0.0
  %68 = vmatprep.subr.mxu0 0.0
  %69 = vmatpush1.msra.mxu0 0.0
  %70 = vmatprep.subr.mxu0 0.0
  %71 = vmatpush1.msra.mxu0 0.0
  %72 = vmatprep.subr.mxu0 0.0
  %73 = vmatpush1.msra.mxu0 0.0
  %74 = vmatprep.subr.mxu0 0.0
  %75 = vmatpush1.msra.mxu0 0.0
  %76 = vmatprep.subr.mxu0 0.0
  %77 = vmatpush1.msra.mxu0 0.0
  %78 = vmatprep.subr.mxu0 0.0
  %79 = vmatpush1.msra.mxu0 0.0
  %80 = vmatprep.subr.mxu0 0.0
  %81 = vmatpush1.msra.mxu0 0.0
  %82 = vmatprep.subr.mxu0 0.0
  %83 = vmatpush1.msra.mxu0 0.0
  %84 = vmatprep.subr.mxu0 0.0
  %85 = vmatpush1.msra.mxu0 0.0
  %86 = vmatprep.subr.mxu0 0.0
  %87 = vmatpush1.msra.mxu0 0.0
  %88 = vmatprep.subr.mxu0 0.0
  %89 = vmatpush1.msra.mxu0 0.0
  %90 = vmatprep.subr.mxu0 0.0
  %91 = vmatpush1.msra.mxu0 0.0
  %92 = vmatprep.subr.mxu0 0.0
  %93 = vmatpush1.msra.mxu0 0.0
  %94 = vmatprep.subr.mxu0 0.0
  %95 = vmatpush1.msra.mxu0 0.0
  %96 = vmatprep.subr.mxu0 0.0
  %97 = vmatpush1.msra.mxu0 0.0
  %98 = vmatprep.subr.mxu0 0.0
  %99 = vmatpush1.msra.mxu0 0.0
  %100 = vmatprep.subr.mxu0 0.0
  %101 = vmatpush1.msra.mxu0 0.0
  %102 = vmatprep.subr.mxu0 0.0
  %103 = vmatpush1.msra.mxu0 0.0
  %104 = vmatprep.subr.mxu0 0.0
  %105 = vmatpush1.msra.mxu0 0.0
  %106 = vmatprep.subr.mxu0 0.0
  %107 = vmatpush1.msra.mxu0 0.0
  %108 = vmatprep.subr.mxu0 0.0
  %109 = vmatpush1.msra.mxu0 0.0
  %110 = vmatprep.mubr.f32.mxu0 0.0
  %111 = vmatmul.mubr.f32.gmra.mrb[0].mxu0 %v40
  %v112 = vpop.f32.mrb[0].mxu0
  %v113 = vadd.f32 %v36, %v112
  %v114 = vpop.f32.mrb[0].mxu0
  %115 = vdwg.mxu0
  %v116 = vld [vmem:[%s6] sm:$0x1f]
  %v117 = vld [vmem:[%s5] sm:$0x7]
  %v118 = vlaneseq
  %v119 = vshrl.u32 %v118, 7
  %v120 = vsub.s32 0, %v119
  %v121 = vrot.slane %v116, %v120
  %vm122 = vcmask 23552
  %v124 = vsel %vm122, %v113, 0
  %vm126 = vcmask 1042432
  %v128 = vsel %vm126, %v117, 0
  %130 = vmatprep.subr.mxu0 0.0
  %131 = vmatpush1.msra.mxu0 %v128
  %132 = vmatprep.subr.mxu0 0.0
  %133 = vmatpush1.msra.mxu0 0.0
  %134 = vmatprep.subr.mxu0 0.0
  %135 = vmatpush1.msra.mxu0 0.0
  %136 = vmatprep.subr.mxu0 0.0
  %137 = vmatpush1.msra.mxu0 0.0
  %138 = vmatprep.subr.mxu0 0.0
  %139 = vmatpush1.msra.mxu0 0.0
  %140 = vmatprep.subr.mxu0 0.0
  %141 = vmatpush1.msra.mxu0 0.0
  %142 = vmatprep.subr.mxu0 0.0
  %143 = vmatpush1.msra.mxu0 0.0
  %144 = vmatprep.subr.mxu0 0.0
  %145 = vmatpush1.msra.mxu0 0.0
  %146 = vmatprep.subr.mxu0 0.0
  %147 = vmatpush1.msra.mxu0 0.0
  %148 = vmatprep.subr.mxu0 0.0
  %149 = vmatpush1.msra.mxu0 0.0
  %150 = vmatprep.subr.mxu0 0.0
  %151 = vmatpush1.msra.mxu0 0.0
  %152 = vmatprep.subr.mxu0 0.0
  %153 = vmatpush1.msra.mxu0 0.0
  %154 = vmatprep.subr.mxu0 0.0
  %155 = vmatpush1.msra.mxu0 0.0
  %156 = vmatprep.subr.mxu0 0.0
  %157 = vmatpush1.msra.mxu0 0.0
  %158 = vmatprep.subr.mxu0 0.0
  %159 = vmatpush1.msra.mxu0 0.0
  %160 = vmatprep.subr.mxu0 0.0
  %161 = vmatpush1.msra.mxu0 0.0
  %162 = vmatprep.subr.mxu0 0.0
  %163 = vmatpush1.msra.mxu0 0.0
  %164 = vmatprep.subr.mxu0 0.0
  %165 = vmatpush1.msra.mxu0 0.0
  %166 = vmatprep.subr.mxu0 0.0
  %167 = vmatpush1.msra.mxu0 0.0
  %168 = vmatprep.subr.mxu0 0.0
  %169 = vmatpush1.msra.mxu0 0.0
  %170 = vmatprep.subr.mxu0 0.0
  %171 = vmatpush1.msra.mxu0 0.0
  %172 = vmatprep.subr.mxu0 0.0
  %173 = vmatpush1.msra.mxu0 0.0
  %174 = vmatprep.subr.mxu0 0.0
  %175 = vmatpush1.msra.mxu0 0.0
  %176 = vmatprep.subr.mxu0 0.0
  %177 = vmatpush1.msra.mxu0 0.0
  %178 = vmatprep.subr.mxu0 0.0
  %179 = vmatpush1.msra.mxu0 0.0
  %180 = vmatprep.subr.mxu0 0.0
  %181 = vmatpush1.msra.mxu0 0.0
  %182 = vmatprep.subr.mxu0 0.0
  %183 = vmatpush1.msra.mxu0 0.0
  %184 = vmatprep.subr.mxu0 0.0
  %185 = vmatpush1.msra.mxu0 0.0
  %186 = vmatprep.subr.mxu0 0.0
  %187 = vmatpush1.msra.mxu0 0.0
  %188 = vmatprep.subr.mxu0 0.0
  %189 = vmatpush1.msra.mxu0 0.0
  %190 = vmatprep.subr.mxu0 0.0
  %191 = vmatpush1.msra.mxu0 0.0
  %192 = vmatprep.subr.mxu0 0.0
  %193 = vmatpush1.msra.mxu0 0.0
  %194 = vmatprep.mubr.f32.mxu0 0.0
  %195 = vmatmul.mubr.f32.gmra.mrb[0].mxu0 %v124
  %v196 = vpop.f32.mrb[0].mxu0
  %v197 = vadd.f32 %v121, %v196
  %v198 = vpop.f32.mrb[0].mxu0
  %199 = vdwg.mxu0
  %v200 = vtanh.pop %v197
  %v201 = vlaneseq
  %v202 = vshrl.u32 %v201, 7
  %v203 = vsub.s32 1, %v202
  %v204 = vrot.slane %v116, %v203
  %v205 = vmul.f32 %v200, %v204
  %v206 = vlaneseq
  %v207 = vshrl.u32 %v206, 7
  %v208 = vsub.s32 2, %v207
  %v209 = vrot.slane %v116, %v208
  %v210 = vadd.f32 %v205, %v209
  %v211 = vlaneseq
  %v212 = vshrl.u32 %v211, 7
  %v213 = vsub.s32 3, %v212
  %v214 = vrot.slane %v116, %v213
  %v215 = vmul.f32 %v210, %v214
  %vm216 = vcmask 125952
  %v217 = vsel %vm216, %v215, 0.0
  %218 = vadd.xlane.f32.xlu0 %v217
  %v219 = vpop.xlane.xlu0 %218
  %v220 = vlaneseq
  %v221 = vshrl.u32 %v220, 7
  %v222 = vsub.s32 4, %v221
  %v223 = vrot.slane %v116, %v222
  %v224 = vadd.f32 %v219, %v223
  %v225 = vtanh.pop %v224
  %227 = vrot.lane.b32.xlu0 %v223, 127
  %v228 = vpop.permute.xlu0 %227
  %v230 = vmul.f32 %v225, %v228
  %231 = vrot.lane.b32.xlu0 %v223, 126
  %v232 = vpop.permute.xlu0 %231
  %v234 = vadd.f32 %v230, %v232
  %235 = vst.msk [vmem:[%s7] sm:$0xf] %vm216, %v210
  %vm236 = vcmask 3072
  %237 = vst.msk [vmem:[%s8] sm:$0xf] %vm236, %v234
  %v238 = vld [vmem:[%s3] sm:$0xff]
  %v239 = vld [vmem:[%s3 + $0x8] sm:$0x3]
  %v240 = vld [vmem:[%s4] sm:$0x1]
  %v242 = vlaneseq
  %v243 = vshrl.u32 %v242, 7
  %v244 = vsub.s32 0, %v243
  %v245 = vrot.slane %v240, %v244
  %248 = vrot.lane.b32.xlu0 %v238, 125
  %v249 = vpop.permute.xlu0 %248
  %250 = vrot.lane.b32.xlu0 %v239, 125
  %v251 = vpop.permute.xlu0 %250
  %253 = vrot.lane.b32.xlu0 %v245, 125
  %v254 = vpop.permute.xlu0 %253
  %v256 = vsel %vm42, %v251, 0
  %258 = vmatprep.subr.mxu0 0.0
  %259 = vmatpush1.msra.mxu0 %v249
  %260 = vmatprep.subr.mxu0 0.0
  %261 = vmatpush1.msra.mxu0 %v256
  %262 = vmatprep.subr.mxu0 0.0
  %263 = vmatpush1.msra.mxu0 0.0
  %264 = vmatprep.subr.mxu0 0.0
  %265 = vmatpush1.msra.mxu0 0.0
  %266 = vmatprep.subr.mxu0 0.0
  %267 = vmatpush1.msra.mxu0 0.0
  %268 = vmatprep.subr.mxu0 0.0
  %269 = vmatpush1.msra.mxu0 0.0
  %270 = vmatprep.subr.mxu0 0.0
  %271 = vmatpush1.msra.mxu0 0.0
  %272 = vmatprep.subr.mxu0 0.0
  %273 = vmatpush1.msra.mxu0 0.0
  %274 = vmatprep.subr.mxu0 0.0
  %275 = vmatpush1.msra.mxu0 0.0
  %276 = vmatprep.subr.mxu0 0.0
  %277 = vmatpush1.msra.mxu0 0.0
  %278 = vmatprep.subr.mxu0 0.0
  %279 = vmatpush1.msra.mxu0 0.0
  %280 = vmatprep.subr.mxu0 0.0
  %281 = vmatpush1.msra.mxu0 0.0
  %282 = vmatprep.subr.mxu0 0.0
  %283 = vmatpush1.msra.mxu0 0.0
  %284 = vmatprep.subr.mxu0 0.0
  %285 = vmatpush1.msra.mxu0 0.0
  %286 = vmatprep.subr.mxu0 0.0
  %287 = vmatpush1.msra.mxu0 0.0
  %288 = vmatprep.subr.mxu0 0.0
  %289 = vmatpush1.msra.mxu0 0.0
  %290 = vmatprep.subr.mxu0 0.0
  %291 = vmatpush1.msra.mxu0 0.0
  %292 = vmatprep.subr.mxu0 0.0
  %293 = vmatpush1.msra.mxu0 0.0
  %294 = vmatprep.subr.mxu0 0.0
  %295 = vmatpush1.msra.mxu0 0.0
  %296 = vmatprep.subr.mxu0 0.0
  %297 = vmatpush1.msra.mxu0 0.0
  %298 = vmatprep.subr.mxu0 0.0
  %299 = vmatpush1.msra.mxu0 0.0
  %300 = vmatprep.subr.mxu0 0.0
  %301 = vmatpush1.msra.mxu0 0.0
  %302 = vmatprep.subr.mxu0 0.0
  %303 = vmatpush1.msra.mxu0 0.0
  %304 = vmatprep.subr.mxu0 0.0
  %305 = vmatpush1.msra.mxu0 0.0
  %306 = vmatprep.subr.mxu0 0.0
  %307 = vmatpush1.msra.mxu0 0.0
  %308 = vmatprep.subr.mxu0 0.0
  %309 = vmatpush1.msra.mxu0 0.0
  %310 = vmatprep.subr.mxu0 0.0
  %311 = vmatpush1.msra.mxu0 0.0
  %312 = vmatprep.subr.mxu0 0.0
  %313 = vmatpush1.msra.mxu0 0.0
  %314 = vmatprep.subr.mxu0 0.0
  %315 = vmatpush1.msra.mxu0 0.0
  %316 = vmatprep.subr.mxu0 0.0
  %317 = vmatpush1.msra.mxu0 0.0
  %318 = vmatprep.subr.mxu0 0.0
  %319 = vmatpush1.msra.mxu0 0.0
  %320 = vmatprep.subr.mxu0 0.0
  %321 = vmatpush1.msra.mxu0 0.0
  %322 = vmatprep.mubr.f32.mxu0 0.0
  %323 = vmatmul.mubr.f32.gmra.mrb[0].mxu0 %v40
  %v324 = vpop.f32.mrb[0].mxu0
  %v325 = vadd.f32 %v254, %v324
  %v326 = vpop.f32.mrb[0].mxu0
  %327 = vdwg.mxu0
  %s328 = scalar_lea.vmem %s6, 8
  %v329 = vld [vmem:[%s328] sm:$0x1f]
  %s330 = scalar_lea.vmem %s5, 32
  %v331 = vld [vmem:[%s330] sm:$0xf]
  %v332 = vlaneseq
  %v333 = vshrl.u32 %v332, 7
  %v334 = vsub.s32 0, %v333
  %v335 = vrot.slane %v329, %v334
  %vm336 = vcmask 31744
  %v338 = vsel %vm336, %v325, 0
  %vm340 = vcmask 1043456
  %v342 = vsel %vm340, %v331, 0
  %344 = vmatprep.subr.mxu0 0.0
  %345 = vmatpush1.msra.mxu0 %v342
  %346 = vmatprep.subr.mxu0 0.0
  %347 = vmatpush1.msra.mxu0 0.0
  %348 = vmatprep.subr.mxu0 0.0
  %349 = vmatpush1.msra.mxu0 0.0
  %350 = vmatprep.subr.mxu0 0.0
  %351 = vmatpush1.msra.mxu0 0.0
  %352 = vmatprep.subr.mxu0 0.0
  %353 = vmatpush1.msra.mxu0 0.0
  %354 = vmatprep.subr.mxu0 0.0
  %355 = vmatpush1.msra.mxu0 0.0
  %356 = vmatprep.subr.mxu0 0.0
  %357 = vmatpush1.msra.mxu0 0.0
  %358 = vmatprep.subr.mxu0 0.0
  %359 = vmatpush1.msra.mxu0 0.0
  %360 = vmatprep.subr.mxu0 0.0
  %361 = vmatpush1.msra.mxu0 0.0
  %362 = vmatprep.subr.mxu0 0.0
  %363 = vmatpush1.msra.mxu0 0.0
  %364 = vmatprep.subr.mxu0 0.0
  %365 = vmatpush1.msra.mxu0 0.0
  %366 = vmatprep.subr.mxu0 0.0
  %367 = vmatpush1.msra.mxu0 0.0
  %368 = vmatprep.subr.mxu0 0.0
  %369 = vmatpush1.msra.mxu0 0.0
  %370 = vmatprep.subr.mxu0 0.0
  %371 = vmatpush1.msra.mxu0 0.0
  %372 = vmatprep.subr.mxu0 0.0
  %373 = vmatpush1.msra.mxu0 0.0
  %374 = vmatprep.subr.mxu0 0.0
  %375 = vmatpush1.msra.mxu0 0.0
  %376 = vmatprep.subr.mxu0 0.0
  %377 = vmatpush1.msra.mxu0 0.0
  %378 = vmatprep.subr.mxu0 0.0
  %379 = vmatpush1.msra.mxu0 0.0
  %380 = vmatprep.subr.mxu0 0.0
  %381 = vmatpush1.msra.mxu0 0.0
  %382 = vmatprep.subr.mxu0 0.0
  %383 = vmatpush1.msra.mxu0 0.0
  %384 = vmatprep.subr.mxu0 0.0
  %385 = vmatpush1.msra.mxu0 0.0
  %386 = vmatprep.subr.mxu0 0.0
  %387 = vmatpush1.msra.mxu0 0.0
  %388 = vmatprep.subr.mxu0 0.0
  %389 = vmatpush1.msra.mxu0 0.0
  %390 = vmatprep.subr.mxu0 0.0
  %391 = vmatpush1.msra.mxu0 0.0
  %392 = vmatprep.subr.mxu0 0.0
  %393 = vmatpush1.msra.mxu0 0.0
  %394 = vmatprep.subr.mxu0 0.0
  %395 = vmatpush1.msra.mxu0 0.0
  %396 = vmatprep.subr.mxu0 0.0
  %397 = vmatpush1.msra.mxu0 0.0
  %398 = vmatprep.subr.mxu0 0.0
  %399 = vmatpush1.msra.mxu0 0.0
  %400 = vmatprep.subr.mxu0 0.0
  %401 = vmatpush1.msra.mxu0 0.0
  %402 = vmatprep.subr.mxu0 0.0
  %403 = vmatpush1.msra.mxu0 0.0
  %404 = vmatprep.subr.mxu0 0.0
  %405 = vmatpush1.msra.mxu0 0.0
  %406 = vmatprep.subr.mxu0 0.0
  %407 = vmatpush1.msra.mxu0 0.0
  %408 = vmatprep.mubr.f32.mxu0 0.0
  %409 = vmatmul.mubr.f32.gmra.mrb[0].mxu0 %v338
  %v410 = vpop.f32.mrb[0].mxu0
  %v411 = vadd.f32 %v335, %v410
  %v412 = vpop.f32.mrb[0].mxu0
  %413 = vdwg.mxu0
  %v414 = vtanh.pop %v411
  %v415 = vlaneseq
  %v416 = vshrl.u32 %v415, 7
  %v417 = vsub.s32 1, %v416
  %v418 = vrot.slane %v329, %v417
  %v419 = vmul.f32 %v414, %v418
  %v420 = vlaneseq
  %v421 = vshrl.u32 %v420, 7
  %v422 = vsub.s32 2, %v421
  %v423 = vrot.slane %v329, %v422
  %v424 = vadd.f32 %v419, %v423
  %v425 = vlaneseq
  %v426 = vshrl.u32 %v425, 7
  %v427 = vsub.s32 3, %v426
  %v428 = vrot.slane %v329, %v427
  %v429 = vmul.f32 %v424, %v428
  %v430 = vsel %vm216, %v429, 0.0
  %431 = vadd.xlane.f32.xlu0 %v430
  %v432 = vpop.xlane.xlu0 %431
  %v433 = vlaneseq
  %v434 = vshrl.u32 %v433, 7
  %v435 = vsub.s32 4, %v434
  %v436 = vrot.slane %v329, %v435
  %v437 = vadd.f32 %v432, %v436
  %v438 = vtanh.pop %v437
  %440 = vrot.lane.b32.xlu0 %v436, 127
  %v441 = vpop.permute.xlu0 %440
  %v443 = vmul.f32 %v438, %v441
  %444 = vrot.lane.b32.xlu0 %v436, 126
  %v445 = vpop.permute.xlu0 %444
  %v447 = vadd.f32 %v443, %v445
  %s448 = scalar_lea.vmem %s7, 4
  %449 = vst.msk [vmem:[%s448] sm:$0xf] %vm216, %v424
  %s450 = scalar_lea.vmem %s8, 4
  %451 = vst.msk [vmem:[%s450] sm:$0xf] %vm236, %v447
  %v452 = vld [vmem:[%s3] sm:$0xff]
  %v453 = vld [vmem:[%s3 + $0x8] sm:$0x3]
  %v454 = vld [vmem:[%s4] sm:$0x1]
  %v456 = vlaneseq
  %v457 = vshrl.u32 %v456, 7
  %v458 = vsub.s32 0, %v457
  %v459 = vrot.slane %v454, %v458
  %462 = vrot.lane.b32.xlu0 %v452, 121
  %v463 = vpop.permute.xlu0 %462
  %464 = vrot.lane.b32.xlu0 %v453, 121
  %v465 = vpop.permute.xlu0 %464
  %467 = vrot.lane.b32.xlu0 %v459, 121
  %v468 = vpop.permute.xlu0 %467
  %v470 = vsel %vm42, %v465, 0
  %472 = vmatprep.subr.mxu0 0.0
  %473 = vmatpush1.msra.mxu0 %v463
  %474 = vmatprep.subr.mxu0 0.0
  %475 = vmatpush1.msra.mxu0 %v470
  %476 = vmatprep.subr.mxu0 0.0
  %477 = vmatpush1.msra.mxu0 0.0
  %478 = vmatprep.subr.mxu0 0.0
  %479 = vmatpush1.msra.mxu0 0.0
  %480 = vmatprep.subr.mxu0 0.0
  %481 = vmatpush1.msra.mxu0 0.0
  %482 = vmatprep.subr.mxu0 0.0
  %483 = vmatpush1.msra.mxu0 0.0
  %484 = vmatprep.subr.mxu0 0.0
  %485 = vmatpush1.msra.mxu0 0.0
  %486 = vmatprep.subr.mxu0 0.0
  %487 = vmatpush1.msra.mxu0 0.0
  %488 = vmatprep.subr.mxu0 0.0
  %489 = vmatpush1.msra.mxu0 0.0
  %490 = vmatprep.subr.mxu0 0.0
  %491 = vmatpush1.msra.mxu0 0.0
  %492 = vmatprep.subr.mxu0 0.0
  %493 = vmatpush1.msra.mxu0 0.0
  %494 = vmatprep.subr.mxu0 0.0
  %495 = vmatpush1.msra.mxu0 0.0
  %496 = vmatprep.subr.mxu0 0.0
  %497 = vmatpush1.msra.mxu0 0.0
  %498 = vmatprep.subr.mxu0 0.0
  %499 = vmatpush1.msra.mxu0 0.0
  %500 = vmatprep.subr.mxu0 0.0
  %501 = vmatpush1.msra.mxu0 0.0
  %502 = vmatprep.subr.mxu0 0.0
  %503 = vmatpush1.msra.mxu0 0.0
  %504 = vmatprep.subr.mxu0 0.0
  %505 = vmatpush1.msra.mxu0 0.0
  %506 = vmatprep.subr.mxu0 0.0
  %507 = vmatpush1.msra.mxu0 0.0
  %508 = vmatprep.subr.mxu0 0.0
  %509 = vmatpush1.msra.mxu0 0.0
  %510 = vmatprep.subr.mxu0 0.0
  %511 = vmatpush1.msra.mxu0 0.0
  %512 = vmatprep.subr.mxu0 0.0
  %513 = vmatpush1.msra.mxu0 0.0
  %514 = vmatprep.subr.mxu0 0.0
  %515 = vmatpush1.msra.mxu0 0.0
  %516 = vmatprep.subr.mxu0 0.0
  %517 = vmatpush1.msra.mxu0 0.0
  %518 = vmatprep.subr.mxu0 0.0
  %519 = vmatpush1.msra.mxu0 0.0
  %520 = vmatprep.subr.mxu0 0.0
  %521 = vmatpush1.msra.mxu0 0.0
  %522 = vmatprep.subr.mxu0 0.0
  %523 = vmatpush1.msra.mxu0 0.0
  %524 = vmatprep.subr.mxu0 0.0
  %525 = vmatpush1.msra.mxu0 0.0
  %526 = vmatprep.subr.mxu0 0.0
  %527 = vmatpush1.msra.mxu0 0.0
  %528 = vmatprep.subr.mxu0 0.0
  %529 = vmatpush1.msra.mxu0 0.0
  %530 = vmatprep.subr.mxu0 0.0
  %531 = vmatpush1.msra.mxu0 0.0
  %532 = vmatprep.subr.mxu0 0.0
  %533 = vmatpush1.msra.mxu0 0.0
  %534 = vmatprep.subr.mxu0 0.0
  %535 = vmatpush1.msra.mxu0 0.0
  %536 = vmatprep.mubr.f32.mxu0 0.0
  %537 = vmatmul.mubr.f32.gmra.mrb[0].mxu0 %v40
  %v538 = vpop.f32.mrb[0].mxu0
  %v539 = vadd.f32 %v468, %v538
  %v540 = vpop.f32.mrb[0].mxu0
  %541 = vdwg.mxu0
  %s542 = scalar_lea.vmem %s6, 16
  %v543 = vld [vmem:[%s542] sm:$0x1f]
  %s544 = scalar_lea.vmem %s5, 64
  %v545 = vld [vmem:[%s544] sm:$0xff]
  %v546 = vld [vmem:[%s544 + $0x8] sm:$0xff]
  %vm547 = vcmask 64512
  %v549 = vsel %vm547, %v424, 0
  %551 = vmatprep.subr.mxu0 0.0
  %552 = vmatpush1.msra.mxu0 %v546
  %553 = vmatprep.subr.mxu0 0.0
  %554 = vmatpush1.msra.mxu0 0.0
  %555 = vmatprep.subr.mxu0 0.0
  %556 = vmatpush1.msra.mxu0 0.0
  %557 = vmatprep.subr.mxu0 0.0
  %558 = vmatpush1.msra.mxu0 0.0
  %559 = vmatprep.subr.mxu0 0.0
  %560 = vmatpush1.msra.mxu0 0.0
  %561 = vmatprep.subr.mxu0 0.0
  %562 = vmatpush1.msra.mxu0 0.0
  %563 = vmatprep.subr.mxu0 0.0
  %564 = vmatpush1.msra.mxu0 0.0
  %565 = vmatprep.subr.mxu0 0.0
  %566 = vmatpush1.msra.mxu0 0.0
  %567 = vmatprep.subr.mxu0 0.0
  %568 = vmatpush1.msra.mxu0 0.0
  %569 = vmatprep.subr.mxu0 0.0
  %570 = vmatpush1.msra.mxu0 0.0
  %571 = vmatprep.subr.mxu0 0.0
  %572 = vmatpush1.msra.mxu0 0.0
  %573 = vmatprep.subr.mxu0 0.0
  %574 = vmatpush1.msra.mxu0 0.0
  %575 = vmatprep.subr.mxu0 0.0
  %576 = vmatpush1.msra.mxu0 0.0
  %577 = vmatprep.subr.mxu0 0.0
  %578 = vmatpush1.msra.mxu0 0.0
  %579 = vmatprep.subr.mxu0 0.0
  %580 = vmatpush1.msra.mxu0 0.0
  %581 = vmatprep.subr.mxu0 0.0
  %582 = vmatpush1.msra.mxu0 0.0
  %583 = vmatprep.subr.mxu0 0.0
  %584 = vmatpush1.msra.mxu0 0.0
  %585 = vmatprep.subr.mxu0 0.0
  %586 = vmatpush1.msra.mxu0 0.0
  %587 = vmatprep.subr.mxu0 0.0
  %588 = vmatpush1.msra.mxu0 0.0
  %589 = vmatprep.subr.mxu0 0.0
  %590 = vmatpush1.msra.mxu0 0.0
  %591 = vmatprep.subr.mxu0 0.0
  %592 = vmatpush1.msra.mxu0 0.0
  %593 = vmatprep.subr.mxu0 0.0
  %594 = vmatpush1.msra.mxu0 0.0
  %595 = vmatprep.subr.mxu0 0.0
  %596 = vmatpush1.msra.mxu0 0.0
  %597 = vmatprep.subr.mxu0 0.0
  %598 = vmatpush1.msra.mxu0 0.0
  %599 = vmatprep.subr.mxu0 0.0
  %600 = vmatpush1.msra.mxu0 0.0
  %601 = vmatprep.subr.mxu0 0.0
  %602 = vmatpush1.msra.mxu0 0.0
  %603 = vmatprep.subr.mxu0 0.0
  %604 = vmatpush1.msra.mxu0 0.0
  %605 = vmatprep.subr.mxu0 0.0
  %606 = vmatpush1.msra.mxu0 0.0
  %607 = vmatprep.subr.mxu0 0.0
  %608 = vmatpush1.msra.mxu0 0.0
  %609 = vmatprep.subr.mxu0 0.0
  %610 = vmatpush1.msra.mxu0 0.0
  %611 = vmatprep.subr.mxu0 0.0
  %612 = vmatpush1.msra.mxu0 0.0
  %613 = vmatprep.subr.mxu0 0.0
  %614 = vmatpush1.msra.mxu0 0.0
  %615 = vmatprep.mubr.f32.mxu0 0.0
  %616 = vmatmul.mubr.f32.gmra.mrb[0].mxu0 %v549
  %v617 = vpop.f32.mrb[0].mxu0
  %v618 = vadd.f32 0.0, %v617
  %v619 = vpop.f32.mrb[0].mxu0
  %620 = vdwg.mxu0
  %v622 = vsel %vm547, %v210, 0
  %624 = vmatprep.subr.mxu0 0.0
  %625 = vmatpush1.msra.mxu0 %v545
  %626 = vmatprep.subr.mxu0 0.0
  %627 = vmatpush1.msra.mxu0 0.0
  %628 = vmatprep.subr.mxu0 0.0
  %629 = vmatpush1.msra.mxu0 0.0
  %630 = vmatprep.subr.mxu0 0.0
  %631 = vmatpush1.msra.mxu0 0.0
  %632 = vmatprep.subr.mxu0 0.0
  %633 = vmatpush1.msra.mxu0 0.0
  %634 = vmatprep.subr.mxu0 0.0
  %635 = vmatpush1.msra.mxu0 0.0
  %636 = vmatprep.subr.mxu0 0.0
  %637 = vmatpush1.msra.mxu0 0.0
  %638 = vmatprep.subr.mxu0 0.0
  %639 = vmatpush1.msra.mxu0 0.0
  %640 = vmatprep.subr.mxu0 0.0
  %641 = vmatpush1.msra.mxu0 0.0
  %642 = vmatprep.subr.mxu0 0.0
  %643 = vmatpush1.msra.mxu0 0.0
  %644 = vmatprep.subr.mxu0 0.0
  %645 = vmatpush1.msra.mxu0 0.0
  %646 = vmatprep.subr.mxu0 0.0
  %647 = vmatpush1.msra.mxu0 0.0
  %648 = vmatprep.subr.mxu0 0.0
  %649 = vmatpush1.msra.mxu0 0.0
  %650 = vmatprep.subr.mxu0 0.0
  %651 = vmatpush1.msra.mxu0 0.0
  %652 = vmatprep.subr.mxu0 0.0
  %653 = vmatpush1.msra.mxu0 0.0
  %654 = vmatprep.subr.mxu0 0.0
  %655 = vmatpush1.msra.mxu0 0.0
  %656 = vmatprep.subr.mxu0 0.0
  %657 = vmatpush1.msra.mxu0 0.0
  %658 = vmatprep.subr.mxu0 0.0
  %659 = vmatpush1.msra.mxu0 0.0
  %660 = vmatprep.subr.mxu0 0.0
  %661 = vmatpush1.msra.mxu0 0.0
  %662 = vmatprep.subr.mxu0 0.0
  %663 = vmatpush1.msra.mxu0 0.0
  %664 = vmatprep.subr.mxu0 0.0
  %665 = vmatpush1.msra.mxu0 0.0
  %666 = vmatprep.subr.mxu0 0.0
  %667 = vmatpush1.msra.mxu0 0.0
  %668 = vmatprep.subr.mxu0 0.0
  %669 = vmatpush1.msra.mxu0 0.0
  %670 = vmatprep.subr.mxu0 0.0
  %671 = vmatpush1.msra.mxu0 0.0
  %672 = vmatprep.subr.mxu0 0.0
  %673 = vmatpush1.msra.mxu0 0.0
  %674 = vmatprep.subr.mxu0 0.0
  %675 = vmatpush1.msra.mxu0 0.0
  %676 = vmatprep.subr.mxu0 0.0
  %677 = vmatpush1.msra.mxu0 0.0
  %678 = vmatprep.subr.mxu0 0.0
  %679 = vmatpush1.msra.mxu0 0.0
  %680 = vmatprep.subr.mxu0 0.0
  %681 = vmatpush1.msra.mxu0 0.0
  %682 = vmatprep.subr.mxu0 0.0
  %683 = vmatpush1.msra.mxu0 0.0
  %684 = vmatprep.subr.mxu0 0.0
  %685 = vmatpush1.msra.mxu0 0.0
  %686 = vmatprep.subr.mxu0 0.0
  %687 = vmatpush1.msra.mxu0 0.0
  %688 = vmatprep.mubr.f32.mxu0 0.0
  %689 = vmatmul.mubr.f32.gmra.mrb[0].mxu0 %v622
  %v690 = vpop.f32.mrb[0].mxu0
  %v691 = vadd.f32 %v618, %v690
  %v692 = vpop.f32.mrb[0].mxu0
  %693 = vdwg.mxu0
  %v694 = vld [vmem:[%s544 + $0x10] sm:$0x3]
  %vm695 = vcmask 15360
  %v697 = vsel %vm695, %v539, 0
  %v700 = vsel %vm42, %v694, 0
  %702 = vmatprep.subr.mxu0 0.0
  %703 = vmatpush1.msra.mxu0 %v700
  %704 = vmatprep.subr.mxu0 0.0
  %705 = vmatpush1.msra.mxu0 0.0
  %706 = vmatprep.subr.mxu0 0.0
  %707 = vmatpush1.msra.mxu0 0.0
  %708 = vmatprep.subr.mxu0 0.0
  %709 = vmatpush1.msra.mxu0 0.0
  %710 = vmatprep.subr.mxu0 0.0
  %711 = vmatpush1.msra.mxu0 0.0
  %712 = vmatprep.subr.mxu0 0.0
  %713 = vmatpush1.msra.mxu0 0.0
  %714 = vmatprep.subr.mxu0 0.0
  %715 = vmatpush1.msra.mxu0 0.0
  %716 = vmatprep.subr.mxu0 0.0
  %717 = vmatpush1.msra.mxu0 0.0
  %718 = vmatprep.subr.mxu0 0.0
  %719 = vmatpush1.msra.mxu0 0.0
  %720 = vmatprep.subr.mxu0 0.0
  %721 = vmatpush1.msra.mxu0 0.0
  %722 = vmatprep.subr.mxu0 0.0
  %723 = vmatpush1.msra.mxu0 0.0
  %724 = vmatprep.subr.mxu0 0.0
  %725 = vmatpush1.msra.mxu0 0.0
  %726 = vmatprep.subr.mxu0 0.0
  %727 = vmatpush1.msra.mxu0 0.0
  %728 = vmatprep.subr.mxu0 0.0
  %729 = vmatpush1.msra.mxu0 0.0
  %730 = vmatprep.subr.mxu0 0.0
  %731 = vmatpush1.msra.mxu0 0.0
  %732 = vmatprep.subr.mxu0 0.0
  %733 = vmatpush1.msra.mxu0 0.0
  %734 = vmatprep.subr.mxu0 0.0
  %735 = vmatpush1.msra.mxu0 0.0
  %736 = vmatprep.subr.mxu0 0.0
  %737 = vmatpush1.msra.mxu0 0.0
  %738 = vmatprep.subr.mxu0 0.0
  %739 = vmatpush1.msra.mxu0 0.0
  %740 = vmatprep.subr.mxu0 0.0
  %741 = vmatpush1.msra.mxu0 0.0
  %742 = vmatprep.subr.mxu0 0.0
  %743 = vmatpush1.msra.mxu0 0.0
  %744 = vmatprep.subr.mxu0 0.0
  %745 = vmatpush1.msra.mxu0 0.0
  %746 = vmatprep.subr.mxu0 0.0
  %747 = vmatpush1.msra.mxu0 0.0
  %748 = vmatprep.subr.mxu0 0.0
  %749 = vmatpush1.msra.mxu0 0.0
  %750 = vmatprep.subr.mxu0 0.0
  %751 = vmatpush1.msra.mxu0 0.0
  %752 = vmatprep.subr.mxu0 0.0
  %753 = vmatpush1.msra.mxu0 0.0
  %754 = vmatprep.subr.mxu0 0.0
  %755 = vmatpush1.msra.mxu0 0.0
  %756 = vmatprep.subr.mxu0 0.0
  %757 = vmatpush1.msra.mxu0 0.0
  %758 = vmatprep.subr.mxu0 0.0
  %759 = vmatpush1.msra.mxu0 0.0
  %760 = vmatprep.subr.mxu0 0.0
  %761 = vmatpush1.msra.mxu0 0.0
  %762 = vmatprep.subr.mxu0 0.0
  %763 = vmatpush1.msra.mxu0 0.0
  %764 = vmatprep.subr.mxu0 0.0
  %765 = vmatpush1.msra.mxu0 0.0
  %766 = vmatprep.mubr.f32.mxu0 0.0
  %767 = vmatmul.mubr.f32.gmra.mrb[0].mxu0 %v697
  %v768 = vpop.f32.mrb[0].mxu0
  %v769 = vadd.f32 0.0, %v768
  %v770 = vpop.f32.mrb[0].mxu0
  %771 = vdwg.mxu0
  %v772 = vadd.f32 %v691, %v769
  %v773 = vlaneseq
  %v774 = vshrl.u32 %v773, 7
  %v775 = vsub.s32 0, %v774
  %v776 = vrot.slane %v543, %v775
  %v777 = vadd.f32 %v772, %v776
  %v778 = vtanh.pop %v777
  %v779 = vlaneseq
  %v780 = vshrl.u32 %v779, 7
  %v781 = vsub.s32 1, %v780
  %v782 = vrot.slane %v543, %v781
  %v783 = vmul.f32 %v778, %v782
  %v784 = vlaneseq
  %v785 = vshrl.u32 %v784, 7
  %v786 = vsub.s32 2, %v785
  %v787 = vrot.slane %v543, %v786
  %v788 = vadd.f32 %v783, %v787
  %v789 = vlaneseq
  %v790 = vshrl.u32 %v789, 7
  %v791 = vsub.s32 3, %v790
  %v792 = vrot.slane %v543, %v791
  %v793 = vmul.f32 %v788, %v792
  %v794 = vsel %vm216, %v793, 0.0
  %795 = vadd.xlane.f32.xlu0 %v794
  %v796 = vpop.xlane.xlu0 %795
  %v797 = vlaneseq
  %v798 = vshrl.u32 %v797, 7
  %v799 = vsub.s32 4, %v798
  %v800 = vrot.slane %v543, %v799
  %v801 = vadd.f32 %v796, %v800
  %v802 = vtanh.pop %v801
  %804 = vrot.lane.b32.xlu0 %v800, 127
  %v805 = vpop.permute.xlu0 %804
  %v807 = vmul.f32 %v802, %v805
  %808 = vrot.lane.b32.xlu0 %v800, 126
  %v809 = vpop.permute.xlu0 %808
  %v811 = vadd.f32 %v807, %v809
  %s812 = scalar_lea.vmem %s7, 8
  %813 = vst.msk [vmem:[%s812] sm:$0xf] %vm216, %v788
  %s814 = scalar_lea.vmem %s8, 8
  %815 = vst.msk [vmem:[%s814] sm:$0xf] %vm236, %v811
  %v816 = vld [vmem:[%s2] sm:$0xf]
  %s817 = scalar_lea.vmem %s6, 24
  %v818 = vld [vmem:[%s817] sm:$0x1f]
  %s819 = scalar_lea.vmem %s5, 96
  %v820 = vld [vmem:[%s819] sm:$0xff]
  %v821 = vld [vmem:[%s819 + $0x8] sm:$0xff]
  %v822 = vld [vmem:[%s819 + $0x10] sm:$0xff]
  %v823 = vld [vmem:[%s819 + $0x18] sm:$0xff]
  %v824 = vlaneseq
  %v825 = vshrl.u32 %v824, 7
  %v826 = vsub.s32 0, %v825
  %v827 = vrot.slane %v818, %v826
  %vm828 = vcmask 261120
  %v830 = vsel %vm828, %v816, 0
  %832 = vmatprep.subr.mxu0 0.0
  %833 = vmatpush1.msra.mxu0 %v820
  %834 = vmatprep.subr.mxu0 0.0
  %835 = vmatpush1.msra.mxu0 %v821
  %836 = vmatprep.subr.mxu0 0.0
  %837 = vmatpush1.msra.mxu0 %v822
  %838 = vmatprep.subr.mxu0 0.0
  %839 = vmatpush1.msra.mxu0 %v823
  %840 = vmatprep.subr.mxu0 0.0
  %841 = vmatpush1.msra.mxu0 0.0
  %842 = vmatprep.subr.mxu0 0.0
  %843 = vmatpush1.msra.mxu0 0.0
  %844 = vmatprep.subr.mxu0 0.0
  %845 = vmatpush1.msra.mxu0 0.0
  %846 = vmatprep.subr.mxu0 0.0
  %847 = vmatpush1.msra.mxu0 0.0
  %848 = vmatprep.subr.mxu0 0.0
  %849 = vmatpush1.msra.mxu0 0.0
  %850 = vmatprep.subr.mxu0 0.0
  %851 = vmatpush1.msra.mxu0 0.0
  %852 = vmatprep.subr.mxu0 0.0
  %853 = vmatpush1.msra.mxu0 0.0
  %854 = vmatprep.subr.mxu0 0.0
  %855 = vmatpush1.msra.mxu0 0.0
  %856 = vmatprep.subr.mxu0 0.0
  %857 = vmatpush1.msra.mxu0 0.0
  %858 = vmatprep.subr.mxu0 0.0
  %859 = vmatpush1.msra.mxu0 0.0
  %860 = vmatprep.subr.mxu0 0.0
  %861 = vmatpush1.msra.mxu0 0.0
  %862 = vmatprep.subr.mxu0 0.0
  %863 = vmatpush1.msra.mxu0 0.0
  %864 = vmatprep.subr.mxu0 0.0
  %865 = vmatpush1.msra.mxu0 0.0
  %866 = vmatprep.subr.mxu0 0.0
  %867 = vmatpush1.msra.mxu0 0.0
  %868 = vmatprep.subr.mxu0 0.0
  %869 = vmatpush1.msra.mxu0 0.0
  %870 = vmatprep.subr.mxu0 0.0
  %871 = vmatpush1.msra.mxu0 0.0
  %872 = vmatprep.subr.mxu0 0.0
  %873 = vmatpush1.msra.mxu0 0.0
  %874 = vmatprep.subr.mxu0 0.0
  %875 = vmatpush1.msra.mxu0 0.0
  %876 = vmatprep.subr.mxu0 0.0
  %877 = vmatpush1.msra.mxu0 0.0
  %878 = vmatprep.subr.mxu0 0.0
  %879 = vmatpush1.msra.mxu0 0.0
  %880 = vmatprep.subr.mxu0 0.0
  %881 = vmatpush1.msra.mxu0 0.0
  %882 = vmatprep.subr.mxu0 0.0
  %883 = vmatpush1.msra.mxu0 0.0
  %884 = vmatprep.subr.mxu0 0.0
  %885 = vmatpush1.msra.mxu0 0.0
  %886 = vmatprep.subr.mxu0 0.0
  %887 = vmatpush1.msra.mxu0 0.0
  %888 = vmatprep.subr.mxu0 0.0
  %889 = vmatpush1.msra.mxu0 0.0
  %890 = vmatprep.subr.mxu0 0.0
  %891 = vmatpush1.msra.mxu0 0.0
  %892 = vmatprep.subr.mxu0 0.0
  %893 = vmatpush1.msra.mxu0 0.0
  %894 = vmatprep.subr.mxu0 0.0
  %895 = vmatpush1.msra.mxu0 0.0
  %896 = vmatprep.mubr.f32.mxu0 0.0
  %897 = vmatmul.mubr.f32.gmra.mrb[0].mxu0 %v830
  %v898 = vpop.f32.mrb[0].mxu0
  %v899 = vadd.f32 %v827, %v898
  %v900 = vpop.f32.mrb[0].mxu0
  %901 = vdwg.mxu0
  %v902 = vtanh.pop %v899
  %v903 = vlaneseq
  %v904 = vshrl.u32 %v903, 7
  %v905 = vsub.s32 1, %v904
  %v906 = vrot.slane %v818, %v905
  %v907 = vmul.f32 %v902, %v906
  %v908 = vlaneseq
  %v909 = vshrl.u32 %v908, 7
  %v910 = vsub.s32 2, %v909
  %v911 = vrot.slane %v818, %v910
  %v912 = vadd.f32 %v907, %v911
  %v913 = vlaneseq
  %v914 = vshrl.u32 %v913, 7
  %v915 = vsub.s32 3, %v914
  %v916 = vrot.slane %v818, %v915
  %v917 = vmul.f32 %v912, %v916
  %v918 = vsel %vm216, %v917, 0.0
  %919 = vadd.xlane.f32.xlu0 %v918
  %v920 = vpop.xlane.xlu0 %919
  %v921 = vlaneseq
  %v922 = vshrl.u32 %v921, 7
  %v923 = vsub.s32 4, %v922
  %v924 = vrot.slane %v818, %v923
  %v925 = vadd.f32 %v920, %v924
  %v926 = vtanh.pop %v925
  %928 = vrot.lane.b32.xlu0 %v924, 127
  %v929 = vpop.permute.xlu0 %928
  %v931 = vmul.f32 %v926, %v929
  %932 = vrot.lane.b32.xlu0 %v924, 126
  %v933 = vpop.permute.xlu0 %932
  %v935 = vadd.f32 %v931, %v933
  %s936 = scalar_lea.vmem %s7, 12
  %937 = vst.msk [vmem:[%s936] sm:$0xf] %vm216, %v912
  %s938 = scalar_lea.vmem %s8, 12
  %939 = vst.msk [vmem:[%s938] sm:$0xf] %vm236, %v935
  %v940 = vld [vmem:[%s1] sm:$0xf]
  %s941 = scalar_lea.vmem %s6, 32
  %v942 = vld [vmem:[%s941] sm:$0x1f]
  %s943 = scalar_lea.vmem %s5, 128
  %v944 = vld [vmem:[%s943] sm:$0xff]
  %v945 = vld [vmem:[%s943 + $0x8] sm:$0xf]
  %v946 = vlaneseq
  %v947 = vshrl.u32 %v946, 7
  %v948 = vsub.s32 0, %v947
  %v949 = vrot.slane %v942, %v948
  %vm950 = vcmask 97280
  %v952 = vsel %vm950, %v940, 0
  %v955 = vsel %vm340, %v945, 0
  %957 = vmatprep.subr.mxu0 0.0
  %958 = vmatpush1.msra.mxu0 %v944
  %959 = vmatprep.subr.mxu0 0.0
  %960 = vmatpush1.msra.mxu0 %v955
  %961 = vmatprep.subr.mxu0 0.0
  %962 = vmatpush1.msra.mxu0 0.0
  %963 = vmatprep.subr.mxu0 0.0
  %964 = vmatpush1.msra.mxu0 0.0
  %965 = vmatprep.subr.mxu0 0.0
  %966 = vmatpush1.msra.mxu0 0.0
  %967 = vmatprep.subr.mxu0 0.0
  %968 = vmatpush1.msra.mxu0 0.0
  %969 = vmatprep.subr.mxu0 0.0
  %970 = vmatpush1.msra.mxu0 0.0
  %971 = vmatprep.subr.mxu0 0.0
  %972 = vmatpush1.msra.mxu0 0.0
  %973 = vmatprep.subr.mxu0 0.0
  %974 = vmatpush1.msra.mxu0 0.0
  %975 = vmatprep.subr.mxu0 0.0
  %976 = vmatpush1.msra.mxu0 0.0
  %977 = vmatprep.subr.mxu0 0.0
  %978 = vmatpush1.msra.mxu0 0.0
  %979 = vmatprep.subr.mxu0 0.0
  %980 = vmatpush1.msra.mxu0 0.0
  %981 = vmatprep.subr.mxu0 0.0
  %982 = vmatpush1.msra.mxu0 0.0
  %983 = vmatprep.subr.mxu0 0.0
  %984 = vmatpush1.msra.mxu0 0.0
  %985 = vmatprep.subr.mxu0 0.0
  %986 = vmatpush1.msra.mxu0 0.0
  %987 = vmatprep.subr.mxu0 0.0
  %988 = vmatpush1.msra.mxu0 0.0
  %989 = vmatprep.subr.mxu0 0.0
  %990 = vmatpush1.msra.mxu0 0.0
  %991 = vmatprep.subr.mxu0 0.0
  %992 = vmatpush1.msra.mxu0 0.0
  %993 = vmatprep.subr.mxu0 0.0
  %994 = vmatpush1.msra.mxu0 0.0
  %995 = vmatprep.subr.mxu0 0.0
  %996 = vmatpush1.msra.mxu0 0.0
  %997 = vmatprep.subr.mxu0 0.0
  %998 = vmatpush1.msra.mxu0 0.0
  %999 = vmatprep.subr.mxu0 0.0
  %1000 = vmatpush1.msra.mxu0 0.0
  %1001 = vmatprep.subr.mxu0 0.0
  %1002 = vmatpush1.msra.mxu0 0.0
  %1003 = vmatprep.subr.mxu0 0.0
  %1004 = vmatpush1.msra.mxu0 0.0
  %1005 = vmatprep.subr.mxu0 0.0
  %1006 = vmatpush1.msra.mxu0 0.0
  %1007 = vmatprep.subr.mxu0 0.0
  %1008 = vmatpush1.msra.mxu0 0.0
  %1009 = vmatprep.subr.mxu0 0.0
  %1010 = vmatpush1.msra.mxu0 0.0
  %1011 = vmatprep.subr.mxu0 0.0
  %1012 = vmatpush1.msra.mxu0 0.0
  %1013 = vmatprep.subr.mxu0 0.0
  %1014 = vmatpush1.msra.mxu0 0.0
  %1015 = vmatprep.subr.mxu0 0.0
  %1016 = vmatpush1.msra.mxu0 0.0
  %1017 = vmatprep.subr.mxu0 0.0
  %1018 = vmatpush1.msra.mxu0 0.0
  %1019 = vmatprep.subr.mxu0 0.0
  %1020 = vmatpush1.msra.mxu0 0.0
  %1021 = vmatprep.mubr.f32.mxu0 0.0
  %1022 = vmatmul.mubr.f32.gmra.mrb[0].mxu0 %v952
  %v1023 = vpop.f32.mrb[0].mxu0
  %v1024 = vadd.f32 %v949, %v1023
  %v1025 = vpop.f32.mrb[0].mxu0
  %1026 = vdwg.mxu0
  %v1027 = vtanh.pop %v1024
  %v1028 = vlaneseq
  %v1029 = vshrl.u32 %v1028, 7
  %v1030 = vsub.s32 1, %v1029
  %v1031 = vrot.slane %v942, %v1030
  %v1032 = vmul.f32 %v1027, %v1031
  %v1033 = vlaneseq
  %v1034 = vshrl.u32 %v1033, 7
  %v1035 = vsub.s32 2, %v1034
  %v1036 = vrot.slane %v942, %v1035
  %v1037 = vadd.f32 %v1032, %v1036
  %v1038 = vlaneseq
  %v1039 = vshrl.u32 %v1038, 7
  %v1040 = vsub.s32 3, %v1039
  %v1041 = vrot.slane %v942, %v1040
  %v1042 = vmul.f32 %v1037, %v1041
  %v1043 = vsel %vm216, %v1042, 0.0
  %1044 = vadd.xlane.f32.xlu0 %v1043
  %v1045 = vpop.xlane.xlu0 %1044
  %v1046 = vlaneseq
  %v1047 = vshrl.u32 %v1046, 7
  %v1048 = vsub.s32 4, %v1047
  %v1049 = vrot.slane %v942, %v1048
  %v1050 = vadd.f32 %v1045, %v1049
  %v1051 = vtanh.pop %v1050
  %1053 = vrot.lane.b32.xlu0 %v1049, 127
  %v1054 = vpop.permute.xlu0 %1053
  %v1056 = vmul.f32 %v1051, %v1054
  %1057 = vrot.lane.b32.xlu0 %v1049, 126
  %v1058 = vpop.permute.xlu0 %1057
  %v1060 = vadd.f32 %v1056, %v1058
  %s1061 = scalar_lea.vmem %s7, 16
  %1062 = vst.msk [vmem:[%s1061] sm:$0xf] %vm216, %v1037
  %s1063 = scalar_lea.vmem %s8, 16
  %1064 = vst.msk [vmem:[%s1063] sm:$0xf] %vm236, %v1060
  %s1065 = scalar_lea.vmem %s6, 40
  %v1066 = vld [vmem:[%s1065] sm:$0x1f]
  %s1067 = scalar_lea.vmem %s5, 160
  %v1068 = vld [vmem:[%s1067] sm:$0xff]
  %v1069 = vld [vmem:[%s1067 + $0x8] sm:$0xff]
  %v1070 = vlaneseq
  %v1071 = vshrl.u32 %v1070, 7
  %v1072 = vsub.s32 0, %v1071
  %v1073 = vrot.slane %v1066, %v1072
  %vm1074 = vcmask 130048
  %v1076 = vsel %vm1074, %v1037, 0
  %1078 = vmatprep.subr.mxu0 0.0
  %1079 = vmatpush1.msra.mxu0 %v1068
  %1080 = vmatprep.subr.mxu0 0.0
  %1081 = vmatpush1.msra.mxu0 %v1069
  %1082 = vmatprep.subr.mxu0 0.0
  %1083 = vmatpush1.msra.mxu0 0.0
  %1084 = vmatprep.subr.mxu0 0.0
  %1085 = vmatpush1.msra.mxu0 0.0
  %1086 = vmatprep.subr.mxu0 0.0
  %1087 = vmatpush1.msra.mxu0 0.0
  %1088 = vmatprep.subr.mxu0 0.0
  %1089 = vmatpush1.msra.mxu0 0.0
  %1090 = vmatprep.subr.mxu0 0.0
  %1091 = vmatpush1.msra.mxu0 0.0
  %1092 = vmatprep.subr.mxu0 0.0
  %1093 = vmatpush1.msra.mxu0 0.0
  %1094 = vmatprep.subr.mxu0 0.0
  %1095 = vmatpush1.msra.mxu0 0.0
  %1096 = vmatprep.subr.mxu0 0.0
  %1097 = vmatpush1.msra.mxu0 0.0
  %1098 = vmatprep.subr.mxu0 0.0
  %1099 = vmatpush1.msra.mxu0 0.0
  %1100 = vmatprep.subr.mxu0 0.0
  %1101 = vmatpush1.msra.mxu0 0.0
  %1102 = vmatprep.subr.mxu0 0.0
  %1103 = vmatpush1.msra.mxu0 0.0
  %1104 = vmatprep.subr.mxu0 0.0
  %1105 = vmatpush1.msra.mxu0 0.0
  %1106 = vmatprep.subr.mxu0 0.0
  %1107 = vmatpush1.msra.mxu0 0.0
  %1108 = vmatprep.subr.mxu0 0.0
  %1109 = vmatpush1.msra.mxu0 0.0
  %1110 = vmatprep.subr.mxu0 0.0
  %1111 = vmatpush1.msra.mxu0 0.0
  %1112 = vmatprep.subr.mxu0 0.0
  %1113 = vmatpush1.msra.mxu0 0.0
  %1114 = vmatprep.subr.mxu0 0.0
  %1115 = vmatpush1.msra.mxu0 0.0
  %1116 = vmatprep.subr.mxu0 0.0
  %1117 = vmatpush1.msra.mxu0 0.0
  %1118 = vmatprep.subr.mxu0 0.0
  %1119 = vmatpush1.msra.mxu0 0.0
  %1120 = vmatprep.subr.mxu0 0.0
  %1121 = vmatpush1.msra.mxu0 0.0
  %1122 = vmatprep.subr.mxu0 0.0
  %1123 = vmatpush1.msra.mxu0 0.0
  %1124 = vmatprep.subr.mxu0 0.0
  %1125 = vmatpush1.msra.mxu0 0.0
  %1126 = vmatprep.subr.mxu0 0.0
  %1127 = vmatpush1.msra.mxu0 0.0
  %1128 = vmatprep.subr.mxu0 0.0
  %1129 = vmatpush1.msra.mxu0 0.0
  %1130 = vmatprep.subr.mxu0 0.0
  %1131 = vmatpush1.msra.mxu0 0.0
  %1132 = vmatprep.subr.mxu0 0.0
  %1133 = vmatpush1.msra.mxu0 0.0
  %1134 = vmatprep.subr.mxu0 0.0
  %1135 = vmatpush1.msra.mxu0 0.0
  %1136 = vmatprep.subr.mxu0 0.0
  %1137 = vmatpush1.msra.mxu0 0.0
  %1138 = vmatprep.subr.mxu0 0.0
  %1139 = vmatpush1.msra.mxu0 0.0
  %1140 = vmatprep.subr.mxu0 0.0
  %1141 = vmatpush1.msra.mxu0 0.0
  %1142 = vmatprep.mubr.f32.mxu0 0.0
  %1143 = vmatmul.mubr.f32.gmra.mrb[0].mxu0 %v1076
  %v1144 = vpop.f32.mrb[0].mxu0
  %v1145 = vadd.f32 %v1073, %v1144
  %v1146 = vpop.f32.mrb[0].mxu0
  %1147 = vdwg.mxu0
  %v1148 = vtanh.pop %v1145
  %v1149 = vlaneseq
  %v1150 = vshrl.u32 %v1149, 7
  %v1151 = vsub.s32 1, %v1150
  %v1152 = vrot.slane %v1066, %v1151
  %v1153 = vmul.f32 %v1148, %v1152
  %v1154 = vlaneseq
  %v1155 = vshrl.u32 %v1154, 7
  %v1156 = vsub.s32 2, %v1155
  %v1157 = vrot.slane %v1066, %v1156
  %v1158 = vadd.f32 %v1153, %v1157
  %v1159 = vlaneseq
  %v1160 = vshrl.u32 %v1159, 7
  %v1161 = vsub.s32 3, %v1160
  %v1162 = vrot.slane %v1066, %v1161
  %v1163 = vmul.f32 %v1158, %v1162
  %v1164 = vsel %vm216, %v1163, 0.0
  %1165 = vadd.xlane.f32.xlu0 %v1164
  %v1166 = vpop.xlane.xlu0 %1165
  %v1167 = vlaneseq
  %v1168 = vshrl.u32 %v1167, 7
  %v1169 = vsub.s32 4, %v1168
  %v1170 = vrot.slane %v1066, %v1169
  %v1171 = vadd.f32 %v1166, %v1170
  %v1172 = vtanh.pop %v1171
  %1174 = vrot.lane.b32.xlu0 %v1170, 127
  %v1175 = vpop.permute.xlu0 %1174
  %v1177 = vmul.f32 %v1172, %v1175
  %1178 = vrot.lane.b32.xlu0 %v1170, 126
  %v1179 = vpop.permute.xlu0 %1178
  %v1181 = vadd.f32 %v1177, %v1179
  %s1182 = scalar_lea.vmem %s7, 20
  %1183 = vst.msk [vmem:[%s1182] sm:$0xf] %vm216, %v1158
  %s1184 = scalar_lea.vmem %s8, 20
  %1185 = vst.msk [vmem:[%s1184] sm:$0xf] %vm236, %v1181
  %s1186 = scalar_lea.vmem %s6, 48
  %v1187 = vld [vmem:[%s1186] sm:$0x1f]
  %s1188 = scalar_lea.vmem %s5, 192
  %v1189 = vld [vmem:[%s1188] sm:$0xff]
  %v1190 = vld [vmem:[%s1188 + $0x8] sm:$0xff]
  %v1192 = vsel %vm547, %v1158, 0
  %1194 = vmatprep.subr.mxu0 0.0
  %1195 = vmatpush1.msra.mxu0 %v1190
  %1196 = vmatprep.subr.mxu0 0.0
  %1197 = vmatpush1.msra.mxu0 0.0
  %1198 = vmatprep.subr.mxu0 0.0
  %1199 = vmatpush1.msra.mxu0 0.0
  %1200 = vmatprep.subr.mxu0 0.0
  %1201 = vmatpush1.msra.mxu0 0.0
  %1202 = vmatprep.subr.mxu0 0.0
  %1203 = vmatpush1.msra.mxu0 0.0
  %1204 = vmatprep.subr.mxu0 0.0
  %1205 = vmatpush1.msra.mxu0 0.0
  %1206 = vmatprep.subr.mxu0 0.0
  %1207 = vmatpush1.msra.mxu0 0.0
  %1208 = vmatprep.subr.mxu0 0.0
  %1209 = vmatpush1.msra.mxu0 0.0
  %1210 = vmatprep.subr.mxu0 0.0
  %1211 = vmatpush1.msra.mxu0 0.0
  %1212 = vmatprep.subr.mxu0 0.0
  %1213 = vmatpush1.msra.mxu0 0.0
  %1214 = vmatprep.subr.mxu0 0.0
  %1215 = vmatpush1.msra.mxu0 0.0
  %1216 = vmatprep.subr.mxu0 0.0
  %1217 = vmatpush1.msra.mxu0 0.0
  %1218 = vmatprep.subr.mxu0 0.0
  %1219 = vmatpush1.msra.mxu0 0.0
  %1220 = vmatprep.subr.mxu0 0.0
  %1221 = vmatpush1.msra.mxu0 0.0
  %1222 = vmatprep.subr.mxu0 0.0
  %1223 = vmatpush1.msra.mxu0 0.0
  %1224 = vmatprep.subr.mxu0 0.0
  %1225 = vmatpush1.msra.mxu0 0.0
  %1226 = vmatprep.subr.mxu0 0.0
  %1227 = vmatpush1.msra.mxu0 0.0
  %1228 = vmatprep.subr.mxu0 0.0
  %1229 = vmatpush1.msra.mxu0 0.0
  %1230 = vmatprep.subr.mxu0 0.0
  %1231 = vmatpush1.msra.mxu0 0.0
  %1232 = vmatprep.subr.mxu0 0.0
  %1233 = vmatpush1.msra.mxu0 0.0
  %1234 = vmatprep.subr.mxu0 0.0
  %1235 = vmatpush1.msra.mxu0 0.0
  %1236 = vmatprep.subr.mxu0 0.0
  %1237 = vmatpush1.msra.mxu0 0.0
  %1238 = vmatprep.subr.mxu0 0.0
  %1239 = vmatpush1.msra.mxu0 0.0
  %1240 = vmatprep.subr.mxu0 0.0
  %1241 = vmatpush1.msra.mxu0 0.0
  %1242 = vmatprep.subr.mxu0 0.0
  %1243 = vmatpush1.msra.mxu0 0.0
  %1244 = vmatprep.subr.mxu0 0.0
  %1245 = vmatpush1.msra.mxu0 0.0
  %1246 = vmatprep.subr.mxu0 0.0
  %1247 = vmatpush1.msra.mxu0 0.0
  %1248 = vmatprep.subr.mxu0 0.0
  %1249 = vmatpush1.msra.mxu0 0.0
  %1250 = vmatprep.subr.mxu0 0.0
  %1251 = vmatpush1.msra.mxu0 0.0
  %1252 = vmatprep.subr.mxu0 0.0
  %1253 = vmatpush1.msra.mxu0 0.0
  %1254 = vmatprep.subr.mxu0 0.0
  %1255 = vmatpush1.msra.mxu0 0.0
  %1256 = vmatprep.subr.mxu0 0.0
  %1257 = vmatpush1.msra.mxu0 0.0
  %1258 = vmatprep.mubr.f32.mxu0 0.0
  %1259 = vmatmul.mubr.f32.gmra.mrb[0].mxu0 %v1192
  %v1260 = vpop.f32.mrb[0].mxu0
  %v1261 = vadd.f32 0.0, %v1260
  %v1262 = vpop.f32.mrb[0].mxu0
  %1263 = vdwg.mxu0
  %v1265 = vsel %vm547, %v788, 0
  %1267 = vmatprep.subr.mxu0 0.0
  %1268 = vmatpush1.msra.mxu0 %v1189
  %1269 = vmatprep.subr.mxu0 0.0
  %1270 = vmatpush1.msra.mxu0 0.0
  %1271 = vmatprep.subr.mxu0 0.0
  %1272 = vmatpush1.msra.mxu0 0.0
  %1273 = vmatprep.subr.mxu0 0.0
  %1274 = vmatpush1.msra.mxu0 0.0
  %1275 = vmatprep.subr.mxu0 0.0
  %1276 = vmatpush1.msra.mxu0 0.0
  %1277 = vmatprep.subr.mxu0 0.0
  %1278 = vmatpush1.msra.mxu0 0.0
  %1279 = vmatprep.subr.mxu0 0.0
  %1280 = vmatpush1.msra.mxu0 0.0
  %1281 = vmatprep.subr.mxu0 0.0
  %1282 = vmatpush1.msra.mxu0 0.0
  %1283 = vmatprep.subr.mxu0 0.0
  %1284 = vmatpush1.msra.mxu0 0.0
  %1285 = vmatprep.subr.mxu0 0.0
  %1286 = vmatpush1.msra.mxu0 0.0
  %1287 = vmatprep.subr.mxu0 0.0
  %1288 = vmatpush1.msra.mxu0 0.0
  %1289 = vmatprep.subr.mxu0 0.0
  %1290 = vmatpush1.msra.mxu0 0.0
  %1291 = vmatprep.subr.mxu0 0.0
  %1292 = vmatpush1.msra.mxu0 0.0
  %1293 = vmatprep.subr.mxu0 0.0
  %1294 = vmatpush1.msra.mxu0 0.0
  %1295 = vmatprep.subr.mxu0 0.0
  %1296 = vmatpush1.msra.mxu0 0.0
  %1297 = vmatprep.subr.mxu0 0.0
  %1298 = vmatpush1.msra.mxu0 0.0
  %1299 = vmatprep.subr.mxu0 0.0
  %1300 = vmatpush1.msra.mxu0 0.0
  %1301 = vmatprep.subr.mxu0 0.0
  %1302 = vmatpush1.msra.mxu0 0.0
  %1303 = vmatprep.subr.mxu0 0.0
  %1304 = vmatpush1.msra.mxu0 0.0
  %1305 = vmatprep.subr.mxu0 0.0
  %1306 = vmatpush1.msra.mxu0 0.0
  %1307 = vmatprep.subr.mxu0 0.0
  %1308 = vmatpush1.msra.mxu0 0.0
  %1309 = vmatprep.subr.mxu0 0.0
  %1310 = vmatpush1.msra.mxu0 0.0
  %1311 = vmatprep.subr.mxu0 0.0
  %1312 = vmatpush1.msra.mxu0 0.0
  %1313 = vmatprep.subr.mxu0 0.0
  %1314 = vmatpush1.msra.mxu0 0.0
  %1315 = vmatprep.subr.mxu0 0.0
  %1316 = vmatpush1.msra.mxu0 0.0
  %1317 = vmatprep.subr.mxu0 0.0
  %1318 = vmatpush1.msra.mxu0 0.0
  %1319 = vmatprep.subr.mxu0 0.0
  %1320 = vmatpush1.msra.mxu0 0.0
  %1321 = vmatprep.subr.mxu0 0.0
  %1322 = vmatpush1.msra.mxu0 0.0
  %1323 = vmatprep.subr.mxu0 0.0
  %1324 = vmatpush1.msra.mxu0 0.0
  %1325 = vmatprep.subr.mxu0 0.0
  %1326 = vmatpush1.msra.mxu0 0.0
  %1327 = vmatprep.subr.mxu0 0.0
  %1328 = vmatpush1.msra.mxu0 0.0
  %1329 = vmatprep.subr.mxu0 0.0
  %1330 = vmatpush1.msra.mxu0 0.0
  %1331 = vmatprep.mubr.f32.mxu0 0.0
  %1332 = vmatmul.mubr.f32.gmra.mrb[0].mxu0 %v1265
  %v1333 = vpop.f32.mrb[0].mxu0
  %v1334 = vadd.f32 %v1261, %v1333
  %v1335 = vpop.f32.mrb[0].mxu0
  %1336 = vdwg.mxu0
  %v1337 = vlaneseq
  %v1338 = vshrl.u32 %v1337, 7
  %v1339 = vsub.s32 0, %v1338
  %v1340 = vrot.slane %v1187, %v1339
  %v1341 = vadd.f32 %v1334, %v1340
  %v1342 = vtanh.pop %v1341
  %v1343 = vlaneseq
  %v1344 = vshrl.u32 %v1343, 7
  %v1345 = vsub.s32 1, %v1344
  %v1346 = vrot.slane %v1187, %v1345
  %v1347 = vmul.f32 %v1342, %v1346
  %v1348 = vlaneseq
  %v1349 = vshrl.u32 %v1348, 7
  %v1350 = vsub.s32 2, %v1349
  %v1351 = vrot.slane %v1187, %v1350
  %v1352 = vadd.f32 %v1347, %v1351
  %v1353 = vlaneseq
  %v1354 = vshrl.u32 %v1353, 7
  %v1355 = vsub.s32 3, %v1354
  %v1356 = vrot.slane %v1187, %v1355
  %v1357 = vmul.f32 %v1352, %v1356
  %v1358 = vsel %vm216, %v1357, 0.0
  %1359 = vadd.xlane.f32.xlu0 %v1358
  %v1360 = vpop.xlane.xlu0 %1359
  %v1361 = vlaneseq
  %v1362 = vshrl.u32 %v1361, 7
  %v1363 = vsub.s32 4, %v1362
  %v1364 = vrot.slane %v1187, %v1363
  %v1365 = vadd.f32 %v1360, %v1364
  %v1366 = vtanh.pop %v1365
  %1368 = vrot.lane.b32.xlu0 %v1364, 127
  %v1369 = vpop.permute.xlu0 %1368
  %v1371 = vmul.f32 %v1366, %v1369
  %1372 = vrot.lane.b32.xlu0 %v1364, 126
  %v1373 = vpop.permute.xlu0 %1372
  %v1375 = vadd.f32 %v1371, %v1373
  %s1376 = scalar_lea.vmem %s7, 24
  %1377 = vst.msk [vmem:[%s1376] sm:$0xf] %vm216, %v1352
  %s1378 = scalar_lea.vmem %s8, 24
  %1379 = vst.msk [vmem:[%s1378] sm:$0xf] %vm236, %v1375
  %s1380 = scalar_lea.vmem %s6, 56
  %v1381 = vld [vmem:[%s1380] sm:$0x1f]
  %s1382 = scalar_lea.vmem %s5, 224
  %v1383 = vld [vmem:[%s1382] sm:$0xff]
  %v1384 = vld [vmem:[%s1382 + $0x8] sm:$0xff]
  %1385 = vmatprep.subr.mxu0 0.0
  %1386 = vmatpush1.msra.mxu0 %v1384
  %1387 = vmatprep.subr.mxu0 0.0
  %1388 = vmatpush1.msra.mxu0 0.0
  %1389 = vmatprep.subr.mxu0 0.0
  %1390 = vmatpush1.msra.mxu0 0.0
  %1391 = vmatprep.subr.mxu0 0.0
  %1392 = vmatpush1.msra.mxu0 0.0
  %1393 = vmatprep.subr.mxu0 0.0
  %1394 = vmatpush1.msra.mxu0 0.0
  %1395 = vmatprep.subr.mxu0 0.0
  %1396 = vmatpush1.msra.mxu0 0.0
  %1397 = vmatprep.subr.mxu0 0.0
  %1398 = vmatpush1.msra.mxu0 0.0
  %1399 = vmatprep.subr.mxu0 0.0
  %1400 = vmatpush1.msra.mxu0 0.0
  %1401 = vmatprep.subr.mxu0 0.0
  %1402 = vmatpush1.msra.mxu0 0.0
  %1403 = vmatprep.subr.mxu0 0.0
  %1404 = vmatpush1.msra.mxu0 0.0
  %1405 = vmatprep.subr.mxu0 0.0
  %1406 = vmatpush1.msra.mxu0 0.0
  %1407 = vmatprep.subr.mxu0 0.0
  %1408 = vmatpush1.msra.mxu0 0.0
  %1409 = vmatprep.subr.mxu0 0.0
  %1410 = vmatpush1.msra.mxu0 0.0
  %1411 = vmatprep.subr.mxu0 0.0
  %1412 = vmatpush1.msra.mxu0 0.0
  %1413 = vmatprep.subr.mxu0 0.0
  %1414 = vmatpush1.msra.mxu0 0.0
  %1415 = vmatprep.subr.mxu0 0.0
  %1416 = vmatpush1.msra.mxu0 0.0
  %1417 = vmatprep.subr.mxu0 0.0
  %1418 = vmatpush1.msra.mxu0 0.0
  %1419 = vmatprep.subr.mxu0 0.0
  %1420 = vmatpush1.msra.mxu0 0.0
  %1421 = vmatprep.subr.mxu0 0.0
  %1422 = vmatpush1.msra.mxu0 0.0
  %1423 = vmatprep.subr.mxu0 0.0
  %1424 = vmatpush1.msra.mxu0 0.0
  %1425 = vmatprep.subr.mxu0 0.0
  %1426 = vmatpush1.msra.mxu0 0.0
  %1427 = vmatprep.subr.mxu0 0.0
  %1428 = vmatpush1.msra.mxu0 0.0
  %1429 = vmatprep.subr.mxu0 0.0
  %1430 = vmatpush1.msra.mxu0 0.0
  %1431 = vmatprep.subr.mxu0 0.0
  %1432 = vmatpush1.msra.mxu0 0.0
  %1433 = vmatprep.subr.mxu0 0.0
  %1434 = vmatpush1.msra.mxu0 0.0
  %1435 = vmatprep.subr.mxu0 0.0
  %1436 = vmatpush1.msra.mxu0 0.0
  %1437 = vmatprep.subr.mxu0 0.0
  %1438 = vmatpush1.msra.mxu0 0.0
  %1439 = vmatprep.subr.mxu0 0.0
  %1440 = vmatpush1.msra.mxu0 0.0
  %1441 = vmatprep.subr.mxu0 0.0
  %1442 = vmatpush1.msra.mxu0 0.0
  %1443 = vmatprep.subr.mxu0 0.0
  %1444 = vmatpush1.msra.mxu0 0.0
  %1445 = vmatprep.subr.mxu0 0.0
  %1446 = vmatpush1.msra.mxu0 0.0
  %1447 = vmatprep.subr.mxu0 0.0
  %1448 = vmatpush1.msra.mxu0 0.0
  %1449 = vmatprep.mubr.f32.mxu0 0.0
  %1450 = vmatmul.mubr.f32.gmra.mrb[0].mxu0 %v1192
  %v1451 = vpop.f32.mrb[0].mxu0
  %v1452 = vadd.f32 0.0, %v1451
  %v1453 = vpop.f32.mrb[0].mxu0
  %1454 = vdwg.mxu0
  %v1456 = vsel %vm547, %v912, 0
  %1458 = vmatprep.subr.mxu0 0.0
  %1459 = vmatpush1.msra.mxu0 %v1383
  %1460 = vmatprep.subr.mxu0 0.0
  %1461 = vmatpush1.msra.mxu0 0.0
  %1462 = vmatprep.subr.mxu0 0.0
  %1463 = vmatpush1.msra.mxu0 0.0
  %1464 = vmatprep.subr.mxu0 0.0
  %1465 = vmatpush1.msra.mxu0 0.0
  %1466 = vmatprep.subr.mxu0 0.0
  %1467 = vmatpush1.msra.mxu0 0.0
  %1468 = vmatprep.subr.mxu0 0.0
  %1469 = vmatpush1.msra.mxu0 0.0
  %1470 = vmatprep.subr.mxu0 0.0
  %1471 = vmatpush1.msra.mxu0 0.0
  %1472 = vmatprep.subr.mxu0 0.0
  %1473 = vmatpush1.msra.mxu0 0.0
  %1474 = vmatprep.subr.mxu0 0.0
  %1475 = vmatpush1.msra.mxu0 0.0
  %1476 = vmatprep.subr.mxu0 0.0
  %1477 = vmatpush1.msra.mxu0 0.0
  %1478 = vmatprep.subr.mxu0 0.0
  %1479 = vmatpush1.msra.mxu0 0.0
  %1480 = vmatprep.subr.mxu0 0.0
  %1481 = vmatpush1.msra.mxu0 0.0
  %1482 = vmatprep.subr.mxu0 0.0
  %1483 = vmatpush1.msra.mxu0 0.0
  %1484 = vmatprep.subr.mxu0 0.0
  %1485 = vmatpush1.msra.mxu0 0.0
  %1486 = vmatprep.subr.mxu0 0.0
  %1487 = vmatpush1.msra.mxu0 0.0
  %1488 = vmatprep.subr.mxu0 0.0
  %1489 = vmatpush1.msra.mxu0 0.0
  %1490 = vmatprep.subr.mxu0 0.0
  %1491 = vmatpush1.msra.mxu0 0.0
  %1492 = vmatprep.subr.mxu0 0.0
  %1493 = vmatpush1.msra.mxu0 0.0
  %1494 = vmatprep.subr.mxu0 0.0
  %1495 = vmatpush1.msra.mxu0 0.0
  %1496 = vmatprep.subr.mxu0 0.0
  %1497 = vmatpush1.msra.mxu0 0.0
  %1498 = vmatprep.subr.mxu0 0.0
  %1499 = vmatpush1.msra.mxu0 0.0
  %1500 = vmatprep.subr.mxu0 0.0
  %1501 = vmatpush1.msra.mxu0 0.0
  %1502 = vmatprep.subr.mxu0 0.0
  %1503 = vmatpush1.msra.mxu0 0.0
  %1504 = vmatprep.subr.mxu0 0.0
  %1505 = vmatpush1.msra.mxu0 0.0
  %1506 = vmatprep.subr.mxu0 0.0
  %1507 = vmatpush1.msra.mxu0 0.0
  %1508 = vmatprep.subr.mxu0 0.0
  %1509 = vmatpush1.msra.mxu0 0.0
  %1510 = vmatprep.subr.mxu0 0.0
  %1511 = vmatpush1.msra.mxu0 0.0
  %1512 = vmatprep.subr.mxu0 0.0
  %1513 = vmatpush1.msra.mxu0 0.0
  %1514 = vmatprep.subr.mxu0 0.0
  %1515 = vmatpush1.msra.mxu0 0.0
  %1516 = vmatprep.subr.mxu0 0.0
  %1517 = vmatpush1.msra.mxu0 0.0
  %1518 = vmatprep.subr.mxu0 0.0
  %1519 = vmatpush1.msra.mxu0 0.0
  %1520 = vmatprep.subr.mxu0 0.0
  %1521 = vmatpush1.msra.mxu0 0.0
  %1522 = vmatprep.mubr.f32.mxu0 0.0
  %1523 = vmatmul.mubr.f32.gmra.mrb[0].mxu0 %v1456
  %v1524 = vpop.f32.mrb[0].mxu0
  %v1525 = vadd.f32 %v1452, %v1524
  %v1526 = vpop.f32.mrb[0].mxu0
  %1527 = vdwg.mxu0
  %v1528 = vlaneseq
  %v1529 = vshrl.u32 %v1528, 7
  %v1530 = vsub.s32 0, %v1529
  %v1531 = vrot.slane %v1381, %v1530
  %v1532 = vadd.f32 %v1525, %v1531
  %v1533 = vtanh.pop %v1532
  %v1534 = vlaneseq
  %v1535 = vshrl.u32 %v1534, 7
  %v1536 = vsub.s32 1, %v1535
  %v1537 = vrot.slane %v1381, %v1536
  %v1538 = vmul.f32 %v1533, %v1537
  %v1539 = vlaneseq
  %v1540 = vshrl.u32 %v1539, 7
  %v1541 = vsub.s32 2, %v1540
  %v1542 = vrot.slane %v1381, %v1541
  %v1543 = vadd.f32 %v1538, %v1542
  %v1544 = vlaneseq
  %v1545 = vshrl.u32 %v1544, 7
  %v1546 = vsub.s32 3, %v1545
  %v1547 = vrot.slane %v1381, %v1546
  %v1548 = vmul.f32 %v1543, %v1547
  %v1549 = vsel %vm216, %v1548, 0.0
  %1550 = vadd.xlane.f32.xlu0 %v1549
  %v1551 = vpop.xlane.xlu0 %1550
  %v1552 = vlaneseq
  %v1553 = vshrl.u32 %v1552, 7
  %v1554 = vsub.s32 4, %v1553
  %v1555 = vrot.slane %v1381, %v1554
  %v1556 = vadd.f32 %v1551, %v1555
  %v1557 = vtanh.pop %v1556
  %1559 = vrot.lane.b32.xlu0 %v1555, 127
  %v1560 = vpop.permute.xlu0 %1559
  %v1562 = vmul.f32 %v1557, %v1560
  %1563 = vrot.lane.b32.xlu0 %v1555, 126
  %v1564 = vpop.permute.xlu0 %1563
  %v1566 = vadd.f32 %v1562, %v1564
  %s1567 = scalar_lea.vmem %s7, 28
  %1568 = vst.msk [vmem:[%s1567] sm:$0xf] %vm216, %v1543
  %s1569 = scalar_lea.vmem %s8, 28
  %1570 = vst.msk [vmem:[%s1569] sm:$0xf] %vm236, %v1566
  %v1571 = vadd.f32 %v1375, %v1566
  %v1572 = vmul.f32 %v1571, 0.5
  %s1573 = scalar_lea.vmem %s8, 32
  %1574 = vst.msk [vmem:[%s1573] sm:$0xf] %vm236, %v1572
  // Predicated region
  $region30: #{idlmm_forward.3} parent=0 // pred_check
    _
  $region31: #{idlmm_forward.3} parent=0 // pred_check_branch
    %1576 = sbr.rel (0) target = $region33
  $region32: #{idlmm_forward.3} parent=0 // pred_region
    _
  $region33: #{idlmm_forward.3} parent=0 // pred_fallthru
    _
  // Predicated region
  $region34: #{idlmm_forward.3} parent=0 // pred_check
    _
  $region35: #{idlmm_forward.3} parent=0 // pred_check_branch
    %1578 = sbr.rel (0) target = $region37
  $region36: #{idlmm_forward.3} parent=0 // pred_region
    _
  $region37: #{idlmm_forward.3} parent=0 // pred_fallthru
    _
  // Predicated region
  $region38: #{idlmm_forward.3} parent=0 // pred_check
    _
  $region39: #{idlmm_forward.3} parent=0 // pred_check_branch
    %1580 = sbr.rel (0) target = $region41
  $region40: #{idlmm_forward.3} parent=0 // pred_region
    _
  $region41: #{idlmm_forward.3} parent=0 // pred_fallthru
    _
  // Predicated region
  $region42: #{idlmm_forward.3} parent=0 // pred_check
    _
  $region43: #{idlmm_forward.3} parent=0 // pred_check_branch
    %1582 = sbr.rel (0) target = $region45
  $region44: #{idlmm_forward.3} parent=0 // pred_region
    _
  $region45: #{idlmm_forward.3} parent=0 // pred_fallthru
    _

// kernel: idlmm_forward.2
$region0: #{idlmm_forward.2}
  #allocation0 [shape = 'u32[]', space=smem, size = 0x4, offset = 0x4, fixed_abs, tag = 'smem constant byte address 0x4 - core index']
  #allocation1 [shape = 'u32[144,128]{1,0:T(1,128)}', space=vmem, size = 0x12000, scoped, tag = 'internal scratch']
  #allocation2 [shape = 'f32[96,96]{1,0:T(8,128)}', space=vmem, size = 0xc000, scoped, tag = 'scratch operand']
  #allocation3 [shape = 'f32[96,32]{1,0:T(8,128)}', space=vmem, size = 0xc000, scoped, tag = 'scratch operand']
  %s0 = inlined_call_operand.vmem [shape: f32[192,32], index: 0, kind: input, shape index: {}]
  %s1 = inlined_call_operand.vmem [shape: bf16[32,96], index: 1, kind: input, shape index: {}]
  %s2 = inlined_call_operand.vmem [shape: f32[1,96], index: 2, kind: input, shape index: {}]
  %s3 = inlined_call_operand.vmem [shape: bf16[32,32], index: 3, kind: input, shape index: {}]
  %s4 = inlined_call_operand.vmem [shape: bf16[32,2048], index: 4, kind: input, shape index: {}]
  %s5 = inlined_call_operand.vmem [shape: f32[1,2048], index: 5, kind: input, shape index: {}]
  %s6 = inlined_call_operand.vmem [shape: bf16[2048,32], index: 6, kind: input, shape index: {}]
  %s7 = inlined_call_operand.vmem [shape: f32[6,32], index: 7, kind: input, shape index: {}]
  %s8 = inlined_call_operand.vmem [shape: f32[4,44,44], index: 8, kind: output, shape index: {0}]
  %s9 = inlined_call_operand.vmem [shape: f32[2,2,32], index: 9, kind: output, shape index: {1}]
  %10 = xla_tuple %s8, %s9
  %s11 = sld [smem:[#allocation0]]
  $region73: #{idlmm_forward.2} parent=0
    _
  %s13 = ssub.s32 1, %s11
  %s14 = scalar_select 0, %s13, %s11
  loop: start=0, step=1, limit=4
  $region2: #{idlmm_forward.2} parent=0 // loop_pre_header
    _
  $region3: #{idlmm_forward.2} parent=0 // loop_header
    %s16 = sphi 0, %s20
    %p17 = scmp.ge.s32.totalorder %s16, 4
    %s26 = sphi 0, %s28
    %s29 = sphi 0, %s26
    %s30 = sphi 0, %s29
    %s46 = sphi 0, %s30
    %s50 = sphi 0, %s50
    %s52 = sphi 0, %s50
    %s53 = sphi 0, %s52
    %s67 = sphi 0, %s53
    %s71 = sphi 0, %s71
    %s73 = sphi 0, %s71
    %s74 = sphi 0, %s73
    %s88 = sphi 0, %s74
    %s92 = sphi 0, %s92
    %s94 = sphi 0, %s92
    %s95 = sphi 0, %s94
    %s109 = sphi 0, %s95
    %s113 = sphi 0, %s113
    %s115 = sphi 0, %s113
    %s116 = sphi 0, %s115
    %s130 = sphi 0, %s116
    %s134 = sphi 0, %s134
    %s136 = sphi 0, %s134
    %s137 = sphi 0, %s136
    %s151 = sphi 0, %s137
    %s155 = sphi 0, %s155
    %s157 = sphi 0, %s155
    %s158 = sphi 0, %s157
    %s172 = sphi 0, %s158
    %s176 = sphi 0, %s176
    %s178 = sphi 0, %s176
    %s179 = sphi 0, %s178
    %s193 = sphi 0, %s179
    %s199 = sphi 0, %s201
    %s202 = sphi 0, %s199
    %s203 = sphi 0, %s202
    %s219 = sphi 0, %s203
    %s225 = sphi 0, %s227
    %s228 = sphi 0, %s225
    %s229 = sphi 0, %s228
    %s245 = sphi 0, %s229
  $region4: #{idlmm_forward.2} parent=0 // loop_header_branch
    %19 = sbr.rel (%p17) target = $region8
  $region5: #{idlmm_forward.2} parent=0 // loop_body
    %s21 = ssub.s32 %s16, 1
    %s22 = ssub.s32 %s16, 2
    %s23 = sadd.s32 %s16, 1
    %s24 = ssub.s32 %s16, %s23
    %p25 = scmp.eq.s32.totalorder %s24, 0
    %s27 = sadd.s32 %s26, 1
    %s28 = scalar_select %p25, %s26, %s27
    %p31 = pneg %p25
    %p32 = scmp.eq.s32.totalorder %s16, 1
    %p33 = por %p31, %p32
    %p34 = scmp.ne.s32.totalorder %s26, %s29
    %p35 = scmp.eq.s32.totalorder %s16, 0
    %p36 = por %p34, %p35
    %p37 = scmp.ne.s32.totalorder %s26, %s29
    %p38 = scmp.eq.s32.totalorder %s21, 1
    %p39 = por %p37, %p38
    %p40 = scmp.ne.s32.totalorder %s29, %s30
    %p41 = scmp.eq.s32.totalorder %s21, 0
    %p42 = por %p40, %p41
    %p43 = scmp.ne.s32.totalorder %s29, %s30
    %p44 = scmp.eq.s32.totalorder %s22, 1
    %p45 = por %p43, %p44
    %p47 = scmp.ne.s32.totalorder %s30, %s46
    %p48 = scmp.eq.s32.totalorder %s22, 0
    %p49 = por %p47, %p48
    %s51 = sadd.s32 %s50, 1
    %p54 = scmp.eq.s32.totalorder %s16, 1
    %p55 = scmp.ne.s32.totalorder %s50, %s52
    %p56 = scmp.eq.s32.totalorder %s16, 0
    %p57 = por %p55, %p56
    %p58 = scmp.ne.s32.totalorder %s50, %s52
    %p59 = scmp.eq.s32.totalorder %s21, 1
    %p60 = por %p58, %p59
    %p61 = scmp.ne.s32.totalorder %s52, %s53
    %p62 = scmp.eq.s32.totalorder %s21, 0
    %p63 = por %p61, %p62
    %p64 = scmp.ne.s32.totalorder %s52, %s53
    %p65 = scmp.eq.s32.totalorder %s22, 1
    %p66 = por %p64, %p65
    %p68 = scmp.ne.s32.totalorder %s53, %s67
    %p69 = scmp.eq.s32.totalorder %s22, 0
    %p70 = por %p68, %p69
    %s72 = sadd.s32 %s71, 1
    %p75 = scmp.eq.s32.totalorder %s16, 1
    %p76 = scmp.ne.s32.totalorder %s71, %s73
    %p77 = scmp.eq.s32.totalorder %s16, 0
    %p78 = por %p76, %p77
    %p79 = scmp.ne.s32.totalorder %s71, %s73
    %p80 = scmp.eq.s32.totalorder %s21, 1
    %p81 = por %p79, %p80
    %p82 = scmp.ne.s32.totalorder %s73, %s74
    %p83 = scmp.eq.s32.totalorder %s21, 0
    %p84 = por %p82, %p83
    %p85 = scmp.ne.s32.totalorder %s73, %s74
    %p86 = scmp.eq.s32.totalorder %s22, 1
    %p87 = por %p85, %p86
    %p89 = scmp.ne.s32.totalorder %s74, %s88
    %p90 = scmp.eq.s32.totalorder %s22, 0
    %p91 = por %p89, %p90
    %s93 = sadd.s32 %s92, 1
    %p96 = scmp.eq.s32.totalorder %s16, 1
    %p97 = scmp.ne.s32.totalorder %s92, %s94
    %p98 = scmp.eq.s32.totalorder %s16, 0
    %p99 = por %p97, %p98
    %p100 = scmp.ne.s32.totalorder %s92, %s94
    %p101 = scmp.eq.s32.totalorder %s21, 1
    %p102 = por %p100, %p101
    %p103 = scmp.ne.s32.totalorder %s94, %s95
    %p104 = scmp.eq.s32.totalorder %s21, 0
    %p105 = por %p103, %p104
    %p106 = scmp.ne.s32.totalorder %s94, %s95
    %p107 = scmp.eq.s32.totalorder %s22, 1
    %p108 = por %p106, %p107
    %p110 = scmp.ne.s32.totalorder %s95, %s109
    %p111 = scmp.eq.s32.totalorder %s22, 0
    %p112 = por %p110, %p111
    %s114 = sadd.s32 %s113, 1
    %p117 = scmp.eq.s32.totalorder %s16, 1
    %p118 = scmp.ne.s32.totalorder %s113, %s115
    %p119 = scmp.eq.s32.totalorder %s16, 0
    %p120 = por %p118, %p119
    %p121 = scmp.ne.s32.totalorder %s113, %s115
    %p122 = scmp.eq.s32.totalorder %s21, 1
    %p123 = por %p121, %p122
    %p124 = scmp.ne.s32.totalorder %s115, %s116
    %p125 = scmp.eq.s32.totalorder %s21, 0
    %p126 = por %p124, %p125
    %p127 = scmp.ne.s32.totalorder %s115, %s116
    %p128 = scmp.eq.s32.totalorder %s22, 1
    %p129 = por %p127, %p128
    %p131 = scmp.ne.s32.totalorder %s116, %s130
    %p132 = scmp.eq.s32.totalorder %s22, 0
    %p133 = por %p131, %p132
    %s135 = sadd.s32 %s134, 1
    %p138 = scmp.eq.s32.totalorder %s16, 1
    %p139 = scmp.ne.s32.totalorder %s134, %s136
    %p140 = scmp.eq.s32.totalorder %s16, 0
    %p141 = por %p139, %p140
    %p142 = scmp.ne.s32.totalorder %s134, %s136
    %p143 = scmp.eq.s32.totalorder %s21, 1
    %p144 = por %p142, %p143
    %p145 = scmp.ne.s32.totalorder %s136, %s137
    %p146 = scmp.eq.s32.totalorder %s21, 0
    %p147 = por %p145, %p146
    %p148 = scmp.ne.s32.totalorder %s136, %s137
    %p149 = scmp.eq.s32.totalorder %s22, 1
    %p150 = por %p148, %p149
    %p152 = scmp.ne.s32.totalorder %s137, %s151
    %p153 = scmp.eq.s32.totalorder %s22, 0
    %p154 = por %p152, %p153
    %s156 = sadd.s32 %s155, 1
    %p159 = scmp.eq.s32.totalorder %s16, 1
    %p160 = scmp.ne.s32.totalorder %s155, %s157
    %p161 = scmp.eq.s32.totalorder %s16, 0
    %p162 = por %p160, %p161
    %p163 = scmp.ne.s32.totalorder %s155, %s157
    %p164 = scmp.eq.s32.totalorder %s21, 1
    %p165 = por %p163, %p164
    %p166 = scmp.ne.s32.totalorder %s157, %s158
    %p167 = scmp.eq.s32.totalorder %s21, 0
    %p168 = por %p166, %p167
    %p169 = scmp.ne.s32.totalorder %s157, %s158
    %p170 = scmp.eq.s32.totalorder %s22, 1
    %p171 = por %p169, %p170
    %p173 = scmp.ne.s32.totalorder %s158, %s172
    %p174 = scmp.eq.s32.totalorder %s22, 0
    %p175 = por %p173, %p174
    %s177 = sadd.s32 %s176, 1
    %p180 = scmp.eq.s32.totalorder %s16, 1
    %p181 = scmp.ne.s32.totalorder %s176, %s178
    %p182 = scmp.eq.s32.totalorder %s16, 0
    %p183 = por %p181, %p182
    %p184 = scmp.ne.s32.totalorder %s176, %s178
    %p185 = scmp.eq.s32.totalorder %s21, 1
    %p186 = por %p184, %p185
    %p187 = scmp.ne.s32.totalorder %s178, %s179
    %p188 = scmp.eq.s32.totalorder %s21, 0
    %p189 = por %p187, %p188
    %p190 = scmp.ne.s32.totalorder %s178, %s179
    %p191 = scmp.eq.s32.totalorder %s22, 1
    %p192 = por %p190, %p191
    %p194 = scmp.ne.s32.totalorder %s179, %s193
    %p195 = scmp.eq.s32.totalorder %s22, 0
    %p196 = por %p194, %p195
    %s197 = ssub.s32 %s16, %s23
    %p198 = scmp.eq.s32.totalorder %s197, 0
    %s200 = sadd.s32 %s199, 1
    %s201 = scalar_select %p198, %s199, %s200
    %p204 = pneg %p198
    %p205 = scmp.eq.s32.totalorder %s16, 1
    %p206 = por %p204, %p205
    %p207 = scmp.ne.s32.totalorder %s199, %s202
    %p208 = scmp.eq.s32.totalorder %s16, 0
    %p209 = por %p207, %p208
    %p210 = scmp.ne.s32.totalorder %s199, %s202
    %p211 = scmp.eq.s32.totalorder %s21, 1
    %p212 = por %p210, %p211
    %p213 = scmp.ne.s32.totalorder %s202, %s203
    %p214 = scmp.eq.s32.totalorder %s21, 0
    %p215 = por %p213, %p214
    %p216 = scmp.ne.s32.totalorder %s202, %s203
    %p217 = scmp.eq.s32.totalorder %s22, 1
    %p218 = por %p216, %p217
    %p220 = scmp.ne.s32.totalorder %s203, %s219
    %p221 = scmp.eq.s32.totalorder %s22, 0
    %p222 = por %p220, %p221
    %s223 = ssub.s32 %s16, %s23
    %p224 = scmp.eq.s32.totalorder %s223, 0
    %s226 = sadd.s32 %s225, 1
    %s227 = scalar_select %p224, %s225, %s226
    %p230 = pneg %p224
    %p231 = scmp.eq.s32.totalorder %s16, 1
    %p232 = por %p230, %p231
    %p233 = scmp.ne.s32.totalorder %s225, %s228
    %p234 = scmp.eq.s32.totalorder %s16, 0
    %p235 = por %p233, %p234
    %p236 = scmp.ne.s32.totalorder %s225, %s228
    %p237 = scmp.eq.s32.totalorder %s21, 1
    %p238 = por %p236, %p237
    %p239 = scmp.ne.s32.totalorder %s228, %s229
    %p240 = scmp.eq.s32.totalorder %s21, 0
    %p241 = por %p239, %p240
    %p242 = scmp.ne.s32.totalorder %s228, %s229
    %p243 = scmp.eq.s32.totalorder %s22, 1
    %p244 = por %p242, %p243
    %p246 = scmp.ne.s32.totalorder %s229, %s245
    %p247 = scmp.eq.s32.totalorder %s22, 0
    %p248 = por %p246, %p247
    %p249 = scmp.le.s32.totalorder 1, %s16
    %p250 = scmp.lt.s32.totalorder %s16, 3
    %p251 = pnand %p249, %p250
    %p252 = pneg %p251
    // Predicated region
    $region9: #{idlmm_forward.2} parent=5 // pred_check
      _
    $region10: #{idlmm_forward.2} parent=5 // pred_check_branch
      %254 = sbr.rel (%p251) target = $region12
    $region11: #{idlmm_forward.2} parent=5 // pred_region
      %s255 = ssub.s32 %s16, 1
      // Predicated region
      $region13: #{idlmm_forward.2} parent=11 // pred_check
        %p256 = pneg %p63
      $region14: #{idlmm_forward.2} parent=11 // pred_check_branch
        %258 = sbr.rel (%p256) target = $region16
      $region15: #{idlmm_forward.2} parent=11 // pred_region
        _
      $region16: #{idlmm_forward.2} parent=11 // pred_fallthru
        _
      // Predicated region
      $region17: #{idlmm_forward.2} parent=11 // pred_check
        %p259 = pneg %p84
      $region18: #{idlmm_forward.2} parent=11 // pred_check_branch
        %261 = sbr.rel (%p259) target = $region20
      $region19: #{idlmm_forward.2} parent=11 // pred_region
        _
      $region20: #{idlmm_forward.2} parent=11 // pred_fallthru
        _
      // Predicated region
      $region21: #{idlmm_forward.2} parent=11 // pred_check
        %p262 = pneg %p105
      $region22: #{idlmm_forward.2} parent=11 // pred_check_branch
        %264 = sbr.rel (%p262) target = $region24
      $region23: #{idlmm_forward.2} parent=11 // pred_region
        _
      $region24: #{idlmm_forward.2} parent=11 // pred_fallthru
        _
      // Predicated region
      $region25: #{idlmm_forward.2} parent=11 // pred_check
        %p265 = pneg %p126
      $region26: #{idlmm_forward.2} parent=11 // pred_check_branch
        %267 = sbr.rel (%p265) target = $region28
      $region27: #{idlmm_forward.2} parent=11 // pred_region
        _
      $region28: #{idlmm_forward.2} parent=11 // pred_fallthru
        _
      // Predicated region
      $region29: #{idlmm_forward.2} parent=11 // pred_check
        %p268 = pneg %p147
      $region30: #{idlmm_forward.2} parent=11 // pred_check_branch
        %270 = sbr.rel (%p268) target = $region32
      $region31: #{idlmm_forward.2} parent=11 // pred_region
        _
      $region32: #{idlmm_forward.2} parent=11 // pred_fallthru
        _
      // Predicated region
      $region33: #{idlmm_forward.2} parent=11 // pred_check
        %p271 = pneg %p168
      $region34: #{idlmm_forward.2} parent=11 // pred_check_branch
        %273 = sbr.rel (%p271) target = $region36
      $region35: #{idlmm_forward.2} parent=11 // pred_region
        _
      $region36: #{idlmm_forward.2} parent=11 // pred_fallthru
        _
      // Predicated region
      $region37: #{idlmm_forward.2} parent=11 // pred_check
        %p274 = pneg %p189
      $region38: #{idlmm_forward.2} parent=11 // pred_check_branch
        %276 = sbr.rel (%p274) target = $region40
      $region39: #{idlmm_forward.2} parent=11 // pred_region
        _
      $region40: #{idlmm_forward.2} parent=11 // pred_fallthru
        _
    $region12: #{idlmm_forward.2} parent=5 // pred_fallthru
      _
    %p277 = scmp.lt.s32.totalorder %s16, 2
    // Predicated region
    $region41: #{idlmm_forward.2} parent=5 // pred_check
      %p278 = pneg %p277
    $region42: #{idlmm_forward.2} parent=5 // pred_check_branch
      %280 = sbr.rel (%p278) target = $region44
    $region43: #{idlmm_forward.2} parent=5 // pred_region
      // Predicated region
      $region45: #{idlmm_forward.2} parent=43 // pred_check
        %p281 = pneg %p36
      $region46: #{idlmm_forward.2} parent=43 // pred_check_branch
        %283 = sbr.rel (%p281) target = $region48
      $region47: #{idlmm_forward.2} parent=43 // pred_region
        %s284 = smul.u32 12, %s16
        %p285 = scmp.lt.s32.totalorder %s284, 23
        %s286 = scalar_select %p285, %s284, 23
        %s287 = smul.addr %s286, 8
        %s288 = scalar_lea.vmem %s0, %s287
        %s289 = smul.u32 12, %s16
      $region48: #{idlmm_forward.2} parent=43 // pred_fallthru
        _
    $region44: #{idlmm_forward.2} parent=5 // pred_fallthru
      _
    %p290 = scmp.le.s32.totalorder 1, %s16
    %p291 = scmp.lt.s32.totalorder %s16, 3
    %p292 = pnand %p290, %p291
    %p293 = pneg %p292
    // Predicated region
    $region49: #{idlmm_forward.2} parent=5 // pred_check
      _
    $region50: #{idlmm_forward.2} parent=5 // pred_check_branch
      %295 = sbr.rel (%p292) target = $region52
    $region51: #{idlmm_forward.2} parent=5 // pred_region
      %s296 = ssub.s32 %s16, 1
      %s297 = smul.u32 12, %s21
      %p298 = scmp.lt.s32.totalorder %s297, 23
      %s299 = scalar_select %p298, %s297, 23
      %s300 = smul.addr %s299, 8
      %s301 = scalar_lea.vmem %s0, %s300
      %p302 = pneg %p42
      %p303 = pneg %p39
      %p304 = pneg %p63
      %p305 = pneg %p60
      %p306 = pneg %p84
      %p307 = pneg %p81
      %p308 = pneg %p105
      %p309 = pneg %p102
      %p310 = pneg %p126
      %p311 = pneg %p123
      %p312 = pneg %p147
      %p313 = pneg %p144
      %p314 = pneg %p168
      %p315 = pneg %p165
      %p316 = pneg %p189
      %p317 = pneg %p186
      %p318 = pneg %p215
      %p319 = pneg %p212
      %s320 = smul.u32 2, %s21
      %p321 = scmp.lt.s32.totalorder %s320, 3
      %s322 = scalar_select %p321, %s320, 3
      %s323 = smul.addr %s322, 6
      %s324 = smul.addr %s323, 8
      %s325 = scalar_lea.vmem %s8, %s324
      %p326 = pneg %p241
      %p327 = pneg %p238
      %p328 = scmp.lt.s32.totalorder %s21, 1
      %s329 = scalar_select %p328, %s21, 1
      %s330 = smul.addr %s329, 2
      %s331 = scalar_lea.vmem %s9, %s330
      %s332 = smul.u32 12, %s21
      %p333 = scmp.lt.s32.totalorder %s332, 23
      %s334 = scalar_select %p333, %s332, 23
      %s335 = smul.addr %s334, 8
      %s336 = scalar_lea.vmem %s0, %s335
      %s337 = smul.u32 12, %s21
      %s338 = smul.u32 2, %s21
      %p339 = scmp.lt.s32.totalorder %s338, 3
      %s340 = scalar_select %p339, %s338, 3
      %s341 = smul.addr %s340, 6
      %s342 = smul.addr %s341, 8
      %s343 = scalar_lea.vmem %s8, %s342
      %s344 = smul.u32 2, %s21
      %p345 = scmp.lt.s32.totalorder %s21, 1
      %s346 = scalar_select %p345, %s21, 1
      %s347 = smul.addr %s346, 2
      %s348 = scalar_lea.vmem %s9, %s347
      %v350 = vld [vmem:[%s336] sm:$0xff]
      %v351 = vld [vmem:[%s336 + $0x8] sm:$0xff]
      %v352 = vld [vmem:[%s336 + $0x10] sm:$0xff]
      %v353 = vld [vmem:[%s336 + $0x18] sm:$0xff]
      %v354 = vld [vmem:[%s336 + $0x20] sm:$0xff]
      %v355 = vld [vmem:[%s336 + $0x28] sm:$0xff]
      %v356 = vld [vmem:[%s336 + $0x30] sm:$0xff]
      %v357 = vld [vmem:[%s336 + $0x38] sm:$0xff]
      %v358 = vld [vmem:[%s336 + $0x40] sm:$0xff]
      %v359 = vld [vmem:[%s336 + $0x48] sm:$0xff]
      %v360 = vld [vmem:[%s336 + $0x50] sm:$0xff]
      %v361 = vld [vmem:[%s336 + $0x58] sm:$0xff]
      %v362 = vpack.c.bf16 %v351, %v350
      %v363 = vpack.c.bf16 %v353, %v352
      %v364 = vpack.c.bf16 %v355, %v354
      %v365 = vpack.c.bf16 %v357, %v356
      %v366 = vpack.c.bf16 %v359, %v358
      %v367 = vpack.c.bf16 %v361, %v360
      %v368 = vld [vmem:[%s1] sm:$0xf]
      %v369 = vld [vmem:[%s1 + $0x4] sm:$0xf]
      %v370 = vld [vmem:[%s1 + $0x8] sm:$0xf]
      %v371 = vld [vmem:[%s1 + $0xc] sm:$0xf]
      %v372 = vld [vmem:[%s2] sm:$0x1]
      %v374 = vlaneseq
      %v375 = vshrl.u32 %v374, 7
      %v376 = vsub.s32 0, %v375
      %v377 = vrot.slane %v372, %v376
      %v383 = vunpack.c.l.b16 %v368
      %v384 = vunpack.c.l.b16 %v369
      %v385 = vunpack.c.l.b16 %v370
      %v386 = vunpack.c.l.b16 %v371
      %v387 = vpack.c.b16 %v384, %v383
      %v388 = vpack.c.b16 %v386, %v385
      %vm391 = vcmask 261120
      %v393 = vsel %vm391, %v362, 0
      %v396 = vsel %vm391, %v363, 0
      %v399 = vsel %vm391, %v364, 0
      %v402 = vsel %vm391, %v365, 0
      %v405 = vsel %vm391, %v366, 0
      %v408 = vsel %vm391, %v367, 0
      %410 = vmatprep.subr.bf16.mxu0 0
      %411 = vmatpush1.bf16.msra.mxu0 %v387
      %412 = vmatprep.subr.bf16.mxu0 0
      %413 = vmatpush1.bf16.msra.mxu0 %v388
      %414 = vmatprep.subr.bf16.mxu0 0
      %415 = vmatpush1.bf16.msra.mxu0 0
      %416 = vmatprep.subr.bf16.mxu0 0
      %417 = vmatpush1.bf16.msra.mxu0 0
      %418 = vmatprep.subr.bf16.mxu0 0
      %419 = vmatpush1.bf16.msra.mxu0 0
      %420 = vmatprep.subr.bf16.mxu0 0
      %421 = vmatpush1.bf16.msra.mxu0 0
      %422 = vmatprep.subr.bf16.mxu0 0
      %423 = vmatpush1.bf16.msra.mxu0 0
      %424 = vmatprep.subr.bf16.mxu0 0
      %425 = vmatpush1.bf16.msra.mxu0 0
      %426 = vmatprep.subr.bf16.mxu0 0
      %427 = vmatpush1.bf16.msra.mxu0 0
      %428 = vmatprep.subr.bf16.mxu0 0
      %429 = vmatpush1.bf16.msra.mxu0 0
      %430 = vmatprep.subr.bf16.mxu0 0
      %431 = vmatpush1.bf16.msra.mxu0 0
      %432 = vmatprep.subr.bf16.mxu0 0
      %433 = vmatpush1.bf16.msra.mxu0 0
      %434 = vmatprep.subr.bf16.mxu0 0
      %435 = vmatpush1.bf16.msra.mxu0 0
      %436 = vmatprep.subr.bf16.mxu0 0
      %437 = vmatpush1.bf16.msra.mxu0 0
      %438 = vmatprep.subr.bf16.mxu0 0
      %439 = vmatpush1.bf16.msra.mxu0 0
      %440 = vmatprep.subr.bf16.mxu0 0
      %441 = vmatpush1.bf16.msra.mxu0 0
      %442 = vmatprep.mubr.bf16.mxu0 0
      %443 = vmatmul.mubr.bf16.gmra.mrb[0].mxu0 %v393
      %v444 = vpop.f32.mrb[0].mxu0
      %v445 = vadd.f32 %v377, %v444
      %v446 = vpop.f32.mrb[0].mxu0
      %v447 = vpop.f32.mrb[0].mxu0
      %v448 = vadd.f32 %v377, %v447
      %v449 = vpop.f32.mrb[0].mxu0
      %450 = vmatprep.mubr.bf16.mxu0 0
      %451 = vmatmul.mubr.bf16.gmra.mrb[0].mxu0 %v396
      %v452 = vpop.f32.mrb[0].mxu0
      %v453 = vadd.f32 %v377, %v452
      %v454 = vpop.f32.mrb[0].mxu0
      %v455 = vpop.f32.mrb[0].mxu0
      %v456 = vadd.f32 %v377, %v455
      %v457 = vpop.f32.mrb[0].mxu0
      %458 = vmatprep.mubr.bf16.mxu0 0
      %459 = vmatmul.mubr.bf16.gmra.mrb[0].mxu0 %v399
      %v460 = vpop.f32.mrb[0].mxu0
      %v461 = vadd.f32 %v377, %v460
      %v462 = vpop.f32.mrb[0].mxu0
      %v463 = vpop.f32.mrb[0].mxu0
      %v464 = vadd.f32 %v377, %v463
      %v465 = vpop.f32.mrb[0].mxu0
      %466 = vmatprep.mubr.bf16.mxu0 0
      %467 = vmatmul.mubr.bf16.gmra.mrb[0].mxu0 %v402
      %v468 = vpop.f32.mrb[0].mxu0
      %v469 = vadd.f32 %v377, %v468
      %v470 = vpop.f32.mrb[0].mxu0
      %v471 = vpop.f32.mrb[0].mxu0
      %v472 = vadd.f32 %v377, %v471
      %v473 = vpop.f32.mrb[0].mxu0
      %474 = vmatprep.mubr.bf16.mxu0 0
      %475 = vmatmul.mubr.bf16.gmra.mrb[0].mxu0 %v405
      %v476 = vpop.f32.mrb[0].mxu0
      %v477 = vadd.f32 %v377, %v476
      %v478 = vpop.f32.mrb[0].mxu0
      %v479 = vpop.f32.mrb[0].mxu0
      %v480 = vadd.f32 %v377, %v479
      %v481 = vpop.f32.mrb[0].mxu0
      %482 = vmatprep.mubr.bf16.mxu0 0
      %483 = vmatmul.mubr.bf16.gmra.mrb[0].mxu0 %v408
      %v484 = vpop.f32.mrb[0].mxu0
      %v485 = vadd.f32 %v377, %v484
      %v486 = vpop.f32.mrb[0].mxu0
      %v487 = vpop.f32.mrb[0].mxu0
      %v488 = vadd.f32 %v377, %v487
      %v489 = vpop.f32.mrb[0].mxu0
      %490 = vdwg.mxu0
      %vm491 = vcmask 785408
      %492 = vst.msk [vmem:[#allocation2] sm:$0xff] %vm491, %v445
      %493 = vst.msk [vmem:[#allocation2 + $0x8] sm:$0xff] %vm491, %v448
      %494 = vst.msk [vmem:[#allocation2 + $0x10] sm:$0xff] %vm491, %v453
      %495 = vst.msk [vmem:[#allocation2 + $0x18] sm:$0xff] %vm491, %v456
      %496 = vst.msk [vmem:[#allocation2 + $0x20] sm:$0xff] %vm491, %v461
      %497 = vst.msk [vmem:[#allocation2 + $0x28] sm:$0xff] %vm491, %v464
      %498 = vst.msk [vmem:[#allocation2 + $0x30] sm:$0xff] %vm491, %v469
      %499 = vst.msk [vmem:[#allocation2 + $0x38] sm:$0xff] %vm491, %v472
      %500 = vst.msk [vmem:[#allocation2 + $0x40] sm:$0xff] %vm491, %v477
      %501 = vst.msk [vmem:[#allocation2 + $0x48] sm:$0xff] %vm491, %v480
      %502 = vst.msk [vmem:[#allocation2 + $0x50] sm:$0xff] %vm491, %v485
      %503 = vst.msk [vmem:[#allocation2 + $0x58] sm:$0xff] %vm491, %v488
      %v504 = vlaneseq
      %v505 = vand.u32 %v504, 127
      %vm506 = vcmp.lt.s32.totalorder %v505, 44
      %v507 = vld [vmem:[#allocation2] sm:$0xff]
      %v508 = vld [vmem:[#allocation2 + $0x8] sm:$0xff]
      %v509 = vld [vmem:[#allocation2 + $0x10] sm:$0xff]
      %v510 = vld [vmem:[#allocation2 + $0x18] sm:$0xff]
      %v511 = vld [vmem:[#allocation2 + $0x20] sm:$0xff]
      %v512 = vld [vmem:[#allocation2 + $0x28] sm:$0xff]
      %519 = vrot.lane.b32.xlu0 %v507, 96
      %v520 = vpop.permute.xlu0 %519
      %521 = vrot.lane.b32.xlu0 %v508, 96
      %v522 = vpop.permute.xlu0 %521
      %523 = vrot.lane.b32.xlu0 %v509, 96
      %v524 = vpop.permute.xlu0 %523
      %525 = vrot.lane.b32.xlu0 %v510, 96
      %v526 = vpop.permute.xlu0 %525
      %527 = vrot.lane.b32.xlu0 %v511, 96
      %v528 = vpop.permute.xlu0 %527
      %529 = vrot.lane.b32.xlu0 %v512, 96
      %v530 = vpop.permute.xlu0 %529
      %vm531 = vcmask 64512
      %v532 = vsel %vm531, %v507, 0
      %v534 = vsel %vm531, %v508, 0
      %v536 = vsel %vm531, %v509, 0
      %v538 = vsel %vm531, %v510, 0
      %v540 = vsel %vm531, %v511, 0
      %v542 = vsel %vm531, %v512, 0
      %v544 = vsel %vm531, %v520, 0
      %v546 = vsel %vm531, %v522, 0
      %v548 = vsel %vm531, %v524, 0
      %v550 = vsel %vm531, %v526, 0
      %v552 = vsel %vm531, %v528, 0
      %v554 = vsel %vm531, %v530, 0
      %556 = vmatprep.subr.mxu0 0.0
      %557 = vmatpush1.xpose.msra.mxu0 %v544
      %558 = vmatprep.subr.mxu0 0.0
      %559 = vmatpush1.xpose.msra.mxu0 %v546
      %560 = vmatprep.subr.mxu0 0.0
      %561 = vmatpush1.xpose.msra.mxu0 %v548
      %562 = vmatprep.subr.mxu0 0.0
      %563 = vmatpush1.xpose.msra.mxu0 %v550
      %564 = vmatprep.subr.mxu0 0.0
      %565 = vmatpush1.xpose.msra.mxu0 %v552
      %566 = vmatprep.subr.mxu0 0.0
      %567 = vmatpush1.xpose.msra.mxu0 %v554
      %568 = vmatprep.subr.mxu0 0.0
      %569 = vmatpush1.xpose.msra.mxu0 0.0
      %570 = vmatprep.subr.mxu0 0.0
      %571 = vmatpush1.xpose.msra.mxu0 0.0
      %572 = vmatprep.subr.mxu0 0.0
      %573 = vmatpush1.xpose.msra.mxu0 0.0
      %574 = vmatprep.subr.mxu0 0.0
      %575 = vmatpush1.xpose.msra.mxu0 0.0
      %576 = vmatprep.subr.mxu0 0.0
      %577 = vmatpush1.xpose.msra.mxu0 0.0
      %578 = vmatprep.subr.mxu0 0.0
      %579 = vmatpush1.xpose.msra.mxu0 0.0
      %580 = vmatprep.subr.mxu0 0.0
      %581 = vmatpush1.xpose.msra.mxu0 0.0
      %582 = vmatprep.subr.mxu0 0.0
      %583 = vmatpush1.xpose.msra.mxu0 0.0
      %584 = vmatprep.subr.mxu0 0.0
      %585 = vmatpush1.xpose.msra.mxu0 0.0
      %586 = vmatprep.subr.mxu0 0.0
      %587 = vmatpush1.xpose.msra.mxu0 0.0
      %588 = vmatprep.subr.mxu0 0.0
      %589 = vmatpush1.xpose.msra.mxu0 0.0
      %590 = vmatprep.subr.mxu0 0.0
      %591 = vmatpush1.xpose.msra.mxu0 0.0
      %592 = vmatprep.subr.mxu0 0.0
      %593 = vmatpush1.xpose.msra.mxu0 0.0
      %594 = vmatprep.subr.mxu0 0.0
      %595 = vmatpush1.xpose.msra.mxu0 0.0
      %596 = vmatprep.subr.mxu0 0.0
      %597 = vmatpush1.xpose.msra.mxu0 0.0
      %598 = vmatprep.subr.mxu0 0.0
      %599 = vmatpush1.xpose.msra.mxu0 0.0
      %600 = vmatprep.subr.mxu0 0.0
      %601 = vmatpush1.xpose.msra.mxu0 0.0
      %602 = vmatprep.subr.mxu0 0.0
      %603 = vmatpush1.xpose.msra.mxu0 0.0
      %604 = vmatprep.subr.mxu0 0.0
      %605 = vmatpush1.xpose.msra.mxu0 0.0
      %606 = vmatprep.subr.mxu0 0.0
      %607 = vmatpush1.xpose.msra.mxu0 0.0
      %608 = vmatprep.subr.mxu0 0.0
      %609 = vmatpush1.xpose.msra.mxu0 0.0
      %610 = vmatprep.subr.mxu0 0.0
      %611 = vmatpush1.xpose.msra.mxu0 0.0
      %612 = vmatprep.subr.mxu0 0.0
      %613 = vmatpush1.xpose.msra.mxu0 0.0
      %614 = vmatprep.subr.mxu0 0.0
      %615 = vmatpush1.xpose.msra.mxu0 0.0
      %616 = vmatprep.subr.mxu0 0.0
      %617 = vmatpush1.xpose.msra.mxu0 0.0
      %618 = vmatprep.subr.mxu0 0.0
      %619 = vmatpush1.xpose.msra.mxu0 0.0
      %620 = vmatprep.mubr.f32.mxu0 0.0
      %621 = vmatmul.mubr.f32.gmra.mrb[0].mxu0 %v532
      %v622 = vpop.f32.mrb[0].mxu0
      %v623 = vadd.f32 0.0, %v622
      %v624 = vpop.f32.mrb[0].mxu0
      %625 = vmatprep.mubr.f32.mxu0 0.0
      %626 = vmatmul.mubr.f32.gmra.mrb[0].mxu0 %v534
      %v627 = vpop.f32.mrb[0].mxu0
      %v628 = vadd.f32 0.0, %v627
      %v629 = vpop.f32.mrb[0].mxu0
      %630 = vmatprep.mubr.f32.mxu0 0.0
      %631 = vmatmul.mubr.f32.gmra.mrb[0].mxu0 %v536
      %v632 = vpop.f32.mrb[0].mxu0
      %v633 = vadd.f32 0.0, %v632
      %v634 = vpop.f32.mrb[0].mxu0
      %635 = vmatprep.mubr.f32.mxu0 0.0
      %636 = vmatmul.mubr.f32.gmra.mrb[0].mxu0 %v538
      %v637 = vpop.f32.mrb[0].mxu0
      %v638 = vadd.f32 0.0, %v637
      %v639 = vpop.f32.mrb[0].mxu0
      %640 = vmatprep.mubr.f32.mxu0 0.0
      %641 = vmatmul.mubr.f32.gmra.mrb[0].mxu0 %v540
      %v642 = vpop.f32.mrb[0].mxu0
      %v643 = vadd.f32 0.0, %v642
      %v644 = vpop.f32.mrb[0].mxu0
      %645 = vmatprep.mubr.f32.mxu0 0.0
      %646 = vmatmul.mubr.f32.gmra.mrb[0].mxu0 %v542
      %v647 = vpop.f32.mrb[0].mxu0
      %v648 = vadd.f32 0.0, %v647
      %v649 = vpop.f32.mrb[0].mxu0
      %650 = vdwg.mxu0
      %v651 = vsel %vm506, %v623, -1e+30
      %v652 = vsel %vm506, %v628, -1e+30
      %v653 = vsel %vm506, %v633, -1e+30
      %v654 = vsel %vm506, %v638, -1e+30
      %v655 = vsel %vm506, %v643, -1e+30
      %v656 = vsel %vm506, %v648, -1e+30
      %vm657 = vcmask 392192
      %v658 = vsel %vm657, %v651, -inf
      %659 = vmax.xlane.f32.xlu0 %v658
      %v660 = vpop.xlane.xlu0 %659
      %v661 = vsel %vm657, %v652, -inf
      %662 = vmax.xlane.f32.xlu0 %v661
      %v663 = vpop.xlane.xlu0 %662
      %v664 = vsel %vm657, %v653, -inf
      %665 = vmax.xlane.f32.xlu0 %v664
      %v666 = vpop.xlane.xlu0 %665
      %v667 = vsel %vm657, %v654, -inf
      %668 = vmax.xlane.f32.xlu0 %v667
      %v669 = vpop.xlane.xlu0 %668
      %v670 = vsel %vm657, %v655, -inf
      %671 = vmax.xlane.f32.xlu0 %v670
      %v672 = vpop.xlane.xlu0 %671
      %v673 = vsel %vm657, %v656, -inf
      %674 = vmax.xlane.f32.xlu0 %v673
      %v675 = vpop.xlane.xlu0 %674
      %v676 = vsub.f32 %v651, %v660
      %v677 = vsub.f32 %v652, %v663
      %v678 = vsub.f32 %v653, %v666
      %v679 = vsub.f32 %v654, %v669
      %v680 = vsub.f32 %v655, %v672
      %v681 = vsub.f32 %v656, %v675
      %v682 = vmul.f32 %v676, 1.442695
      %v683 = vpow.pop %v682
      %v684 = vmul.f32 %v677, 1.442695
      %v685 = vpow.pop %v684
      %v686 = vmul.f32 %v678, 1.442695
      %v687 = vpow.pop %v686
      %v688 = vmul.f32 %v679, 1.442695
      %v689 = vpow.pop %v688
      %v690 = vmul.f32 %v680, 1.442695
      %v691 = vpow.pop %v690
      %v692 = vmul.f32 %v681, 1.442695
      %v693 = vpow.pop %v692
      %v694 = vsel %vm657, %v683, 0.0
      %695 = vadd.xlane.f32.xlu0 %v694
      %v696 = vpop.xlane.xlu0 %695
      %v697 = vsel %vm657, %v685, 0.0
      %698 = vadd.xlane.f32.xlu0 %v697
      %v699 = vpop.xlane.xlu0 %698
      %v700 = vsel %vm657, %v687, 0.0
      %701 = vadd.xlane.f32.xlu0 %v700
      %v702 = vpop.xlane.xlu0 %701
      %v703 = vsel %vm657, %v689, 0.0
      %704 = vadd.xlane.f32.xlu0 %v703
      %v705 = vpop.xlane.xlu0 %704
      %v706 = vsel %vm657, %v691, 0.0
      %707 = vadd.xlane.f32.xlu0 %v706
      %v708 = vpop.xlane.xlu0 %707
      %v709 = vsel %vm657, %v693, 0.0
      %710 = vadd.xlane.f32.xlu0 %v709
      %v711 = vpop.xlane.xlu0 %710
      %v712 = vrcp.pop %v696
      %v713 = vmul.f32 %v683, %v712
      %v714 = vrcp.pop %v699
      %v715 = vmul.f32 %v685, %v714
      %v716 = vrcp.pop %v702
      %v717 = vmul.f32 %v687, %v716
      %v718 = vrcp.pop %v705
      %v719 = vmul.f32 %v689, %v718
      %v720 = vrcp.pop %v708
      %v721 = vmul.f32 %v691, %v720
      %v722 = vrcp.pop %v711
      %v723 = vmul.f32 %v693, %v722
      %v724 = vadd.f32 %v713, 0.0
      %v725 = vadd.f32 %v715, 0.0
      %v726 = vadd.f32 %v717, 0.0
      %v727 = vadd.f32 %v719, 0.0
      %v728 = vadd.f32 %v721, 0.0
      %v729 = vadd.f32 %v723, 0.0
      %v730 = vpack.c.bf16 %v715, %v713
      %v731 = vpack.c.bf16 %v719, %v717
      %v732 = vpack.c.bf16 %v723, %v721
      %v733 = vpack.c.bf16 %v508, %v507
      %v734 = vpack.c.bf16 %v510, %v509
      %v735 = vpack.c.bf16 %v512, %v511
      %739 = vrot.lane.b32.xlu0 %v733, 64
      %v740 = vpop.permute.xlu0 %739
      %741 = vrot.lane.b32.xlu0 %v734, 64
      %v742 = vpop.permute.xlu0 %741
      %743 = vrot.lane.b32.xlu0 %v735, 64
      %v744 = vpop.permute.xlu0 %743
      %v749 = vsel %vm657, %v730, 0
      %v752 = vsel %vm657, %v731, 0
      %v755 = vsel %vm657, %v732, 0
      %757 = vmatprep.subr.bf16.mxu0 0
      %758 = vmatpush1.bf16.msra.mxu0 %v740
      %759 = vmatprep.subr.bf16.mxu0 0
      %760 = vmatpush1.bf16.msra.mxu0 %v742
      %761 = vmatprep.subr.bf16.mxu0 0
      %762 = vmatpush1.bf16.msra.mxu0 %v744
      %763 = vmatprep.subr.bf16.mxu0 0
      %764 = vmatpush1.bf16.msra.mxu0 0
      %765 = vmatprep.subr.bf16.mxu0 0
      %766 = vmatpush1.bf16.msra.mxu0 0
      %767 = vmatprep.subr.bf16.mxu0 0
      %768 = vmatpush1.bf16.msra.mxu0 0
      %769 = vmatprep.subr.bf16.mxu0 0
      %770 = vmatpush1.bf16.msra.mxu0 0
      %771 = vmatprep.subr.bf16.mxu0 0
      %772 = vmatpush1.bf16.msra.mxu0 0
      %773 = vmatprep.subr.bf16.mxu0 0
      %774 = vmatpush1.bf16.msra.mxu0 0
      %775 = vmatprep.subr.bf16.mxu0 0
      %776 = vmatpush1.bf16.msra.mxu0 0
      %777 = vmatprep.subr.bf16.mxu0 0
      %778 = vmatpush1.bf16.msra.mxu0 0
      %779 = vmatprep.subr.bf16.mxu0 0
      %780 = vmatpush1.bf16.msra.mxu0 0
      %781 = vmatprep.subr.bf16.mxu0 0
      %782 = vmatpush1.bf16.msra.mxu0 0
      %783 = vmatprep.subr.bf16.mxu0 0
      %784 = vmatpush1.bf16.msra.mxu0 0
      %785 = vmatprep.subr.bf16.mxu0 0
      %786 = vmatpush1.bf16.msra.mxu0 0
      %787 = vmatprep.subr.bf16.mxu0 0
      %788 = vmatpush1.bf16.msra.mxu0 0
      %789 = vmatprep.mubr.bf16.mxu0 0
      %790 = vmatmul.mubr.bf16.gmra.mrb[0].mxu0 %v749
      %v791 = vpop.f32.mrb[0].mxu0
      %v792 = vadd.f32 0.0, %v791
      %v793 = vpop.f32.mrb[0].mxu0
      %v794 = vpop.f32.mrb[0].mxu0
      %v795 = vadd.f32 0.0, %v794
      %v796 = vpop.f32.mrb[0].mxu0
      %797 = vmatprep.mubr.bf16.mxu0 0
      %798 = vmatmul.mubr.bf16.gmra.mrb[0].mxu0 %v752
      %v799 = vpop.f32.mrb[0].mxu0
      %v800 = vadd.f32 0.0, %v799
      %v801 = vpop.f32.mrb[0].mxu0
      %v802 = vpop.f32.mrb[0].mxu0
      %v803 = vadd.f32 0.0, %v802
      %v804 = vpop.f32.mrb[0].mxu0
      %805 = vmatprep.mubr.bf16.mxu0 0
      %806 = vmatmul.mubr.bf16.gmra.mrb[0].mxu0 %v755
      %v807 = vpop.f32.mrb[0].mxu0
      %v808 = vadd.f32 0.0, %v807
      %v809 = vpop.f32.mrb[0].mxu0
      %v810 = vpop.f32.mrb[0].mxu0
      %v811 = vadd.f32 0.0, %v810
      %v812 = vpop.f32.mrb[0].mxu0
      %813 = vdwg.mxu0
      %v814 = vpack.c.bf16 %v795, %v792
      %v815 = vpack.c.bf16 %v803, %v800
      %v816 = vpack.c.bf16 %v811, %v808
      %v817 = vld [vmem:[%s3] sm:$0xf]
      %818 = vrot.lane.b32.xlu0 %v507, 120
      %v819 = vpop.permute.xlu0 %818
      %820 = vrot.lane.b32.xlu0 %v508, 120
      %v821 = vpop.permute.xlu0 %820
      %822 = vrot.lane.b32.xlu0 %v509, 120
      %v823 = vpop.permute.xlu0 %822
      %824 = vrot.lane.b32.xlu0 %v510, 120
      %v825 = vpop.permute.xlu0 %824
      %826 = vrot.lane.b32.xlu0 %v511, 120
      %v827 = vpop.permute.xlu0 %826
      %828 = vrot.lane.b32.xlu0 %v512, 120
      %v829 = vpop.permute.xlu0 %828
      %830 = vrot.lane.b32.xlu0 %v507, 88
      %v831 = vpop.permute.xlu0 %830
      %832 = vrot.lane.b32.xlu0 %v508, 88
      %v833 = vpop.permute.xlu0 %832
      %834 = vrot.lane.b32.xlu0 %v509, 88
      %v835 = vpop.permute.xlu0 %834
      %836 = vrot.lane.b32.xlu0 %v510, 88
      %v837 = vpop.permute.xlu0 %836
      %838 = vrot.lane.b32.xlu0 %v511, 88
      %v839 = vpop.permute.xlu0 %838
      %840 = vrot.lane.b32.xlu0 %v512, 88
      %v841 = vpop.permute.xlu0 %840
      %v842 = vsel %vm531, %v819, 0
      %v844 = vsel %vm531, %v821, 0
      %v846 = vsel %vm531, %v823, 0
      %v848 = vsel %vm531, %v825, 0
      %v850 = vsel %vm531, %v827, 0
      %v852 = vsel %vm531, %v829, 0
      %v854 = vsel %vm531, %v831, 0
      %v856 = vsel %vm531, %v833, 0
      %v858 = vsel %vm531, %v835, 0
      %v860 = vsel %vm531, %v837, 0
      %v862 = vsel %vm531, %v839, 0
      %v864 = vsel %vm531, %v841, 0
      %866 = vmatprep.subr.mxu0 0.0
      %867 = vmatpush1.xpose.msra.mxu0 %v854
      %868 = vmatprep.subr.mxu0 0.0
      %869 = vmatpush1.xpose.msra.mxu0 %v856
      %870 = vmatprep.subr.mxu0 0.0
      %871 = vmatpush1.xpose.msra.mxu0 %v858
      %872 = vmatprep.subr.mxu0 0.0
      %873 = vmatpush1.xpose.msra.mxu0 %v860
      %874 = vmatprep.subr.mxu0 0.0
      %875 = vmatpush1.xpose.msra.mxu0 %v862
      %876 = vmatprep.subr.mxu0 0.0
      %877 = vmatpush1.xpose.msra.mxu0 %v864
      %878 = vmatprep.subr.mxu0 0.0
      %879 = vmatpush1.xpose.msra.mxu0 0.0
      %880 = vmatprep.subr.mxu0 0.0
      %881 = vmatpush1.xpose.msra.mxu0 0.0
      %882 = vmatprep.subr.mxu0 0.0
      %883 = vmatpush1.xpose.msra.mxu0 0.0
      %884 = vmatprep.subr.mxu0 0.0
      %885 = vmatpush1.xpose.msra.mxu0 0.0
      %886 = vmatprep.subr.mxu0 0.0
      %887 = vmatpush1.xpose.msra.mxu0 0.0
      %888 = vmatprep.subr.mxu0 0.0
      %889 = vmatpush1.xpose.msra.mxu0 0.0
      %890 = vmatprep.subr.mxu0 0.0
      %891 = vmatpush1.xpose.msra.mxu0 0.0
      %892 = vmatprep.subr.mxu0 0.0
      %893 = vmatpush1.xpose.msra.mxu0 0.0
      %894 = vmatprep.subr.mxu0 0.0
      %895 = vmatpush1.xpose.msra.mxu0 0.0
      %896 = vmatprep.subr.mxu0 0.0
      %897 = vmatpush1.xpose.msra.mxu0 0.0
      %898 = vmatprep.subr.mxu0 0.0
      %899 = vmatpush1.xpose.msra.mxu0 0.0
      %900 = vmatprep.subr.mxu0 0.0
      %901 = vmatpush1.xpose.msra.mxu0 0.0
      %902 = vmatprep.subr.mxu0 0.0
      %903 = vmatpush1.xpose.msra.mxu0 0.0
      %904 = vmatprep.subr.mxu0 0.0
      %905 = vmatpush1.xpose.msra.mxu0 0.0
      %906 = vmatprep.subr.mxu0 0.0
      %907 = vmatpush1.xpose.msra.mxu0 0.0
      %908 = vmatprep.subr.mxu0 0.0
      %909 = vmatpush1.xpose.msra.mxu0 0.0
      %910 = vmatprep.subr.mxu0 0.0
      %911 = vmatpush1.xpose.msra.mxu0 0.0
      %912 = vmatprep.subr.mxu0 0.0
      %913 = vmatpush1.xpose.msra.mxu0 0.0
      %914 = vmatprep.subr.mxu0 0.0
      %915 = vmatpush1.xpose.msra.mxu0 0.0
      %916 = vmatprep.subr.mxu0 0.0
      %917 = vmatpush1.xpose.msra.mxu0 0.0
      %918 = vmatprep.subr.mxu0 0.0
      %919 = vmatpush1.xpose.msra.mxu0 0.0
      %920 = vmatprep.subr.mxu0 0.0
      %921 = vmatpush1.xpose.msra.mxu0 0.0
      %922 = vmatprep.subr.mxu0 0.0
      %923 = vmatpush1.xpose.msra.mxu0 0.0
      %924 = vmatprep.subr.mxu0 0.0
      %925 = vmatpush1.xpose.msra.mxu0 0.0
      %926 = vmatprep.subr.mxu0 0.0
      %927 = vmatpush1.xpose.msra.mxu0 0.0
      %928 = vmatprep.subr.mxu0 0.0
      %929 = vmatpush1.xpose.msra.mxu0 0.0
      %930 = vmatprep.mubr.f32.mxu0 0.0
      %931 = vmatmul.mubr.f32.gmra.mrb[0].mxu0 %v842
      %v932 = vpop.f32.mrb[0].mxu0
      %v933 = vadd.f32 0.0, %v932
      %v934 = vpop.f32.mrb[0].mxu0
      %935 = vmatprep.mubr.f32.mxu0 0.0
      %936 = vmatmul.mubr.f32.gmra.mrb[0].mxu0 %v844
      %v937 = vpop.f32.mrb[0].mxu0
      %v938 = vadd.f32 0.0, %v937
      %v939 = vpop.f32.mrb[0].mxu0
      %940 = vmatprep.mubr.f32.mxu0 0.0
      %941 = vmatmul.mubr.f32.gmra.mrb[0].mxu0 %v846
      %v942 = vpop.f32.mrb[0].mxu0
      %v943 = vadd.f32 0.0, %v942
      %v944 = vpop.f32.mrb[0].mxu0
      %945 = vmatprep.mubr.f32.mxu0 0.0
      %946 = vmatmul.mubr.f32.gmra.mrb[0].mxu0 %v848
      %v947 = vpop.f32.mrb[0].mxu0
      %v948 = vadd.f32 0.0, %v947
      %v949 = vpop.f32.mrb[0].mxu0
      %950 = vmatprep.mubr.f32.mxu0 0.0
      %951 = vmatmul.mubr.f32.gmra.mrb[0].mxu0 %v850
      %v952 = vpop.f32.mrb[0].mxu0
      %v953 = vadd.f32 0.0, %v952
      %v954 = vpop.f32.mrb[0].mxu0
      %955 = vmatprep.mubr.f32.mxu0 0.0
      %956 = vmatmul.mubr.f32.gmra.mrb[0].mxu0 %v852
      %v957 = vpop.f32.mrb[0].mxu0
      %v958 = vadd.f32 0.0, %v957
      %v959 = vpop.f32.mrb[0].mxu0
      %960 = vdwg.mxu0
      %v961 = vsel %vm506, %v933, -1e+30
      %v962 = vsel %vm506, %v938, -1e+30
      %v963 = vsel %vm506, %v943, -1e+30
      %v964 = vsel %vm506, %v948, -1e+30
      %v965 = vsel %vm506, %v953, -1e+30
      %v966 = vsel %vm506, %v958, -1e+30
      %v967 = vsel %vm657, %v961, -inf
      %968 = vmax.xlane.f32.xlu0 %v967
      %v969 = vpop.xlane.xlu0 %968
      %v970 = vsel %vm657, %v962, -inf
      %971 = vmax.xlane.f32.xlu0 %v970
      %v972 = vpop.xlane.xlu0 %971
      %v973 = vsel %vm657, %v963, -inf
      %974 = vmax.xlane.f32.xlu0 %v973
      %v975 = vpop.xlane.xlu0 %974
      %v976 = vsel %vm657, %v964, -inf
      %977 = vmax.xlane.f32.xlu0 %v976
      %v978 = vpop.xlane.xlu0 %977
      %v979 = vsel %vm657, %v965, -inf
      %980 = vmax.xlane.f32.xlu0 %v979
      %v981 = vpop.xlane.xlu0 %980
      %v982 = vsel %vm657, %v966, -inf
      %983 = vmax.xlane.f32.xlu0 %v982
      %v984 = vpop.xlane.xlu0 %983
      %v985 = vsub.f32 %v961, %v969
      %v986 = vsub.f32 %v962, %v972
      %v987 = vsub.f32 %v963, %v975
      %v988 = vsub.f32 %v964, %v978
      %v989 = vsub.f32 %v965, %v981
      %v990 = vsub.f32 %v966, %v984
      %v991 = vmul.f32 %v985, 1.442695
      %v992 = vpow.pop %v991
      %v993 = vmul.f32 %v986, 1.442695
      %v994 = vpow.pop %v993
      %v995 = vmul.f32 %v987, 1.442695
      %v996 = vpow.pop %v995
      %v997 = vmul.f32 %v988, 1.442695
      %v998 = vpow.pop %v997
      %v999 = vmul.f32 %v989, 1.442695
      %v1000 = vpow.pop %v999
      %v1001 = vmul.f32 %v990, 1.442695
      %v1002 = vpow.pop %v1001
      %v1003 = vsel %vm657, %v992, 0.0
      %1004 = vadd.xlane.f32.xlu0 %v1003
      %v1005 = vpop.xlane.xlu0 %1004
      %v1006 = vsel %vm657, %v994, 0.0
      %1007 = vadd.xlane.f32.xlu0 %v1006
      %v1008 = vpop.xlane.xlu0 %1007
      %v1009 = vsel %vm657, %v996, 0.0
      %1010 = vadd.xlane.f32.xlu0 %v1009
      %v1011 = vpop.xlane.xlu0 %1010
      %v1012 = vsel %vm657, %v998, 0.0
      %1013 = vadd.xlane.f32.xlu0 %v1012
      %v1014 = vpop.xlane.xlu0 %1013
      %v1015 = vsel %vm657, %v1000, 0.0
      %1016 = vadd.xlane.f32.xlu0 %v1015
      %v1017 = vpop.xlane.xlu0 %1016
      %v1018 = vsel %vm657, %v1002, 0.0
      %1019 = vadd.xlane.f32.xlu0 %v1018
      %v1020 = vpop.xlane.xlu0 %1019
      %v1021 = vrcp.pop %v1005
      %v1022 = vmul.f32 %v992, %v1021
      %v1023 = vrcp.pop %v1008
      %v1024 = vmul.f32 %v994, %v1023
      %v1025 = vrcp.pop %v1011
      %v1026 = vmul.f32 %v996, %v1025
      %v1027 = vrcp.pop %v1014
      %v1028 = vmul.f32 %v998, %v1027
      %v1029 = vrcp.pop %v1017
      %v1030 = vmul.f32 %v1000, %v1029
      %v1031 = vrcp.pop %v1020
      %v1032 = vmul.f32 %v1002, %v1031
      %v1033 = vadd.f32 %v724, %v1022
      %v1034 = vadd.f32 %v725, %v1024
      %v1035 = vadd.f32 %v726, %v1026
      %v1036 = vadd.f32 %v727, %v1028
      %v1037 = vadd.f32 %v728, %v1030
      %v1038 = vadd.f32 %v729, %v1032
      %v1039 = vpack.c.bf16 %v1024, %v1022
      %v1040 = vpack.c.bf16 %v1028, %v1026
      %v1041 = vpack.c.bf16 %v1032, %v1030
      %1042 = vrot.lane.b32.xlu0 %v733, 56
      %v1043 = vpop.permute.xlu0 %1042
      %1044 = vrot.lane.b32.xlu0 %v734, 56
      %v1045 = vpop.permute.xlu0 %1044
      %1046 = vrot.lane.b32.xlu0 %v735, 56
      %v1047 = vpop.permute.xlu0 %1046
      %v1052 = vsel %vm657, %v1039, 0
      %v1055 = vsel %vm657, %v1040, 0
      %v1058 = vsel %vm657, %v1041, 0
      %1060 = vmatprep.subr.bf16.mxu0 0
      %1061 = vmatpush1.bf16.msra.mxu0 %v1043
      %1062 = vmatprep.subr.bf16.mxu0 0
      %1063 = vmatpush1.bf16.msra.mxu0 %v1045
      %1064 = vmatprep.subr.bf16.mxu0 0
      %1065 = vmatpush1.bf16.msra.mxu0 %v1047
      %1066 = vmatprep.subr.bf16.mxu0 0
      %1067 = vmatpush1.bf16.msra.mxu0 0
      %1068 = vmatprep.subr.bf16.mxu0 0
      %1069 = vmatpush1.bf16.msra.mxu0 0
      %1070 = vmatprep.subr.bf16.mxu0 0
      %1071 = vmatpush1.bf16.msra.mxu0 0
      %1072 = vmatprep.subr.bf16.mxu0 0
      %1073 = vmatpush1.bf16.msra.mxu0 0
      %1074 = vmatprep.subr.bf16.mxu0 0
      %1075 = vmatpush1.bf16.msra.mxu0 0
      %1076 = vmatprep.subr.bf16.mxu0 0
      %1077 = vmatpush1.bf16.msra.mxu0 0
      %1078 = vmatprep.subr.bf16.mxu0 0
      %1079 = vmatpush1.bf16.msra.mxu0 0
      %1080 = vmatprep.subr.bf16.mxu0 0
      %1081 = vmatpush1.bf16.msra.mxu0 0
      %1082 = vmatprep.subr.bf16.mxu0 0
      %1083 = vmatpush1.bf16.msra.mxu0 0
      %1084 = vmatprep.subr.bf16.mxu0 0
      %1085 = vmatpush1.bf16.msra.mxu0 0
      %1086 = vmatprep.subr.bf16.mxu0 0
      %1087 = vmatpush1.bf16.msra.mxu0 0
      %1088 = vmatprep.subr.bf16.mxu0 0
      %1089 = vmatpush1.bf16.msra.mxu0 0
      %1090 = vmatprep.subr.bf16.mxu0 0
      %1091 = vmatpush1.bf16.msra.mxu0 0
      %1092 = vmatprep.mubr.bf16.mxu0 0
      %1093 = vmatmul.mubr.bf16.gmra.mrb[0].mxu0 %v1052
      %v1094 = vpop.f32.mrb[0].mxu0
      %v1095 = vadd.f32 0.0, %v1094
      %v1096 = vpop.f32.mrb[0].mxu0
      %v1097 = vpop.f32.mrb[0].mxu0
      %v1098 = vadd.f32 0.0, %v1097
      %v1099 = vpop.f32.mrb[0].mxu0
      %1100 = vmatprep.mubr.bf16.mxu0 0
      %1101 = vmatmul.mubr.bf16.gmra.mrb[0].mxu0 %v1055
      %v1102 = vpop.f32.mrb[0].mxu0
      %v1103 = vadd.f32 0.0, %v1102
      %v1104 = vpop.f32.mrb[0].mxu0
      %v1105 = vpop.f32.mrb[0].mxu0
      %v1106 = vadd.f32 0.0, %v1105
      %v1107 = vpop.f32.mrb[0].mxu0
      %1108 = vmatprep.mubr.bf16.mxu0 0
      %1109 = vmatmul.mubr.bf16.gmra.mrb[0].mxu0 %v1058
      %v1110 = vpop.f32.mrb[0].mxu0
      %v1111 = vadd.f32 0.0, %v1110
      %v1112 = vpop.f32.mrb[0].mxu0
      %v1113 = vpop.f32.mrb[0].mxu0
      %v1114 = vadd.f32 0.0, %v1113
      %v1115 = vpop.f32.mrb[0].mxu0
      %1116 = vdwg.mxu0
      %v1117 = vpack.c.bf16 %v1098, %v1095
      %v1118 = vpack.c.bf16 %v1106, %v1103
      %v1119 = vpack.c.bf16 %v1114, %v1111
      %v1120 = vld [vmem:[%s3 + $0x4] sm:$0xf]
      %v1122 = vsel %vm531, %v1117, 0
      %v1125 = vsel %vm531, %v1118, 0
      %v1128 = vsel %vm531, %v1119, 0
      %vm1130 = vcmask 1043456
      %v1132 = vsel %vm1130, %v1120, 0
      %1134 = vmatprep.subr.bf16.mxu0 0
      %1135 = vmatpush1.bf16.msra.mxu0 %v1132
      %1136 = vmatprep.subr.bf16.mxu0 0
      %1137 = vmatpush1.bf16.msra.mxu0 0
      %1138 = vmatprep.subr.bf16.mxu0 0
      %1139 = vmatpush1.bf16.msra.mxu0 0
      %1140 = vmatprep.subr.bf16.mxu0 0
      %1141 = vmatpush1.bf16.msra.mxu0 0
      %1142 = vmatprep.subr.bf16.mxu0 0
      %1143 = vmatpush1.bf16.msra.mxu0 0
      %1144 = vmatprep.subr.bf16.mxu0 0
      %1145 = vmatpush1.bf16.msra.mxu0 0
      %1146 = vmatprep.subr.bf16.mxu0 0
      %1147 = vmatpush1.bf16.msra.mxu0 0
      %1148 = vmatprep.subr.bf16.mxu0 0
      %1149 = vmatpush1.bf16.msra.mxu0 0
      %1150 = vmatprep.subr.bf16.mxu0 0
      %1151 = vmatpush1.bf16.msra.mxu0 0
      %1152 = vmatprep.subr.bf16.mxu0 0
      %1153 = vmatpush1.bf16.msra.mxu0 0
      %1154 = vmatprep.subr.bf16.mxu0 0
      %1155 = vmatpush1.bf16.msra.mxu0 0
      %1156 = vmatprep.subr.bf16.mxu0 0
      %1157 = vmatpush1.bf16.msra.mxu0 0
      %1158 = vmatprep.subr.bf16.mxu0 0
      %1159 = vmatpush1.bf16.msra.mxu0 0
      %1160 = vmatprep.subr.bf16.mxu0 0
      %1161 = vmatpush1.bf16.msra.mxu0 0
      %1162 = vmatprep.subr.bf16.mxu0 0
      %1163 = vmatpush1.bf16.msra.mxu0 0
      %1164 = vmatprep.subr.bf16.mxu0 0
      %1165 = vmatpush1.bf16.msra.mxu0 0
      %1166 = vmatprep.mubr.bf16.mxu0 0
      %1167 = vmatmul.mubr.bf16.gmra.mrb[0].mxu0 %v1122
      %v1168 = vpop.f32.mrb[0].mxu0
      %v1169 = vadd.f32 0.0, %v1168
      %v1170 = vpop.f32.mrb[0].mxu0
      %v1171 = vpop.f32.mrb[0].mxu0
      %v1172 = vadd.f32 0.0, %v1171
      %v1173 = vpop.f32.mrb[0].mxu0
      %1174 = vmatprep.mubr.bf16.mxu0 0
      %1175 = vmatmul.mubr.bf16.gmra.mrb[0].mxu0 %v1125
      %v1176 = vpop.f32.mrb[0].mxu0
      %v1177 = vadd.f32 0.0, %v1176
      %v1178 = vpop.f32.mrb[0].mxu0
      %v1179 = vpop.f32.mrb[0].mxu0
      %v1180 = vadd.f32 0.0, %v1179
      %v1181 = vpop.f32.mrb[0].mxu0
      %1182 = vmatprep.mubr.bf16.mxu0 0
      %1183 = vmatmul.mubr.bf16.gmra.mrb[0].mxu0 %v1128
      %v1184 = vpop.f32.mrb[0].mxu0
      %v1185 = vadd.f32 0.0, %v1184
      %v1186 = vpop.f32.mrb[0].mxu0
      %v1187 = vpop.f32.mrb[0].mxu0
      %v1188 = vadd.f32 0.0, %v1187
      %v1189 = vpop.f32.mrb[0].mxu0
      %1190 = vdwg.mxu0
      %v1192 = vsel %vm531, %v814, 0
      %v1195 = vsel %vm531, %v815, 0
      %v1198 = vsel %vm531, %v816, 0
      %v1201 = vsel %vm1130, %v817, 0
      %1203 = vmatprep.subr.bf16.mxu0 0
      %1204 = vmatpush1.bf16.msra.mxu0 %v1201
      %1205 = vmatprep.subr.bf16.mxu0 0
      %1206 = vmatpush1.bf16.msra.mxu0 0
      %1207 = vmatprep.subr.bf16.mxu0 0
      %1208 = vmatpush1.bf16.msra.mxu0 0
      %1209 = vmatprep.subr.bf16.mxu0 0
      %1210 = vmatpush1.bf16.msra.mxu0 0
      %1211 = vmatprep.subr.bf16.mxu0 0
      %1212 = vmatpush1.bf16.msra.mxu0 0
      %1213 = vmatprep.subr.bf16.mxu0 0
      %1214 = vmatpush1.bf16.msra.mxu0 0
      %1215 = vmatprep.subr.bf16.mxu0 0
      %1216 = vmatpush1.bf16.msra.mxu0 0
      %1217 = vmatprep.subr.bf16.mxu0 0
      %1218 = vmatpush1.bf16.msra.mxu0 0
      %1219 = vmatprep.subr.bf16.mxu0 0
      %1220 = vmatpush1.bf16.msra.mxu0 0
      %1221 = vmatprep.subr.bf16.mxu0 0
      %1222 = vmatpush1.bf16.msra.mxu0 0
      %1223 = vmatprep.subr.bf16.mxu0 0
      %1224 = vmatpush1.bf16.msra.mxu0 0
      %1225 = vmatprep.subr.bf16.mxu0 0
      %1226 = vmatpush1.bf16.msra.mxu0 0
      %1227 = vmatprep.subr.bf16.mxu0 0
      %1228 = vmatpush1.bf16.msra.mxu0 0
      %1229 = vmatprep.subr.bf16.mxu0 0
      %1230 = vmatpush1.bf16.msra.mxu0 0
      %1231 = vmatprep.subr.bf16.mxu0 0
      %1232 = vmatpush1.bf16.msra.mxu0 0
      %1233 = vmatprep.subr.bf16.mxu0 0
      %1234 = vmatpush1.bf16.msra.mxu0 0
      %1235 = vmatprep.mubr.bf16.mxu0 0
      %1236 = vmatmul.mubr.bf16.gmra.mrb[0].mxu0 %v1192
      %v1237 = vpop.f32.mrb[0].mxu0
      %v1238 = vadd.f32 %v1169, %v1237
      %v1239 = vpop.f32.mrb[0].mxu0
      %v1240 = vpop.f32.mrb[0].mxu0
      %v1241 = vadd.f32 %v1172, %v1240
      %v1242 = vpop.f32.mrb[0].mxu0
      %1243 = vmatprep.mubr.bf16.mxu0 0
      %1244 = vmatmul.mubr.bf16.gmra.mrb[0].mxu0 %v1195
      %v1245 = vpop.f32.mrb[0].mxu0
      %v1246 = vadd.f32 %v1177, %v1245
      %v1247 = vpop.f32.mrb[0].mxu0
      %v1248 = vpop.f32.mrb[0].mxu0
      %v1249 = vadd.f32 %v1180, %v1248
      %v1250 = vpop.f32.mrb[0].mxu0
      %1251 = vmatprep.mubr.bf16.mxu0 0
      %1252 = vmatmul.mubr.bf16.gmra.mrb[0].mxu0 %v1198
      %v1253 = vpop.f32.mrb[0].mxu0
      %v1254 = vadd.f32 %v1185, %v1253
      %v1255 = vpop.f32.mrb[0].mxu0
      %v1256 = vpop.f32.mrb[0].mxu0
      %v1257 = vadd.f32 %v1188, %v1256
      %v1258 = vpop.f32.mrb[0].mxu0
      %1259 = vdwg.mxu0
      %1260 = vrot.lane.b32.xlu0 %v507, 112
      %v1261 = vpop.permute.xlu0 %1260
      %1262 = vrot.lane.b32.xlu0 %v508, 112
      %v1263 = vpop.permute.xlu0 %1262
      %1264 = vrot.lane.b32.xlu0 %v509, 112
      %v1265 = vpop.permute.xlu0 %1264
      %1266 = vrot.lane.b32.xlu0 %v510, 112
      %v1267 = vpop.permute.xlu0 %1266
      %1268 = vrot.lane.b32.xlu0 %v511, 112
      %v1269 = vpop.permute.xlu0 %1268
      %1270 = vrot.lane.b32.xlu0 %v512, 112
      %v1271 = vpop.permute.xlu0 %1270
      %1272 = vrot.lane.b32.xlu0 %v507, 80
      %v1273 = vpop.permute.xlu0 %1272
      %1274 = vrot.lane.b32.xlu0 %v508, 80
      %v1275 = vpop.permute.xlu0 %1274
      %1276 = vrot.lane.b32.xlu0 %v509, 80
      %v1277 = vpop.permute.xlu0 %1276
      %1278 = vrot.lane.b32.xlu0 %v510, 80
      %v1279 = vpop.permute.xlu0 %1278
      %1280 = vrot.lane.b32.xlu0 %v511, 80
      %v1281 = vpop.permute.xlu0 %1280
      %1282 = vrot.lane.b32.xlu0 %v512, 80
      %v1283 = vpop.permute.xlu0 %1282
      %v1284 = vsel %vm531, %v1261, 0
      %v1286 = vsel %vm531, %v1263, 0
      %v1288 = vsel %vm531, %v1265, 0
      %v1290 = vsel %vm531, %v1267, 0
      %v1292 = vsel %vm531, %v1269, 0
      %v1294 = vsel %vm531, %v1271, 0
      %v1296 = vsel %vm531, %v1273, 0
      %v1298 = vsel %vm531, %v1275, 0
      %v1300 = vsel %vm531, %v1277, 0
      %v1302 = vsel %vm531, %v1279, 0
      %v1304 = vsel %vm531, %v1281, 0
      %v1306 = vsel %vm531, %v1283, 0
      %1308 = vmatprep.subr.mxu0 0.0
      %1309 = vmatpush1.xpose.msra.mxu0 %v1296
      %1310 = vmatprep.subr.mxu0 0.0
      %1311 = vmatpush1.xpose.msra.mxu0 %v1298
      %1312 = vmatprep.subr.mxu0 0.0
      %1313 = vmatpush1.xpose.msra.mxu0 %v1300
      %1314 = vmatprep.subr.mxu0 0.0
      %1315 = vmatpush1.xpose.msra.mxu0 %v1302
      %1316 = vmatprep.subr.mxu0 0.0
      %1317 = vmatpush1.xpose.msra.mxu0 %v1304
      %1318 = vmatprep.subr.mxu0 0.0
      %1319 = vmatpush1.xpose.msra.mxu0 %v1306
      %1320 = vmatprep.subr.mxu0 0.0
      %1321 = vmatpush1.xpose.msra.mxu0 0.0
      %1322 = vmatprep.subr.mxu0 0.0
      %1323 = vmatpush1.xpose.msra.mxu0 0.0
      %1324 = vmatprep.subr.mxu0 0.0
      %1325 = vmatpush1.xpose.msra.mxu0 0.0
      %1326 = vmatprep.subr.mxu0 0.0
      %1327 = vmatpush1.xpose.msra.mxu0 0.0
      %1328 = vmatprep.subr.mxu0 0.0
      %1329 = vmatpush1.xpose.msra.mxu0 0.0
      %1330 = vmatprep.subr.mxu0 0.0
      %1331 = vmatpush1.xpose.msra.mxu0 0.0
      %1332 = vmatprep.subr.mxu0 0.0
      %1333 = vmatpush1.xpose.msra.mxu0 0.0
      %1334 = vmatprep.subr.mxu0 0.0
      %1335 = vmatpush1.xpose.msra.mxu0 0.0
      %1336 = vmatprep.subr.mxu0 0.0
      %1337 = vmatpush1.xpose.msra.mxu0 0.0
      %1338 = vmatprep.subr.mxu0 0.0
      %1339 = vmatpush1.xpose.msra.mxu0 0.0
      %1340 = vmatprep.subr.mxu0 0.0
      %1341 = vmatpush1.xpose.msra.mxu0 0.0
      %1342 = vmatprep.subr.mxu0 0.0
      %1343 = vmatpush1.xpose.msra.mxu0 0.0
      %1344 = vmatprep.subr.mxu0 0.0
      %1345 = vmatpush1.xpose.msra.mxu0 0.0
      %1346 = vmatprep.subr.mxu0 0.0
      %1347 = vmatpush1.xpose.msra.mxu0 0.0
      %1348 = vmatprep.subr.mxu0 0.0
      %1349 = vmatpush1.xpose.msra.mxu0 0.0
      %1350 = vmatprep.subr.mxu0 0.0
      %1351 = vmatpush1.xpose.msra.mxu0 0.0
      %1352 = vmatprep.subr.mxu0 0.0
      %1353 = vmatpush1.xpose.msra.mxu0 0.0
      %1354 = vmatprep.subr.mxu0 0.0
      %1355 = vmatpush1.xpose.msra.mxu0 0.0
      %1356 = vmatprep.subr.mxu0 0.0
      %1357 = vmatpush1.xpose.msra.mxu0 0.0
      %1358 = vmatprep.subr.mxu0 0.0
      %1359 = vmatpush1.xpose.msra.mxu0 0.0
      %1360 = vmatprep.subr.mxu0 0.0
      %1361 = vmatpush1.xpose.msra.mxu0 0.0
      %1362 = vmatprep.subr.mxu0 0.0
      %1363 = vmatpush1.xpose.msra.mxu0 0.0
      %1364 = vmatprep.subr.mxu0 0.0
      %1365 = vmatpush1.xpose.msra.mxu0 0.0
      %1366 = vmatprep.subr.mxu0 0.0
      %1367 = vmatpush1.xpose.msra.mxu0 0.0
      %1368 = vmatprep.subr.mxu0 0.0
      %1369 = vmatpush1.xpose.msra.mxu0 0.0
      %1370 = vmatprep.subr.mxu0 0.0
      %1371 = vmatpush1.xpose.msra.mxu0 0.0
      %1372 = vmatprep.mubr.f32.mxu0 0.0
      %1373 = vmatmul.mubr.f32.gmra.mrb[0].mxu0 %v1284
      %v1374 = vpop.f32.mrb[0].mxu0
      %v1375 = vadd.f32 0.0, %v1374
      %v1376 = vpop.f32.mrb[0].mxu0
      %1377 = vmatprep.mubr.f32.mxu0 0.0
      %1378 = vmatmul.mubr.f32.gmra.mrb[0].mxu0 %v1286
      %v1379 = vpop.f32.mrb[0].mxu0
      %v1380 = vadd.f32 0.0, %v1379
      %v1381 = vpop.f32.mrb[0].mxu0
      %1382 = vmatprep.mubr.f32.mxu0 0.0
      %1383 = vmatmul.mubr.f32.gmra.mrb[0].mxu0 %v1288
      %v1384 = vpop.f32.mrb[0].mxu0
      %v1385 = vadd.f32 0.0, %v1384
      %v1386 = vpop.f32.mrb[0].mxu0
      %1387 = vmatprep.mubr.f32.mxu0 0.0
      %1388 = vmatmul.mubr.f32.gmra.mrb[0].mxu0 %v1290
      %v1389 = vpop.f32.mrb[0].mxu0
      %v1390 = vadd.f32 0.0, %v1389
      %v1391 = vpop.f32.mrb[0].mxu0
      %1392 = vmatprep.mubr.f32.mxu0 0.0
      %1393 = vmatmul.mubr.f32.gmra.mrb[0].mxu0 %v1292
      %v1394 = vpop.f32.mrb[0].mxu0
      %v1395 = vadd.f32 0.0, %v1394
      %v1396 = vpop.f32.mrb[0].mxu0
      %1397 = vmatprep.mubr.f32.mxu0 0.0
      %1398 = vmatmul.mubr.f32.gmra.mrb[0].mxu0 %v1294
      %v1399 = vpop.f32.mrb[0].mxu0
      %v1400 = vadd.f32 0.0, %v1399
      %v1401 = vpop.f32.mrb[0].mxu0
      %1402 = vdwg.mxu0
      %v1403 = vsel %vm506, %v1375, -1e+30
      %v1404 = vsel %vm506, %v1380, -1e+30
      %v1405 = vsel %vm506, %v1385, -1e+30
      %v1406 = vsel %vm506, %v1390, -1e+30
      %v1407 = vsel %vm506, %v1395, -1e+30
      %v1408 = vsel %vm506, %v1400, -1e+30
      %v1409 = vsel %vm657, %v1403, -inf
      %1410 = vmax.xlane.f32.xlu0 %v1409
      %v1411 = vpop.xlane.xlu0 %1410
      %v1412 = vsel %vm657, %v1404, -inf
      %1413 = vmax.xlane.f32.xlu0 %v1412
      %v1414 = vpop.xlane.xlu0 %1413
      %v1415 = vsel %vm657, %v1405, -inf
      %1416 = vmax.xlane.f32.xlu0 %v1415
      %v1417 = vpop.xlane.xlu0 %1416
      %v1418 = vsel %vm657, %v1406, -inf
      %1419 = vmax.xlane.f32.xlu0 %v1418
      %v1420 = vpop.xlane.xlu0 %1419
      %v1421 = vsel %vm657, %v1407, -inf
      %1422 = vmax.xlane.f32.xlu0 %v1421
      %v1423 = vpop.xlane.xlu0 %1422
      %v1424 = vsel %vm657, %v1408, -inf
      %1425 = vmax.xlane.f32.xlu0 %v1424
      %v1426 = vpop.xlane.xlu0 %1425
      %v1427 = vsub.f32 %v1403, %v1411
      %v1428 = vsub.f32 %v1404, %v1414
      %v1429 = vsub.f32 %v1405, %v1417
      %v1430 = vsub.f32 %v1406, %v1420
      %v1431 = vsub.f32 %v1407, %v1423
      %v1432 = vsub.f32 %v1408, %v1426
      %v1433 = vmul.f32 %v1427, 1.442695
      %v1434 = vpow.pop %v1433
      %v1435 = vmul.f32 %v1428, 1.442695
      %v1436 = vpow.pop %v1435
      %v1437 = vmul.f32 %v1429, 1.442695
      %v1438 = vpow.pop %v1437
      %v1439 = vmul.f32 %v1430, 1.442695
      %v1440 = vpow.pop %v1439
      %v1441 = vmul.f32 %v1431, 1.442695
      %v1442 = vpow.pop %v1441
      %v1443 = vmul.f32 %v1432, 1.442695
      %v1444 = vpow.pop %v1443
      %v1445 = vsel %vm657, %v1434, 0.0
      %1446 = vadd.xlane.f32.xlu0 %v1445
      %v1447 = vpop.xlane.xlu0 %1446
      %v1448 = vsel %vm657, %v1436, 0.0
      %1449 = vadd.xlane.f32.xlu0 %v1448
      %v1450 = vpop.xlane.xlu0 %1449
      %v1451 = vsel %vm657, %v1438, 0.0
      %1452 = vadd.xlane.f32.xlu0 %v1451
      %v1453 = vpop.xlane.xlu0 %1452
      %v1454 = vsel %vm657, %v1440, 0.0
      %1455 = vadd.xlane.f32.xlu0 %v1454
      %v1456 = vpop.xlane.xlu0 %1455
      %v1457 = vsel %vm657, %v1442, 0.0
      %1458 = vadd.xlane.f32.xlu0 %v1457
      %v1459 = vpop.xlane.xlu0 %1458
      %v1460 = vsel %vm657, %v1444, 0.0
      %1461 = vadd.xlane.f32.xlu0 %v1460
      %v1462 = vpop.xlane.xlu0 %1461
      %v1463 = vrcp.pop %v1447
      %v1464 = vmul.f32 %v1434, %v1463
      %v1465 = vrcp.pop %v1450
      %v1466 = vmul.f32 %v1436, %v1465
      %v1467 = vrcp.pop %v1453
      %v1468 = vmul.f32 %v1438, %v1467
      %v1469 = vrcp.pop %v1456
      %v1470 = vmul.f32 %v1440, %v1469
      %v1471 = vrcp.pop %v1459
      %v1472 = vmul.f32 %v1442, %v1471
      %v1473 = vrcp.pop %v1462
      %v1474 = vmul.f32 %v1444, %v1473
      %v1475 = vadd.f32 %v1033, %v1464
      %v1476 = vadd.f32 %v1034, %v1466
      %v1477 = vadd.f32 %v1035, %v1468
      %v1478 = vadd.f32 %v1036, %v1470
      %v1479 = vadd.f32 %v1037, %v1472
      %v1480 = vadd.f32 %v1038, %v1474
      %v1481 = vpack.c.bf16 %v1466, %v1464
      %v1482 = vpack.c.bf16 %v1470, %v1468
      %v1483 = vpack.c.bf16 %v1474, %v1472
      %1484 = vrot.lane.b32.xlu0 %v733, 48
      %v1485 = vpop.permute.xlu0 %1484
      %1486 = vrot.lane.b32.xlu0 %v734, 48
      %v1487 = vpop.permute.xlu0 %1486
      %1488 = vrot.lane.b32.xlu0 %v735, 48
      %v1489 = vpop.permute.xlu0 %1488
      %v1494 = vsel %vm657, %v1481, 0
      %v1497 = vsel %vm657, %v1482, 0
      %v1500 = vsel %vm657, %v1483, 0
      %1502 = vmatprep.subr.bf16.mxu0 0
      %1503 = vmatpush1.bf16.msra.mxu0 %v1485
      %1504 = vmatprep.subr.bf16.mxu0 0
      %1505 = vmatpush1.bf16.msra.mxu0 %v1487
      %1506 = vmatprep.subr.bf16.mxu0 0
      %1507 = vmatpush1.bf16.msra.mxu0 %v1489
      %1508 = vmatprep.subr.bf16.mxu0 0
      %1509 = vmatpush1.bf16.msra.mxu0 0
      %1510 = vmatprep.subr.bf16.mxu0 0
      %1511 = vmatpush1.bf16.msra.mxu0 0
      %1512 = vmatprep.subr.bf16.mxu0 0
      %1513 = vmatpush1.bf16.msra.mxu0 0
      %1514 = vmatprep.subr.bf16.mxu0 0
      %1515 = vmatpush1.bf16.msra.mxu0 0
      %1516 = vmatprep.subr.bf16.mxu0 0
      %1517 = vmatpush1.bf16.msra.mxu0 0
      %1518 = vmatprep.subr.bf16.mxu0 0
      %1519 = vmatpush1.bf16.msra.mxu0 0
      %1520 = vmatprep.subr.bf16.mxu0 0
      %1521 = vmatpush1.bf16.msra.mxu0 0
      %1522 = vmatprep.subr.bf16.mxu0 0
      %1523 = vmatpush1.bf16.msra.mxu0 0
      %1524 = vmatprep.subr.bf16.mxu0 0
      %1525 = vmatpush1.bf16.msra.mxu0 0
      %1526 = vmatprep.subr.bf16.mxu0 0
      %1527 = vmatpush1.bf16.msra.mxu0 0
      %1528 = vmatprep.subr.bf16.mxu0 0
      %1529 = vmatpush1.bf16.msra.mxu0 0
      %1530 = vmatprep.subr.bf16.mxu0 0
      %1531 = vmatpush1.bf16.msra.mxu0 0
      %1532 = vmatprep.subr.bf16.mxu0 0
      %1533 = vmatpush1.bf16.msra.mxu0 0
      %1534 = vmatprep.mubr.bf16.mxu0 0
      %1535 = vmatmul.mubr.bf16.gmra.mrb[0].mxu0 %v1494
      %v1536 = vpop.f32.mrb[0].mxu0
      %v1537 = vadd.f32 0.0, %v1536
      %v1538 = vpop.f32.mrb[0].mxu0
      %v1539 = vpop.f32.mrb[0].mxu0
      %v1540 = vadd.f32 0.0, %v1539
      %v1541 = vpop.f32.mrb[0].mxu0
      %1542 = vmatprep.mubr.bf16.mxu0 0
      %1543 = vmatmul.mubr.bf16.gmra.mrb[0].mxu0 %v1497
      %v1544 = vpop.f32.mrb[0].mxu0
      %v1545 = vadd.f32 0.0, %v1544
      %v1546 = vpop.f32.mrb[0].mxu0
      %v1547 = vpop.f32.mrb[0].mxu0
      %v1548 = vadd.f32 0.0, %v1547
      %v1549 = vpop.f32.mrb[0].mxu0
      %1550 = vmatprep.mubr.bf16.mxu0 0
      %1551 = vmatmul.mubr.bf16.gmra.mrb[0].mxu0 %v1500
      %v1552 = vpop.f32.mrb[0].mxu0
      %v1553 = vadd.f32 0.0, %v1552
      %v1554 = vpop.f32.mrb[0].mxu0
      %v1555 = vpop.f32.mrb[0].mxu0
      %v1556 = vadd.f32 0.0, %v1555
      %v1557 = vpop.f32.mrb[0].mxu0
      %1558 = vdwg.mxu0
      %v1559 = vpack.c.bf16 %v1540, %v1537
      %v1560 = vpack.c.bf16 %v1548, %v1545
      %v1561 = vpack.c.bf16 %v1556, %v1553
      %v1562 = vld [vmem:[%s3 + $0x8] sm:$0xf]
      %v1564 = vsel %vm531, %v1559, 0
      %v1567 = vsel %vm531, %v1560, 0
      %v1570 = vsel %vm531, %v1561, 0
      %v1573 = vsel %vm1130, %v1562, 0
      %1575 = vmatprep.subr.bf16.mxu0 0
      %1576 = vmatpush1.bf16.msra.mxu0 %v1573
      %1577 = vmatprep.subr.bf16.mxu0 0
      %1578 = vmatpush1.bf16.msra.mxu0 0
      %1579 = vmatprep.subr.bf16.mxu0 0
      %1580 = vmatpush1.bf16.msra.mxu0 0
      %1581 = vmatprep.subr.bf16.mxu0 0
      %1582 = vmatpush1.bf16.msra.mxu0 0
      %1583 = vmatprep.subr.bf16.mxu0 0
      %1584 = vmatpush1.bf16.msra.mxu0 0
      %1585 = vmatprep.subr.bf16.mxu0 0
      %1586 = vmatpush1.bf16.msra.mxu0 0
      %1587 = vmatprep.subr.bf16.mxu0 0
      %1588 = vmatpush1.bf16.msra.mxu0 0
      %1589 = vmatprep.subr.bf16.mxu0 0
      %1590 = vmatpush1.bf16.msra.mxu0 0
      %1591 = vmatprep.subr.bf16.mxu0 0
      %1592 = vmatpush1.bf16.msra.mxu0 0
      %1593 = vmatprep.subr.bf16.mxu0 0
      %1594 = vmatpush1.bf16.msra.mxu0 0
      %1595 = vmatprep.subr.bf16.mxu0 0
      %1596 = vmatpush1.bf16.msra.mxu0 0
      %1597 = vmatprep.subr.bf16.mxu0 0
      %1598 = vmatpush1.bf16.msra.mxu0 0
      %1599 = vmatprep.subr.bf16.mxu0 0
      %1600 = vmatpush1.bf16.msra.mxu0 0
      %1601 = vmatprep.subr.bf16.mxu0 0
      %1602 = vmatpush1.bf16.msra.mxu0 0
      %1603 = vmatprep.subr.bf16.mxu0 0
      %1604 = vmatpush1.bf16.msra.mxu0 0
      %1605 = vmatprep.subr.bf16.mxu0 0
      %1606 = vmatpush1.bf16.msra.mxu0 0
      %1607 = vmatprep.mubr.bf16.mxu0 0
      %1608 = vmatmul.mubr.bf16.gmra.mrb[0].mxu0 %v1564
      %v1609 = vpop.f32.mrb[0].mxu0
      %v1610 = vadd.f32 0.0, %v1609
      %v1611 = vpop.f32.mrb[0].mxu0
      %v1612 = vpop.f32.mrb[0].mxu0
      %v1613 = vadd.f32 0.0, %v1612
      %v1614 = vpop.f32.mrb[0].mxu0
      %1615 = vmatprep.mubr.bf16.mxu0 0
      %1616 = vmatmul.mubr.bf16.gmra.mrb[0].mxu0 %v1567
      %v1617 = vpop.f32.mrb[0].mxu0
      %v1618 = vadd.f32 0.0, %v1617
      %v1619 = vpop.f32.mrb[0].mxu0
      %v1620 = vpop.f32.mrb[0].mxu0
      %v1621 = vadd.f32 0.0, %v1620
      %v1622 = vpop.f32.mrb[0].mxu0
      %1623 = vmatprep.mubr.bf16.mxu0 0
      %1624 = vmatmul.mubr.bf16.gmra.mrb[0].mxu0 %v1570
      %v1625 = vpop.f32.mrb[0].mxu0
      %v1626 = vadd.f32 0.0, %v1625
      %v1627 = vpop.f32.mrb[0].mxu0
      %v1628 = vpop.f32.mrb[0].mxu0
      %v1629 = vadd.f32 0.0, %v1628
      %v1630 = vpop.f32.mrb[0].mxu0
      %1631 = vdwg.mxu0
      %v1632 = vadd.f32 %v1238, %v1610
      %v1633 = vadd.f32 %v1241, %v1613
      %v1634 = vadd.f32 %v1246, %v1618
      %v1635 = vadd.f32 %v1249, %v1621
      %v1636 = vadd.f32 %v1254, %v1626
      %v1637 = vadd.f32 %v1257, %v1629
      %1638 = vrot.lane.b32.xlu0 %v507, 104
      %v1639 = vpop.permute.xlu0 %1638
      %1640 = vrot.lane.b32.xlu0 %v508, 104
      %v1641 = vpop.permute.xlu0 %1640
      %1642 = vrot.lane.b32.xlu0 %v509, 104
      %v1643 = vpop.permute.xlu0 %1642
      %1644 = vrot.lane.b32.xlu0 %v510, 104
      %v1645 = vpop.permute.xlu0 %1644
      %1646 = vrot.lane.b32.xlu0 %v511, 104
      %v1647 = vpop.permute.xlu0 %1646
      %1648 = vrot.lane.b32.xlu0 %v512, 104
      %v1649 = vpop.permute.xlu0 %1648
      %1650 = vrot.lane.b32.xlu0 %v507, 72
      %v1651 = vpop.permute.xlu0 %1650
      %1652 = vrot.lane.b32.xlu0 %v508, 72
      %v1653 = vpop.permute.xlu0 %1652
      %1654 = vrot.lane.b32.xlu0 %v509, 72
      %v1655 = vpop.permute.xlu0 %1654
      %1656 = vrot.lane.b32.xlu0 %v510, 72
      %v1657 = vpop.permute.xlu0 %1656
      %1658 = vrot.lane.b32.xlu0 %v511, 72
      %v1659 = vpop.permute.xlu0 %1658
      %1660 = vrot.lane.b32.xlu0 %v512, 72
      %v1661 = vpop.permute.xlu0 %1660
      %v1662 = vsel %vm531, %v1639, 0
      %v1664 = vsel %vm531, %v1641, 0
      %v1666 = vsel %vm531, %v1643, 0
      %v1668 = vsel %vm531, %v1645, 0
      %v1670 = vsel %vm531, %v1647, 0
      %v1672 = vsel %vm531, %v1649, 0
      %v1674 = vsel %vm531, %v1651, 0
      %v1676 = vsel %vm531, %v1653, 0
      %v1678 = vsel %vm531, %v1655, 0
      %v1680 = vsel %vm531, %v1657, 0
      %v1682 = vsel %vm531, %v1659, 0
      %v1684 = vsel %vm531, %v1661, 0
      %1686 = vmatprep.subr.mxu0 0.0
      %1687 = vmatpush1.xpose.msra.mxu0 %v1674
      %1688 = vmatprep.subr.mxu0 0.0
      %1689 = vmatpush1.xpose.msra.mxu0 %v1676
      %1690 = vmatprep.subr.mxu0 0.0
      %1691 = vmatpush1.xpose.msra.mxu0 %v1678
      %1692 = vmatprep.subr.mxu0 0.0
      %1693 = vmatpush1.xpose.msra.mxu0 %v1680
      %1694 = vmatprep.subr.mxu0 0.0
      %1695 = vmatpush1.xpose.msra.mxu0 %v1682
      %1696 = vmatprep.subr.mxu0 0.0
      %1697 = vmatpush1.xpose.msra.mxu0 %v1684
      %1698 = vmatprep.subr.mxu0 0.0
      %1699 = vmatpush1.xpose.msra.mxu0 0.0
      %1700 = vmatprep.subr.mxu0 0.0
      %1701 = vmatpush1.xpose.msra.mxu0 0.0
      %1702 = vmatprep.subr.mxu0 0.0
      %1703 = vmatpush1.xpose.msra.mxu0 0.0
      %1704 = vmatprep.subr.mxu0 0.0
      %1705 = vmatpush1.xpose.msra.mxu0 0.0
      %1706 = vmatprep.subr.mxu0 0.0
      %1707 = vmatpush1.xpose.msra.mxu0 0.0
      %1708 = vmatprep.subr.mxu0 0.0
      %1709 = vmatpush1.xpose.msra.mxu0 0.0
      %1710 = vmatprep.subr.mxu0 0.0
      %1711 = vmatpush1.xpose.msra.mxu0 0.0
      %1712 = vmatprep.subr.mxu0 0.0
      %1713 = vmatpush1.xpose.msra.mxu0 0.0
      %1714 = vmatprep.subr.mxu0 0.0
      %1715 = vmatpush1.xpose.msra.mxu0 0.0
      %1716 = vmatprep.subr.mxu0 0.0
      %1717 = vmatpush1.xpose.msra.mxu0 0.0
      %1718 = vmatprep.subr.mxu0 0.0
      %1719 = vmatpush1.xpose.msra.mxu0 0.0
      %1720 = vmatprep.subr.mxu0 0.0
      %1721 = vmatpush1.xpose.msra.mxu0 0.0
      %1722 = vmatprep.subr.mxu0 0.0
      %1723 = vmatpush1.xpose.msra.mxu0 0.0
      %1724 = vmatprep.subr.mxu0 0.0
      %1725 = vmatpush1.xpose.msra.mxu0 0.0
      %1726 = vmatprep.subr.mxu0 0.0
      %1727 = vmatpush1.xpose.msra.mxu0 0.0
      %1728 = vmatprep.subr.mxu0 0.0
      %1729 = vmatpush1.xpose.msra.mxu0 0.0
      %1730 = vmatprep.subr.mxu0 0.0
      %1731 = vmatpush1.xpose.msra.mxu0 0.0
      %1732 = vmatprep.subr.mxu0 0.0
      %1733 = vmatpush1.xpose.msra.mxu0 0.0
      %1734 = vmatprep.subr.mxu0 0.0
      %1735 = vmatpush1.xpose.msra.mxu0 0.0
      %1736 = vmatprep.subr.mxu0 0.0
      %1737 = vmatpush1.xpose.msra.mxu0 0.0
      %1738 = vmatprep.subr.mxu0 0.0
      %1739 = vmatpush1.xpose.msra.mxu0 0.0
      %1740 = vmatprep.subr.mxu0 0.0
      %1741 = vmatpush1.xpose.msra.mxu0 0.0
      %1742 = vmatprep.subr.mxu0 0.0
      %1743 = vmatpush1.xpose.msra.mxu0 0.0
      %1744 = vmatprep.subr.mxu0 0.0
      %1745 = vmatpush1.xpose.msra.mxu0 0.0
      %1746 = vmatprep.subr.mxu0 0.0
      %1747 = vmatpush1.xpose.msra.mxu0 0.0
      %1748 = vmatprep.subr.mxu0 0.0
      %1749 = vmatpush1.xpose.msra.mxu0 0.0
      %1750 = vmatprep.mubr.f32.mxu0 0.0
      %1751 = vmatmul.mubr.f32.gmra.mrb[0].mxu0 %v1662
      %v1752 = vpop.f32.mrb[0].mxu0
      %v1753 = vadd.f32 0.0, %v1752
      %v1754 = vpop.f32.mrb[0].mxu0
      %1755 = vmatprep.mubr.f32.mxu0 0.0
      %1756 = vmatmul.mubr.f32.gmra.mrb[0].mxu0 %v1664
      %v1757 = vpop.f32.mrb[0].mxu0
      %v1758 = vadd.f32 0.0, %v1757
      %v1759 = vpop.f32.mrb[0].mxu0
      %1760 = vmatprep.mubr.f32.mxu0 0.0
      %1761 = vmatmul.mubr.f32.gmra.mrb[0].mxu0 %v1666
      %v1762 = vpop.f32.mrb[0].mxu0
      %v1763 = vadd.f32 0.0, %v1762
      %v1764 = vpop.f32.mrb[0].mxu0
      %1765 = vmatprep.mubr.f32.mxu0 0.0
      %1766 = vmatmul.mubr.f32.gmra.mrb[0].mxu0 %v1668
      %v1767 = vpop.f32.mrb[0].mxu0
      %v1768 = vadd.f32 0.0, %v1767
      %v1769 = vpop.f32.mrb[0].mxu0
      %1770 = vmatprep.mubr.f32.mxu0 0.0
      %1771 = vmatmul.mubr.f32.gmra.mrb[0].mxu0 %v1670
      %v1772 = vpop.f32.mrb[0].mxu0
      %v1773 = vadd.f32 0.0, %v1772
      %v1774 = vpop.f32.mrb[0].mxu0
      %1775 = vmatprep.mubr.f32.mxu0 0.0
      %1776 = vmatmul.mubr.f32.gmra.mrb[0].mxu0 %v1672
      %v1777 = vpop.f32.mrb[0].mxu0
      %v1778 = vadd.f32 0.0, %v1777
      %v1779 = vpop.f32.mrb[0].mxu0
      %1780 = vdwg.mxu0
      %v1781 = vsel %vm506, %v1753, -1e+30
      %v1782 = vsel %vm506, %v1758, -1e+30
      %v1783 = vsel %vm506, %v1763, -1e+30
      %v1784 = vsel %vm506, %v1768, -1e+30
      %v1785 = vsel %vm506, %v1773, -1e+30
      %v1786 = vsel %vm506, %v1778, -1e+30
      %v1787 = vsel %vm657, %v1781, -inf
      %1788 = vmax.xlane.f32.xlu0 %v1787
      %v1789 = vpop.xlane.xlu0 %1788
      %v1790 = vsel %vm657, %v1782, -inf
      %1791 = vmax.xlane.f32.xlu0 %v1790
      %v1792 = vpop.xlane.xlu0 %1791
      %v1793 = vsel %vm657, %v1783, -inf
      %1794 = vmax.xlane.f32.xlu0 %v1793
      %v1795 = vpop.xlane.xlu0 %1794
      %v1796 = vsel %vm657, %v1784, -inf
      %1797 = vmax.xlane.f32.xlu0 %v1796
      %v1798 = vpop.xlane.xlu0 %1797
      %v1799 = vsel %vm657, %v1785, -inf
      %1800 = vmax.xlane.f32.xlu0 %v1799
      %v1801 = vpop.xlane.xlu0 %1800
      %v1802 = vsel %vm657, %v1786, -inf
      %1803 = vmax.xlane.f32.xlu0 %v1802
      %v1804 = vpop.xlane.xlu0 %1803
      %v1805 = vsub.f32 %v1781, %v1789
      %v1806 = vsub.f32 %v1782, %v1792
      %v1807 = vsub.f32 %v1783, %v1795
      %v1808 = vsub.f32 %v1784, %v1798
      %v1809 = vsub.f32 %v1785, %v1801
      %v1810 = vsub.f32 %v1786, %v1804
      %v1811 = vmul.f32 %v1805, 1.442695
      %v1812 = vpow.pop %v1811
      %v1813 = vmul.f32 %v1806, 1.442695
      %v1814 = vpow.pop %v1813
      %v1815 = vmul.f32 %v1807, 1.442695
      %v1816 = vpow.pop %v1815
      %v1817 = vmul.f32 %v1808, 1.442695
      %v1818 = vpow.pop %v1817
      %v1819 = vmul.f32 %v1809, 1.442695
      %v1820 = vpow.pop %v1819
      %v1821 = vmul.f32 %v1810, 1.442695
      %v1822 = vpow.pop %v1821
      %v1823 = vsel %vm657, %v1812, 0.0
      %1824 = vadd.xlane.f32.xlu0 %v1823
      %v1825 = vpop.xlane.xlu0 %1824
      %v1826 = vsel %vm657, %v1814, 0.0
      %1827 = vadd.xlane.f32.xlu0 %v1826
      %v1828 = vpop.xlane.xlu0 %1827
      %v1829 = vsel %vm657, %v1816, 0.0
      %1830 = vadd.xlane.f32.xlu0 %v1829
      %v1831 = vpop.xlane.xlu0 %1830
      %v1832 = vsel %vm657, %v1818, 0.0
      %1833 = vadd.xlane.f32.xlu0 %v1832
      %v1834 = vpop.xlane.xlu0 %1833
      %v1835 = vsel %vm657, %v1820, 0.0
      %1836 = vadd.xlane.f32.xlu0 %v1835
      %v1837 = vpop.xlane.xlu0 %1836
      %v1838 = vsel %vm657, %v1822, 0.0
      %1839 = vadd.xlane.f32.xlu0 %v1838
      %v1840 = vpop.xlane.xlu0 %1839
      %v1841 = vrcp.pop %v1825
      %v1842 = vmul.f32 %v1812, %v1841
      %v1843 = vrcp.pop %v1828
      %v1844 = vmul.f32 %v1814, %v1843
      %v1845 = vrcp.pop %v1831
      %v1846 = vmul.f32 %v1816, %v1845
      %v1847 = vrcp.pop %v1834
      %v1848 = vmul.f32 %v1818, %v1847
      %v1849 = vrcp.pop %v1837
      %v1850 = vmul.f32 %v1820, %v1849
      %v1851 = vrcp.pop %v1840
      %v1852 = vmul.f32 %v1822, %v1851
      %v1853 = vadd.f32 %v1475, %v1842
      %v1854 = vadd.f32 %v1476, %v1844
      %v1855 = vadd.f32 %v1477, %v1846
      %v1856 = vadd.f32 %v1478, %v1848
      %v1857 = vadd.f32 %v1479, %v1850
      %v1858 = vadd.f32 %v1480, %v1852
      %v1859 = vpack.c.bf16 %v1844, %v1842
      %v1860 = vpack.c.bf16 %v1848, %v1846
      %v1861 = vpack.c.bf16 %v1852, %v1850
      %1862 = vrot.lane.b32.xlu0 %v733, 40
      %v1863 = vpop.permute.xlu0 %1862
      %1864 = vrot.lane.b32.xlu0 %v734, 40
      %v1865 = vpop.permute.xlu0 %1864
      %1866 = vrot.lane.b32.xlu0 %v735, 40
      %v1867 = vpop.permute.xlu0 %1866
      %v1872 = vsel %vm657, %v1859, 0
      %v1875 = vsel %vm657, %v1860, 0
      %v1878 = vsel %vm657, %v1861, 0
      %1880 = vmatprep.subr.bf16.mxu0 0
      %1881 = vmatpush1.bf16.msra.mxu0 %v1863
      %1882 = vmatprep.subr.bf16.mxu0 0
      %1883 = vmatpush1.bf16.msra.mxu0 %v1865
      %1884 = vmatprep.subr.bf16.mxu0 0
      %1885 = vmatpush1.bf16.msra.mxu0 %v1867
      %1886 = vmatprep.subr.bf16.mxu0 0
      %1887 = vmatpush1.bf16.msra.mxu0 0
      %1888 = vmatprep.subr.bf16.mxu0 0
      %1889 = vmatpush1.bf16.msra.mxu0 0
      %1890 = vmatprep.subr.bf16.mxu0 0
      %1891 = vmatpush1.bf16.msra.mxu0 0
      %1892 = vmatprep.subr.bf16.mxu0 0
      %1893 = vmatpush1.bf16.msra.mxu0 0
      %1894 = vmatprep.subr.bf16.mxu0 0
      %1895 = vmatpush1.bf16.msra.mxu0 0
      %1896 = vmatprep.subr.bf16.mxu0 0
      %1897 = vmatpush1.bf16.msra.mxu0 0
      %1898 = vmatprep.subr.bf16.mxu0 0
      %1899 = vmatpush1.bf16.msra.mxu0 0
      %1900 = vmatprep.subr.bf16.mxu0 0
      %1901 = vmatpush1.bf16.msra.mxu0 0
      %1902 = vmatprep.subr.bf16.mxu0 0
      %1903 = vmatpush1.bf16.msra.mxu0 0
      %1904 = vmatprep.subr.bf16.mxu0 0
      %1905 = vmatpush1.bf16.msra.mxu0 0
      %1906 = vmatprep.subr.bf16.mxu0 0
      %1907 = vmatpush1.bf16.msra.mxu0 0
      %1908 = vmatprep.subr.bf16.mxu0 0
      %1909 = vmatpush1.bf16.msra.mxu0 0
      %1910 = vmatprep.subr.bf16.mxu0 0
      %1911 = vmatpush1.bf16.msra.mxu0 0
      %1912 = vmatprep.mubr.bf16.mxu0 0
      %1913 = vmatmul.mubr.bf16.gmra.mrb[0].mxu0 %v1872
      %v1914 = vpop.f32.mrb[0].mxu0
      %v1915 = vadd.f32 0.0, %v1914
      %v1916 = vpop.f32.mrb[0].mxu0
      %v1917 = vpop.f32.mrb[0].mxu0
      %v1918 = vadd.f32 0.0, %v1917
      %v1919 = vpop.f32.mrb[0].mxu0
      %1920 = vmatprep.mubr.bf16.mxu0 0
      %1921 = vmatmul.mubr.bf16.gmra.mrb[0].mxu0 %v1875
      %v1922 = vpop.f32.mrb[0].mxu0
      %v1923 = vadd.f32 0.0, %v1922
      %v1924 = vpop.f32.mrb[0].mxu0
      %v1925 = vpop.f32.mrb[0].mxu0
      %v1926 = vadd.f32 0.0, %v1925
      %v1927 = vpop.f32.mrb[0].mxu0
      %1928 = vmatprep.mubr.bf16.mxu0 0
      %1929 = vmatmul.mubr.bf16.gmra.mrb[0].mxu0 %v1878
      %v1930 = vpop.f32.mrb[0].mxu0
      %v1931 = vadd.f32 0.0, %v1930
      %v1932 = vpop.f32.mrb[0].mxu0
      %v1933 = vpop.f32.mrb[0].mxu0
      %v1934 = vadd.f32 0.0, %v1933
      %v1935 = vpop.f32.mrb[0].mxu0
      %1936 = vdwg.mxu0
      %v1937 = vpack.c.bf16 %v1918, %v1915
      %v1938 = vpack.c.bf16 %v1926, %v1923
      %v1939 = vpack.c.bf16 %v1934, %v1931
      %v1940 = vld [vmem:[%s3 + $0xc] sm:$0xf]
      %v1942 = vsel %vm531, %v1937, 0
      %v1945 = vsel %vm531, %v1938, 0
      %v1948 = vsel %vm531, %v1939, 0
      %v1951 = vsel %vm1130, %v1940, 0
      %1953 = vmatprep.subr.bf16.mxu0 0
      %1954 = vmatpush1.bf16.msra.mxu0 %v1951
      %1955 = vmatprep.subr.bf16.mxu0 0
      %1956 = vmatpush1.bf16.msra.mxu0 0
      %1957 = vmatprep.subr.bf16.mxu0 0
      %1958 = vmatpush1.bf16.msra.mxu0 0
      %1959 = vmatprep.subr.bf16.mxu0 0
      %1960 = vmatpush1.bf16.msra.mxu0 0
      %1961 = vmatprep.subr.bf16.mxu0 0
      %1962 = vmatpush1.bf16.msra.mxu0 0
      %1963 = vmatprep.subr.bf16.mxu0 0
      %1964 = vmatpush1.bf16.msra.mxu0 0
      %1965 = vmatprep.subr.bf16.mxu0 0
      %1966 = vmatpush1.bf16.msra.mxu0 0
      %1967 = vmatprep.subr.bf16.mxu0 0
      %1968 = vmatpush1.bf16.msra.mxu0 0
      %1969 = vmatprep.subr.bf16.mxu0 0
      %1970 = vmatpush1.bf16.msra.mxu0 0
      %1971 = vmatprep.subr.bf16.mxu0 0
      %1972 = vmatpush1.bf16.msra.mxu0 0
      %1973 = vmatprep.subr.bf16.mxu0 0
      %1974 = vmatpush1.bf16.msra.mxu0 0
      %1975 = vmatprep.subr.bf16.mxu0 0
      %1976 = vmatpush1.bf16.msra.mxu0 0
      %1977 = vmatprep.subr.bf16.mxu0 0
      %1978 = vmatpush1.bf16.msra.mxu0 0
      %1979 = vmatprep.subr.bf16.mxu0 0
      %1980 = vmatpush1.bf16.msra.mxu0 0
      %1981 = vmatprep.subr.bf16.mxu0 0
      %1982 = vmatpush1.bf16.msra.mxu0 0
      %1983 = vmatprep.subr.bf16.mxu0 0
      %1984 = vmatpush1.bf16.msra.mxu0 0
      %1985 = vmatprep.mubr.bf16.mxu0 0
      %1986 = vmatmul.mubr.bf16.gmra.mrb[0].mxu0 %v1942
      %v1987 = vpop.f32.mrb[0].mxu0
      %v1988 = vadd.f32 0.0, %v1987
      %v1989 = vpop.f32.mrb[0].mxu0
      %v1990 = vpop.f32.mrb[0].mxu0
      %v1991 = vadd.f32 0.0, %v1990
      %v1992 = vpop.f32.mrb[0].mxu0
      %1993 = vmatprep.mubr.bf16.mxu0 0
      %1994 = vmatmul.mubr.bf16.gmra.mrb[0].mxu0 %v1945
      %v1995 = vpop.f32.mrb[0].mxu0
      %v1996 = vadd.f32 0.0, %v1995
      %v1997 = vpop.f32.mrb[0].mxu0
      %v1998 = vpop.f32.mrb[0].mxu0
      %v1999 = vadd.f32 0.0, %v1998
      %v2000 = vpop.f32.mrb[0].mxu0
      %2001 = vmatprep.mubr.bf16.mxu0 0
      %2002 = vmatmul.mubr.bf16.gmra.mrb[0].mxu0 %v1948
      %v2003 = vpop.f32.mrb[0].mxu0
      %v2004 = vadd.f32 0.0, %v2003
      %v2005 = vpop.f32.mrb[0].mxu0
      %v2006 = vpop.f32.mrb[0].mxu0
      %v2007 = vadd.f32 0.0, %v2006
      %v2008 = vpop.f32.mrb[0].mxu0
      %2009 = vdwg.mxu0
      %v2010 = vadd.f32 %v1632, %v1988
      %v2011 = vadd.f32 %v1633, %v1991
      %v2012 = vadd.f32 %v1634, %v1996
      %v2013 = vadd.f32 %v1635, %v1999
      %v2014 = vadd.f32 %v1636, %v2004
      %v2015 = vadd.f32 %v1637, %v2007
      %v2016 = vmul.f32 %v1853, 0.25
      %v2017 = vmul.f32 %v1854, 0.25
      %v2018 = vmul.f32 %v1855, 0.25
      %v2019 = vmul.f32 %v1856, 0.25
      %v2020 = vmul.f32 %v1857, 0.25
      %v2021 = vmul.f32 %v1858, 0.25
      %vm2022 = vcmask 359424
      %2023 = vst.msk [vmem:[%s343] sm:$0xff] %vm2022, %v2016
      %2024 = vst.msk [vmem:[%s343 + $0x8] sm:$0xff] %vm2022, %v2017
      %2025 = vst.msk [vmem:[%s343 + $0x10] sm:$0xff] %vm2022, %v2018
      %2026 = vst.msk [vmem:[%s343 + $0x18] sm:$0xff] %vm2022, %v2019
      %2027 = vst.msk [vmem:[%s343 + $0x20] sm:$0xff] %vm2022, %v2020
      %vm2028 = vcmask 355328
      %2029 = vst.msk [vmem:[%s343 + $0x28] sm:$0xf] %vm2028, %v2021
      %2030 = vst.msk [vmem:[#allocation3] sm:$0xff] %vm391, %v2010
      %2031 = vst.msk [vmem:[#allocation3 + $0x8] sm:$0xff] %vm391, %v2011
      %2032 = vst.msk [vmem:[#allocation3 + $0x10] sm:$0xff] %vm391, %v2012
      %2033 = vst.msk [vmem:[#allocation3 + $0x18] sm:$0xff] %vm391, %v2013
      %2034 = vst.msk [vmem:[#allocation3 + $0x20] sm:$0xff] %vm391, %v2014
      %2035 = vst.msk [vmem:[#allocation3 + $0x28] sm:$0xff] %vm391, %v2015
      %v2036 = vld [vmem:[#allocation2 + $0x30] sm:$0xff]
      %v2037 = vld [vmem:[#allocation2 + $0x38] sm:$0xff]
      %v2038 = vld [vmem:[#allocation2 + $0x40] sm:$0xff]
      %v2039 = vld [vmem:[#allocation2 + $0x48] sm:$0xff]
      %v2040 = vld [vmem:[#allocation2 + $0x50] sm:$0xff]
      %v2041 = vld [vmem:[#allocation2 + $0x58] sm:$0xff]
      %2048 = vrot.lane.b32.xlu0 %v2036, 96
      %v2049 = vpop.permute.xlu0 %2048
      %2050 = vrot.lane.b32.xlu0 %v2037, 96
      %v2051 = vpop.permute.xlu0 %2050
      %2052 = vrot.lane.b32.xlu0 %v2038, 96
      %v2053 = vpop.permute.xlu0 %2052
      %2054 = vrot.lane.b32.xlu0 %v2039, 96
      %v2055 = vpop.permute.xlu0 %2054
      %2056 = vrot.lane.b32.xlu0 %v2040, 96
      %v2057 = vpop.permute.xlu0 %2056
      %2058 = vrot.lane.b32.xlu0 %v2041, 96
      %v2059 = vpop.permute.xlu0 %2058
      %v2060 = vsel %vm531, %v2036, 0
      %v2062 = vsel %vm531, %v2037, 0
      %v2064 = vsel %vm531, %v2038, 0
      %v2066 = vsel %vm531, %v2039, 0
      %v2068 = vsel %vm531, %v2040, 0
      %v2070 = vsel %vm531, %v2041, 0
      %v2072 = vsel %vm531, %v2049, 0
      %v2074 = vsel %vm531, %v2051, 0
      %v2076 = vsel %vm531, %v2053, 0
      %v2078 = vsel %vm531, %v2055, 0
      %v2080 = vsel %vm531, %v2057, 0
      %v2082 = vsel %vm531, %v2059, 0
      %2084 = vmatprep.subr.mxu0 0.0
      %2085 = vmatpush1.xpose.msra.mxu0 %v2072
      %2086 = vmatprep.subr.mxu0 0.0
      %2087 = vmatpush1.xpose.msra.mxu0 %v2074
      %2088 = vmatprep.subr.mxu0 0.0
      %2089 = vmatpush1.xpose.msra.mxu0 %v2076
      %2090 = vmatprep.subr.mxu0 0.0
      %2091 = vmatpush1.xpose.msra.mxu0 %v2078
      %2092 = vmatprep.subr.mxu0 0.0
      %2093 = vmatpush1.xpose.msra.mxu0 %v2080
      %2094 = vmatprep.subr.mxu0 0.0
      %2095 = vmatpush1.xpose.msra.mxu0 %v2082
      %2096 = vmatprep.subr.mxu0 0.0
      %2097 = vmatpush1.xpose.msra.mxu0 0.0
      %2098 = vmatprep.subr.mxu0 0.0
      %2099 = vmatpush1.xpose.msra.mxu0 0.0
      %2100 = vmatprep.subr.mxu0 0.0
      %2101 = vmatpush1.xpose.msra.mxu0 0.0
      %2102 = vmatprep.subr.mxu0 0.0
      %2103 = vmatpush1.xpose.msra.mxu0 0.0
      %2104 = vmatprep.subr.mxu0 0.0
      %2105 = vmatpush1.xpose.msra.mxu0 0.0
      %2106 = vmatprep.subr.mxu0 0.0
      %2107 = vmatpush1.xpose.msra.mxu0 0.0
      %2108 = vmatprep.subr.mxu0 0.0
      %2109 = vmatpush1.xpose.msra.mxu0 0.0
      %2110 = vmatprep.subr.mxu0 0.0
      %2111 = vmatpush1.xpose.msra.mxu0 0.0
      %2112 = vmatprep.subr.mxu0 0.0
      %2113 = vmatpush1.xpose.msra.mxu0 0.0
      %2114 = vmatprep.subr.mxu0 0.0
      %2115 = vmatpush1.xpose.msra.mxu0 0.0
      %2116 = vmatprep.subr.mxu0 0.0
      %2117 = vmatpush1.xpose.msra.mxu0 0.0
      %2118 = vmatprep.subr.mxu0 0.0
      %2119 = vmatpush1.xpose.msra.mxu0 0.0
      %2120 = vmatprep.subr.mxu0 0.0
      %2121 = vmatpush1.xpose.msra.mxu0 0.0
      %2122 = vmatprep.subr.mxu0 0.0
      %2123 = vmatpush1.xpose.msra.mxu0 0.0
      %2124 = vmatprep.subr.mxu0 0.0
      %2125 = vmatpush1.xpose.msra.mxu0 0.0
      %2126 = vmatprep.subr.mxu0 0.0
      %2127 = vmatpush1.xpose.msra.mxu0 0.0
      %2128 = vmatprep.subr.mxu0 0.0
      %2129 = vmatpush1.xpose.msra.mxu0 0.0
      %2130 = vmatprep.subr.mxu0 0.0
      %2131 = vmatpush1.xpose.msra.mxu0 0.0
      %2132 = vmatprep.subr.mxu0 0.0
      %2133 = vmatpush1.xpose.msra.mxu0 0.0
      %2134 = vmatprep.subr.mxu0 0.0
      %2135 = vmatpush1.xpose.msra.mxu0 0.0
      %2136 = vmatprep.subr.mxu0 0.0
      %2137 = vmatpush1.xpose.msra.mxu0 0.0
      %2138 = vmatprep.subr.mxu0 0.0
      %2139 = vmatpush1.xpose.msra.mxu0 0.0
      %2140 = vmatprep.subr.mxu0 0.0
      %2141 = vmatpush1.xpose.msra.mxu0 0.0
      %2142 = vmatprep.subr.mxu0 0.0
      %2143 = vmatpush1.xpose.msra.mxu0 0.0
      %2144 = vmatprep.subr.mxu0 0.0
      %2145 = vmatpush1.xpose.msra.mxu0 0.0
      %2146 = vmatprep.subr.mxu0 0.0
      %2147 = vmatpush1.xpose.msra.mxu0 0.0
      %2148 = vmatprep.mubr.f32.mxu0 0.0
      %2149 = vmatmul.mubr.f32.gmra.mrb[0].mxu0 %v2060
      %v2150 = vpop.f32.mrb[0].mxu0
      %v2151 = vadd.f32 0.0, %v2150
      %v2152 = vpop.f32.mrb[0].mxu0
      %2153 = vmatprep.mubr.f32.mxu0 0.0
      %2154 = vmatmul.mubr.f32.gmra.mrb[0].mxu0 %v2062
      %v2155 = vpop.f32.mrb[0].mxu0
      %v2156 = vadd.f32 0.0, %v2155
      %v2157 = vpop.f32.mrb[0].mxu0
      %2158 = vmatprep.mubr.f32.mxu0 0.0
      %2159 = vmatmul.mubr.f32.gmra.mrb[0].mxu0 %v2064
      %v2160 = vpop.f32.mrb[0].mxu0
      %v2161 = vadd.f32 0.0, %v2160
      %v2162 = vpop.f32.mrb[0].mxu0
      %2163 = vmatprep.mubr.f32.mxu0 0.0
      %2164 = vmatmul.mubr.f32.gmra.mrb[0].mxu0 %v2066
      %v2165 = vpop.f32.mrb[0].mxu0
      %v2166 = vadd.f32 0.0, %v2165
      %v2167 = vpop.f32.mrb[0].mxu0
      %2168 = vmatprep.mubr.f32.mxu0 0.0
      %2169 = vmatmul.mubr.f32.gmra.mrb[0].mxu0 %v2068
      %v2170 = vpop.f32.mrb[0].mxu0
      %v2171 = vadd.f32 0.0, %v2170
      %v2172 = vpop.f32.mrb[0].mxu0
      %2173 = vmatprep.mubr.f32.mxu0 0.0
      %2174 = vmatmul.mubr.f32.gmra.mrb[0].mxu0 %v2070
      %v2175 = vpop.f32.mrb[0].mxu0
      %v2176 = vadd.f32 0.0, %v2175
      %v2177 = vpop.f32.mrb[0].mxu0
      %2178 = vdwg.mxu0
      %v2179 = vsel %vm506, %v2151, -1e+30
      %v2180 = vsel %vm506, %v2156, -1e+30
      %v2181 = vsel %vm506, %v2161, -1e+30
      %v2182 = vsel %vm506, %v2166, -1e+30
      %v2183 = vsel %vm506, %v2171, -1e+30
      %v2184 = vsel %vm506, %v2176, -1e+30
      %v2185 = vsel %vm657, %v2179, -inf
      %2186 = vmax.xlane.f32.xlu0 %v2185
      %v2187 = vpop.xlane.xlu0 %2186
      %v2188 = vsel %vm657, %v2180, -inf
      %2189 = vmax.xlane.f32.xlu0 %v2188
      %v2190 = vpop.xlane.xlu0 %2189
      %v2191 = vsel %vm657, %v2181, -inf
      %2192 = vmax.xlane.f32.xlu0 %v2191
      %v2193 = vpop.xlane.xlu0 %2192
      %v2194 = vsel %vm657, %v2182, -inf
      %2195 = vmax.xlane.f32.xlu0 %v2194
      %v2196 = vpop.xlane.xlu0 %2195
      %v2197 = vsel %vm657, %v2183, -inf
      %2198 = vmax.xlane.f32.xlu0 %v2197
      %v2199 = vpop.xlane.xlu0 %2198
      %v2200 = vsel %vm657, %v2184, -inf
      %2201 = vmax.xlane.f32.xlu0 %v2200
      %v2202 = vpop.xlane.xlu0 %2201
      %v2203 = vsub.f32 %v2179, %v2187
      %v2204 = vsub.f32 %v2180, %v2190
      %v2205 = vsub.f32 %v2181, %v2193
      %v2206 = vsub.f32 %v2182, %v2196
      %v2207 = vsub.f32 %v2183, %v2199
      %v2208 = vsub.f32 %v2184, %v2202
      %v2209 = vmul.f32 %v2203, 1.442695
      %v2210 = vpow.pop %v2209
      %v2211 = vmul.f32 %v2204, 1.442695
      %v2212 = vpow.pop %v2211
      %v2213 = vmul.f32 %v2205, 1.442695
      %v2214 = vpow.pop %v2213
      %v2215 = vmul.f32 %v2206, 1.442695
      %v2216 = vpow.pop %v2215
      %v2217 = vmul.f32 %v2207, 1.442695
      %v2218 = vpow.pop %v2217
      %v2219 = vmul.f32 %v2208, 1.442695
      %v2220 = vpow.pop %v2219
      %v2221 = vsel %vm657, %v2210, 0.0
      %2222 = vadd.xlane.f32.xlu0 %v2221
      %v2223 = vpop.xlane.xlu0 %2222
      %v2224 = vsel %vm657, %v2212, 0.0
      %2225 = vadd.xlane.f32.xlu0 %v2224
      %v2226 = vpop.xlane.xlu0 %2225
      %v2227 = vsel %vm657, %v2214, 0.0
      %2228 = vadd.xlane.f32.xlu0 %v2227
      %v2229 = vpop.xlane.xlu0 %2228
      %v2230 = vsel %vm657, %v2216, 0.0
      %2231 = vadd.xlane.f32.xlu0 %v2230
      %v2232 = vpop.xlane.xlu0 %2231
      %v2233 = vsel %vm657, %v2218, 0.0
      %2234 = vadd.xlane.f32.xlu0 %v2233
      %v2235 = vpop.xlane.xlu0 %2234
      %v2236 = vsel %vm657, %v2220, 0.0
      %2237 = vadd.xlane.f32.xlu0 %v2236
      %v2238 = vpop.xlane.xlu0 %2237
      %v2239 = vrcp.pop %v2223
      %v2240 = vmul.f32 %v2210, %v2239
      %v2241 = vrcp.pop %v2226
      %v2242 = vmul.f32 %v2212, %v2241
      %v2243 = vrcp.pop %v2229
      %v2244 = vmul.f32 %v2214, %v2243
      %v2245 = vrcp.pop %v2232
      %v2246 = vmul.f32 %v2216, %v2245
      %v2247 = vrcp.pop %v2235
      %v2248 = vmul.f32 %v2218, %v2247
      %v2249 = vrcp.pop %v2238
      %v2250 = vmul.f32 %v2220, %v2249
      %v2251 = vadd.f32 %v2240, 0.0
      %v2252 = vadd.f32 %v2242, 0.0
      %v2253 = vadd.f32 %v2244, 0.0
      %v2254 = vadd.f32 %v2246, 0.0
      %v2255 = vadd.f32 %v2248, 0.0
      %v2256 = vadd.f32 %v2250, 0.0
      %v2257 = vpack.c.bf16 %v2242, %v2240
      %v2258 = vpack.c.bf16 %v2246, %v2244
      %v2259 = vpack.c.bf16 %v2250, %v2248
      %v2260 = vpack.c.bf16 %v2037, %v2036
      %v2261 = vpack.c.bf16 %v2039, %v2038
      %v2262 = vpack.c.bf16 %v2041, %v2040
      %2266 = vrot.lane.b32.xlu0 %v2260, 64
      %v2267 = vpop.permute.xlu0 %2266
      %2268 = vrot.lane.b32.xlu0 %v2261, 64
      %v2269 = vpop.permute.xlu0 %2268
      %2270 = vrot.lane.b32.xlu0 %v2262, 64
      %v2271 = vpop.permute.xlu0 %2270
      %v2276 = vsel %vm657, %v2257, 0
      %v2279 = vsel %vm657, %v2258, 0
      %v2282 = vsel %vm657, %v2259, 0
      %2284 = vmatprep.subr.bf16.mxu0 0
      %2285 = vmatpush1.bf16.msra.mxu0 %v2267
      %2286 = vmatprep.subr.bf16.mxu0 0
      %2287 = vmatpush1.bf16.msra.mxu0 %v2269
      %2288 = vmatprep.subr.bf16.mxu0 0
      %2289 = vmatpush1.bf16.msra.mxu0 %v2271
      %2290 = vmatprep.subr.bf16.mxu0 0
      %2291 = vmatpush1.bf16.msra.mxu0 0
      %2292 = vmatprep.subr.bf16.mxu0 0
      %2293 = vmatpush1.bf16.msra.mxu0 0
      %2294 = vmatprep.subr.bf16.mxu0 0
      %2295 = vmatpush1.bf16.msra.mxu0 0
      %2296 = vmatprep.subr.bf16.mxu0 0
      %2297 = vmatpush1.bf16.msra.mxu0 0
      %2298 = vmatprep.subr.bf16.mxu0 0
      %2299 = vmatpush1.bf16.msra.mxu0 0
      %2300 = vmatprep.subr.bf16.mxu0 0
      %2301 = vmatpush1.bf16.msra.mxu0 0
      %2302 = vmatprep.subr.bf16.mxu0 0
      %2303 = vmatpush1.bf16.msra.mxu0 0
      %2304 = vmatprep.subr.bf16.mxu0 0
      %2305 = vmatpush1.bf16.msra.mxu0 0
      %2306 = vmatprep.subr.bf16.mxu0 0
      %2307 = vmatpush1.bf16.msra.mxu0 0
      %2308 = vmatprep.subr.bf16.mxu0 0
      %2309 = vmatpush1.bf16.msra.mxu0 0
      %2310 = vmatprep.subr.bf16.mxu0 0
      %2311 = vmatpush1.bf16.msra.mxu0 0
      %2312 = vmatprep.subr.bf16.mxu0 0
      %2313 = vmatpush1.bf16.msra.mxu0 0
      %2314 = vmatprep.subr.bf16.mxu0 0
      %2315 = vmatpush1.bf16.msra.mxu0 0
      %2316 = vmatprep.mubr.bf16.mxu0 0
      %2317 = vmatmul.mubr.bf16.gmra.mrb[0].mxu0 %v2276
      %v2318 = vpop.f32.mrb[0].mxu0
      %v2319 = vadd.f32 0.0, %v2318
      %v2320 = vpop.f32.mrb[0].mxu0
      %v2321 = vpop.f32.mrb[0].mxu0
      %v2322 = vadd.f32 0.0, %v2321
      %v2323 = vpop.f32.mrb[0].mxu0
      %2324 = vmatprep.mubr.bf16.mxu0 0
      %2325 = vmatmul.mubr.bf16.gmra.mrb[0].mxu0 %v2279
      %v2326 = vpop.f32.mrb[0].mxu0
      %v2327 = vadd.f32 0.0, %v2326
      %v2328 = vpop.f32.mrb[0].mxu0
      %v2329 = vpop.f32.mrb[0].mxu0
      %v2330 = vadd.f32 0.0, %v2329
      %v2331 = vpop.f32.mrb[0].mxu0
      %2332 = vmatprep.mubr.bf16.mxu0 0
      %2333 = vmatmul.mubr.bf16.gmra.mrb[0].mxu0 %v2282
      %v2334 = vpop.f32.mrb[0].mxu0
      %v2335 = vadd.f32 0.0, %v2334
      %v2336 = vpop.f32.mrb[0].mxu0
      %v2337 = vpop.f32.mrb[0].mxu0
      %v2338 = vadd.f32 0.0, %v2337
      %v2339 = vpop.f32.mrb[0].mxu0
      %2340 = vdwg.mxu0
      %v2341 = vpack.c.bf16 %v2322, %v2319
      %v2342 = vpack.c.bf16 %v2330, %v2327
      %v2343 = vpack.c.bf16 %v2338, %v2335
      %v2344 = vld [vmem:[%s3] sm:$0xf]
      %2345 = vrot.lane.b32.xlu0 %v2036, 120
      %v2346 = vpop.permute.xlu0 %2345
      %2347 = vrot.lane.b32.xlu0 %v2037, 120
      %v2348 = vpop.permute.xlu0 %2347
      %2349 = vrot.lane.b32.xlu0 %v2038, 120
      %v2350 = vpop.permute.xlu0 %2349
      %2351 = vrot.lane.b32.xlu0 %v2039, 120
      %v2352 = vpop.permute.xlu0 %2351
      %2353 = vrot.lane.b32.xlu0 %v2040, 120
      %v2354 = vpop.permute.xlu0 %2353
      %2355 = vrot.lane.b32.xlu0 %v2041, 120
      %v2356 = vpop.permute.xlu0 %2355
      %2357 = vrot.lane.b32.xlu0 %v2036, 88
      %v2358 = vpop.permute.xlu0 %2357
      %2359 = vrot.lane.b32.xlu0 %v2037, 88
      %v2360 = vpop.permute.xlu0 %2359
      %2361 = vrot.lane.b32.xlu0 %v2038, 88
      %v2362 = vpop.permute.xlu0 %2361
      %2363 = vrot.lane.b32.xlu0 %v2039, 88
      %v2364 = vpop.permute.xlu0 %2363
      %2365 = vrot.lane.b32.xlu0 %v2040, 88
      %v2366 = vpop.permute.xlu0 %2365
      %2367 = vrot.lane.b32.xlu0 %v2041, 88
      %v2368 = vpop.permute.xlu0 %2367
      %v2369 = vsel %vm531, %v2346, 0
      %v2371 = vsel %vm531, %v2348, 0
      %v2373 = vsel %vm531, %v2350, 0
      %v2375 = vsel %vm531, %v2352, 0
      %v2377 = vsel %vm531, %v2354, 0
      %v2379 = vsel %vm531, %v2356, 0
      %v2381 = vsel %vm531, %v2358, 0
      %v2383 = vsel %vm531, %v2360, 0
      %v2385 = vsel %vm531, %v2362, 0
      %v2387 = vsel %vm531, %v2364, 0
      %v2389 = vsel %vm531, %v2366, 0
      %v2391 = vsel %vm531, %v2368, 0
      %2393 = vmatprep.subr.mxu0 0.0
      %2394 = vmatpush1.xpose.msra.mxu0 %v2381
      %2395 = vmatprep.subr.mxu0 0.0
      %2396 = vmatpush1.xpose.msra.mxu0 %v2383
      %2397 = vmatprep.subr.mxu0 0.0
      %2398 = vmatpush1.xpose.msra.mxu0 %v2385
      %2399 = vmatprep.subr.mxu0 0.0
      %2400 = vmatpush1.xpose.msra.mxu0 %v2387
      %2401 = vmatprep.subr.mxu0 0.0
      %2402 = vmatpush1.xpose.msra.mxu0 %v2389
      %2403 = vmatprep.subr.mxu0 0.0
      %2404 = vmatpush1.xpose.msra.mxu0 %v2391
      %2405 = vmatprep.subr.mxu0 0.0
      %2406 = vmatpush1.xpose.msra.mxu0 0.0
      %2407 = vmatprep.subr.mxu0 0.0
      %2408 = vmatpush1.xpose.msra.mxu0 0.0
      %2409 = vmatprep.subr.mxu0 0.0
      %2410 = vmatpush1.xpose.msra.mxu0 0.0
      %2411 = vmatprep.subr.mxu0 0.0
      %2412 = vmatpush1.xpose.msra.mxu0 0.0
      %2413 = vmatprep.subr.mxu0 0.0
      %2414 = vmatpush1.xpose.msra.mxu0 0.0
      %2415 = vmatprep.subr.mxu0 0.0
      %2416 = vmatpush1.xpose.msra.mxu0 0.0
      %2417 = vmatprep.subr.mxu0 0.0
      %2418 = vmatpush1.xpose.msra.mxu0 0.0
      %2419 = vmatprep.subr.mxu0 0.0
      %2420 = vmatpush1.xpose.msra.mxu0 0.0
      %2421 = vmatprep.subr.mxu0 0.0
      %2422 = vmatpush1.xpose.msra.mxu0 0.0
      %2423 = vmatprep.subr.mxu0 0.0
      %2424 = vmatpush1.xpose.msra.mxu0 0.0
      %2425 = vmatprep.subr.mxu0 0.0
      %2426 = vmatpush1.xpose.msra.mxu0 0.0
      %2427 = vmatprep.subr.mxu0 0.0
      %2428 = vmatpush1.xpose.msra.mxu0 0.0
      %2429 = vmatprep.subr.mxu0 0.0
      %2430 = vmatpush1.xpose.msra.mxu0 0.0
      %2431 = vmatprep.subr.mxu0 0.0
      %2432 = vmatpush1.xpose.msra.mxu0 0.0
      %2433 = vmatprep.subr.mxu0 0.0
      %2434 = vmatpush1.xpose.msra.mxu0 0.0
      %2435 = vmatprep.subr.mxu0 0.0
      %2436 = vmatpush1.xpose.msra.mxu0 0.0
      %2437 = vmatprep.subr.mxu0 0.0
      %2438 = vmatpush1.xpose.msra.mxu0 0.0
      %2439 = vmatprep.subr.mxu0 0.0
      %2440 = vmatpush1.xpose.msra.mxu0 0.0
      %2441 = vmatprep.subr.mxu0 0.0
      %2442 = vmatpush1.xpose.msra.mxu0 0.0
      %2443 = vmatprep.subr.mxu0 0.0
      %2444 = vmatpush1.xpose.msra.mxu0 0.0
      %2445 = vmatprep.subr.mxu0 0.0
      %2446 = vmatpush1.xpose.msra.mxu0 0.0
      %2447 = vmatprep.subr.mxu0 0.0
      %2448 = vmatpush1.xpose.msra.mxu0 0.0
      %2449 = vmatprep.subr.mxu0 0.0
      %2450 = vmatpush1.xpose.msra.mxu0 0.0
      %2451 = vmatprep.subr.mxu0 0.0
      %2452 = vmatpush1.xpose.msra.mxu0 0.0
      %2453 = vmatprep.subr.mxu0 0.0
      %2454 = vmatpush1.xpose.msra.mxu0 0.0
      %2455 = vmatprep.subr.mxu0 0.0
      %2456 = vmatpush1.xpose.msra.mxu0 0.0
      %2457 = vmatprep.mubr.f32.mxu0 0.0
      %2458 = vmatmul.mubr.f32.gmra.mrb[0].mxu0 %v2369
      %v2459 = vpop.f32.mrb[0].mxu0
      %v2460 = vadd.f32 0.0, %v2459
      %v2461 = vpop.f32.mrb[0].mxu0
      %2462 = vmatprep.mubr.f32.mxu0 0.0
      %2463 = vmatmul.mubr.f32.gmra.mrb[0].mxu0 %v2371
      %v2464 = vpop.f32.mrb[0].mxu0
      %v2465 = vadd.f32 0.0, %v2464
      %v2466 = vpop.f32.mrb[0].mxu0
      %2467 = vmatprep.mubr.f32.mxu0 0.0
      %2468 = vmatmul.mubr.f32.gmra.mrb[0].mxu0 %v2373
      %v2469 = vpop.f32.mrb[0].mxu0
      %v2470 = vadd.f32 0.0, %v2469
      %v2471 = vpop.f32.mrb[0].mxu0
      %2472 = vmatprep.mubr.f32.mxu0 0.0
      %2473 = vmatmul.mubr.f32.gmra.mrb[0].mxu0 %v2375
      %v2474 = vpop.f32.mrb[0].mxu0
      %v2475 = vadd.f32 0.0, %v2474
      %v2476 = vpop.f32.mrb[0].mxu0
      %2477 = vmatprep.mubr.f32.mxu0 0.0
      %2478 = vmatmul.mubr.f32.gmra.mrb[0].mxu0 %v2377
      %v2479 = vpop.f32.mrb[0].mxu0
      %v2480 = vadd.f32 0.0, %v2479
      %v2481 = vpop.f32.mrb[0].mxu0
      %2482 = vmatprep.mubr.f32.mxu0 0.0
      %2483 = vmatmul.mubr.f32.gmra.mrb[0].mxu0 %v2379
      %v2484 = vpop.f32.mrb[0].mxu0
      %v2485 = vadd.f32 0.0, %v2484
      %v2486 = vpop.f32.mrb[0].mxu0
      %2487 = vdwg.mxu0
      %v2488 = vsel %vm506, %v2460, -1e+30
      %v2489 = vsel %vm506, %v2465, -1e+30
      %v2490 = vsel %vm506, %v2470, -1e+30
      %v2491 = vsel %vm506, %v2475, -1e+30
      %v2492 = vsel %vm506, %v2480, -1e+30
      %v2493 = vsel %vm506, %v2485, -1e+30
      %v2494 = vsel %vm657, %v2488, -inf
      %2495 = vmax.xlane.f32.xlu0 %v2494
      %v2496 = vpop.xlane.xlu0 %2495
      %v2497 = vsel %vm657, %v2489, -inf
      %2498 = vmax.xlane.f32.xlu0 %v2497
      %v2499 = vpop.xlane.xlu0 %2498
      %v2500 = vsel %vm657, %v2490, -inf
      %2501 = vmax.xlane.f32.xlu0 %v2500
      %v2502 = vpop.xlane.xlu0 %2501
      %v2503 = vsel %vm657, %v2491, -inf
      %2504 = vmax.xlane.f32.xlu0 %v2503
      %v2505 = vpop.xlane.xlu0 %2504
      %v2506 = vsel %vm657, %v2492, -inf
      %2507 = vmax.xlane.f32.xlu0 %v2506
      %v2508 = vpop.xlane.xlu0 %2507
      %v2509 = vsel %vm657, %v2493, -inf
      %2510 = vmax.xlane.f32.xlu0 %v2509
      %v2511 = vpop.xlane.xlu0 %2510
      %v2512 = vsub.f32 %v2488, %v2496
      %v2513 = vsub.f32 %v2489, %v2499
      %v2514 = vsub.f32 %v2490, %v2502
      %v2515 = vsub.f32 %v2491, %v2505
      %v2516 = vsub.f32 %v2492, %v2508
      %v2517 = vsub.f32 %v2493, %v2511
      %v2518 = vmul.f32 %v2512, 1.442695
      %v2519 = vpow.pop %v2518
      %v2520 = vmul.f32 %v2513, 1.442695
      %v2521 = vpow.pop %v2520
      %v2522 = vmul.f32 %v2514, 1.442695
      %v2523 = vpow.pop %v2522
      %v2524 = vmul.f32 %v2515, 1.442695
      %v2525 = vpow.pop %v2524
      %v2526 = vmul.f32 %v2516, 1.442695
      %v2527 = vpow.pop %v2526
      %v2528 = vmul.f32 %v2517, 1.442695
      %v2529 = vpow.pop %v2528
      %v2530 = vsel %vm657, %v2519, 0.0
      %2531 = vadd.xlane.f32.xlu0 %v2530
      %v2532 = vpop.xlane.xlu0 %2531
      %v2533 = vsel %vm657, %v2521, 0.0
      %2534 = vadd.xlane.f32.xlu0 %v2533
      %v2535 = vpop.xlane.xlu0 %2534
      %v2536 = vsel %vm657, %v2523, 0.0
      %2537 = vadd.xlane.f32.xlu0 %v2536
      %v2538 = vpop.xlane.xlu0 %2537
      %v2539 = vsel %vm657, %v2525, 0.0
      %2540 = vadd.xlane.f32.xlu0 %v2539
      %v2541 = vpop.xlane.xlu0 %2540
      %v2542 = vsel %vm657, %v2527, 0.0
      %2543 = vadd.xlane.f32.xlu0 %v2542
      %v2544 = vpop.xlane.xlu0 %2543
      %v2545 = vsel %vm657, %v2529, 0.0
      %2546 = vadd.xlane.f32.xlu0 %v2545
      %v2547 = vpop.xlane.xlu0 %2546
      %v2548 = vrcp.pop %v2532
      %v2549 = vmul.f32 %v2519, %v2548
      %v2550 = vrcp.pop %v2535
      %v2551 = vmul.f32 %v2521, %v2550
      %v2552 = vrcp.pop %v2538
      %v2553 = vmul.f32 %v2523, %v2552
      %v2554 = vrcp.pop %v2541
      %v2555 = vmul.f32 %v2525, %v2554
      %v2556 = vrcp.pop %v2544
      %v2557 = vmul.f32 %v2527, %v2556
      %v2558 = vrcp.pop %v2547
      %v2559 = vmul.f32 %v2529, %v2558
      %v2560 = vadd.f32 %v2251, %v2549
      %v2561 = vadd.f32 %v2252, %v2551
      %v2562 = vadd.f32 %v2253, %v2553
      %v2563 = vadd.f32 %v2254, %v2555
      %v2564 = vadd.f32 %v2255, %v2557
      %v2565 = vadd.f32 %v2256, %v2559
      %v2566 = vpack.c.bf16 %v2551, %v2549
      %v2567 = vpack.c.bf16 %v2555, %v2553
      %v2568 = vpack.c.bf16 %v2559, %v2557
      %2569 = vrot.lane.b32.xlu0 %v2260, 56
      %v2570 = vpop.permute.xlu0 %2569
      %2571 = vrot.lane.b32.xlu0 %v2261, 56
      %v2572 = vpop.permute.xlu0 %2571
      %2573 = vrot.lane.b32.xlu0 %v2262, 56
      %v2574 = vpop.permute.xlu0 %2573
      %v2579 = vsel %vm657, %v2566, 0
      %v2582 = vsel %vm657, %v2567, 0
      %v2585 = vsel %vm657, %v2568, 0
      %2587 = vmatprep.subr.bf16.mxu0 0
      %2588 = vmatpush1.bf16.msra.mxu0 %v2570
      %2589 = vmatprep.subr.bf16.mxu0 0
      %2590 = vmatpush1.bf16.msra.mxu0 %v2572
      %2591 = vmatprep.subr.bf16.mxu0 0
      %2592 = vmatpush1.bf16.msra.mxu0 %v2574
      %2593 = vmatprep.subr.bf16.mxu0 0
      %2594 = vmatpush1.bf16.msra.mxu0 0
      %2595 = vmatprep.subr.bf16.mxu0 0
      %2596 = vmatpush1.bf16.msra.mxu0 0
      %2597 = vmatprep.subr.bf16.mxu0 0
      %2598 = vmatpush1.bf16.msra.mxu0 0
      %2599 = vmatprep.subr.bf16.mxu0 0
      %2600 = vmatpush1.bf16.msra.mxu0 0
      %2601 = vmatprep.subr.bf16.mxu0 0
      %2602 = vmatpush1.bf16.msra.mxu0 0
      %2603 = vmatprep.subr.bf16.mxu0 0
      %2604 = vmatpush1.bf16.msra.mxu0 0
      %2605 = vmatprep.subr.bf16.mxu0 0
      %2606 = vmatpush1.bf16.msra.mxu0 0
      %2607 = vmatprep.subr.bf16.mxu0 0
      %2608 = vmatpush1.bf16.msra.mxu0 0
      %2609 = vmatprep.subr.bf16.mxu0 0
      %2610 = vmatpush1.bf16.msra.mxu0 0
      %2611 = vmatprep.subr.bf16.mxu0 0
      %2612 = vmatpush1.bf16.msra.mxu0 0
      %2613 = vmatprep.subr.bf16.mxu0 0
      %2614 = vmatpush1.bf16.msra.mxu0 0
      %2615 = vmatprep.subr.bf16.mxu0 0
      %2616 = vmatpush1.bf16.msra.mxu0 0
      %2617 = vmatprep.subr.bf16.mxu0 0
      %2618 = vmatpush1.bf16.msra.mxu0 0
      %2619 = vmatprep.mubr.bf16.mxu0 0
      %2620 = vmatmul.mubr.bf16.gmra.mrb[0].mxu0 %v2579
      %v2621 = vpop.f32.mrb[0].mxu0
      %v2622 = vadd.f32 0.0, %v2621
      %v2623 = vpop.f32.mrb[0].mxu0
      %v2624 = vpop.f32.mrb[0].mxu0
      %v2625 = vadd.f32 0.0, %v2624
      %v2626 = vpop.f32.mrb[0].mxu0
      %2627 = vmatprep.mubr.bf16.mxu0 0
      %2628 = vmatmul.mubr.bf16.gmra.mrb[0].mxu0 %v2582
      %v2629 = vpop.f32.mrb[0].mxu0
      %v2630 = vadd.f32 0.0, %v2629
      %v2631 = vpop.f32.mrb[0].mxu0
      %v2632 = vpop.f32.mrb[0].mxu0
      %v2633 = vadd.f32 0.0, %v2632
      %v2634 = vpop.f32.mrb[0].mxu0
      %2635 = vmatprep.mubr.bf16.mxu0 0
      %2636 = vmatmul.mubr.bf16.gmra.mrb[0].mxu0 %v2585
      %v2637 = vpop.f32.mrb[0].mxu0
      %v2638 = vadd.f32 0.0, %v2637
      %v2639 = vpop.f32.mrb[0].mxu0
      %v2640 = vpop.f32.mrb[0].mxu0
      %v2641 = vadd.f32 0.0, %v2640
      %v2642 = vpop.f32.mrb[0].mxu0
      %2643 = vdwg.mxu0
      %v2644 = vpack.c.bf16 %v2625, %v2622
      %v2645 = vpack.c.bf16 %v2633, %v2630
      %v2646 = vpack.c.bf16 %v2641, %v2638
      %v2647 = vld [vmem:[%s3 + $0x4] sm:$0xf]
      %v2649 = vsel %vm531, %v2644, 0
      %v2652 = vsel %vm531, %v2645, 0
      %v2655 = vsel %vm531, %v2646, 0
      %v2658 = vsel %vm1130, %v2647, 0
      %2660 = vmatprep.subr.bf16.mxu0 0
      %2661 = vmatpush1.bf16.msra.mxu0 %v2658
      %2662 = vmatprep.subr.bf16.mxu0 0
      %2663 = vmatpush1.bf16.msra.mxu0 0
      %2664 = vmatprep.subr.bf16.mxu0 0
      %2665 = vmatpush1.bf16.msra.mxu0 0
      %2666 = vmatprep.subr.bf16.mxu0 0
      %2667 = vmatpush1.bf16.msra.mxu0 0
      %2668 = vmatprep.subr.bf16.mxu0 0
      %2669 = vmatpush1.bf16.msra.mxu0 0
      %2670 = vmatprep.subr.bf16.mxu0 0
      %2671 = vmatpush1.bf16.msra.mxu0 0
      %2672 = vmatprep.subr.bf16.mxu0 0
      %2673 = vmatpush1.bf16.msra.mxu0 0
      %2674 = vmatprep.subr.bf16.mxu0 0
      %2675 = vmatpush1.bf16.msra.mxu0 0
      %2676 = vmatprep.subr.bf16.mxu0 0
      %2677 = vmatpush1.bf16.msra.mxu0 0
      %2678 = vmatprep.subr.bf16.mxu0 0
      %2679 = vmatpush1.bf16.msra.mxu0 0
      %2680 = vmatprep.subr.bf16.mxu0 0
      %2681 = vmatpush1.bf16.msra.mxu0 0
      %2682 = vmatprep.subr.bf16.mxu0 0
      %2683 = vmatpush1.bf16.msra.mxu0 0
      %2684 = vmatprep.subr.bf16.mxu0 0
      %2685 = vmatpush1.bf16.msra.mxu0 0
      %2686 = vmatprep.subr.bf16.mxu0 0
      %2687 = vmatpush1.bf16.msra.mxu0 0
      %2688 = vmatprep.subr.bf16.mxu0 0
      %2689 = vmatpush1.bf16.msra.mxu0 0
      %2690 = vmatprep.subr.bf16.mxu0 0
      %2691 = vmatpush1.bf16.msra.mxu0 0
      %2692 = vmatprep.mubr.bf16.mxu0 0
      %2693 = vmatmul.mubr.bf16.gmra.mrb[0].mxu0 %v2649
      %v2694 = vpop.f32.mrb[0].mxu0
      %v2695 = vadd.f32 0.0, %v2694
      %v2696 = vpop.f32.mrb[0].mxu0
      %v2697 = vpop.f32.mrb[0].mxu0
      %v2698 = vadd.f32 0.0, %v2697
      %v2699 = vpop.f32.mrb[0].mxu0
      %2700 = vmatprep.mubr.bf16.mxu0 0
      %2701 = vmatmul.mubr.bf16.gmra.mrb[0].mxu0 %v2652
      %v2702 = vpop.f32.mrb[0].mxu0
      %v2703 = vadd.f32 0.0, %v2702
      %v2704 = vpop.f32.mrb[0].mxu0
      %v2705 = vpop.f32.mrb[0].mxu0
      %v2706 = vadd.f32 0.0, %v2705
      %v2707 = vpop.f32.mrb[0].mxu0
      %2708 = vmatprep.mubr.bf16.mxu0 0
      %2709 = vmatmul.mubr.bf16.gmra.mrb[0].mxu0 %v2655
      %v2710 = vpop.f32.mrb[0].mxu0
      %v2711 = vadd.f32 0.0, %v2710
      %v2712 = vpop.f32.mrb[0].mxu0
      %v2713 = vpop.f32.mrb[0].mxu0
      %v2714 = vadd.f32 0.0, %v2713
      %v2715 = vpop.f32.mrb[0].mxu0
      %2716 = vdwg.mxu0
      %v2718 = vsel %vm531, %v2341, 0
      %v2721 = vsel %vm531, %v2342, 0
      %v2724 = vsel %vm531, %v2343, 0
      %v2727 = vsel %vm1130, %v2344, 0
      %2729 = vmatprep.subr.bf16.mxu0 0
      %2730 = vmatpush1.bf16.msra.mxu0 %v2727
      %2731 = vmatprep.subr.bf16.mxu0 0
      %2732 = vmatpush1.bf16.msra.mxu0 0
      %2733 = vmatprep.subr.bf16.mxu0 0
      %2734 = vmatpush1.bf16.msra.mxu0 0
      %2735 = vmatprep.subr.bf16.mxu0 0
      %2736 = vmatpush1.bf16.msra.mxu0 0
      %2737 = vmatprep.subr.bf16.mxu0 0
      %2738 = vmatpush1.bf16.msra.mxu0 0
      %2739 = vmatprep.subr.bf16.mxu0 0
      %2740 = vmatpush1.bf16.msra.mxu0 0
      %2741 = vmatprep.subr.bf16.mxu0 0
      %2742 = vmatpush1.bf16.msra.mxu0 0
      %2743 = vmatprep.subr.bf16.mxu0 0
      %2744 = vmatpush1.bf16.msra.mxu0 0
      %2745 = vmatprep.subr.bf16.mxu0 0
      %2746 = vmatpush1.bf16.msra.mxu0 0
      %2747 = vmatprep.subr.bf16.mxu0 0
      %2748 = vmatpush1.bf16.msra.mxu0 0
      %2749 = vmatprep.subr.bf16.mxu0 0
      %2750 = vmatpush1.bf16.msra.mxu0 0
      %2751 = vmatprep.subr.bf16.mxu0 0
      %2752 = vmatpush1.bf16.msra.mxu0 0
      %2753 = vmatprep.subr.bf16.mxu0 0
      %2754 = vmatpush1.bf16.msra.mxu0 0
      %2755 = vmatprep.subr.bf16.mxu0 0
      %2756 = vmatpush1.bf16.msra.mxu0 0
      %2757 = vmatprep.subr.bf16.mxu0 0
      %2758 = vmatpush1.bf16.msra.mxu0 0
      %2759 = vmatprep.subr.bf16.mxu0 0
      %2760 = vmatpush1.bf16.msra.mxu0 0
      %2761 = vmatprep.mubr.bf16.mxu0 0
      %2762 = vmatmul.mubr.bf16.gmra.mrb[0].mxu0 %v2718
      %v2763 = vpop.f32.mrb[0].mxu0
      %v2764 = vadd.f32 %v2695, %v2763
      %v2765 = vpop.f32.mrb[0].mxu0
      %v2766 = vpop.f32.mrb[0].mxu0
      %v2767 = vadd.f32 %v2698, %v2766
      %v2768 = vpop.f32.mrb[0].mxu0
      %2769 = vmatprep.mubr.bf16.mxu0 0
      %2770 = vmatmul.mubr.bf16.gmra.mrb[0].mxu0 %v2721
      %v2771 = vpop.f32.mrb[0].mxu0
      %v2772 = vadd.f32 %v2703, %v2771
      %v2773 = vpop.f32.mrb[0].mxu0
      %v2774 = vpop.f32.mrb[0].mxu0
      %v2775 = vadd.f32 %v2706, %v2774
      %v2776 = vpop.f32.mrb[0].mxu0
      %2777 = vmatprep.mubr.bf16.mxu0 0
      %2778 = vmatmul.mubr.bf16.gmra.mrb[0].mxu0 %v2724
      %v2779 = vpop.f32.mrb[0].mxu0
      %v2780 = vadd.f32 %v2711, %v2779
      %v2781 = vpop.f32.mrb[0].mxu0
      %v2782 = vpop.f32.mrb[0].mxu0
      %v2783 = vadd.f32 %v2714, %v2782
      %v2784 = vpop.f32.mrb[0].mxu0
      %2785 = vdwg.mxu0
      %2786 = vrot.lane.b32.xlu0 %v2036, 112
      %v2787 = vpop.permute.xlu0 %2786
      %2788 = vrot.lane.b32.xlu0 %v2037, 112
      %v2789 = vpop.permute.xlu0 %2788
      %2790 = vrot.lane.b32.xlu0 %v2038, 112
      %v2791 = vpop.permute.xlu0 %2790
      %2792 = vrot.lane.b32.xlu0 %v2039, 112
      %v2793 = vpop.permute.xlu0 %2792
      %2794 = vrot.lane.b32.xlu0 %v2040, 112
      %v2795 = vpop.permute.xlu0 %2794
      %2796 = vrot.lane.b32.xlu0 %v2041, 112
      %v2797 = vpop.permute.xlu0 %2796
      %2798 = vrot.lane.b32.xlu0 %v2036, 80
      %v2799 = vpop.permute.xlu0 %2798
      %2800 = vrot.lane.b32.xlu0 %v2037, 80
      %v2801 = vpop.permute.xlu0 %2800
      %2802 = vrot.lane.b32.xlu0 %v2038, 80
      %v2803 = vpop.permute.xlu0 %2802
      %2804 = vrot.lane.b32.xlu0 %v2039, 80
      %v2805 = vpop.permute.xlu0 %2804
      %2806 = vrot.lane.b32.xlu0 %v2040, 80
      %v2807 = vpop.permute.xlu0 %2806
      %2808 = vrot.lane.b32.xlu0 %v2041, 80
      %v2809 = vpop.permute.xlu0 %2808
      %v2810 = vsel %vm531, %v2787, 0
      %v2812 = vsel %vm531, %v2789, 0
      %v2814 = vsel %vm531, %v2791, 0
      %v2816 = vsel %vm531, %v2793, 0
      %v2818 = vsel %vm531, %v2795, 0
      %v2820 = vsel %vm531, %v2797, 0
      %v2822 = vsel %vm531, %v2799, 0
      %v2824 = vsel %vm531, %v2801, 0
      %v2826 = vsel %vm531, %v2803, 0
      %v2828 = vsel %vm531, %v2805, 0
      %v2830 = vsel %vm531, %v2807, 0
      %v2832 = vsel %vm531, %v2809, 0
      %2834 = vmatprep.subr.mxu0 0.0
      %2835 = vmatpush1.xpose.msra.mxu0 %v2822
      %2836 = vmatprep.subr.mxu0 0.0
      %2837 = vmatpush1.xpose.msra.mxu0 %v2824
      %2838 = vmatprep.subr.mxu0 0.0
      %2839 = vmatpush1.xpose.msra.mxu0 %v2826
      %2840 = vmatprep.subr.mxu0 0.0
      %2841 = vmatpush1.xpose.msra.mxu0 %v2828
      %2842 = vmatprep.subr.mxu0 0.0
      %2843 = vmatpush1.xpose.msra.mxu0 %v2830
      %2844 = vmatprep.subr.mxu0 0.0
      %2845 = vmatpush1.xpose.msra.mxu0 %v2832
      %2846 = vmatprep.subr.mxu0 0.0
      %2847 = vmatpush1.xpose.msra.mxu0 0.0
      %2848 = vmatprep.subr.mxu0 0.0
      %2849 = vmatpush1.xpose.msra.mxu0 0.0
      %2850 = vmatprep.subr.mxu0 0.0
      %2851 = vmatpush1.xpose.msra.mxu0 0.0
      %2852 = vmatprep.subr.mxu0 0.0
      %2853 = vmatpush1.xpose.msra.mxu0 0.0
      %2854 = vmatprep.subr.mxu0 0.0
      %2855 = vmatpush1.xpose.msra.mxu0 0.0
      %2856 = vmatprep.subr.mxu0 0.0
      %2857 = vmatpush1.xpose.msra.mxu0 0.0
      %2858 = vmatprep.subr.mxu0 0.0
      %2859 = vmatpush1.xpose.msra.mxu0 0.0
      %2860 = vmatprep.subr.mxu0 0.0
      %2861 = vmatpush1.xpose.msra.mxu0 0.0
      %2862 = vmatprep.subr.mxu0 0.0
      %2863 = vmatpush1.xpose.msra.mxu0 0.0
      %2864 = vmatprep.subr.mxu0 0.0
      %2865 = vmatpush1.xpose.msra.mxu0 0.0
      %2866 = vmatprep.subr.mxu0 0.0
      %2867 = vmatpush1.xpose.msra.mxu0 0.0
      %2868 = vmatprep.subr.mxu0 0.0
      %2869 = vmatpush1.xpose.msra.mxu0 0.0
      %2870 = vmatprep.subr.mxu0 0.0
      %2871 = vmatpush1.xpose.msra.mxu0 0.0
      %2872 = vmatprep.subr.mxu0 0.0
      %2873 = vmatpush1.xpose.msra.mxu0 0.0
      %2874 = vmatprep.subr.mxu0 0.0
      %2875 = vmatpush1.xpose.msra.mxu0 0.0
      %2876 = vmatprep.subr.mxu0 0.0
      %2877 = vmatpush1.xpose.msra.mxu0 0.0
      %2878 = vmatprep.subr.mxu0 0.0
      %2879 = vmatpush1.xpose.msra.mxu0 0.0
      %2880 = vmatprep.subr.mxu0 0.0
      %2881 = vmatpush1.xpose.msra.mxu0 0.0
      %2882 = vmatprep.subr.mxu0 0.0
      %2883 = vmatpush1.xpose.msra.mxu0 0.0
      %2884 = vmatprep.subr.mxu0 0.0
      %2885 = vmatpush1.xpose.msra.mxu0 0.0
      %2886 = vmatprep.subr.mxu0 0.0
      %2887 = vmatpush1.xpose.msra.mxu0 0.0
      %2888 = vmatprep.subr.mxu0 0.0
      %2889 = vmatpush1.xpose.msra.mxu0 0.0
      %2890 = vmatprep.subr.mxu0 0.0
      %2891 = vmatpush1.xpose.msra.mxu0 0.0
      %2892 = vmatprep.subr.mxu0 0.0
      %2893 = vmatpush1.xpose.msra.mxu0 0.0
      %2894 = vmatprep.subr.mxu0 0.0
      %2895 = vmatpush1.xpose.msra.mxu0 0.0
      %2896 = vmatprep.subr.mxu0 0.0
      %2897 = vmatpush1.xpose.msra.mxu0 0.0
      %2898 = vmatprep.mubr.f32.mxu0 0.0
      %2899 = vmatmul.mubr.f32.gmra.mrb[0].mxu0 %v2810
      %v2900 = vpop.f32.mrb[0].mxu0
      %v2901 = vadd.f32 0.0, %v2900
      %v2902 = vpop.f32.mrb[0].mxu0
      %2903 = vmatprep.mubr.f32.mxu0 0.0
      %2904 = vmatmul.mubr.f32.gmra.mrb[0].mxu0 %v2812
      %v2905 = vpop.f32.mrb[0].mxu0
      %v2906 = vadd.f32 0.0, %v2905
      %v2907 = vpop.f32.mrb[0].mxu0
      %2908 = vmatprep.mubr.f32.mxu0 0.0
      %2909 = vmatmul.mubr.f32.gmra.mrb[0].mxu0 %v2814
      %v2910 = vpop.f32.mrb[0].mxu0
      %v2911 = vadd.f32 0.0, %v2910
      %v2912 = vpop.f32.mrb[0].mxu0
      %2913 = vmatprep.mubr.f32.mxu0 0.0
      %2914 = vmatmul.mubr.f32.gmra.mrb[0].mxu0 %v2816
      %v2915 = vpop.f32.mrb[0].mxu0
      %v2916 = vadd.f32 0.0, %v2915
      %v2917 = vpop.f32.mrb[0].mxu0
      %2918 = vmatprep.mubr.f32.mxu0 0.0
      %2919 = vmatmul.mubr.f32.gmra.mrb[0].mxu0 %v2818
      %v2920 = vpop.f32.mrb[0].mxu0
      %v2921 = vadd.f32 0.0, %v2920
      %v2922 = vpop.f32.mrb[0].mxu0
      %2923 = vmatprep.mubr.f32.mxu0 0.0
      %2924 = vmatmul.mubr.f32.gmra.mrb[0].mxu0 %v2820
      %v2925 = vpop.f32.mrb[0].mxu0
      %v2926 = vadd.f32 0.0, %v2925
      %v2927 = vpop.f32.mrb[0].mxu0
      %2928 = vdwg.mxu0
      %v2929 = vsel %vm506, %v2901, -1e+30
      %v2930 = vsel %vm506, %v2906, -1e+30
      %v2931 = vsel %vm506, %v2911, -1e+30
      %v2932 = vsel %vm506, %v2916, -1e+30
      %v2933 = vsel %vm506, %v2921, -1e+30
      %v2934 = vsel %vm506, %v2926, -1e+30
      %v2935 = vsel %vm657, %v2929, -inf
      %2936 = vmax.xlane.f32.xlu0 %v2935
      %v2937 = vpop.xlane.xlu0 %2936
      %v2938 = vsel %vm657, %v2930, -inf
      %2939 = vmax.xlane.f32.xlu0 %v2938
      %v2940 = vpop.xlane.xlu0 %2939
      %v2941 = vsel %vm657, %v2931, -inf
      %2942 = vmax.xlane.f32.xlu0 %v2941
      %v2943 = vpop.xlane.xlu0 %2942
      %v2944 = vsel %vm657, %v2932, -inf
      %2945 = vmax.xlane.f32.xlu0 %v2944
      %v2946 = vpop.xlane.xlu0 %2945
      %v2947 = vsel %vm657, %v2933, -inf
      %2948 = vmax.xlane.f32.xlu0 %v2947
      %v2949 = vpop.xlane.xlu0 %2948
      %v2950 = vsel %vm657, %v2934, -inf
      %2951 = vmax.xlane.f32.xlu0 %v2950
      %v2952 = vpop.xlane.xlu0 %2951
      %v2953 = vsub.f32 %v2929, %v2937
      %v2954 = vsub.f32 %v2930, %v2940
      %v2955 = vsub.f32 %v2931, %v2943
      %v2956 = vsub.f32 %v2932, %v2946
      %v2957 = vsub.f32 %v2933, %v2949
      %v2958 = vsub.f32 %v2934, %v2952
      %v2959 = vmul.f32 %v2953, 1.442695
      %v2960 = vpow.pop %v2959
      %v2961 = vmul.f32 %v2954, 1.442695
      %v2962 = vpow.pop %v2961
      %v2963 = vmul.f32 %v2955, 1.442695
      %v2964 = vpow.pop %v2963
      %v2965 = vmul.f32 %v2956, 1.442695
      %v2966 = vpow.pop %v2965
      %v2967 = vmul.f32 %v2957, 1.442695
      %v2968 = vpow.pop %v2967
      %v2969 = vmul.f32 %v2958, 1.442695
      %v2970 = vpow.pop %v2969
      %v2971 = vsel %vm657, %v2960, 0.0
      %2972 = vadd.xlane.f32.xlu0 %v2971
      %v2973 = vpop.xlane.xlu0 %2972
      %v2974 = vsel %vm657, %v2962, 0.0
      %2975 = vadd.xlane.f32.xlu0 %v2974
      %v2976 = vpop.xlane.xlu0 %2975
      %v2977 = vsel %vm657, %v2964, 0.0
      %2978 = vadd.xlane.f32.xlu0 %v2977
      %v2979 = vpop.xlane.xlu0 %2978
      %v2980 = vsel %vm657, %v2966, 0.0
      %2981 = vadd.xlane.f32.xlu0 %v2980
      %v2982 = vpop.xlane.xlu0 %2981
      %v2983 = vsel %vm657, %v2968, 0.0
      %2984 = vadd.xlane.f32.xlu0 %v2983
      %v2985 = vpop.xlane.xlu0 %2984
      %v2986 = vsel %vm657, %v2970, 0.0
      %2987 = vadd.xlane.f32.xlu0 %v2986
      %v2988 = vpop.xlane.xlu0 %2987
      %v2989 = vrcp.pop %v2973
      %v2990 = vmul.f32 %v2960, %v2989
      %v2991 = vrcp.pop %v2976
      %v2992 = vmul.f32 %v2962, %v2991
      %v2993 = vrcp.pop %v2979
      %v2994 = vmul.f32 %v2964, %v2993
      %v2995 = vrcp.pop %v2982
      %v2996 = vmul.f32 %v2966, %v2995
      %v2997 = vrcp.pop %v2985
      %v2998 = vmul.f32 %v2968, %v2997
      %v2999 = vrcp.pop %v2988
      %v3000 = vmul.f32 %v2970, %v2999
      %v3001 = vadd.f32 %v2560, %v2990
      %v3002 = vadd.f32 %v2561, %v2992
      %v3003 = vadd.f32 %v2562, %v2994
      %v3004 = vadd.f32 %v2563, %v2996
      %v3005 = vadd.f32 %v2564, %v2998
      %v3006 = vadd.f32 %v2565, %v3000
      %v3007 = vpack.c.bf16 %v2992, %v2990
      %v3008 = vpack.c.bf16 %v2996, %v2994
      %v3009 = vpack.c.bf16 %v3000, %v2998
      %3010 = vrot.lane.b32.xlu0 %v2260, 48
      %v3011 = vpop.permute.xlu0 %3010
      %3012 = vrot.lane.b32.xlu0 %v2261, 48
      %v3013 = vpop.permute.xlu0 %3012
      %3014 = vrot.lane.b32.xlu0 %v2262, 48
      %v3015 = vpop.permute.xlu0 %3014
      %v3020 = vsel %vm657, %v3007, 0
      %v3023 = vsel %vm657, %v3008, 0
      %v3026 = vsel %vm657, %v3009, 0
      %3028 = vmatprep.subr.bf16.mxu0 0
      %3029 = vmatpush1.bf16.msra.mxu0 %v3011
      %3030 = vmatprep.subr.bf16.mxu0 0
      %3031 = vmatpush1.bf16.msra.mxu0 %v3013
      %3032 = vmatprep.subr.bf16.mxu0 0
      %3033 = vmatpush1.bf16.msra.mxu0 %v3015
      %3034 = vmatprep.subr.bf16.mxu0 0
      %3035 = vmatpush1.bf16.msra.mxu0 0
      %3036 = vmatprep.subr.bf16.mxu0 0
      %3037 = vmatpush1.bf16.msra.mxu0 0
      %3038 = vmatprep.subr.bf16.mxu0 0
      %3039 = vmatpush1.bf16.msra.mxu0 0
      %3040 = vmatprep.subr.bf16.mxu0 0
      %3041 = vmatpush1.bf16.msra.mxu0 0
      %3042 = vmatprep.subr.bf16.mxu0 0
      %3043 = vmatpush1.bf16.msra.mxu0 0
      %3044 = vmatprep.subr.bf16.mxu0 0
      %3045 = vmatpush1.bf16.msra.mxu0 0
      %3046 = vmatprep.subr.bf16.mxu0 0
      %3047 = vmatpush1.bf16.msra.mxu0 0
      %3048 = vmatprep.subr.bf16.mxu0 0
      %3049 = vmatpush1.bf16.msra.mxu0 0
      %3050 = vmatprep.subr.bf16.mxu0 0
      %3051 = vmatpush1.bf16.msra.mxu0 0
      %3052 = vmatprep.subr.bf16.mxu0 0
      %3053 = vmatpush1.bf16.msra.mxu0 0
      %3054 = vmatprep.subr.bf16.mxu0 0
      %3055 = vmatpush1.bf16.msra.mxu0 0
      %3056 = vmatprep.subr.bf16.mxu0 0
      %3057 = vmatpush1.bf16.msra.mxu0 0
      %3058 = vmatprep.subr.bf16.mxu0 0
      %3059 = vmatpush1.bf16.msra.mxu0 0
      %3060 = vmatprep.mubr.bf16.mxu0 0
      %3061 = vmatmul.mubr.bf16.gmra.mrb[0].mxu0 %v3020
      %v3062 = vpop.f32.mrb[0].mxu0
      %v3063 = vadd.f32 0.0, %v3062
      %v3064 = vpop.f32.mrb[0].mxu0
      %v3065 = vpop.f32.mrb[0].mxu0
      %v3066 = vadd.f32 0.0, %v3065
      %v3067 = vpop.f32.mrb[0].mxu0
      %3068 = vmatprep.mubr.bf16.mxu0 0
      %3069 = vmatmul.mubr.bf16.gmra.mrb[0].mxu0 %v3023
      %v3070 = vpop.f32.mrb[0].mxu0
      %v3071 = vadd.f32 0.0, %v3070
      %v3072 = vpop.f32.mrb[0].mxu0
      %v3073 = vpop.f32.mrb[0].mxu0
      %v3074 = vadd.f32 0.0, %v3073
      %v3075 = vpop.f32.mrb[0].mxu0
      %3076 = vmatprep.mubr.bf16.mxu0 0
      %3077 = vmatmul.mubr.bf16.gmra.mrb[0].mxu0 %v3026
      %v3078 = vpop.f32.mrb[0].mxu0
      %v3079 = vadd.f32 0.0, %v3078
      %v3080 = vpop.f32.mrb[0].mxu0
      %v3081 = vpop.f32.mrb[0].mxu0
      %v3082 = vadd.f32 0.0, %v3081
      %v3083 = vpop.f32.mrb[0].mxu0
      %3084 = vdwg.mxu0
      %v3085 = vpack.c.bf16 %v3066, %v3063
      %v3086 = vpack.c.bf16 %v3074, %v3071
      %v3087 = vpack.c.bf16 %v3082, %v3079
      %v3088 = vld [vmem:[%s3 + $0x8] sm:$0xf]
      %v3090 = vsel %vm531, %v3085, 0
      %v3093 = vsel %vm531, %v3086, 0
      %v3096 = vsel %vm531, %v3087, 0
      %v3099 = vsel %vm1130, %v3088, 0
      %3101 = vmatprep.subr.bf16.mxu0 0
      %3102 = vmatpush1.bf16.msra.mxu0 %v3099
      %3103 = vmatprep.subr.bf16.mxu0 0
      %3104 = vmatpush1.bf16.msra.mxu0 0
      %3105 = vmatprep.subr.bf16.mxu0 0
      %3106 = vmatpush1.bf16.msra.mxu0 0
      %3107 = vmatprep.subr.bf16.mxu0 0
      %3108 = vmatpush1.bf16.msra.mxu0 0
      %3109 = vmatprep.subr.bf16.mxu0 0
      %3110 = vmatpush1.bf16.msra.mxu0 0
      %3111 = vmatprep.subr.bf16.mxu0 0
      %3112 = vmatpush1.bf16.msra.mxu0 0
      %3113 = vmatprep.subr.bf16.mxu0 0
      %3114 = vmatpush1.bf16.msra.mxu0 0
      %3115 = vmatprep.subr.bf16.mxu0 0
      %3116 = vmatpush1.bf16.msra.mxu0 0
      %3117 = vmatprep.subr.bf16.mxu0 0
      %3118 = vmatpush1.bf16.msra.mxu0 0
      %3119 = vmatprep.subr.bf16.mxu0 0
      %3120 = vmatpush1.bf16.msra.mxu0 0
      %3121 = vmatprep.subr.bf16.mxu0 0
      %3122 = vmatpush1.bf16.msra.mxu0 0
      %3123 = vmatprep.subr.bf16.mxu0 0
      %3124 = vmatpush1.bf16.msra.mxu0 0
      %3125 = vmatprep.subr.bf16.mxu0 0
      %3126 = vmatpush1.bf16.msra.mxu0 0
      %3127 = vmatprep.subr.bf16.mxu0 0
      %3128 = vmatpush1.bf16.msra.mxu0 0
      %3129 = vmatprep.subr.bf16.mxu0 0
      %3130 = vmatpush1.bf16.msra.mxu0 0
      %3131 = vmatprep.subr.bf16.mxu0 0
      %3132 = vmatpush1.bf16.msra.mxu0 0
      %3133 = vmatprep.mubr.bf16.mxu0 0
      %3134 = vmatmul.mubr.bf16.gmra.mrb[0].mxu0 %v3090
      %v3135 = vpop.f32.mrb[0].mxu0
      %v3136 = vadd.f32 0.0, %v3135
      %v3137 = vpop.f32.mrb[0].mxu0
      %v3138 = vpop.f32.mrb[0].mxu0
      %v3139 = vadd.f32 0.0, %v3138
      %v3140 = vpop.f32.mrb[0].mxu0
      %3141 = vmatprep.mubr.bf16.mxu0 0
      %3142 = vmatmul.mubr.bf16.gmra.mrb[0].mxu0 %v3093
      %v3143 = vpop.f32.mrb[0].mxu0
      %v3144 = vadd.f32 0.0, %v3143
      %v3145 = vpop.f32.mrb[0].mxu0
      %v3146 = vpop.f32.mrb[0].mxu0
      %v3147 = vadd.f32 0.0, %v3146
      %v3148 = vpop.f32.mrb[0].mxu0
      %3149 = vmatprep.mubr.bf16.mxu0 0
      %3150 = vmatmul.mubr.bf16.gmra.mrb[0].mxu0 %v3096
      %v3151 = vpop.f32.mrb[0].mxu0
      %v3152 = vadd.f32 0.0, %v3151
      %v3153 = vpop.f32.mrb[0].mxu0
      %v3154 = vpop.f32.mrb[0].mxu0
      %v3155 = vadd.f32 0.0, %v3154
      %v3156 = vpop.f32.mrb[0].mxu0
      %3157 = vdwg.mxu0
      %v3158 = vadd.f32 %v2764, %v3136
      %v3159 = vadd.f32 %v2767, %v3139
      %v3160 = vadd.f32 %v2772, %v3144
      %v3161 = vadd.f32 %v2775, %v3147
      %v3162 = vadd.f32 %v2780, %v3152
      %v3163 = vadd.f32 %v2783, %v3155
      %3164 = vrot.lane.b32.xlu0 %v2036, 104
      %v3165 = vpop.permute.xlu0 %3164
      %3166 = vrot.lane.b32.xlu0 %v2037, 104
      %v3167 = vpop.permute.xlu0 %3166
      %3168 = vrot.lane.b32.xlu0 %v2038, 104
      %v3169 = vpop.permute.xlu0 %3168
      %3170 = vrot.lane.b32.xlu0 %v2039, 104
      %v3171 = vpop.permute.xlu0 %3170
      %3172 = vrot.lane.b32.xlu0 %v2040, 104
      %v3173 = vpop.permute.xlu0 %3172
      %3174 = vrot.lane.b32.xlu0 %v2041, 104
      %v3175 = vpop.permute.xlu0 %3174
      %3176 = vrot.lane.b32.xlu0 %v2036, 72
      %v3177 = vpop.permute.xlu0 %3176
      %3178 = vrot.lane.b32.xlu0 %v2037, 72
      %v3179 = vpop.permute.xlu0 %3178
      %3180 = vrot.lane.b32.xlu0 %v2038, 72
      %v3181 = vpop.permute.xlu0 %3180
      %3182 = vrot.lane.b32.xlu0 %v2039, 72
      %v3183 = vpop.permute.xlu0 %3182
      %3184 = vrot.lane.b32.xlu0 %v2040, 72
      %v3185 = vpop.permute.xlu0 %3184
      %3186 = vrot.lane.b32.xlu0 %v2041, 72
      %v3187 = vpop.permute.xlu0 %3186
      %v3188 = vsel %vm531, %v3165, 0
      %v3190 = vsel %vm531, %v3167, 0
      %v3192 = vsel %vm531, %v3169, 0
      %v3194 = vsel %vm531, %v3171, 0
      %v3196 = vsel %vm531, %v3173, 0
      %v3198 = vsel %vm531, %v3175, 0
      %v3200 = vsel %vm531, %v3177, 0
      %v3202 = vsel %vm531, %v3179, 0
      %v3204 = vsel %vm531, %v3181, 0
      %v3206 = vsel %vm531, %v3183, 0
      %v3208 = vsel %vm531, %v3185, 0
      %v3210 = vsel %vm531, %v3187, 0
      %3212 = vmatprep.subr.mxu0 0.0
      %3213 = vmatpush1.xpose.msra.mxu0 %v3200
      %3214 = vmatprep.subr.mxu0 0.0
      %3215 = vmatpush1.xpose.msra.mxu0 %v3202
      %3216 = vmatprep.subr.mxu0 0.0
      %3217 = vmatpush1.xpose.msra.mxu0 %v3204
      %3218 = vmatprep.subr.mxu0 0.0
      %3219 = vmatpush1.xpose.msra.mxu0 %v3206
      %3220 = vmatprep.subr.mxu0 0.0
      %3221 = vmatpush1.xpose.msra.mxu0 %v3208
      %3222 = vmatprep.subr.mxu0 0.0
      %3223 = vmatpush1.xpose.msra.mxu0 %v3210
      %3224 = vmatprep.subr.mxu0 0.0
      %3225 = vmatpush1.xpose.msra.mxu0 0.0
      %3226 = vmatprep.subr.mxu0 0.0
      %3227 = vmatpush1.xpose.msra.mxu0 0.0
      %3228 = vmatprep.subr.mxu0 0.0
      %3229 = vmatpush1.xpose.msra.mxu0 0.0
      %3230 = vmatprep.subr.mxu0 0.0
      %3231 = vmatpush1.xpose.msra.mxu0 0.0
      %3232 = vmatprep.subr.mxu0 0.0
      %3233 = vmatpush1.xpose.msra.mxu0 0.0
      %3234 = vmatprep.subr.mxu0 0.0
      %3235 = vmatpush1.xpose.msra.mxu0 0.0
      %3236 = vmatprep.subr.mxu0 0.0
      %3237 = vmatpush1.xpose.msra.mxu0 0.0
      %3238 = vmatprep.subr.mxu0 0.0
      %3239 = vmatpush1.xpose.msra.mxu0 0.0
      %3240 = vmatprep.subr.mxu0 0.0
      %3241 = vmatpush1.xpose.msra.mxu0 0.0
      %3242 = vmatprep.subr.mxu0 0.0
      %3243 = vmatpush1.xpose.msra.mxu0 0.0
      %3244 = vmatprep.subr.mxu0 0.0
      %3245 = vmatpush1.xpose.msra.mxu0 0.0
      %3246 = vmatprep.subr.mxu0 0.0
      %3247 = vmatpush1.xpose.msra.mxu0 0.0
      %3248 = vmatprep.subr.mxu0 0.0
      %3249 = vmatpush1.xpose.msra.mxu0 0.0
      %3250 = vmatprep.subr.mxu0 0.0
      %3251 = vmatpush1.xpose.msra.mxu0 0.0
      %3252 = vmatprep.subr.mxu0 0.0
      %3253 = vmatpush1.xpose.msra.mxu0 0.0
      %3254 = vmatprep.subr.mxu0 0.0
      %3255 = vmatpush1.xpose.msra.mxu0 0.0
      %3256 = vmatprep.subr.mxu0 0.0
      %3257 = vmatpush1.xpose.msra.mxu0 0.0
      %3258 = vmatprep.subr.mxu0 0.0
      %3259 = vmatpush1.xpose.msra.mxu0 0.0
      %3260 = vmatprep.subr.mxu0 0.0
      %3261 = vmatpush1.xpose.msra.mxu0 0.0
      %3262 = vmatprep.subr.mxu0 0.0
      %3263 = vmatpush1.xpose.msra.mxu0 0.0
      %3264 = vmatprep.subr.mxu0 0.0
      %3265 = vmatpush1.xpose.msra.mxu0 0.0
      %3266 = vmatprep.subr.mxu0 0.0
      %3267 = vmatpush1.xpose.msra.mxu0 0.0
      %3268 = vmatprep.subr.mxu0 0.0
      %3269 = vmatpush1.xpose.msra.mxu0 0.0
      %3270 = vmatprep.subr.mxu0 0.0
      %3271 = vmatpush1.xpose.msra.mxu0 0.0
      %3272 = vmatprep.subr.mxu0 0.0
      %3273 = vmatpush1.xpose.msra.mxu0 0.0
      %3274 = vmatprep.subr.mxu0 0.0
      %3275 = vmatpush1.xpose.msra.mxu0 0.0
      %3276 = vmatprep.mubr.f32.mxu0 0.0
      %3277 = vmatmul.mubr.f32.gmra.mrb[0].mxu0 %v3188
      %v3278 = vpop.f32.mrb[0].mxu0
      %v3279 = vadd.f32 0.0, %v3278
      %v3280 = vpop.f32.mrb[0].mxu0
      %3281 = vmatprep.mubr.f32.mxu0 0.0
      %3282 = vmatmul.mubr.f32.gmra.mrb[0].mxu0 %v3190
      %v3283 = vpop.f32.mrb[0].mxu0
      %v3284 = vadd.f32 0.0, %v3283
      %v3285 = vpop.f32.mrb[0].mxu0
      %3286 = vmatprep.mubr.f32.mxu0 0.0
      %3287 = vmatmul.mubr.f32.gmra.mrb[0].mxu0 %v3192
      %v3288 = vpop.f32.mrb[0].mxu0
      %v3289 = vadd.f32 0.0, %v3288
      %v3290 = vpop.f32.mrb[0].mxu0
      %3291 = vmatprep.mubr.f32.mxu0 0.0
      %3292 = vmatmul.mubr.f32.gmra.mrb[0].mxu0 %v3194
      %v3293 = vpop.f32.mrb[0].mxu0
      %v3294 = vadd.f32 0.0, %v3293
      %v3295 = vpop.f32.mrb[0].mxu0
      %3296 = vmatprep.mubr.f32.mxu0 0.0
      %3297 = vmatmul.mubr.f32.gmra.mrb[0].mxu0 %v3196
      %v3298 = vpop.f32.mrb[0].mxu0
      %v3299 = vadd.f32 0.0, %v3298
      %v3300 = vpop.f32.mrb[0].mxu0
      %3301 = vmatprep.mubr.f32.mxu0 0.0
      %3302 = vmatmul.mubr.f32.gmra.mrb[0].mxu0 %v3198
      %v3303 = vpop.f32.mrb[0].mxu0
      %v3304 = vadd.f32 0.0, %v3303
      %v3305 = vpop.f32.mrb[0].mxu0
      %3306 = vdwg.mxu0
      %v3307 = vsel %vm506, %v3279, -1e+30
      %v3308 = vsel %vm506, %v3284, -1e+30
      %v3309 = vsel %vm506, %v3289, -1e+30
      %v3310 = vsel %vm506, %v3294, -1e+30
      %v3311 = vsel %vm506, %v3299, -1e+30
      %v3312 = vsel %vm506, %v3304, -1e+30
      %v3313 = vsel %vm657, %v3307, -inf
      %3314 = vmax.xlane.f32.xlu0 %v3313
      %v3315 = vpop.xlane.xlu0 %3314
      %v3316 = vsel %vm657, %v3308, -inf
      %3317 = vmax.xlane.f32.xlu0 %v3316
      %v3318 = vpop.xlane.xlu0 %3317
      %v3319 = vsel %vm657, %v3309, -inf
      %3320 = vmax.xlane.f32.xlu0 %v3319
      %v3321 = vpop.xlane.xlu0 %3320
      %v3322 = vsel %vm657, %v3310, -inf
      %3323 = vmax.xlane.f32.xlu0 %v3322
      %v3324 = vpop.xlane.xlu0 %3323
      %v3325 = vsel %vm657, %v3311, -inf
      %3326 = vmax.xlane.f32.xlu0 %v3325
      %v3327 = vpop.xlane.xlu0 %3326
      %v3328 = vsel %vm657, %v3312, -inf
      %3329 = vmax.xlane.f32.xlu0 %v3328
      %v3330 = vpop.xlane.xlu0 %3329
      %v3331 = vsub.f32 %v3307, %v3315
      %v3332 = vsub.f32 %v3308, %v3318
      %v3333 = vsub.f32 %v3309, %v3321
      %v3334 = vsub.f32 %v3310, %v3324
      %v3335 = vsub.f32 %v3311, %v3327
      %v3336 = vsub.f32 %v3312, %v3330
      %v3337 = vmul.f32 %v3331, 1.442695
      %v3338 = vpow.pop %v3337
      %v3339 = vmul.f32 %v3332, 1.442695
      %v3340 = vpow.pop %v3339
      %v3341 = vmul.f32 %v3333, 1.442695
      %v3342 = vpow.pop %v3341
      %v3343 = vmul.f32 %v3334, 1.442695
      %v3344 = vpow.pop %v3343
      %v3345 = vmul.f32 %v3335, 1.442695
      %v3346 = vpow.pop %v3345
      %v3347 = vmul.f32 %v3336, 1.442695
      %v3348 = vpow.pop %v3347
      %v3349 = vsel %vm657, %v3338, 0.0
      %3350 = vadd.xlane.f32.xlu0 %v3349
      %v3351 = vpop.xlane.xlu0 %3350
      %v3352 = vsel %vm657, %v3340, 0.0
      %3353 = vadd.xlane.f32.xlu0 %v3352
      %v3354 = vpop.xlane.xlu0 %3353
      %v3355 = vsel %vm657, %v3342, 0.0
      %3356 = vadd.xlane.f32.xlu0 %v3355
      %v3357 = vpop.xlane.xlu0 %3356
      %v3358 = vsel %vm657, %v3344, 0.0
      %3359 = vadd.xlane.f32.xlu0 %v3358
      %v3360 = vpop.xlane.xlu0 %3359
      %v3361 = vsel %vm657, %v3346, 0.0
      %3362 = vadd.xlane.f32.xlu0 %v3361
      %v3363 = vpop.xlane.xlu0 %3362
      %v3364 = vsel %vm657, %v3348, 0.0
      %3365 = vadd.xlane.f32.xlu0 %v3364
      %v3366 = vpop.xlane.xlu0 %3365
      %v3367 = vrcp.pop %v3351
      %v3368 = vmul.f32 %v3338, %v3367
      %v3369 = vrcp.pop %v3354
      %v3370 = vmul.f32 %v3340, %v3369
      %v3371 = vrcp.pop %v3357
      %v3372 = vmul.f32 %v3342, %v3371
      %v3373 = vrcp.pop %v3360
      %v3374 = vmul.f32 %v3344, %v3373
      %v3375 = vrcp.pop %v3363
      %v3376 = vmul.f32 %v3346, %v3375
      %v3377 = vrcp.pop %v3366
      %v3378 = vmul.f32 %v3348, %v3377
      %v3379 = vadd.f32 %v3001, %v3368
      %v3380 = vadd.f32 %v3002, %v3370
      %v3381 = vadd.f32 %v3003, %v3372
      %v3382 = vadd.f32 %v3004, %v3374
      %v3383 = vadd.f32 %v3005, %v3376
      %v3384 = vadd.f32 %v3006, %v3378
      %v3385 = vpack.c.bf16 %v3370, %v3368
      %v3386 = vpack.c.bf16 %v3374, %v3372
      %v3387 = vpack.c.bf16 %v3378, %v3376
      %3388 = vrot.lane.b32.xlu0 %v2260, 40
      %v3389 = vpop.permute.xlu0 %3388
      %3390 = vrot.lane.b32.xlu0 %v2261, 40
      %v3391 = vpop.permute.xlu0 %3390
      %3392 = vrot.lane.b32.xlu0 %v2262, 40
      %v3393 = vpop.permute.xlu0 %3392
      %v3398 = vsel %vm657, %v3385, 0
      %v3401 = vsel %vm657, %v3386, 0
      %v3404 = vsel %vm657, %v3387, 0
      %3406 = vmatprep.subr.bf16.mxu0 0
      %3407 = vmatpush1.bf16.msra.mxu0 %v3389
      %3408 = vmatprep.subr.bf16.mxu0 0
      %3409 = vmatpush1.bf16.msra.mxu0 %v3391
      %3410 = vmatprep.subr.bf16.mxu0 0
      %3411 = vmatpush1.bf16.msra.mxu0 %v3393
      %3412 = vmatprep.subr.bf16.mxu0 0
      %3413 = vmatpush1.bf16.msra.mxu0 0
      %3414 = vmatprep.subr.bf16.mxu0 0
      %3415 = vmatpush1.bf16.msra.mxu0 0
      %3416 = vmatprep.subr.bf16.mxu0 0
      %3417 = vmatpush1.bf16.msra.mxu0 0
      %3418 = vmatprep.subr.bf16.mxu0 0
      %3419 = vmatpush1.bf16.msra.mxu0 0
      %3420 = vmatprep.subr.bf16.mxu0 0
      %3421 = vmatpush1.bf16.msra.mxu0 0
      %3422 = vmatprep.subr.bf16.mxu0 0
      %3423 = vmatpush1.bf16.msra.mxu0 0
      %3424 = vmatprep.subr.bf16.mxu0 0
      %3425 = vmatpush1.bf16.msra.mxu0 0
      %3426 = vmatprep.subr.bf16.mxu0 0
      %3427 = vmatpush1.bf16.msra.mxu0 0
      %3428 = vmatprep.subr.bf16.mxu0 0
      %3429 = vmatpush1.bf16.msra.mxu0 0
      %3430 = vmatprep.subr.bf16.mxu0 0
      %3431 = vmatpush1.bf16.msra.mxu0 0
      %3432 = vmatprep.subr.bf16.mxu0 0
      %3433 = vmatpush1.bf16.msra.mxu0 0
      %3434 = vmatprep.subr.bf16.mxu0 0
      %3435 = vmatpush1.bf16.msra.mxu0 0
      %3436 = vmatprep.subr.bf16.mxu0 0
      %3437 = vmatpush1.bf16.msra.mxu0 0
      %3438 = vmatprep.mubr.bf16.mxu0 0
      %3439 = vmatmul.mubr.bf16.gmra.mrb[0].mxu0 %v3398
      %v3440 = vpop.f32.mrb[0].mxu0
      %v3441 = vadd.f32 0.0, %v3440
      %v3442 = vpop.f32.mrb[0].mxu0
      %v3443 = vpop.f32.mrb[0].mxu0
      %v3444 = vadd.f32 0.0, %v3443
      %v3445 = vpop.f32.mrb[0].mxu0
      %3446 = vmatprep.mubr.bf16.mxu0 0
      %3447 = vmatmul.mubr.bf16.gmra.mrb[0].mxu0 %v3401
      %v3448 = vpop.f32.mrb[0].mxu0
      %v3449 = vadd.f32 0.0, %v3448
      %v3450 = vpop.f32.mrb[0].mxu0
      %v3451 = vpop.f32.mrb[0].mxu0
      %v3452 = vadd.f32 0.0, %v3451
      %v3453 = vpop.f32.mrb[0].mxu0
      %3454 = vmatprep.mubr.bf16.mxu0 0
      %3455 = vmatmul.mubr.bf16.gmra.mrb[0].mxu0 %v3404
      %v3456 = vpop.f32.mrb[0].mxu0
      %v3457 = vadd.f32 0.0, %v3456
      %v3458 = vpop.f32.mrb[0].mxu0
      %v3459 = vpop.f32.mrb[0].mxu0
      %v3460 = vadd.f32 0.0, %v3459
      %v3461 = vpop.f32.mrb[0].mxu0
      %3462 = vdwg.mxu0
      %v3463 = vpack.c.bf16 %v3444, %v3441
      %v3464 = vpack.c.bf16 %v3452, %v3449
      %v3465 = vpack.c.bf16 %v3460, %v3457
      %v3466 = vld [vmem:[%s3 + $0xc] sm:$0xf]
      %v3468 = vsel %vm531, %v3463, 0
      %v3471 = vsel %vm531, %v3464, 0
      %v3474 = vsel %vm531, %v3465, 0
      %v3477 = vsel %vm1130, %v3466, 0
      %3479 = vmatprep.subr.bf16.mxu0 0
      %3480 = vmatpush1.bf16.msra.mxu0 %v3477
      %3481 = vmatprep.subr.bf16.mxu0 0
      %3482 = vmatpush1.bf16.msra.mxu0 0
      %3483 = vmatprep.subr.bf16.mxu0 0
      %3484 = vmatpush1.bf16.msra.mxu0 0
      %3485 = vmatprep.subr.bf16.mxu0 0
      %3486 = vmatpush1.bf16.msra.mxu0 0
      %3487 = vmatprep.subr.bf16.mxu0 0
      %3488 = vmatpush1.bf16.msra.mxu0 0
      %3489 = vmatprep.subr.bf16.mxu0 0
      %3490 = vmatpush1.bf16.msra.mxu0 0
      %3491 = vmatprep.subr.bf16.mxu0 0
      %3492 = vmatpush1.bf16.msra.mxu0 0
      %3493 = vmatprep.subr.bf16.mxu0 0
      %3494 = vmatpush1.bf16.msra.mxu0 0
      %3495 = vmatprep.subr.bf16.mxu0 0
      %3496 = vmatpush1.bf16.msra.mxu0 0
      %3497 = vmatprep.subr.bf16.mxu0 0
      %3498 = vmatpush1.bf16.msra.mxu0 0
      %3499 = vmatprep.subr.bf16.mxu0 0
      %3500 = vmatpush1.bf16.msra.mxu0 0
      %3501 = vmatprep.subr.bf16.mxu0 0
      %3502 = vmatpush1.bf16.msra.mxu0 0
      %3503 = vmatprep.subr.bf16.mxu0 0
      %3504 = vmatpush1.bf16.msra.mxu0 0
      %3505 = vmatprep.subr.bf16.mxu0 0
      %3506 = vmatpush1.bf16.msra.mxu0 0
      %3507 = vmatprep.subr.bf16.mxu0 0
      %3508 = vmatpush1.bf16.msra.mxu0 0
      %3509 = vmatprep.subr.bf16.mxu0 0
      %3510 = vmatpush1.bf16.msra.mxu0 0
      %3511 = vmatprep.mubr.bf16.mxu0 0
      %3512 = vmatmul.mubr.bf16.gmra.mrb[0].mxu0 %v3468
      %v3513 = vpop.f32.mrb[0].mxu0
      %v3514 = vadd.f32 0.0, %v3513
      %v3515 = vpop.f32.mrb[0].mxu0
      %v3516 = vpop.f32.mrb[0].mxu0
      %v3517 = vadd.f32 0.0, %v3516
      %v3518 = vpop.f32.mrb[0].mxu0
      %3519 = vmatprep.mubr.bf16.mxu0 0
      %3520 = vmatmul.mubr.bf16.gmra.mrb[0].mxu0 %v3471
      %v3521 = vpop.f32.mrb[0].mxu0
      %v3522 = vadd.f32 0.0, %v3521
      %v3523 = vpop.f32.mrb[0].mxu0
      %v3524 = vpop.f32.mrb[0].mxu0
      %v3525 = vadd.f32 0.0, %v3524
      %v3526 = vpop.f32.mrb[0].mxu0
      %3527 = vmatprep.mubr.bf16.mxu0 0
      %3528 = vmatmul.mubr.bf16.gmra.mrb[0].mxu0 %v3474
      %v3529 = vpop.f32.mrb[0].mxu0
      %v3530 = vadd.f32 0.0, %v3529
      %v3531 = vpop.f32.mrb[0].mxu0
      %v3532 = vpop.f32.mrb[0].mxu0
      %v3533 = vadd.f32 0.0, %v3532
      %v3534 = vpop.f32.mrb[0].mxu0
      %3535 = vdwg.mxu0
      %v3536 = vadd.f32 %v3158, %v3514
      %v3537 = vadd.f32 %v3159, %v3517
      %v3538 = vadd.f32 %v3160, %v3522
      %v3539 = vadd.f32 %v3161, %v3525
      %v3540 = vadd.f32 %v3162, %v3530
      %v3541 = vadd.f32 %v3163, %v3533
      %v3542 = vmul.f32 %v3379, 0.25
      %v3543 = vmul.f32 %v3380, 0.25
      %v3544 = vmul.f32 %v3381, 0.25
      %v3545 = vmul.f32 %v3382, 0.25
      %v3546 = vmul.f32 %v3383, 0.25
      %v3547 = vmul.f32 %v3384, 0.25
      %s3548 = scalar_lea.vmem %s343, 48
      %3549 = vst.msk [vmem:[%s3548] sm:$0xff] %vm2022, %v3542
      %3550 = vst.msk [vmem:[%s3548 + $0x8] sm:$0xff] %vm2022, %v3543
      %3551 = vst.msk [vmem:[%s3548 + $0x10] sm:$0xff] %vm2022, %v3544
      %3552 = vst.msk [vmem:[%s3548 + $0x18] sm:$0xff] %vm2022, %v3545
      %3553 = vst.msk [vmem:[%s3548 + $0x20] sm:$0xff] %vm2022, %v3546
      %3554 = vst.msk [vmem:[%s3548 + $0x28] sm:$0xf] %vm2028, %v3547
      %3555 = vst.msk [vmem:[#allocation3 + $0x30] sm:$0xff] %vm391, %v3536
      %3556 = vst.msk [vmem:[#allocation3 + $0x38] sm:$0xff] %vm391, %v3537
      %3557 = vst.msk [vmem:[#allocation3 + $0x40] sm:$0xff] %vm391, %v3538
      %3558 = vst.msk [vmem:[#allocation3 + $0x48] sm:$0xff] %vm391, %v3539
      %3559 = vst.msk [vmem:[#allocation3 + $0x50] sm:$0xff] %vm391, %v3540
      %3560 = vst.msk [vmem:[#allocation3 + $0x58] sm:$0xff] %vm391, %v3541
      %v3561 = vld [vmem:[%s7] sm:$0x3f]
      %v3562 = vld [vmem:[#allocation3] sm:$0xff]
      %v3563 = vld [vmem:[#allocation3 + $0x8] sm:$0xff]
      %v3564 = vld [vmem:[#allocation3 + $0x10] sm:$0xff]
      %v3565 = vld [vmem:[#allocation3 + $0x18] sm:$0xff]
      %v3566 = vld [vmem:[#allocation3 + $0x20] sm:$0xff]
      %v3567 = vld [vmem:[#allocation3 + $0x28] sm:$0xff]
      %v3568 = vld [vmem:[#allocation3 + $0x30] sm:$0xff]
      %v3569 = vld [vmem:[#allocation3 + $0x38] sm:$0xff]
      %v3570 = vld [vmem:[#allocation3 + $0x40] sm:$0xff]
      %v3571 = vld [vmem:[#allocation3 + $0x48] sm:$0xff]
      %v3572 = vld [vmem:[#allocation3 + $0x50] sm:$0xff]
      %v3573 = vld [vmem:[#allocation3 + $0x58] sm:$0xff]
      %v3574 = vadd.f32 %v350, %v3562
      %v3575 = vadd.f32 %v351, %v3563
      %v3576 = vadd.f32 %v352, %v3564
      %v3577 = vadd.f32 %v353, %v3565
      %v3578 = vadd.f32 %v354, %v3566
      %v3579 = vadd.f32 %v355, %v3567
      %v3580 = vadd.f32 %v356, %v3568
      %v3581 = vadd.f32 %v357, %v3569
      %v3582 = vadd.f32 %v358, %v3570
      %v3583 = vadd.f32 %v359, %v3571
      %v3584 = vadd.f32 %v360, %v3572
      %v3585 = vadd.f32 %v361, %v3573
      %v3586 = vlaneseq
      %v3587 = vshrl.u32 %v3586, 7
      %v3588 = vsub.s32 0, %v3587
      %v3589 = vrot.slane %v3561, %v3588
      %v3590 = vadd.f32 %v3574, %v3589
      %v3591 = vadd.f32 %v3575, %v3589
      %v3592 = vadd.f32 %v3576, %v3589
      %v3593 = vadd.f32 %v3577, %v3589
      %v3594 = vadd.f32 %v3578, %v3589
      %v3595 = vadd.f32 %v3579, %v3589
      %v3596 = vadd.f32 %v3580, %v3589
      %v3597 = vadd.f32 %v3581, %v3589
      %v3598 = vadd.f32 %v3582, %v3589
      %v3599 = vadd.f32 %v3583, %v3589
      %v3600 = vadd.f32 %v3584, %v3589
      %v3601 = vadd.f32 %v3585, %v3589
      %v3602 = vsel %vm391, %v3590, 0.0
      %3603 = vadd.xlane.f32.xlu0 %v3602
      %v3604 = vpop.xlane.xlu0 %3603
      %v3605 = vsel %vm391, %v3591, 0.0
      %3606 = vadd.xlane.f32.xlu0 %v3605
      %v3607 = vpop.xlane.xlu0 %3606
      %v3608 = vsel %vm391, %v3592, 0.0
      %3609 = vadd.xlane.f32.xlu0 %v3608
      %v3610 = vpop.xlane.xlu0 %3609
      %v3611 = vsel %vm391, %v3593, 0.0
      %3612 = vadd.xlane.f32.xlu0 %v3611
      %v3613 = vpop.xlane.xlu0 %3612
      %v3614 = vsel %vm391, %v3594, 0.0
      %3615 = vadd.xlane.f32.xlu0 %v3614
      %v3616 = vpop.xlane.xlu0 %3615
      %v3617 = vsel %vm391, %v3595, 0.0
      %3618 = vadd.xlane.f32.xlu0 %v3617
      %v3619 = vpop.xlane.xlu0 %3618
      %v3620 = vsel %vm391, %v3596, 0.0
      %3621 = vadd.xlane.f32.xlu0 %v3620
      %v3622 = vpop.xlane.xlu0 %3621
      %v3623 = vsel %vm391, %v3597, 0.0
      %3624 = vadd.xlane.f32.xlu0 %v3623
      %v3625 = vpop.xlane.xlu0 %3624
      %v3626 = vsel %vm391, %v3598, 0.0
      %3627 = vadd.xlane.f32.xlu0 %v3626
      %v3628 = vpop.xlane.xlu0 %3627
      %v3629 = vsel %vm391, %v3599, 0.0
      %3630 = vadd.xlane.f32.xlu0 %v3629
      %v3631 = vpop.xlane.xlu0 %3630
      %v3632 = vsel %vm391, %v3600, 0.0
      %3633 = vadd.xlane.f32.xlu0 %v3632
      %v3634 = vpop.xlane.xlu0 %3633
      %v3635 = vsel %vm391, %v3601, 0.0
      %3636 = vadd.xlane.f32.xlu0 %v3635
      %v3637 = vpop.xlane.xlu0 %3636
      %v3638 = vrcp.pop 32.0
      %v3639 = vmul.f32 %v3604, %v3638
      %v3640 = vmul.f32 %v3607, %v3638
      %v3641 = vmul.f32 %v3610, %v3638
      %v3642 = vmul.f32 %v3613, %v3638
      %v3643 = vmul.f32 %v3616, %v3638
      %v3644 = vmul.f32 %v3619, %v3638
      %v3645 = vmul.f32 %v3622, %v3638
      %v3646 = vmul.f32 %v3625, %v3638
      %v3647 = vmul.f32 %v3628, %v3638
      %v3648 = vmul.f32 %v3631, %v3638
      %v3649 = vmul.f32 %v3634, %v3638
      %v3650 = vmul.f32 %v3637, %v3638
      %v3651 = vsub.f32 %v3590, %v3639
      %v3652 = vsub.f32 %v3591, %v3640
      %v3653 = vsub.f32 %v3592, %v3641
      %v3654 = vsub.f32 %v3593, %v3642
      %v3655 = vsub.f32 %v3594, %v3643
      %v3656 = vsub.f32 %v3595, %v3644
      %v3657 = vsub.f32 %v3596, %v3645
      %v3658 = vsub.f32 %v3597, %v3646
      %v3659 = vsub.f32 %v3598, %v3647
      %v3660 = vsub.f32 %v3599, %v3648
      %v3661 = vsub.f32 %v3600, %v3649
      %v3662 = vsub.f32 %v3601, %v3650
      %v3663 = vmul.f32 %v3651, %v3651
      %v3664 = vmul.f32 %v3652, %v3652
      %v3665 = vmul.f32 %v3653, %v3653
      %v3666 = vmul.f32 %v3654, %v3654
      %v3667 = vmul.f32 %v3655, %v3655
      %v3668 = vmul.f32 %v3656, %v3656
      %v3669 = vmul.f32 %v3657, %v3657
      %v3670 = vmul.f32 %v3658, %v3658
      %v3671 = vmul.f32 %v3659, %v3659
      %v3672 = vmul.f32 %v3660, %v3660
      %v3673 = vmul.f32 %v3661, %v3661
      %v3674 = vmul.f32 %v3662, %v3662
      %v3675 = vsel %vm391, %v3663, 0.0
      %3676 = vadd.xlane.f32.xlu0 %v3675
      %v3677 = vpop.xlane.xlu0 %3676
      %v3678 = vsel %vm391, %v3664, 0.0
      %3679 = vadd.xlane.f32.xlu0 %v3678
      %v3680 = vpop.xlane.xlu0 %3679
      %v3681 = vsel %vm391, %v3665, 0.0
      %3682 = vadd.xlane.f32.xlu0 %v3681
      %v3683 = vpop.xlane.xlu0 %3682
      %v3684 = vsel %vm391, %v3666, 0.0
      %3685 = vadd.xlane.f32.xlu0 %v3684
      %v3686 = vpop.xlane.xlu0 %3685
      %v3687 = vsel %vm391, %v3667, 0.0
      %3688 = vadd.xlane.f32.xlu0 %v3687
      %v3689 = vpop.xlane.xlu0 %3688
      %v3690 = vsel %vm391, %v3668, 0.0
      %3691 = vadd.xlane.f32.xlu0 %v3690
      %v3692 = vpop.xlane.xlu0 %3691
      %v3693 = vsel %vm391, %v3669, 0.0
      %3694 = vadd.xlane.f32.xlu0 %v3693
      %v3695 = vpop.xlane.xlu0 %3694
      %v3696 = vsel %vm391, %v3670, 0.0
      %3697 = vadd.xlane.f32.xlu0 %v3696
      %v3698 = vpop.xlane.xlu0 %3697
      %v3699 = vsel %vm391, %v3671, 0.0
      %3700 = vadd.xlane.f32.xlu0 %v3699
      %v3701 = vpop.xlane.xlu0 %3700
      %v3702 = vsel %vm391, %v3672, 0.0
      %3703 = vadd.xlane.f32.xlu0 %v3702
      %v3704 = vpop.xlane.xlu0 %3703
      %v3705 = vsel %vm391, %v3673, 0.0
      %3706 = vadd.xlane.f32.xlu0 %v3705
      %v3707 = vpop.xlane.xlu0 %3706
      %v3708 = vsel %vm391, %v3674, 0.0
      %3709 = vadd.xlane.f32.xlu0 %v3708
      %v3710 = vpop.xlane.xlu0 %3709
      %v3711 = vmul.f32 %v3677, %v3638
      %v3712 = vmul.f32 %v3680, %v3638
      %v3713 = vmul.f32 %v3683, %v3638
      %v3714 = vmul.f32 %v3686, %v3638
      %v3715 = vmul.f32 %v3689, %v3638
      %v3716 = vmul.f32 %v3692, %v3638
      %v3717 = vmul.f32 %v3695, %v3638
      %v3718 = vmul.f32 %v3698, %v3638
      %v3719 = vmul.f32 %v3701, %v3638
      %v3720 = vmul.f32 %v3704, %v3638
      %v3721 = vmul.f32 %v3707, %v3638
      %v3722 = vmul.f32 %v3710, %v3638
      %v3723 = vadd.f32 %v3711, 1e-05
      %v3724 = vadd.f32 %v3712, 1e-05
      %v3725 = vadd.f32 %v3713, 1e-05
      %v3726 = vadd.f32 %v3714, 1e-05
      %v3727 = vadd.f32 %v3715, 1e-05
      %v3728 = vadd.f32 %v3716, 1e-05
      %v3729 = vadd.f32 %v3717, 1e-05
      %v3730 = vadd.f32 %v3718, 1e-05
      %v3731 = vadd.f32 %v3719, 1e-05
      %v3732 = vadd.f32 %v3720, 1e-05
      %v3733 = vadd.f32 %v3721, 1e-05
      %v3734 = vadd.f32 %v3722, 1e-05
      %v3735 = vrsqrt.pop %v3723
      %v3736 = vrsqrt.pop %v3724
      %v3737 = vrsqrt.pop %v3725
      %v3738 = vrsqrt.pop %v3726
      %v3739 = vrsqrt.pop %v3727
      %v3740 = vrsqrt.pop %v3728
      %v3741 = vrsqrt.pop %v3729
      %v3742 = vrsqrt.pop %v3730
      %v3743 = vrsqrt.pop %v3731
      %v3744 = vrsqrt.pop %v3732
      %v3745 = vrsqrt.pop %v3733
      %v3746 = vrsqrt.pop %v3734
      %v3747 = vmul.f32 %v3651, %v3735
      %v3748 = vmul.f32 %v3652, %v3736
      %v3749 = vmul.f32 %v3653, %v3737
      %v3750 = vmul.f32 %v3654, %v3738
      %v3751 = vmul.f32 %v3655, %v3739
      %v3752 = vmul.f32 %v3656, %v3740
      %v3753 = vmul.f32 %v3657, %v3741
      %v3754 = vmul.f32 %v3658, %v3742
      %v3755 = vmul.f32 %v3659, %v3743
      %v3756 = vmul.f32 %v3660, %v3744
      %v3757 = vmul.f32 %v3661, %v3745
      %v3758 = vmul.f32 %v3662, %v3746
      %v3759 = vlaneseq
      %v3760 = vshrl.u32 %v3759, 7
      %v3761 = vsub.s32 2, %v3760
      %v3762 = vrot.slane %v3561, %v3761
      %v3763 = vmul.f32 %v3747, %v3762
      %v3764 = vmul.f32 %v3748, %v3762
      %v3765 = vmul.f32 %v3749, %v3762
      %v3766 = vmul.f32 %v3750, %v3762
      %v3767 = vmul.f32 %v3751, %v3762
      %v3768 = vmul.f32 %v3752, %v3762
      %v3769 = vmul.f32 %v3753, %v3762
      %v3770 = vmul.f32 %v3754, %v3762
      %v3771 = vmul.f32 %v3755, %v3762
      %v3772 = vmul.f32 %v3756, %v3762
      %v3773 = vmul.f32 %v3757, %v3762
      %v3774 = vmul.f32 %v3758, %v3762
      %v3775 = vlaneseq
      %v3776 = vshrl.u32 %v3775, 7
      %v3777 = vsub.s32 3, %v3776
      %v3778 = vrot.slane %v3561, %v3777
      %v3779 = vadd.f32 %v3763, %v3778
      %v3780 = vadd.f32 %v3764, %v3778
      %v3781 = vadd.f32 %v3765, %v3778
      %v3782 = vadd.f32 %v3766, %v3778
      %v3783 = vadd.f32 %v3767, %v3778
      %v3784 = vadd.f32 %v3768, %v3778
      %v3785 = vadd.f32 %v3769, %v3778
      %v3786 = vadd.f32 %v3770, %v3778
      %v3787 = vadd.f32 %v3771, %v3778
      %v3788 = vadd.f32 %v3772, %v3778
      %v3789 = vadd.f32 %v3773, %v3778
      %v3790 = vadd.f32 %v3774, %v3778
      %v3791 = vpack.c.bf16 %v3780, %v3779
      %v3792 = vpack.c.bf16 %v3782, %v3781
      %v3793 = vpack.c.bf16 %v3784, %v3783
      %v3794 = vpack.c.bf16 %v3786, %v3785
      %v3795 = vpack.c.bf16 %v3788, %v3787
      %v3796 = vpack.c.bf16 %v3790, %v3789
      %v3797 = vld [vmem:[%s4] sm:$0xff]
      %v3798 = vld [vmem:[%s4 + $0x40] sm:$0xff]
      %v3799 = vld [vmem:[%s4 + $0x80] sm:$0xff]
      %v3800 = vld [vmem:[%s4 + $0xc0] sm:$0xff]
      %v3801 = vld [vmem:[%s5] sm:$0x3]
      %v3803 = vlaneseq
      %v3804 = vshrl.u32 %v3803, 7
      %v3805 = vsub.s32 0, %v3804
      %v3806 = vrot.slane %v3801, %v3805
      %v3807 = vlaneseq
      %v3808 = vshrl.u32 %v3807, 7
      %v3809 = vsub.s32 1, %v3808
      %v3810 = vrot.slane %v3801, %v3809
      %v3817 = vunpack.c.l.b16 %v3797
      %v3818 = vunpack.c.h.b16 %v3797
      %v3819 = vunpack.c.l.b16 %v3798
      %v3820 = vunpack.c.h.b16 %v3798
      %v3821 = vunpack.c.l.b16 %v3799
      %v3822 = vunpack.c.h.b16 %v3799
      %v3823 = vunpack.c.l.b16 %v3800
      %v3824 = vunpack.c.h.b16 %v3800
      %v3825 = vpack.c.b16 %v3819, %v3817
      %v3826 = vpack.c.b16 %v3820, %v3818
      %v3827 = vpack.c.b16 %v3823, %v3821
      %v3828 = vpack.c.b16 %v3824, %v3822
      %v3834 = vsel %vm391, %v3791, 0
      %v3837 = vsel %vm391, %v3792, 0
      %v3840 = vsel %vm391, %v3793, 0
      %v3843 = vsel %vm391, %v3794, 0
      %v3846 = vsel %vm391, %v3795, 0
      %v3849 = vsel %vm391, %v3796, 0
      %3851 = vmatprep.subr.bf16.mxu0 %v3826
      %3852 = vmatpush1.bf16.msra.mxu0 %v3825
      %3853 = vmatprep.subr.bf16.mxu0 %v3828
      %3854 = vmatpush1.bf16.msra.mxu0 %v3827
      %3855 = vmatprep.subr.bf16.mxu0 0
      %3856 = vmatpush1.bf16.msra.mxu0 0
      %3857 = vmatprep.subr.bf16.mxu0 0
      %3858 = vmatpush1.bf16.msra.mxu0 0
      %3859 = vmatprep.subr.bf16.mxu0 0
      %3860 = vmatpush1.bf16.msra.mxu0 0
      %3861 = vmatprep.subr.bf16.mxu0 0
      %3862 = vmatpush1.bf16.msra.mxu0 0
      %3863 = vmatprep.subr.bf16.mxu0 0
      %3864 = vmatpush1.bf16.msra.mxu0 0
      %3865 = vmatprep.subr.bf16.mxu0 0
      %3866 = vmatpush1.bf16.msra.mxu0 0
      %3867 = vmatprep.subr.bf16.mxu0 0
      %3868 = vmatpush1.bf16.msra.mxu0 0
      %3869 = vmatprep.subr.bf16.mxu0 0
      %3870 = vmatpush1.bf16.msra.mxu0 0
      %3871 = vmatprep.subr.bf16.mxu0 0
      %3872 = vmatpush1.bf16.msra.mxu0 0
      %3873 = vmatprep.subr.bf16.mxu0 0
      %3874 = vmatpush1.bf16.msra.mxu0 0
      %3875 = vmatprep.subr.bf16.mxu0 0
      %3876 = vmatpush1.bf16.msra.mxu0 0
      %3877 = vmatprep.subr.bf16.mxu0 0
      %3878 = vmatpush1.bf16.msra.mxu0 0
      %3879 = vmatprep.subr.bf16.mxu0 0
      %3880 = vmatpush1.bf16.msra.mxu0 0
      %3881 = vmatprep.subr.bf16.mxu0 0
      %3882 = vmatpush1.bf16.msra.mxu0 0
      %3883 = vmatprep.mubr.bf16.mxu0 0
      %3884 = vmatmul.mubr.bf16.gmra.mrb[0].mxu0 %v3834
      %v3885 = vpop.f32.mrb[0].mxu0
      %v3886 = vadd.f32 %v3806, %v3885
      %v3887 = vpop.f32.mrb[0].mxu0
      %v3888 = vadd.f32 %v3810, %v3887
      %v3889 = vpop.f32.mrb[0].mxu0
      %v3890 = vadd.f32 %v3806, %v3889
      %v3891 = vpop.f32.mrb[0].mxu0
      %v3892 = vadd.f32 %v3810, %v3891
      %3893 = vmatprep.mubr.bf16.mxu0 0
      %3894 = vmatmul.mubr.bf16.gmra.mrb[0].mxu0 %v3837
      %v3895 = vpop.f32.mrb[0].mxu0
      %v3896 = vadd.f32 %v3806, %v3895
      %v3897 = vpop.f32.mrb[0].mxu0
      %v3898 = vadd.f32 %v3810, %v3897
      %v3899 = vpop.f32.mrb[0].mxu0
      %v3900 = vadd.f32 %v3806, %v3899
      %v3901 = vpop.f32.mrb[0].mxu0
      %v3902 = vadd.f32 %v3810, %v3901
      %3903 = vmatprep.mubr.bf16.mxu0 0
      %3904 = vmatmul.mubr.bf16.gmra.mrb[0].mxu0 %v3840
      %v3905 = vpop.f32.mrb[0].mxu0
      %v3906 = vadd.f32 %v3806, %v3905
      %v3907 = vpop.f32.mrb[0].mxu0
      %v3908 = vadd.f32 %v3810, %v3907
      %v3909 = vpop.f32.mrb[0].mxu0
      %v3910 = vadd.f32 %v3806, %v3909
      %v3911 = vpop.f32.mrb[0].mxu0
      %v3912 = vadd.f32 %v3810, %v3911
      %3913 = vmatprep.mubr.bf16.mxu0 0
      %3914 = vmatmul.mubr.bf16.gmra.mrb[0].mxu0 %v3843
      %v3915 = vpop.f32.mrb[0].mxu0
      %v3916 = vadd.f32 %v3806, %v3915
      %v3917 = vpop.f32.mrb[0].mxu0
      %v3918 = vadd.f32 %v3810, %v3917
      %v3919 = vpop.f32.mrb[0].mxu0
      %v3920 = vadd.f32 %v3806, %v3919
      %v3921 = vpop.f32.mrb[0].mxu0
      %v3922 = vadd.f32 %v3810, %v3921
      %3923 = vmatprep.mubr.bf16.mxu0 0
      %3924 = vmatmul.mubr.bf16.gmra.mrb[0].mxu0 %v3846
      %v3925 = vpop.f32.mrb[0].mxu0
      %v3926 = vadd.f32 %v3806, %v3925
      %v3927 = vpop.f32.mrb[0].mxu0
      %v3928 = vadd.f32 %v3810, %v3927
      %v3929 = vpop.f32.mrb[0].mxu0
      %v3930 = vadd.f32 %v3806, %v3929
      %v3931 = vpop.f32.mrb[0].mxu0
      %v3932 = vadd.f32 %v3810, %v3931
      %3933 = vmatprep.mubr.bf16.mxu0 0
      %3934 = vmatmul.mubr.bf16.gmra.mrb[0].mxu0 %v3849
      %v3935 = vpop.f32.mrb[0].mxu0
      %v3936 = vadd.f32 %v3806, %v3935
      %v3937 = vpop.f32.mrb[0].mxu0
      %v3938 = vadd.f32 %v3810, %v3937
      %v3939 = vpop.f32.mrb[0].mxu0
      %v3940 = vadd.f32 %v3806, %v3939
      %v3941 = vpop.f32.mrb[0].mxu0
      %v3942 = vadd.f32 %v3810, %v3941
      %3943 = vdwg.mxu0
      %v3944 = vmax.f32 %v3886, 0.0
      %v3945 = vmax.f32 %v3888, 0.0
      %v3946 = vmax.f32 %v3890, 0.0
      %v3947 = vmax.f32 %v3892, 0.0
      %v3948 = vmax.f32 %v3896, 0.0
      %v3949 = vmax.f32 %v3898, 0.0
      %v3950 = vmax.f32 %v3900, 0.0
      %v3951 = vmax.f32 %v3902, 0.0
      %v3952 = vmax.f32 %v3906, 0.0
      %v3953 = vmax.f32 %v3908, 0.0
      %v3954 = vmax.f32 %v3910, 0.0
      %v3955 = vmax.f32 %v3912, 0.0
      %v3956 = vmax.f32 %v3916, 0.0
      %v3957 = vmax.f32 %v3918, 0.0
      %v3958 = vmax.f32 %v3920, 0.0
      %v3959 = vmax.f32 %v3922, 0.0
      %v3960 = vmax.f32 %v3926, 0.0
      %v3961 = vmax.f32 %v3928, 0.0
      %v3962 = vmax.f32 %v3930, 0.0
      %v3963 = vmax.f32 %v3932, 0.0
      %v3964 = vmax.f32 %v3936, 0.0
      %v3965 = vmax.f32 %v3938, 0.0
      %v3966 = vmax.f32 %v3940, 0.0
      %v3967 = vmax.f32 %v3942, 0.0
      %v3968 = vpack.c.bf16 %v3946, %v3944
      %v3969 = vpack.c.bf16 %v3947, %v3945
      %v3970 = vpack.c.bf16 %v3950, %v3948
      %v3971 = vpack.c.bf16 %v3951, %v3949
      %v3972 = vpack.c.bf16 %v3954, %v3952
      %v3973 = vpack.c.bf16 %v3955, %v3953
      %v3974 = vpack.c.bf16 %v3958, %v3956
      %v3975 = vpack.c.bf16 %v3959, %v3957
      %v3976 = vpack.c.bf16 %v3962, %v3960
      %v3977 = vpack.c.bf16 %v3963, %v3961
      %v3978 = vpack.c.bf16 %v3966, %v3964
      %v3979 = vpack.c.bf16 %v3967, %v3965
      %v3980 = vld [vmem:[%s6] sm:$0xf]
      %v3981 = vld [vmem:[%s6 + $0x4] sm:$0xf]
      %v3982 = vld [vmem:[%s6 + $0x8] sm:$0xf]
      %v3983 = vld [vmem:[%s6 + $0xc] sm:$0xf]
      %v3984 = vld [vmem:[%s6 + $0x10] sm:$0xf]
      %v3985 = vld [vmem:[%s6 + $0x14] sm:$0xf]
      %v3986 = vld [vmem:[%s6 + $0x18] sm:$0xf]
      %v3987 = vld [vmem:[%s6 + $0x1c] sm:$0xf]
      %v3988 = vld [vmem:[%s6 + $0x20] sm:$0xf]
      %v3989 = vld [vmem:[%s6 + $0x24] sm:$0xf]
      %v3990 = vld [vmem:[%s6 + $0x28] sm:$0xf]
      %v3991 = vld [vmem:[%s6 + $0x2c] sm:$0xf]
      %v3992 = vld [vmem:[%s6 + $0x30] sm:$0xf]
      %v3993 = vld [vmem:[%s6 + $0x34] sm:$0xf]
      %v3994 = vld [vmem:[%s6 + $0x38] sm:$0xf]
      %v3995 = vld [vmem:[%s6 + $0x3c] sm:$0xf]
      %v3996 = vld [vmem:[%s6 + $0x40] sm:$0xf]
      %v3997 = vld [vmem:[%s6 + $0x44] sm:$0xf]
      %v3998 = vld [vmem:[%s6 + $0x48] sm:$0xf]
      %v3999 = vld [vmem:[%s6 + $0x4c] sm:$0xf]
      %v4000 = vld [vmem:[%s6 + $0x50] sm:$0xf]
      %v4001 = vld [vmem:[%s6 + $0x54] sm:$0xf]
      %v4002 = vld [vmem:[%s6 + $0x58] sm:$0xf]
      %v4003 = vld [vmem:[%s6 + $0x5c] sm:$0xf]
      %v4004 = vld [vmem:[%s6 + $0x60] sm:$0xf]
      %v4005 = vld [vmem:[%s6 + $0x64] sm:$0xf]
      %v4006 = vld [vmem:[%s6 + $0x68] sm:$0xf]
      %v4007 = vld [vmem:[%s6 + $0x6c] sm:$0xf]
      %v4008 = vld [vmem:[%s6 + $0x70] sm:$0xf]
      %v4009 = vld [vmem:[%s6 + $0x74] sm:$0xf]
      %v4010 = vld [vmem:[%s6 + $0x78] sm:$0xf]
      %v4011 = vld [vmem:[%s6 + $0x7c] sm:$0xf]
      %v4012 = vld [vmem:[%s4 + $0x8] sm:$0xff]
      %v4013 = vld [vmem:[%s4 + $0x48] sm:$0xff]
      %v4014 = vld [vmem:[%s4 + $0x88] sm:$0xff]
      %v4015 = vld [vmem:[%s4 + $0xc8] sm:$0xff]
      %v4016 = vld [vmem:[%s5 + $0x2] sm:$0x3]
      %v4018 = vlaneseq
      %v4019 = vshrl.u32 %v4018, 7
      %v4020 = vsub.s32 0, %v4019
      %v4021 = vrot.slane %v4016, %v4020
      %v4022 = vlaneseq
      %v4023 = vshrl.u32 %v4022, 7
      %v4024 = vsub.s32 1, %v4023
      %v4025 = vrot.slane %v4016, %v4024
      %v4032 = vunpack.c.l.b16 %v4012
      %v4033 = vunpack.c.h.b16 %v4012
      %v4034 = vunpack.c.l.b16 %v4013
      %v4035 = vunpack.c.h.b16 %v4013
      %v4036 = vunpack.c.l.b16 %v4014
      %v4037 = vunpack.c.h.b16 %v4014
      %v4038 = vunpack.c.l.b16 %v4015
      %v4039 = vunpack.c.h.b16 %v4015
      %v4040 = vpack.c.b16 %v4034, %v4032
      %v4041 = vpack.c.b16 %v4035, %v4033
      %v4042 = vpack.c.b16 %v4038, %v4036
      %v4043 = vpack.c.b16 %v4039, %v4037
      %4048 = vmatprep.subr.bf16.mxu0 %v4041
      %4049 = vmatpush1.bf16.msra.mxu0 %v4040
      %4050 = vmatprep.subr.bf16.mxu0 %v4043
      %4051 = vmatpush1.bf16.msra.mxu0 %v4042
      %4052 = vmatprep.subr.bf16.mxu0 0
      %4053 = vmatpush1.bf16.msra.mxu0 0
      %4054 = vmatprep.subr.bf16.mxu0 0
      %4055 = vmatpush1.bf16.msra.mxu0 0
      %4056 = vmatprep.subr.bf16.mxu0 0
      %4057 = vmatpush1.bf16.msra.mxu0 0
      %4058 = vmatprep.subr.bf16.mxu0 0
      %4059 = vmatpush1.bf16.msra.mxu0 0
      %4060 = vmatprep.subr.bf16.mxu0 0
      %4061 = vmatpush1.bf16.msra.mxu0 0
      %4062 = vmatprep.subr.bf16.mxu0 0
      %4063 = vmatpush1.bf16.msra.mxu0 0
      %4064 = vmatprep.subr.bf16.mxu0 0
      %4065 = vmatpush1.bf16.msra.mxu0 0
      %4066 = vmatprep.subr.bf16.mxu0 0
      %4067 = vmatpush1.bf16.msra.mxu0 0
      %4068 = vmatprep.subr.bf16.mxu0 0
      %4069 = vmatpush1.bf16.msra.mxu0 0
      %4070 = vmatprep.subr.bf16.mxu0 0
      %4071 = vmatpush1.bf16.msra.mxu0 0
      %4072 = vmatprep.subr.bf16.mxu0 0
      %4073 = vmatpush1.bf16.msra.mxu0 0
      %4074 = vmatprep.subr.bf16.mxu0 0
      %4075 = vmatpush1.bf16.msra.mxu0 0
      %4076 = vmatprep.subr.bf16.mxu0 0
      %4077 = vmatpush1.bf16.msra.mxu0 0
      %4078 = vmatprep.subr.bf16.mxu0 0
      %4079 = vmatpush1.bf16.msra.mxu0 0
      %4080 = vmatprep.mubr.bf16.mxu0 0
      %4081 = vmatmul.mubr.bf16.gmra.mrb[0].mxu0 %v3834
      %v4082 = vpop.f32.mrb[0].mxu0
      %v4083 = vadd.f32 %v4021, %v4082
      %v4084 = vpop.f32.mrb[0].mxu0
      %v4085 = vadd.f32 %v4025, %v4084
      %v4086 = vpop.f32.mrb[0].mxu0
      %v4087 = vadd.f32 %v4021, %v4086
      %v4088 = vpop.f32.mrb[0].mxu0
      %v4089 = vadd.f32 %v4025, %v4088
      %4090 = vmatprep.mubr.bf16.mxu0 0
      %4091 = vmatmul.mubr.bf16.gmra.mrb[0].mxu0 %v3837
      %v4092 = vpop.f32.mrb[0].mxu0
      %v4093 = vadd.f32 %v4021, %v4092
      %v4094 = vpop.f32.mrb[0].mxu0
      %v4095 = vadd.f32 %v4025, %v4094
      %v4096 = vpop.f32.mrb[0].mxu0
      %v4097 = vadd.f32 %v4021, %v4096
      %v4098 = vpop.f32.mrb[0].mxu0
      %v4099 = vadd.f32 %v4025, %v4098
      %4100 = vmatprep.mubr.bf16.mxu0 0
      %4101 = vmatmul.mubr.bf16.gmra.mrb[0].mxu0 %v3840
      %v4102 = vpop.f32.mrb[0].mxu0
      %v4103 = vadd.f32 %v4021, %v4102
      %v4104 = vpop.f32.mrb[0].mxu0
      %v4105 = vadd.f32 %v4025, %v4104
      %v4106 = vpop.f32.mrb[0].mxu0
      %v4107 = vadd.f32 %v4021, %v4106
      %v4108 = vpop.f32.mrb[0].mxu0
      %v4109 = vadd.f32 %v4025, %v4108
      %4110 = vmatprep.mubr.bf16.mxu0 0
      %4111 = vmatmul.mubr.bf16.gmra.mrb[0].mxu0 %v3843
      %v4112 = vpop.f32.mrb[0].mxu0
      %v4113 = vadd.f32 %v4021, %v4112
      %v4114 = vpop.f32.mrb[0].mxu0
      %v4115 = vadd.f32 %v4025, %v4114
      %v4116 = vpop.f32.mrb[0].mxu0
      %v4117 = vadd.f32 %v4021, %v4116
      %v4118 = vpop.f32.mrb[0].mxu0
      %v4119 = vadd.f32 %v4025, %v4118
      %4120 = vmatprep.mubr.bf16.mxu0 0
      %4121 = vmatmul.mubr.bf16.gmra.mrb[0].mxu0 %v3846
      %v4122 = vpop.f32.mrb[0].mxu0
      %v4123 = vadd.f32 %v4021, %v4122
      %v4124 = vpop.f32.mrb[0].mxu0
      %v4125 = vadd.f32 %v4025, %v4124
      %v4126 = vpop.f32.mrb[0].mxu0
      %v4127 = vadd.f32 %v4021, %v4126
      %v4128 = vpop.f32.mrb[0].mxu0
      %v4129 = vadd.f32 %v4025, %v4128
      %4130 = vmatprep.mubr.bf16.mxu0 0
      %4131 = vmatmul.mubr.bf16.gmra.mrb[0].mxu0 %v3849
      %v4132 = vpop.f32.mrb[0].mxu0
      %v4133 = vadd.f32 %v4021, %v4132
      %v4134 = vpop.f32.mrb[0].mxu0
      %v4135 = vadd.f32 %v4025, %v4134
      %v4136 = vpop.f32.mrb[0].mxu0
      %v4137 = vadd.f32 %v4021, %v4136
      %v4138 = vpop.f32.mrb[0].mxu0
      %v4139 = vadd.f32 %v4025, %v4138
      %4140 = vdwg.mxu0
      %v4141 = vmax.f32 %v4083, 0.0
      %v4142 = vmax.f32 %v4085, 0.0
      %v4143 = vmax.f32 %v4087, 0.0
      %v4144 = vmax.f32 %v4089, 0.0
      %v4145 = vmax.f32 %v4093, 0.0
      %v4146 = vmax.f32 %v4095, 0.0
      %v4147 = vmax.f32 %v4097, 0.0
      %v4148 = vmax.f32 %v4099, 0.0
      %v4149 = vmax.f32 %v4103, 0.0
      %v4150 = vmax.f32 %v4105, 0.0
      %v4151 = vmax.f32 %v4107, 0.0
      %v4152 = vmax.f32 %v4109, 0.0
      %v4153 = vmax.f32 %v4113, 0.0
      %v4154 = vmax.f32 %v4115, 0.0
      %v4155 = vmax.f32 %v4117, 0.0
      %v4156 = vmax.f32 %v4119, 0.0
      %v4157 = vmax.f32 %v4123, 0.0
      %v4158 = vmax.f32 %v4125, 0.0
      %v4159 = vmax.f32 %v4127, 0.0
      %v4160 = vmax.f32 %v4129, 0.0
      %v4161 = vmax.f32 %v4133, 0.0
      %v4162 = vmax.f32 %v4135, 0.0
      %v4163 = vmax.f32 %v4137, 0.0
      %v4164 = vmax.f32 %v4139, 0.0
      %v4165 = vpack.c.bf16 %v4143, %v4141
      %v4166 = vpack.c.bf16 %v4144, %v4142
      %v4167 = vpack.c.bf16 %v4147, %v4145
      %v4168 = vpack.c.bf16 %v4148, %v4146
      %v4169 = vpack.c.bf16 %v4151, %v4149
      %v4170 = vpack.c.bf16 %v4152, %v4150
      %v4171 = vpack.c.bf16 %v4155, %v4153
      %v4172 = vpack.c.bf16 %v4156, %v4154
      %v4173 = vpack.c.bf16 %v4159, %v4157
      %v4174 = vpack.c.bf16 %v4160, %v4158
      %v4175 = vpack.c.bf16 %v4163, %v4161
      %v4176 = vpack.c.bf16 %v4164, %v4162
      %v4177 = vld [vmem:[%s6 + $0x80] sm:$0xf]
      %v4178 = vld [vmem:[%s6 + $0x84] sm:$0xf]
      %v4179 = vld [vmem:[%s6 + $0x88] sm:$0xf]
      %v4180 = vld [vmem:[%s6 + $0x8c] sm:$0xf]
      %v4181 = vld [vmem:[%s6 + $0x90] sm:$0xf]
      %v4182 = vld [vmem:[%s6 + $0x94] sm:$0xf]
      %v4183 = vld [vmem:[%s6 + $0x98] sm:$0xf]
      %v4184 = vld [vmem:[%s6 + $0x9c] sm:$0xf]
      %v4185 = vld [vmem:[%s6 + $0xa0] sm:$0xf]
      %v4186 = vld [vmem:[%s6 + $0xa4] sm:$0xf]
      %v4187 = vld [vmem:[%s6 + $0xa8] sm:$0xf]
      %v4188 = vld [vmem:[%s6 + $0xac] sm:$0xf]
      %v4189 = vld [vmem:[%s6 + $0xb0] sm:$0xf]
      %v4190 = vld [vmem:[%s6 + $0xb4] sm:$0xf]
      %v4191 = vld [vmem:[%s6 + $0xb8] sm:$0xf]
      %v4192 = vld [vmem:[%s6 + $0xbc] sm:$0xf]
      %v4193 = vld [vmem:[%s6 + $0xc0] sm:$0xf]
      %v4194 = vld [vmem:[%s6 + $0xc4] sm:$0xf]
      %v4195 = vld [vmem:[%s6 + $0xc8] sm:$0xf]
      %v4196 = vld [vmem:[%s6 + $0xcc] sm:$0xf]
      %v4197 = vld [vmem:[%s6 + $0xd0] sm:$0xf]
      %v4198 = vld [vmem:[%s6 + $0xd4] sm:$0xf]
      %v4199 = vld [vmem:[%s6 + $0xd8] sm:$0xf]
      %v4200 = vld [vmem:[%s6 + $0xdc] sm:$0xf]
      %v4201 = vld [vmem:[%s6 + $0xe0] sm:$0xf]
      %v4202 = vld [vmem:[%s6 + $0xe4] sm:$0xf]
      %v4203 = vld [vmem:[%s6 + $0xe8] sm:$0xf]
      %v4204 = vld [vmem:[%s6 + $0xec] sm:$0xf]
      %v4205 = vld [vmem:[%s6 + $0xf0] sm:$0xf]
      %v4206 = vld [vmem:[%s6 + $0xf4] sm:$0xf]
      %v4207 = vld [vmem:[%s6 + $0xf8] sm:$0xf]
      %v4208 = vld [vmem:[%s6 + $0xfc] sm:$0xf]
      %v4241 = vunpack.c.l.b16 %v4177
      %v4242 = vunpack.c.l.b16 %v4178
      %v4243 = vunpack.c.l.b16 %v4179
      %v4244 = vunpack.c.l.b16 %v4180
      %v4245 = vunpack.c.l.b16 %v4181
      %v4246 = vunpack.c.l.b16 %v4182
      %v4247 = vunpack.c.l.b16 %v4183
      %v4248 = vunpack.c.l.b16 %v4184
      %v4249 = vunpack.c.l.b16 %v4185
      %v4250 = vunpack.c.l.b16 %v4186
      %v4251 = vunpack.c.l.b16 %v4187
      %v4252 = vunpack.c.l.b16 %v4188
      %v4253 = vunpack.c.l.b16 %v4189
      %v4254 = vunpack.c.l.b16 %v4190
      %v4255 = vunpack.c.l.b16 %v4191
      %v4256 = vunpack.c.l.b16 %v4192
      %v4257 = vunpack.c.l.b16 %v4193
      %v4258 = vunpack.c.l.b16 %v4194
      %v4259 = vunpack.c.l.b16 %v4195
      %v4260 = vunpack.c.l.b16 %v4196
      %v4261 = vunpack.c.l.b16 %v4197
      %v4262 = vunpack.c.l.b16 %v4198
      %v4263 = vunpack.c.l.b16 %v4199
      %v4264 = vunpack.c.l.b16 %v4200
      %v4265 = vunpack.c.l.b16 %v4201
      %v4266 = vunpack.c.l.b16 %v4202
      %v4267 = vunpack.c.l.b16 %v4203
      %v4268 = vunpack.c.l.b16 %v4204
      %v4269 = vunpack.c.l.b16 %v4205
      %v4270 = vunpack.c.l.b16 %v4206
      %v4271 = vunpack.c.l.b16 %v4207
      %v4272 = vunpack.c.l.b16 %v4208
      %v4273 = vpack.c.b16 %v4242, %v4241
      %v4274 = vpack.c.b16 %v4244, %v4243
      %v4275 = vpack.c.b16 %v4246, %v4245
      %v4276 = vpack.c.b16 %v4248, %v4247
      %v4277 = vpack.c.b16 %v4250, %v4249
      %v4278 = vpack.c.b16 %v4252, %v4251
      %v4279 = vpack.c.b16 %v4254, %v4253
      %v4280 = vpack.c.b16 %v4256, %v4255
      %v4281 = vpack.c.b16 %v4258, %v4257
      %v4282 = vpack.c.b16 %v4260, %v4259
      %v4283 = vpack.c.b16 %v4262, %v4261
      %v4284 = vpack.c.b16 %v4264, %v4263
      %v4285 = vpack.c.b16 %v4266, %v4265
      %v4286 = vpack.c.b16 %v4268, %v4267
      %v4287 = vpack.c.b16 %v4270, %v4269
      %v4288 = vpack.c.b16 %v4272, %v4271
      %4305 = vmatprep.subr.bf16.mxu0 0
      %4306 = vmatpush1.bf16.msra.mxu0 %v4273
      %4307 = vmatprep.subr.bf16.mxu0 0
      %4308 = vmatpush1.bf16.msra.mxu0 %v4274
      %4309 = vmatprep.subr.bf16.mxu0 0
      %4310 = vmatpush1.bf16.msra.mxu0 %v4275
      %4311 = vmatprep.subr.bf16.mxu0 0
      %4312 = vmatpush1.bf16.msra.mxu0 %v4276
      %4313 = vmatprep.subr.bf16.mxu0 0
      %4314 = vmatpush1.bf16.msra.mxu0 %v4277
      %4315 = vmatprep.subr.bf16.mxu0 0
      %4316 = vmatpush1.bf16.msra.mxu0 %v4278
      %4317 = vmatprep.subr.bf16.mxu0 0
      %4318 = vmatpush1.bf16.msra.mxu0 %v4279
      %4319 = vmatprep.subr.bf16.mxu0 0
      %4320 = vmatpush1.bf16.msra.mxu0 %v4280
      %4321 = vmatprep.subr.bf16.mxu0 0
      %4322 = vmatpush1.bf16.msra.mxu0 %v4281
      %4323 = vmatprep.subr.bf16.mxu0 0
      %4324 = vmatpush1.bf16.msra.mxu0 %v4282
      %4325 = vmatprep.subr.bf16.mxu0 0
      %4326 = vmatpush1.bf16.msra.mxu0 %v4283
      %4327 = vmatprep.subr.bf16.mxu0 0
      %4328 = vmatpush1.bf16.msra.mxu0 %v4284
      %4329 = vmatprep.subr.bf16.mxu0 0
      %4330 = vmatpush1.bf16.msra.mxu0 %v4285
      %4331 = vmatprep.subr.bf16.mxu0 0
      %4332 = vmatpush1.bf16.msra.mxu0 %v4286
      %4333 = vmatprep.subr.bf16.mxu0 0
      %4334 = vmatpush1.bf16.msra.mxu0 %v4287
      %4335 = vmatprep.subr.bf16.mxu0 0
      %4336 = vmatpush1.bf16.msra.mxu0 %v4288
      %4337 = vmatprep.mubr.bf16.mxu0 %v4166
      %4338 = vmatmul.mubr.bf16.gmra.mrb[0].mxu0 %v4165
      %v4339 = vpop.f32.mrb[0].mxu0
      %v4340 = vadd.f32 0.0, %v4339
      %v4341 = vpop.f32.mrb[0].mxu0
      %v4342 = vpop.f32.mrb[0].mxu0
      %v4343 = vadd.f32 0.0, %v4342
      %v4344 = vpop.f32.mrb[0].mxu0
      %4345 = vmatprep.mubr.bf16.mxu0 %v4168
      %4346 = vmatmul.mubr.bf16.gmra.mrb[0].mxu0 %v4167
      %v4347 = vpop.f32.mrb[0].mxu0
      %v4348 = vadd.f32 0.0, %v4347
      %v4349 = vpop.f32.mrb[0].mxu0
      %v4350 = vpop.f32.mrb[0].mxu0
      %v4351 = vadd.f32 0.0, %v4350
      %v4352 = vpop.f32.mrb[0].mxu0
      %4353 = vmatprep.mubr.bf16.mxu0 %v4170
      %4354 = vmatmul.mubr.bf16.gmra.mrb[0].mxu0 %v4169
      %v4355 = vpop.f32.mrb[0].mxu0
      %v4356 = vadd.f32 0.0, %v4355
      %v4357 = vpop.f32.mrb[0].mxu0
      %v4358 = vpop.f32.mrb[0].mxu0
      %v4359 = vadd.f32 0.0, %v4358
      %v4360 = vpop.f32.mrb[0].mxu0
      %4361 = vmatprep.mubr.bf16.mxu0 %v4172
      %4362 = vmatmul.mubr.bf16.gmra.mrb[0].mxu0 %v4171
      %v4363 = vpop.f32.mrb[0].mxu0
      %v4364 = vadd.f32 0.0, %v4363
      %v4365 = vpop.f32.mrb[0].mxu0
      %v4366 = vpop.f32.mrb[0].mxu0
      %v4367 = vadd.f32 0.0, %v4366
      %v4368 = vpop.f32.mrb[0].mxu0
      %4369 = vmatprep.mubr.bf16.mxu0 %v4174
      %4370 = vmatmul.mubr.bf16.gmra.mrb[0].mxu0 %v4173
      %v4371 = vpop.f32.mrb[0].mxu0
      %v4372 = vadd.f32 0.0, %v4371
      %v4373 = vpop.f32.mrb[0].mxu0
      %v4374 = vpop.f32.mrb[0].mxu0
      %v4375 = vadd.f32 0.0, %v4374
      %v4376 = vpop.f32.mrb[0].mxu0
      %4377 = vmatprep.mubr.bf16.mxu0 %v4176
      %4378 = vmatmul.mubr.bf16.gmra.mrb[0].mxu0 %v4175
      %v4379 = vpop.f32.mrb[0].mxu0
      %v4380 = vadd.f32 0.0, %v4379
      %v4381 = vpop.f32.mrb[0].mxu0
      %v4382 = vpop.f32.mrb[0].mxu0
      %v4383 = vadd.f32 0.0, %v4382
      %v4384 = vpop.f32.mrb[0].mxu0
      %4385 = vdwg.mxu0
      %v4418 = vunpack.c.l.b16 %v3980
      %v4419 = vunpack.c.l.b16 %v3981
      %v4420 = vunpack.c.l.b16 %v3982
      %v4421 = vunpack.c.l.b16 %v3983
      %v4422 = vunpack.c.l.b16 %v3984
      %v4423 = vunpack.c.l.b16 %v3985
      %v4424 = vunpack.c.l.b16 %v3986
      %v4425 = vunpack.c.l.b16 %v3987
      %v4426 = vunpack.c.l.b16 %v3988
      %v4427 = vunpack.c.l.b16 %v3989
      %v4428 = vunpack.c.l.b16 %v3990
      %v4429 = vunpack.c.l.b16 %v3991
      %v4430 = vunpack.c.l.b16 %v3992
      %v4431 = vunpack.c.l.b16 %v3993
      %v4432 = vunpack.c.l.b16 %v3994
      %v4433 = vunpack.c.l.b16 %v3995
      %v4434 = vunpack.c.l.b16 %v3996
      %v4435 = vunpack.c.l.b16 %v3997
      %v4436 = vunpack.c.l.b16 %v3998
      %v4437 = vunpack.c.l.b16 %v3999
      %v4438 = vunpack.c.l.b16 %v4000
      %v4439 = vunpack.c.l.b16 %v4001
      %v4440 = vunpack.c.l.b16 %v4002
      %v4441 = vunpack.c.l.b16 %v4003
      %v4442 = vunpack.c.l.b16 %v4004
      %v4443 = vunpack.c.l.b16 %v4005
      %v4444 = vunpack.c.l.b16 %v4006
      %v4445 = vunpack.c.l.b16 %v4007
      %v4446 = vunpack.c.l.b16 %v4008
      %v4447 = vunpack.c.l.b16 %v4009
      %v4448 = vunpack.c.l.b16 %v4010
      %v4449 = vunpack.c.l.b16 %v4011
      %v4450 = vpack.c.b16 %v4419, %v4418
      %v4451 = vpack.c.b16 %v4421, %v4420
      %v4452 = vpack.c.b16 %v4423, %v4422
      %v4453 = vpack.c.b16 %v4425, %v4424
      %v4454 = vpack.c.b16 %v4427, %v4426
      %v4455 = vpack.c.b16 %v4429, %v4428
      %v4456 = vpack.c.b16 %v4431, %v4430
      %v4457 = vpack.c.b16 %v4433, %v4432
      %v4458 = vpack.c.b16 %v4435, %v4434
      %v4459 = vpack.c.b16 %v4437, %v4436
      %v4460 = vpack.c.b16 %v4439, %v4438
      %v4461 = vpack.c.b16 %v4441, %v4440
      %v4462 = vpack.c.b16 %v4443, %v4442
      %v4463 = vpack.c.b16 %v4445, %v4444
      %v4464 = vpack.c.b16 %v4447, %v4446
      %v4465 = vpack.c.b16 %v4449, %v4448
      %4482 = vmatprep.subr.bf16.mxu0 0
      %4483 = vmatpush1.bf16.msra.mxu0 %v4450
      %4484 = vmatprep.subr.bf16.mxu0 0
      %4485 = vmatpush1.bf16.msra.mxu0 %v4451
      %4486 = vmatprep.subr.bf16.mxu0 0
      %4487 = vmatpush1.bf16.msra.mxu0 %v4452
      %4488 = vmatprep.subr.bf16.mxu0 0
      %4489 = vmatpush1.bf16.msra.mxu0 %v4453
      %4490 = vmatprep.subr.bf16.mxu0 0
      %4491 = vmatpush1.bf16.msra.mxu0 %v4454
      %4492 = vmatprep.subr.bf16.mxu0 0
      %4493 = vmatpush1.bf16.msra.mxu0 %v4455
      %4494 = vmatprep.subr.bf16.mxu0 0
      %4495 = vmatpush1.bf16.msra.mxu0 %v4456
      %4496 = vmatprep.subr.bf16.mxu0 0
      %4497 = vmatpush1.bf16.msra.mxu0 %v4457
      %4498 = vmatprep.subr.bf16.mxu0 0
      %4499 = vmatpush1.bf16.msra.mxu0 %v4458
      %4500 = vmatprep.subr.bf16.mxu0 0
      %4501 = vmatpush1.bf16.msra.mxu0 %v4459
      %4502 = vmatprep.subr.bf16.mxu0 0
      %4503 = vmatpush1.bf16.msra.mxu0 %v4460
      %4504 = vmatprep.subr.bf16.mxu0 0
      %4505 = vmatpush1.bf16.msra.mxu0 %v4461
      %4506 = vmatprep.subr.bf16.mxu0 0
      %4507 = vmatpush1.bf16.msra.mxu0 %v4462
      %4508 = vmatprep.subr.bf16.mxu0 0
      %4509 = vmatpush1.bf16.msra.mxu0 %v4463
      %4510 = vmatprep.subr.bf16.mxu0 0
      %4511 = vmatpush1.bf16.msra.mxu0 %v4464
      %4512 = vmatprep.subr.bf16.mxu0 0
      %4513 = vmatpush1.bf16.msra.mxu0 %v4465
      %4514 = vmatprep.mubr.bf16.mxu0 %v3969
      %4515 = vmatmul.mubr.bf16.gmra.mrb[0].mxu0 %v3968
      %v4516 = vpop.f32.mrb[0].mxu0
      %v4517 = vadd.f32 %v4340, %v4516
      %v4518 = vpop.f32.mrb[0].mxu0
      %v4519 = vpop.f32.mrb[0].mxu0
      %v4520 = vadd.f32 %v4343, %v4519
      %v4521 = vpop.f32.mrb[0].mxu0
      %4522 = vmatprep.mubr.bf16.mxu0 %v3971
      %4523 = vmatmul.mubr.bf16.gmra.mrb[0].mxu0 %v3970
      %v4524 = vpop.f32.mrb[0].mxu0
      %v4525 = vadd.f32 %v4348, %v4524
      %v4526 = vpop.f32.mrb[0].mxu0
      %v4527 = vpop.f32.mrb[0].mxu0
      %v4528 = vadd.f32 %v4351, %v4527
      %v4529 = vpop.f32.mrb[0].mxu0
      %4530 = vmatprep.mubr.bf16.mxu0 %v3973
      %4531 = vmatmul.mubr.bf16.gmra.mrb[0].mxu0 %v3972
      %v4532 = vpop.f32.mrb[0].mxu0
      %v4533 = vadd.f32 %v4356, %v4532
      %v4534 = vpop.f32.mrb[0].mxu0
      %v4535 = vpop.f32.mrb[0].mxu0
      %v4536 = vadd.f32 %v4359, %v4535
      %v4537 = vpop.f32.mrb[0].mxu0
      %4538 = vmatprep.mubr.bf16.mxu0 %v3975
      %4539 = vmatmul.mubr.bf16.gmra.mrb[0].mxu0 %v3974
      %v4540 = vpop.f32.mrb[0].mxu0
      %v4541 = vadd.f32 %v4364, %v4540
      %v4542 = vpop.f32.mrb[0].mxu0
      %v4543 = vpop.f32.mrb[0].mxu0
      %v4544 = vadd.f32 %v4367, %v4543
      %v4545 = vpop.f32.mrb[0].mxu0
      %4546 = vmatprep.mubr.bf16.mxu0 %v3977
      %4547 = vmatmul.mubr.bf16.gmra.mrb[0].mxu0 %v3976
      %v4548 = vpop.f32.mrb[0].mxu0
      %v4549 = vadd.f32 %v4372, %v4548
      %v4550 = vpop.f32.mrb[0].mxu0
      %v4551 = vpop.f32.mrb[0].mxu0
      %v4552 = vadd.f32 %v4375, %v4551
      %v4553 = vpop.f32.mrb[0].mxu0
      %4554 = vmatprep.mubr.bf16.mxu0 %v3979
      %4555 = vmatmul.mubr.bf16.gmra.mrb[0].mxu0 %v3978
      %v4556 = vpop.f32.mrb[0].mxu0
      %v4557 = vadd.f32 %v4380, %v4556
      %v4558 = vpop.f32.mrb[0].mxu0
      %v4559 = vpop.f32.mrb[0].mxu0
      %v4560 = vadd.f32 %v4383, %v4559
      %v4561 = vpop.f32.mrb[0].mxu0
      %4562 = vdwg.mxu0
      %v4563 = vld [vmem:[%s4 + $0x10] sm:$0xff]
      %v4564 = vld [vmem:[%s4 + $0x50] sm:$0xff]
      %v4565 = vld [vmem:[%s4 + $0x90] sm:$0xff]
      %v4566 = vld [vmem:[%s4 + $0xd0] sm:$0xff]
      %v4567 = vld [vmem:[%s5 + $0x4] sm:$0x3]
      %v4569 = vlaneseq
      %v4570 = vshrl.u32 %v4569, 7
      %v4571 = vsub.s32 0, %v4570
      %v4572 = vrot.slane %v4567, %v4571
      %v4573 = vlaneseq
      %v4574 = vshrl.u32 %v4573, 7
      %v4575 = vsub.s32 1, %v4574
      %v4576 = vrot.slane %v4567, %v4575
      %v4583 = vunpack.c.l.b16 %v4563
      %v4584 = vunpack.c.h.b16 %v4563
      %v4585 = vunpack.c.l.b16 %v4564
      %v4586 = vunpack.c.h.b16 %v4564
      %v4587 = vunpack.c.l.b16 %v4565
      %v4588 = vunpack.c.h.b16 %v4565
      %v4589 = vunpack.c.l.b16 %v4566
      %v4590 = vunpack.c.h.b16 %v4566
      %v4591 = vpack.c.b16 %v4585, %v4583
      %v4592 = vpack.c.b16 %v4586, %v4584
      %v4593 = vpack.c.b16 %v4589, %v4587
      %v4594 = vpack.c.b16 %v4590, %v4588
      %4599 = vmatprep.subr.bf16.mxu0 %v4592
      %4600 = vmatpush1.bf16.msra.mxu0 %v4591
      %4601 = vmatprep.subr.bf16.mxu0 %v4594
      %4602 = vmatpush1.bf16.msra.mxu0 %v4593
      %4603 = vmatprep.subr.bf16.mxu0 0
      %4604 = vmatpush1.bf16.msra.mxu0 0
      %4605 = vmatprep.subr.bf16.mxu0 0
      %4606 = vmatpush1.bf16.msra.mxu0 0
      %4607 = vmatprep.subr.bf16.mxu0 0
      %4608 = vmatpush1.bf16.msra.mxu0 0
      %4609 = vmatprep.subr.bf16.mxu0 0
      %4610 = vmatpush1.bf16.msra.mxu0 0
      %4611 = vmatprep.subr.bf16.mxu0 0
      %4612 = vmatpush1.bf16.msra.mxu0 0
      %4613 = vmatprep.subr.bf16.mxu0 0
      %4614 = vmatpush1.bf16.msra.mxu0 0
      %4615 = vmatprep.subr.bf16.mxu0 0
      %4616 = vmatpush1.bf16.msra.mxu0 0
      %4617 = vmatprep.subr.bf16.mxu0 0
      %4618 = vmatpush1.bf16.msra.mxu0 0
      %4619 = vmatprep.subr.bf16.mxu0 0
      %4620 = vmatpush1.bf16.msra.mxu0 0
      %4621 = vmatprep.subr.bf16.mxu0 0
      %4622 = vmatpush1.bf16.msra.mxu0 0
      %4623 = vmatprep.subr.bf16.mxu0 0
      %4624 = vmatpush1.bf16.msra.mxu0 0
      %4625 = vmatprep.subr.bf16.mxu0 0
      %4626 = vmatpush1.bf16.msra.mxu0 0
      %4627 = vmatprep.subr.bf16.mxu0 0
      %4628 = vmatpush1.bf16.msra.mxu0 0
      %4629 = vmatprep.subr.bf16.mxu0 0
      %4630 = vmatpush1.bf16.msra.mxu0 0
      %4631 = vmatprep.mubr.bf16.mxu0 0
      %4632 = vmatmul.mubr.bf16.gmra.mrb[0].mxu0 %v3834
      %v4633 = vpop.f32.mrb[0].mxu0
      %v4634 = vadd.f32 %v4572, %v4633
      %v4635 = vpop.f32.mrb[0].mxu0
      %v4636 = vadd.f32 %v4576, %v4635
      %v4637 = vpop.f32.mrb[0].mxu0
      %v4638 = vadd.f32 %v4572, %v4637
      %v4639 = vpop.f32.mrb[0].mxu0
      %v4640 = vadd.f32 %v4576, %v4639
      %4641 = vmatprep.mubr.bf16.mxu0 0
      %4642 = vmatmul.mubr.bf16.gmra.mrb[0].mxu0 %v3837
      %v4643 = vpop.f32.mrb[0].mxu0
      %v4644 = vadd.f32 %v4572, %v4643
      %v4645 = vpop.f32.mrb[0].mxu0
      %v4646 = vadd.f32 %v4576, %v4645
      %v4647 = vpop.f32.mrb[0].mxu0
      %v4648 = vadd.f32 %v4572, %v4647
      %v4649 = vpop.f32.mrb[0].mxu0
      %v4650 = vadd.f32 %v4576, %v4649
      %4651 = vmatprep.mubr.bf16.mxu0 0
      %4652 = vmatmul.mubr.bf16.gmra.mrb[0].mxu0 %v3840
      %v4653 = vpop.f32.mrb[0].mxu0
      %v4654 = vadd.f32 %v4572, %v4653
      %v4655 = vpop.f32.mrb[0].mxu0
      %v4656 = vadd.f32 %v4576, %v4655
      %v4657 = vpop.f32.mrb[0].mxu0
      %v4658 = vadd.f32 %v4572, %v4657
      %v4659 = vpop.f32.mrb[0].mxu0
      %v4660 = vadd.f32 %v4576, %v4659
      %4661 = vmatprep.mubr.bf16.mxu0 0
      %4662 = vmatmul.mubr.bf16.gmra.mrb[0].mxu0 %v3843
      %v4663 = vpop.f32.mrb[0].mxu0
      %v4664 = vadd.f32 %v4572, %v4663
      %v4665 = vpop.f32.mrb[0].mxu0
      %v4666 = vadd.f32 %v4576, %v4665
      %v4667 = vpop.f32.mrb[0].mxu0
      %v4668 = vadd.f32 %v4572, %v4667
      %v4669 = vpop.f32.mrb[0].mxu0
      %v4670 = vadd.f32 %v4576, %v4669
      %4671 = vmatprep.mubr.bf16.mxu0 0
      %4672 = vmatmul.mubr.bf16.gmra.mrb[0].mxu0 %v3846
      %v4673 = vpop.f32.mrb[0].mxu0
      %v4674 = vadd.f32 %v4572, %v4673
      %v4675 = vpop.f32.mrb[0].mxu0
      %v4676 = vadd.f32 %v4576, %v4675
      %v4677 = vpop.f32.mrb[0].mxu0
      %v4678 = vadd.f32 %v4572, %v4677
      %v4679 = vpop.f32.mrb[0].mxu0
      %v4680 = vadd.f32 %v4576, %v4679
      %4681 = vmatprep.mubr.bf16.mxu0 0
      %4682 = vmatmul.mubr.bf16.gmra.mrb[0].mxu0 %v3849
      %v4683 = vpop.f32.mrb[0].mxu0
      %v4684 = vadd.f32 %v4572, %v4683
      %v4685 = vpop.f32.mrb[0].mxu0
      %v4686 = vadd.f32 %v4576, %v4685
      %v4687 = vpop.f32.mrb[0].mxu0
      %v4688 = vadd.f32 %v4572, %v4687
      %v4689 = vpop.f32.mrb[0].mxu0
      %v4690 = vadd.f32 %v4576, %v4689
      %4691 = vdwg.mxu0
      %v4692 = vmax.f32 %v4634, 0.0
      %v4693 = vmax.f32 %v4636, 0.0
      %v4694 = vmax.f32 %v4638, 0.0
      %v4695 = vmax.f32 %v4640, 0.0
      %v4696 = vmax.f32 %v4644, 0.0
      %v4697 = vmax.f32 %v4646, 0.0
      %v4698 = vmax.f32 %v4648, 0.0
      %v4699 = vmax.f32 %v4650, 0.0
      %v4700 = vmax.f32 %v4654, 0.0
      %v4701 = vmax.f32 %v4656, 0.0
      %v4702 = vmax.f32 %v4658, 0.0
      %v4703 = vmax.f32 %v4660, 0.0
      %v4704 = vmax.f32 %v4664, 0.0
      %v4705 = vmax.f32 %v4666, 0.0
      %v4706 = vmax.f32 %v4668, 0.0
      %v4707 = vmax.f32 %v4670, 0.0
      %v4708 = vmax.f32 %v4674, 0.0
      %v4709 = vmax.f32 %v4676, 0.0
      %v4710 = vmax.f32 %v4678, 0.0
      %v4711 = vmax.f32 %v4680, 0.0
      %v4712 = vmax.f32 %v4684, 0.0
      %v4713 = vmax.f32 %v4686, 0.0
      %v4714 = vmax.f32 %v4688, 0.0
      %v4715 = vmax.f32 %v4690, 0.0
      %v4716 = vpack.c.bf16 %v4694, %v4692
      %v4717 = vpack.c.bf16 %v4695, %v4693
      %v4718 = vpack.c.bf16 %v4698, %v4696
      %v4719 = vpack.c.bf16 %v4699, %v4697
      %v4720 = vpack.c.bf16 %v4702, %v4700
      %v4721 = vpack.c.bf16 %v4703, %v4701
      %v4722 = vpack.c.bf16 %v4706, %v4704
      %v4723 = vpack.c.bf16 %v4707, %v4705
      %v4724 = vpack.c.bf16 %v4710, %v4708
      %v4725 = vpack.c.bf16 %v4711, %v4709
      %v4726 = vpack.c.bf16 %v4714, %v4712
      %v4727 = vpack.c.bf16 %v4715, %v4713
      %v4728 = vld [vmem:[%s6 + $0x100] sm:$0xf]
      %v4729 = vld [vmem:[%s6 + $0x104] sm:$0xf]
      %v4730 = vld [vmem:[%s6 + $0x108] sm:$0xf]
      %v4731 = vld [vmem:[%s6 + $0x10c] sm:$0xf]
      %v4732 = vld [vmem:[%s6 + $0x110] sm:$0xf]
      %v4733 = vld [vmem:[%s6 + $0x114] sm:$0xf]
      %v4734 = vld [vmem:[%s6 + $0x118] sm:$0xf]
      %v4735 = vld [vmem:[%s6 + $0x11c] sm:$0xf]
      %v4736 = vld [vmem:[%s6 + $0x120] sm:$0xf]
      %v4737 = vld [vmem:[%s6 + $0x124] sm:$0xf]
      %v4738 = vld [vmem:[%s6 + $0x128] sm:$0xf]
      %v4739 = vld [vmem:[%s6 + $0x12c] sm:$0xf]
      %v4740 = vld [vmem:[%s6 + $0x130] sm:$0xf]
      %v4741 = vld [vmem:[%s6 + $0x134] sm:$0xf]
      %v4742 = vld [vmem:[%s6 + $0x138] sm:$0xf]
      %v4743 = vld [vmem:[%s6 + $0x13c] sm:$0xf]
      %v4744 = vld [vmem:[%s6 + $0x140] sm:$0xf]
      %v4745 = vld [vmem:[%s6 + $0x144] sm:$0xf]
      %v4746 = vld [vmem:[%s6 + $0x148] sm:$0xf]
      %v4747 = vld [vmem:[%s6 + $0x14c] sm:$0xf]
      %v4748 = vld [vmem:[%s6 + $0x150] sm:$0xf]
      %v4749 = vld [vmem:[%s6 + $0x154] sm:$0xf]
      %v4750 = vld [vmem:[%s6 + $0x158] sm:$0xf]
      %v4751 = vld [vmem:[%s6 + $0x15c] sm:$0xf]
      %v4752 = vld [vmem:[%s6 + $0x160] sm:$0xf]
      %v4753 = vld [vmem:[%s6 + $0x164] sm:$0xf]
      %v4754 = vld [vmem:[%s6 + $0x168] sm:$0xf]
      %v4755 = vld [vmem:[%s6 + $0x16c] sm:$0xf]
      %v4756 = vld [vmem:[%s6 + $0x170] sm:$0xf]
      %v4757 = vld [vmem:[%s6 + $0x174] sm:$0xf]
      %v4758 = vld [vmem:[%s6 + $0x178] sm:$0xf]
      %v4759 = vld [vmem:[%s6 + $0x17c] sm:$0xf]
      %v4792 = vunpack.c.l.b16 %v4728
      %v4793 = vunpack.c.l.b16 %v4729
      %v4794 = vunpack.c.l.b16 %v4730
      %v4795 = vunpack.c.l.b16 %v4731
      %v4796 = vunpack.c.l.b16 %v4732
      %v4797 = vunpack.c.l.b16 %v4733
      %v4798 = vunpack.c.l.b16 %v4734
      %v4799 = vunpack.c.l.b16 %v4735
      %v4800 = vunpack.c.l.b16 %v4736
      %v4801 = vunpack.c.l.b16 %v4737
      %v4802 = vunpack.c.l.b16 %v4738
      %v4803 = vunpack.c.l.b16 %v4739
      %v4804 = vunpack.c.l.b16 %v4740
      %v4805 = vunpack.c.l.b16 %v4741
      %v4806 = vunpack.c.l.b16 %v4742
      %v4807 = vunpack.c.l.b16 %v4743
      %v4808 = vunpack.c.l.b16 %v4744
      %v4809 = vunpack.c.l.b16 %v4745
      %v4810 = vunpack.c.l.b16 %v4746
      %v4811 = vunpack.c.l.b16 %v4747
      %v4812 = vunpack.c.l.b16 %v4748
      %v4813 = vunpack.c.l.b16 %v4749
      %v4814 = vunpack.c.l.b16 %v4750
      %v4815 = vunpack.c.l.b16 %v4751
      %v4816 = vunpack.c.l.b16 %v4752
      %v4817 = vunpack.c.l.b16 %v4753
      %v4818 = vunpack.c.l.b16 %v4754
      %v4819 = vunpack.c.l.b16 %v4755
      %v4820 = vunpack.c.l.b16 %v4756
      %v4821 = vunpack.c.l.b16 %v4757
      %v4822 = vunpack.c.l.b16 %v4758
      %v4823 = vunpack.c.l.b16 %v4759
      %v4824 = vpack.c.b16 %v4793, %v4792
      %v4825 = vpack.c.b16 %v4795, %v4794
      %v4826 = vpack.c.b16 %v4797, %v4796
      %v4827 = vpack.c.b16 %v4799, %v4798
      %v4828 = vpack.c.b16 %v4801, %v4800
      %v4829 = vpack.c.b16 %v4803, %v4802
      %v4830 = vpack.c.b16 %v4805, %v4804
      %v4831 = vpack.c.b16 %v4807, %v4806
      %v4832 = vpack.c.b16 %v4809, %v4808
      %v4833 = vpack.c.b16 %v4811, %v4810
      %v4834 = vpack.c.b16 %v4813, %v4812
      %v4835 = vpack.c.b16 %v4815, %v4814
      %v4836 = vpack.c.b16 %v4817, %v4816
      %v4837 = vpack.c.b16 %v4819, %v4818
      %v4838 = vpack.c.b16 %v4821, %v4820
      %v4839 = vpack.c.b16 %v4823, %v4822
      %4856 = vmatprep.subr.bf16.mxu0 0
      %4857 = vmatpush1.bf16.msra.mxu0 %v4824
      %4858 = vmatprep.subr.bf16.mxu0 0
      %4859 = vmatpush1.bf16.msra.mxu0 %v4825
      %4860 = vmatprep.subr.bf16.mxu0 0
      %4861 = vmatpush1.bf16.msra.mxu0 %v4826
      %4862 = vmatprep.subr.bf16.mxu0 0
      %4863 = vmatpush1.bf16.msra.mxu0 %v4827
      %4864 = vmatprep.subr.bf16.mxu0 0
      %4865 = vmatpush1.bf16.msra.mxu0 %v4828
      %4866 = vmatprep.subr.bf16.mxu0 0
      %4867 = vmatpush1.bf16.msra.mxu0 %v4829
      %4868 = vmatprep.subr.bf16.mxu0 0
      %4869 = vmatpush1.bf16.msra.mxu0 %v4830
      %4870 = vmatprep.subr.bf16.mxu0 0
      %4871 = vmatpush1.bf16.msra.mxu0 %v4831
      %4872 = vmatprep.subr.bf16.mxu0 0
      %4873 = vmatpush1.bf16.msra.mxu0 %v4832
      %4874 = vmatprep.subr.bf16.mxu0 0
      %4875 = vmatpush1.bf16.msra.mxu0 %v4833
      %4876 = vmatprep.subr.bf16.mxu0 0
      %4877 = vmatpush1.bf16.msra.mxu0 %v4834
      %4878 = vmatprep.subr.bf16.mxu0 0
      %4879 = vmatpush1.bf16.msra.mxu0 %v4835
      %4880 = vmatprep.subr.bf16.mxu0 0
      %4881 = vmatpush1.bf16.msra.mxu0 %v4836
      %4882 = vmatprep.subr.bf16.mxu0 0
      %4883 = vmatpush1.bf16.msra.mxu0 %v4837
      %4884 = vmatprep.subr.bf16.mxu0 0
      %4885 = vmatpush1.bf16.msra.mxu0 %v4838
      %4886 = vmatprep.subr.bf16.mxu0 0
      %4887 = vmatpush1.bf16.msra.mxu0 %v4839
      %4888 = vmatprep.mubr.bf16.mxu0 %v4717
      %4889 = vmatmul.mubr.bf16.gmra.mrb[0].mxu0 %v4716
      %v4890 = vpop.f32.mrb[0].mxu0
      %v4891 = vadd.f32 0.0, %v4890
      %v4892 = vpop.f32.mrb[0].mxu0
      %v4893 = vpop.f32.mrb[0].mxu0
      %v4894 = vadd.f32 0.0, %v4893
      %v4895 = vpop.f32.mrb[0].mxu0
      %4896 = vmatprep.mubr.bf16.mxu0 %v4719
      %4897 = vmatmul.mubr.bf16.gmra.mrb[0].mxu0 %v4718
      %v4898 = vpop.f32.mrb[0].mxu0
      %v4899 = vadd.f32 0.0, %v4898
      %v4900 = vpop.f32.mrb[0].mxu0
      %v4901 = vpop.f32.mrb[0].mxu0
      %v4902 = vadd.f32 0.0, %v4901
      %v4903 = vpop.f32.mrb[0].mxu0
      %4904 = vmatprep.mubr.bf16.mxu0 %v4721
      %4905 = vmatmul.mubr.bf16.gmra.mrb[0].mxu0 %v4720
      %v4906 = vpop.f32.mrb[0].mxu0
      %v4907 = vadd.f32 0.0, %v4906
      %v4908 = vpop.f32.mrb[0].mxu0
      %v4909 = vpop.f32.mrb[0].mxu0
      %v4910 = vadd.f32 0.0, %v4909
      %v4911 = vpop.f32.mrb[0].mxu0
      %4912 = vmatprep.mubr.bf16.mxu0 %v4723
      %4913 = vmatmul.mubr.bf16.gmra.mrb[0].mxu0 %v4722
      %v4914 = vpop.f32.mrb[0].mxu0
      %v4915 = vadd.f32 0.0, %v4914
      %v4916 = vpop.f32.mrb[0].mxu0
      %v4917 = vpop.f32.mrb[0].mxu0
      %v4918 = vadd.f32 0.0, %v4917
      %v4919 = vpop.f32.mrb[0].mxu0
      %4920 = vmatprep.mubr.bf16.mxu0 %v4725
      %4921 = vmatmul.mubr.bf16.gmra.mrb[0].mxu0 %v4724
      %v4922 = vpop.f32.mrb[0].mxu0
      %v4923 = vadd.f32 0.0, %v4922
      %v4924 = vpop.f32.mrb[0].mxu0
      %v4925 = vpop.f32.mrb[0].mxu0
      %v4926 = vadd.f32 0.0, %v4925
      %v4927 = vpop.f32.mrb[0].mxu0
      %4928 = vmatprep.mubr.bf16.mxu0 %v4727
      %4929 = vmatmul.mubr.bf16.gmra.mrb[0].mxu0 %v4726
      %v4930 = vpop.f32.mrb[0].mxu0
      %v4931 = vadd.f32 0.0, %v4930
      %v4932 = vpop.f32.mrb[0].mxu0
      %v4933 = vpop.f32.mrb[0].mxu0
      %v4934 = vadd.f32 0.0, %v4933
      %v4935 = vpop.f32.mrb[0].mxu0
      %4936 = vdwg.mxu0
      %v4937 = vadd.f32 %v4517, %v4891
      %v4938 = vadd.f32 %v4520, %v4894
      %v4939 = vadd.f32 %v4525, %v4899
      %v4940 = vadd.f32 %v4528, %v4902
      %v4941 = vadd.f32 %v4533, %v4907
      %v4942 = vadd.f32 %v4536, %v4910
      %v4943 = vadd.f32 %v4541, %v4915
      %v4944 = vadd.f32 %v4544, %v4918
      %v4945 = vadd.f32 %v4549, %v4923
      %v4946 = vadd.f32 %v4552, %v4926
      %v4947 = vadd.f32 %v4557, %v4931
      %v4948 = vadd.f32 %v4560, %v4934
      %v4949 = vld [vmem:[%s4 + $0x18] sm:$0xff]
      %v4950 = vld [vmem:[%s4 + $0x58] sm:$0xff]
      %v4951 = vld [vmem:[%s4 + $0x98] sm:$0xff]
      %v4952 = vld [vmem:[%s4 + $0xd8] sm:$0xff]
      %v4953 = vld [vmem:[%s5 + $0x6] sm:$0x3]
      %v4955 = vlaneseq
      %v4956 = vshrl.u32 %v4955, 7
      %v4957 = vsub.s32 0, %v4956
      %v4958 = vrot.slane %v4953, %v4957
      %v4959 = vlaneseq
      %v4960 = vshrl.u32 %v4959, 7
      %v4961 = vsub.s32 1, %v4960
      %v4962 = vrot.slane %v4953, %v4961
      %v4969 = vunpack.c.l.b16 %v4949
      %v4970 = vunpack.c.h.b16 %v4949
      %v4971 = vunpack.c.l.b16 %v4950
      %v4972 = vunpack.c.h.b16 %v4950
      %v4973 = vunpack.c.l.b16 %v4951
      %v4974 = vunpack.c.h.b16 %v4951
      %v4975 = vunpack.c.l.b16 %v4952
      %v4976 = vunpack.c.h.b16 %v4952
      %v4977 = vpack.c.b16 %v4971, %v4969
      %v4978 = vpack.c.b16 %v4972, %v4970
      %v4979 = vpack.c.b16 %v4975, %v4973
      %v4980 = vpack.c.b16 %v4976, %v4974
      %4985 = vmatprep.subr.bf16.mxu0 %v4978
      %4986 = vmatpush1.bf16.msra.mxu0 %v4977
      %4987 = vmatprep.subr.bf16.mxu0 %v4980
      %4988 = vmatpush1.bf16.msra.mxu0 %v4979
      %4989 = vmatprep.subr.bf16.mxu0 0
      %4990 = vmatpush1.bf16.msra.mxu0 0
      %4991 = vmatprep.subr.bf16.mxu0 0
      %4992 = vmatpush1.bf16.msra.mxu0 0
      %4993 = vmatprep.subr.bf16.mxu0 0
      %4994 = vmatpush1.bf16.msra.mxu0 0
      %4995 = vmatprep.subr.bf16.mxu0 0
      %4996 = vmatpush1.bf16.msra.mxu0 0
      %4997 = vmatprep.subr.bf16.mxu0 0
      %4998 = vmatpush1.bf16.msra.mxu0 0
      %4999 = vmatprep.subr.bf16.mxu0 0
      %5000 = vmatpush1.bf16.msra.mxu0 0
      %5001 = vmatprep.subr.bf16.mxu0 0
      %5002 = vmatpush1.bf16.msra.mxu0 0
      %5003 = vmatprep.subr.bf16.mxu0 0
      %5004 = vmatpush1.bf16.msra.mxu0 0
      %5005 = vmatprep.subr.bf16.mxu0 0
      %5006 = vmatpush1.bf16.msra.mxu0 0
      %5007 = vmatprep.subr.bf16.mxu0 0
      %5008 = vmatpush1.bf16.msra.mxu0 0
      %5009 = vmatprep.subr.bf16.mxu0 0
      %5010 = vmatpush1.bf16.msra.mxu0 0
      %5011 = vmatprep.subr.bf16.mxu0 0
      %5012 = vmatpush1.bf16.msra.mxu0 0
      %5013 = vmatprep.subr.bf16.mxu0 0
      %5014 = vmatpush1.bf16.msra.mxu0 0
      %5015 = vmatprep.subr.bf16.mxu0 0
      %5016 = vmatpush1.bf16.msra.mxu0 0
      %5017 = vmatprep.mubr.bf16.mxu0 0
      %5018 = vmatmul.mubr.bf16.gmra.mrb[0].mxu0 %v3834
      %v5019 = vpop.f32.mrb[0].mxu0
      %v5020 = vadd.f32 %v4958, %v5019
      %v5021 = vpop.f32.mrb[0].mxu0
      %v5022 = vadd.f32 %v4962, %v5021
      %v5023 = vpop.f32.mrb[0].mxu0
      %v5024 = vadd.f32 %v4958, %v5023
      %v5025 = vpop.f32.mrb[0].mxu0
      %v5026 = vadd.f32 %v4962, %v5025
      %5027 = vmatprep.mubr.bf16.mxu0 0
      %5028 = vmatmul.mubr.bf16.gmra.mrb[0].mxu0 %v3837
      %v5029 = vpop.f32.mrb[0].mxu0
      %v5030 = vadd.f32 %v4958, %v5029
      %v5031 = vpop.f32.mrb[0].mxu0
      %v5032 = vadd.f32 %v4962, %v5031
      %v5033 = vpop.f32.mrb[0].mxu0
      %v5034 = vadd.f32 %v4958, %v5033
      %v5035 = vpop.f32.mrb[0].mxu0
      %v5036 = vadd.f32 %v4962, %v5035
      %5037 = vmatprep.mubr.bf16.mxu0 0
      %5038 = vmatmul.mubr.bf16.gmra.mrb[0].mxu0 %v3840
      %v5039 = vpop.f32.mrb[0].mxu0
      %v5040 = vadd.f32 %v4958, %v5039
      %v5041 = vpop.f32.mrb[0].mxu0
      %v5042 = vadd.f32 %v4962, %v5041
      %v5043 = vpop.f32.mrb[0].mxu0
      %v5044 = vadd.f32 %v4958, %v5043
      %v5045 = vpop.f32.mrb[0].mxu0
      %v5046 = vadd.f32 %v4962, %v5045
      %5047 = vmatprep.mubr.bf16.mxu0 0
      %5048 = vmatmul.mubr.bf16.gmra.mrb[0].mxu0 %v3843
      %v5049 = vpop.f32.mrb[0].mxu0
      %v5050 = vadd.f32 %v4958, %v5049
      %v5051 = vpop.f32.mrb[0].mxu0
      %v5052 = vadd.f32 %v4962, %v5051
      %v5053 = vpop.f32.mrb[0].mxu0
      %v5054 = vadd.f32 %v4958, %v5053
      %v5055 = vpop.f32.mrb[0].mxu0
      %v5056 = vadd.f32 %v4962, %v5055
      %5057 = vmatprep.mubr.bf16.mxu0 0
      %5058 = vmatmul.mubr.bf16.gmra.mrb[0].mxu0 %v3846
      %v5059 = vpop.f32.mrb[0].mxu0
      %v5060 = vadd.f32 %v4958, %v5059
      %v5061 = vpop.f32.mrb[0].mxu0
      %v5062 = vadd.f32 %v4962, %v5061
      %v5063 = vpop.f32.mrb[0].mxu0
      %v5064 = vadd.f32 %v4958, %v5063
      %v5065 = vpop.f32.mrb[0].mxu0
      %v5066 = vadd.f32 %v4962, %v5065
      %5067 = vmatprep.mubr.bf16.mxu0 0
      %5068 = vmatmul.mubr.bf16.gmra.mrb[0].mxu0 %v3849
      %v5069 = vpop.f32.mrb[0].mxu0
      %v5070 = vadd.f32 %v4958, %v5069
      %v5071 = vpop.f32.mrb[0].mxu0
      %v5072 = vadd.f32 %v4962, %v5071
      %v5073 = vpop.f32.mrb[0].mxu0
      %v5074 = vadd.f32 %v4958, %v5073
      %v5075 = vpop.f32.mrb[0].mxu0
      %v5076 = vadd.f32 %v4962, %v5075
      %5077 = vdwg.mxu0
      %v5078 = vmax.f32 %v5020, 0.0
      %v5079 = vmax.f32 %v5022, 0.0
      %v5080 = vmax.f32 %v5024, 0.0
      %v5081 = vmax.f32 %v5026, 0.0
      %v5082 = vmax.f32 %v5030, 0.0
      %v5083 = vmax.f32 %v5032, 0.0
      %v5084 = vmax.f32 %v5034, 0.0
      %v5085 = vmax.f32 %v5036, 0.0
      %v5086 = vmax.f32 %v5040, 0.0
      %v5087 = vmax.f32 %v5042, 0.0
      %v5088 = vmax.f32 %v5044, 0.0
      %v5089 = vmax.f32 %v5046, 0.0
      %v5090 = vmax.f32 %v5050, 0.0
      %v5091 = vmax.f32 %v5052, 0.0
      %v5092 = vmax.f32 %v5054, 0.0
      %v5093 = vmax.f32 %v5056, 0.0
      %v5094 = vmax.f32 %v5060, 0.0
      %v5095 = vmax.f32 %v5062, 0.0
      %v5096 = vmax.f32 %v5064, 0.0
      %v5097 = vmax.f32 %v5066, 0.0
      %v5098 = vmax.f32 %v5070, 0.0
      %v5099 = vmax.f32 %v5072, 0.0
      %v5100 = vmax.f32 %v5074, 0.0
      %v5101 = vmax.f32 %v5076, 0.0
      %v5102 = vpack.c.bf16 %v5080, %v5078
      %v5103 = vpack.c.bf16 %v5081, %v5079
      %v5104 = vpack.c.bf16 %v5084, %v5082
      %v5105 = vpack.c.bf16 %v5085, %v5083
      %v5106 = vpack.c.bf16 %v5088, %v5086
      %v5107 = vpack.c.bf16 %v5089, %v5087
      %v5108 = vpack.c.bf16 %v5092, %v5090
      %v5109 = vpack.c.bf16 %v5093, %v5091
      %v5110 = vpack.c.bf16 %v5096, %v5094
      %v5111 = vpack.c.bf16 %v5097, %v5095
      %v5112 = vpack.c.bf16 %v5100, %v5098
      %v5113 = vpack.c.bf16 %v5101, %v5099
      %v5114 = vld [vmem:[%s6 + $0x180] sm:$0xf]
      %v5115 = vld [vmem:[%s6 + $0x184] sm:$0xf]
      %v5116 = vld [vmem:[%s6 + $0x188] sm:$0xf]
      %v5117 = vld [vmem:[%s6 + $0x18c] sm:$0xf]
      %v5118 = vld [vmem:[%s6 + $0x190] sm:$0xf]
      %v5119 = vld [vmem:[%s6 + $0x194] sm:$0xf]
      %v5120 = vld [vmem:[%s6 + $0x198] sm:$0xf]
      %v5121 = vld [vmem:[%s6 + $0x19c] sm:$0xf]
      %v5122 = vld [vmem:[%s6 + $0x1a0] sm:$0xf]
      %v5123 = vld [vmem:[%s6 + $0x1a4] sm:$0xf]
      %v5124 = vld [vmem:[%s6 + $0x1a8] sm:$0xf]
      %v5125 = vld [vmem:[%s6 + $0x1ac] sm:$0xf]
      %v5126 = vld [vmem:[%s6 + $0x1b0] sm:$0xf]
      %v5127 = vld [vmem:[%s6 + $0x1b4] sm:$0xf]
      %v5128 = vld [vmem:[%s6 + $0x1b8] sm:$0xf]
      %v5129 = vld [vmem:[%s6 + $0x1bc] sm:$0xf]
      %v5130 = vld [vmem:[%s6 + $0x1c0] sm:$0xf]
      %v5131 = vld [vmem:[%s6 + $0x1c4] sm:$0xf]
      %v5132 = vld [vmem:[%s6 + $0x1c8] sm:$0xf]
      %v5133 = vld [vmem:[%s6 + $0x1cc] sm:$0xf]
      %v5134 = vld [vmem:[%s6 + $0x1d0] sm:$0xf]
      %v5135 = vld [vmem:[%s6 + $0x1d4] sm:$0xf]
      %v5136 = vld [vmem:[%s6 + $0x1d8] sm:$0xf]
      %v5137 = vld [vmem:[%s6 + $0x1dc] sm:$0xf]
      %v5138 = vld [vmem:[%s6 + $0x1e0] sm:$0xf]
      %v5139 = vld [vmem:[%s6 + $0x1e4] sm:$0xf]
      %v5140 = vld [vmem:[%s6 + $0x1e8] sm:$0xf]
      %v5141 = vld [vmem:[%s6 + $0x1ec] sm:$0xf]
      %v5142 = vld [vmem:[%s6 + $0x1f0] sm:$0xf]
      %v5143 = vld [vmem:[%s6 + $0x1f4] sm:$0xf]
      %v5144 = vld [vmem:[%s6 + $0x1f8] sm:$0xf]
      %v5145 = vld [vmem:[%s6 + $0x1fc] sm:$0xf]
      %v5178 = vunpack.c.l.b16 %v5114
      %v5179 = vunpack.c.l.b16 %v5115
      %v5180 = vunpack.c.l.b16 %v5116
      %v5181 = vunpack.c.l.b16 %v5117
      %v5182 = vunpack.c.l.b16 %v5118
      %v5183 = vunpack.c.l.b16 %v5119
      %v5184 = vunpack.c.l.b16 %v5120
      %v5185 = vunpack.c.l.b16 %v5121
      %v5186 = vunpack.c.l.b16 %v5122
      %v5187 = vunpack.c.l.b16 %v5123
      %v5188 = vunpack.c.l.b16 %v5124
      %v5189 = vunpack.c.l.b16 %v5125
      %v5190 = vunpack.c.l.b16 %v5126
      %v5191 = vunpack.c.l.b16 %v5127
      %v5192 = vunpack.c.l.b16 %v5128
      %v5193 = vunpack.c.l.b16 %v5129
      %v5194 = vunpack.c.l.b16 %v5130
      %v5195 = vunpack.c.l.b16 %v5131
      %v5196 = vunpack.c.l.b16 %v5132
      %v5197 = vunpack.c.l.b16 %v5133
      %v5198 = vunpack.c.l.b16 %v5134
      %v5199 = vunpack.c.l.b16 %v5135
      %v5200 = vunpack.c.l.b16 %v5136
      %v5201 = vunpack.c.l.b16 %v5137
      %v5202 = vunpack.c.l.b16 %v5138
      %v5203 = vunpack.c.l.b16 %v5139
      %v5204 = vunpack.c.l.b16 %v5140
      %v5205 = vunpack.c.l.b16 %v5141
      %v5206 = vunpack.c.l.b16 %v5142
      %v5207 = vunpack.c.l.b16 %v5143
      %v5208 = vunpack.c.l.b16 %v5144
      %v5209 = vunpack.c.l.b16 %v5145
      %v5210 = vpack.c.b16 %v5179, %v5178
      %v5211 = vpack.c.b16 %v5181, %v5180
      %v5212 = vpack.c.b16 %v5183, %v5182
      %v5213 = vpack.c.b16 %v5185, %v5184
      %v5214 = vpack.c.b16 %v5187, %v5186
      %v5215 = vpack.c.b16 %v5189, %v5188
      %v5216 = vpack.c.b16 %v5191, %v5190
      %v5217 = vpack.c.b16 %v5193, %v5192
      %v5218 = vpack.c.b16 %v5195, %v5194
      %v5219 = vpack.c.b16 %v5197, %v5196
      %v5220 = vpack.c.b16 %v5199, %v5198
      %v5221 = vpack.c.b16 %v5201, %v5200
      %v5222 = vpack.c.b16 %v5203, %v5202
      %v5223 = vpack.c.b16 %v5205, %v5204
      %v5224 = vpack.c.b16 %v5207, %v5206
      %v5225 = vpack.c.b16 %v5209, %v5208
      %5242 = vmatprep.subr.bf16.mxu0 0
      %5243 = vmatpush1.bf16.msra.mxu0 %v5210
      %5244 = vmatprep.subr.bf16.mxu0 0
      %5245 = vmatpush1.bf16.msra.mxu0 %v5211
      %5246 = vmatprep.subr.bf16.mxu0 0
      %5247 = vmatpush1.bf16.msra.mxu0 %v5212
      %5248 = vmatprep.subr.bf16.mxu0 0
      %5249 = vmatpush1.bf16.msra.mxu0 %v5213
      %5250 = vmatprep.subr.bf16.mxu0 0
      %5251 = vmatpush1.bf16.msra.mxu0 %v5214
      %5252 = vmatprep.subr.bf16.mxu0 0
      %5253 = vmatpush1.bf16.msra.mxu0 %v5215
      %5254 = vmatprep.subr.bf16.mxu0 0
      %5255 = vmatpush1.bf16.msra.mxu0 %v5216
      %5256 = vmatprep.subr.bf16.mxu0 0
      %5257 = vmatpush1.bf16.msra.mxu0 %v5217
      %5258 = vmatprep.subr.bf16.mxu0 0
      %5259 = vmatpush1.bf16.msra.mxu0 %v5218
      %5260 = vmatprep.subr.bf16.mxu0 0
      %5261 = vmatpush1.bf16.msra.mxu0 %v5219
      %5262 = vmatprep.subr.bf16.mxu0 0
      %5263 = vmatpush1.bf16.msra.mxu0 %v5220
      %5264 = vmatprep.subr.bf16.mxu0 0
      %5265 = vmatpush1.bf16.msra.mxu0 %v5221
      %5266 = vmatprep.subr.bf16.mxu0 0
      %5267 = vmatpush1.bf16.msra.mxu0 %v5222
      %5268 = vmatprep.subr.bf16.mxu0 0
      %5269 = vmatpush1.bf16.msra.mxu0 %v5223
      %5270 = vmatprep.subr.bf16.mxu0 0
      %5271 = vmatpush1.bf16.msra.mxu0 %v5224
      %5272 = vmatprep.subr.bf16.mxu0 0
      %5273 = vmatpush1.bf16.msra.mxu0 %v5225
      %5274 = vmatprep.mubr.bf16.mxu0 %v5103
      %5275 = vmatmul.mubr.bf16.gmra.mrb[0].mxu0 %v5102
      %v5276 = vpop.f32.mrb[0].mxu0
      %v5277 = vadd.f32 0.0, %v5276
      %v5278 = vpop.f32.mrb[0].mxu0
      %v5279 = vpop.f32.mrb[0].mxu0
      %v5280 = vadd.f32 0.0, %v5279
      %v5281 = vpop.f32.mrb[0].mxu0
      %5282 = vmatprep.mubr.bf16.mxu0 %v5105
      %5283 = vmatmul.mubr.bf16.gmra.mrb[0].mxu0 %v5104
      %v5284 = vpop.f32.mrb[0].mxu0
      %v5285 = vadd.f32 0.0, %v5284
      %v5286 = vpop.f32.mrb[0].mxu0
      %v5287 = vpop.f32.mrb[0].mxu0
      %v5288 = vadd.f32 0.0, %v5287
      %v5289 = vpop.f32.mrb[0].mxu0
      %5290 = vmatprep.mubr.bf16.mxu0 %v5107
      %5291 = vmatmul.mubr.bf16.gmra.mrb[0].mxu0 %v5106
      %v5292 = vpop.f32.mrb[0].mxu0
      %v5293 = vadd.f32 0.0, %v5292
      %v5294 = vpop.f32.mrb[0].mxu0
      %v5295 = vpop.f32.mrb[0].mxu0
      %v5296 = vadd.f32 0.0, %v5295
      %v5297 = vpop.f32.mrb[0].mxu0
      %5298 = vmatprep.mubr.bf16.mxu0 %v5109
      %5299 = vmatmul.mubr.bf16.gmra.mrb[0].mxu0 %v5108
      %v5300 = vpop.f32.mrb[0].mxu0
      %v5301 = vadd.f32 0.0, %v5300
      %v5302 = vpop.f32.mrb[0].mxu0
      %v5303 = vpop.f32.mrb[0].mxu0
      %v5304 = vadd.f32 0.0, %v5303
      %v5305 = vpop.f32.mrb[0].mxu0
      %5306 = vmatprep.mubr.bf16.mxu0 %v5111
      %5307 = vmatmul.mubr.bf16.gmra.mrb[0].mxu0 %v5110
      %v5308 = vpop.f32.mrb[0].mxu0
      %v5309 = vadd.f32 0.0, %v5308
      %v5310 = vpop.f32.mrb[0].mxu0
      %v5311 = vpop.f32.mrb[0].mxu0
      %v5312 = vadd.f32 0.0, %v5311
      %v5313 = vpop.f32.mrb[0].mxu0
      %5314 = vmatprep.mubr.bf16.mxu0 %v5113
      %5315 = vmatmul.mubr.bf16.gmra.mrb[0].mxu0 %v5112
      %v5316 = vpop.f32.mrb[0].mxu0
      %v5317 = vadd.f32 0.0, %v5316
      %v5318 = vpop.f32.mrb[0].mxu0
      %v5319 = vpop.f32.mrb[0].mxu0
      %v5320 = vadd.f32 0.0, %v5319
      %v5321 = vpop.f32.mrb[0].mxu0
      %5322 = vdwg.mxu0
      %v5323 = vadd.f32 %v4937, %v5277
      %v5324 = vadd.f32 %v4938, %v5280
      %v5325 = vadd.f32 %v4939, %v5285
      %v5326 = vadd.f32 %v4940, %v5288
      %v5327 = vadd.f32 %v4941, %v5293
      %v5328 = vadd.f32 %v4942, %v5296
      %v5329 = vadd.f32 %v4943, %v5301
      %v5330 = vadd.f32 %v4944, %v5304
      %v5331 = vadd.f32 %v4945, %v5309
      %v5332 = vadd.f32 %v4946, %v5312
      %v5333 = vadd.f32 %v4947, %v5317
      %v5334 = vadd.f32 %v4948, %v5320
      %v5335 = vld [vmem:[%s4 + $0x20] sm:$0xff]
      %v5336 = vld [vmem:[%s4 + $0x60] sm:$0xff]
      %v5337 = vld [vmem:[%s4 + $0xa0] sm:$0xff]
      %v5338 = vld [vmem:[%s4 + $0xe0] sm:$0xff]
      %v5339 = vld [vmem:[%s5 + $0x8] sm:$0x3]
      %v5341 = vlaneseq
      %v5342 = vshrl.u32 %v5341, 7
      %v5343 = vsub.s32 0, %v5342
      %v5344 = vrot.slane %v5339, %v5343
      %v5345 = vlaneseq
      %v5346 = vshrl.u32 %v5345, 7
      %v5347 = vsub.s32 1, %v5346
      %v5348 = vrot.slane %v5339, %v5347
      %v5355 = vunpack.c.l.b16 %v5335
      %v5356 = vunpack.c.h.b16 %v5335
      %v5357 = vunpack.c.l.b16 %v5336
      %v5358 = vunpack.c.h.b16 %v5336
      %v5359 = vunpack.c.l.b16 %v5337
      %v5360 = vunpack.c.h.b16 %v5337
      %v5361 = vunpack.c.l.b16 %v5338
      %v5362 = vunpack.c.h.b16 %v5338
      %v5363 = vpack.c.b16 %v5357, %v5355
      %v5364 = vpack.c.b16 %v5358, %v5356
      %v5365 = vpack.c.b16 %v5361, %v5359
      %v5366 = vpack.c.b16 %v5362, %v5360
      %5371 = vmatprep.subr.bf16.mxu0 %v5364
      %5372 = vmatpush1.bf16.msra.mxu0 %v5363
      %5373 = vmatprep.subr.bf16.mxu0 %v5366
      %5374 = vmatpush1.bf16.msra.mxu0 %v5365
      %5375 = vmatprep.subr.bf16.mxu0 0
      %5376 = vmatpush1.bf16.msra.mxu0 0
      %5377 = vmatprep.subr.bf16.mxu0 0
      %5378 = vmatpush1.bf16.msra.mxu0 0
      %5379 = vmatprep.subr.bf16.mxu0 0
      %5380 = vmatpush1.bf16.msra.mxu0 0
      %5381 = vmatprep.subr.bf16.mxu0 0
      %5382 = vmatpush1.bf16.msra.mxu0 0
      %5383 = vmatprep.subr.bf16.mxu0 0
      %5384 = vmatpush1.bf16.msra.mxu0 0
      %5385 = vmatprep.subr.bf16.mxu0 0
      %5386 = vmatpush1.bf16.msra.mxu0 0
      %5387 = vmatprep.subr.bf16.mxu0 0
      %5388 = vmatpush1.bf16.msra.mxu0 0
      %5389 = vmatprep.subr.bf16.mxu0 0
      %5390 = vmatpush1.bf16.msra.mxu0 0
      %5391 = vmatprep.subr.bf16.mxu0 0
      %5392 = vmatpush1.bf16.msra.mxu0 0
      %5393 = vmatprep.subr.bf16.mxu0 0
      %5394 = vmatpush1.bf16.msra.mxu0 0
      %5395 = vmatprep.subr.bf16.mxu0 0
      %5396 = vmatpush1.bf16.msra.mxu0 0
      %5397 = vmatprep.subr.bf16.mxu0 0
      %5398 = vmatpush1.bf16.msra.mxu0 0
      %5399 = vmatprep.subr.bf16.mxu0 0
      %5400 = vmatpush1.bf16.msra.mxu0 0
      %5401 = vmatprep.subr.bf16.mxu0 0
      %5402 = vmatpush1.bf16.msra.mxu0 0
      %5403 = vmatprep.mubr.bf16.mxu0 0
      %5404 = vmatmul.mubr.bf16.gmra.mrb[0].mxu0 %v3834
      %v5405 = vpop.f32.mrb[0].mxu0
      %v5406 = vadd.f32 %v5344, %v5405
      %v5407 = vpop.f32.mrb[0].mxu0
      %v5408 = vadd.f32 %v5348, %v5407
      %v5409 = vpop.f32.mrb[0].mxu0
      %v5410 = vadd.f32 %v5344, %v5409
      %v5411 = vpop.f32.mrb[0].mxu0
      %v5412 = vadd.f32 %v5348, %v5411
      %5413 = vmatprep.mubr.bf16.mxu0 0
      %5414 = vmatmul.mubr.bf16.gmra.mrb[0].mxu0 %v3837
      %v5415 = vpop.f32.mrb[0].mxu0
      %v5416 = vadd.f32 %v5344, %v5415
      %v5417 = vpop.f32.mrb[0].mxu0
      %v5418 = vadd.f32 %v5348, %v5417
      %v5419 = vpop.f32.mrb[0].mxu0
      %v5420 = vadd.f32 %v5344, %v5419
      %v5421 = vpop.f32.mrb[0].mxu0
      %v5422 = vadd.f32 %v5348, %v5421
      %5423 = vmatprep.mubr.bf16.mxu0 0
      %5424 = vmatmul.mubr.bf16.gmra.mrb[0].mxu0 %v3840
      %v5425 = vpop.f32.mrb[0].mxu0
      %v5426 = vadd.f32 %v5344, %v5425
      %v5427 = vpop.f32.mrb[0].mxu0
      %v5428 = vadd.f32 %v5348, %v5427
      %v5429 = vpop.f32.mrb[0].mxu0
      %v5430 = vadd.f32 %v5344, %v5429
      %v5431 = vpop.f32.mrb[0].mxu0
      %v5432 = vadd.f32 %v5348, %v5431
      %5433 = vmatprep.mubr.bf16.mxu0 0
      %5434 = vmatmul.mubr.bf16.gmra.mrb[0].mxu0 %v3843
      %v5435 = vpop.f32.mrb[0].mxu0
      %v5436 = vadd.f32 %v5344, %v5435
      %v5437 = vpop.f32.mrb[0].mxu0
      %v5438 = vadd.f32 %v5348, %v5437
      %v5439 = vpop.f32.mrb[0].mxu0
      %v5440 = vadd.f32 %v5344, %v5439
      %v5441 = vpop.f32.mrb[0].mxu0
      %v5442 = vadd.f32 %v5348, %v5441
      %5443 = vmatprep.mubr.bf16.mxu0 0
      %5444 = vmatmul.mubr.bf16.gmra.mrb[0].mxu0 %v3846
      %v5445 = vpop.f32.mrb[0].mxu0
      %v5446 = vadd.f32 %v5344, %v5445
      %v5447 = vpop.f32.mrb[0].mxu0
      %v5448 = vadd.f32 %v5348, %v5447
      %v5449 = vpop.f32.mrb[0].mxu0
      %v5450 = vadd.f32 %v5344, %v5449
      %v5451 = vpop.f32.mrb[0].mxu0
      %v5452 = vadd.f32 %v5348, %v5451
      %5453 = vmatprep.mubr.bf16.mxu0 0
      %5454 = vmatmul.mubr.bf16.gmra.mrb[0].mxu0 %v3849
      %v5455 = vpop.f32.mrb[0].mxu0
      %v5456 = vadd.f32 %v5344, %v5455
      %v5457 = vpop.f32.mrb[0].mxu0
      %v5458 = vadd.f32 %v5348, %v5457
      %v5459 = vpop.f32.mrb[0].mxu0
      %v5460 = vadd.f32 %v5344, %v5459
      %v5461 = vpop.f32.mrb[0].mxu0
      %v5462 = vadd.f32 %v5348, %v5461
      %5463 = vdwg.mxu0
      %v5464 = vmax.f32 %v5406, 0.0
      %v5465 = vmax.f32 %v5408, 0.0
      %v5466 = vmax.f32 %v5410, 0.0
      %v5467 = vmax.f32 %v5412, 0.0
      %v5468 = vmax.f32 %v5416, 0.0
      %v5469 = vmax.f32 %v5418, 0.0
      %v5470 = vmax.f32 %v5420, 0.0
      %v5471 = vmax.f32 %v5422, 0.0
      %v5472 = vmax.f32 %v5426, 0.0
      %v5473 = vmax.f32 %v5428, 0.0
      %v5474 = vmax.f32 %v5430, 0.0
      %v5475 = vmax.f32 %v5432, 0.0
      %v5476 = vmax.f32 %v5436, 0.0
      %v5477 = vmax.f32 %v5438, 0.0
      %v5478 = vmax.f32 %v5440, 0.0
      %v5479 = vmax.f32 %v5442, 0.0
      %v5480 = vmax.f32 %v5446, 0.0
      %v5481 = vmax.f32 %v5448, 0.0
      %v5482 = vmax.f32 %v5450, 0.0
      %v5483 = vmax.f32 %v5452, 0.0
      %v5484 = vmax.f32 %v5456, 0.0
      %v5485 = vmax.f32 %v5458, 0.0
      %v5486 = vmax.f32 %v5460, 0.0
      %v5487 = vmax.f32 %v5462, 0.0
      %v5488 = vpack.c.bf16 %v5466, %v5464
      %v5489 = vpack.c.bf16 %v5467, %v5465
      %v5490 = vpack.c.bf16 %v5470, %v5468
      %v5491 = vpack.c.bf16 %v5471, %v5469
      %v5492 = vpack.c.bf16 %v5474, %v5472
      %v5493 = vpack.c.bf16 %v5475, %v5473
      %v5494 = vpack.c.bf16 %v5478, %v5476
      %v5495 = vpack.c.bf16 %v5479, %v5477
      %v5496 = vpack.c.bf16 %v5482, %v5480
      %v5497 = vpack.c.bf16 %v5483, %v5481
      %v5498 = vpack.c.bf16 %v5486, %v5484
      %v5499 = vpack.c.bf16 %v5487, %v5485
      %v5500 = vld [vmem:[%s6 + $0x200] sm:$0xf]
      %v5501 = vld [vmem:[%s6 + $0x204] sm:$0xf]
      %v5502 = vld [vmem:[%s6 + $0x208] sm:$0xf]
      %v5503 = vld [vmem:[%s6 + $0x20c] sm:$0xf]
      %v5504 = vld [vmem:[%s6 + $0x210] sm:$0xf]
      %v5505 = vld [vmem:[%s6 + $0x214] sm:$0xf]
      %v5506 = vld [vmem:[%s6 + $0x218] sm:$0xf]
      %v5507 = vld [vmem:[%s6 + $0x21c] sm:$0xf]
      %v5508 = vld [vmem:[%s6 + $0x220] sm:$0xf]
      %v5509 = vld [vmem:[%s6 + $0x224] sm:$0xf]
      %v5510 = vld [vmem:[%s6 + $0x228] sm:$0xf]
      %v5511 = vld [vmem:[%s6 + $0x22c] sm:$0xf]
      %v5512 = vld [vmem:[%s6 + $0x230] sm:$0xf]
      %v5513 = vld [vmem:[%s6 + $0x234] sm:$0xf]
      %v5514 = vld [vmem:[%s6 + $0x238] sm:$0xf]
      %v5515 = vld [vmem:[%s6 + $0x23c] sm:$0xf]
      %v5516 = vld [vmem:[%s6 + $0x240] sm:$0xf]
      %v5517 = vld [vmem:[%s6 + $0x244] sm:$0xf]
      %v5518 = vld [vmem:[%s6 + $0x248] sm:$0xf]
      %v5519 = vld [vmem:[%s6 + $0x24c] sm:$0xf]
      %v5520 = vld [vmem:[%s6 + $0x250] sm:$0xf]
      %v5521 = vld [vmem:[%s6 + $0x254] sm:$0xf]
      %v5522 = vld [vmem:[%s6 + $0x258] sm:$0xf]
      %v5523 = vld [vmem:[%s6 + $0x25c] sm:$0xf]
      %v5524 = vld [vmem:[%s6 + $0x260] sm:$0xf]
      %v5525 = vld [vmem:[%s6 + $0x264] sm:$0xf]
      %v5526 = vld [vmem:[%s6 + $0x268] sm:$0xf]
      %v5527 = vld [vmem:[%s6 + $0x26c] sm:$0xf]
      %v5528 = vld [vmem:[%s6 + $0x270] sm:$0xf]
      %v5529 = vld [vmem:[%s6 + $0x274] sm:$0xf]
      %v5530 = vld [vmem:[%s6 + $0x278] sm:$0xf]
      %v5531 = vld [vmem:[%s6 + $0x27c] sm:$0xf]
      %v5564 = vunpack.c.l.b16 %v5500
      %v5565 = vunpack.c.l.b16 %v5501
      %v5566 = vunpack.c.l.b16 %v5502
      %v5567 = vunpack.c.l.b16 %v5503
      %v5568 = vunpack.c.l.b16 %v5504
      %v5569 = vunpack.c.l.b16 %v5505
      %v5570 = vunpack.c.l.b16 %v5506
      %v5571 = vunpack.c.l.b16 %v5507
      %v5572 = vunpack.c.l.b16 %v5508
      %v5573 = vunpack.c.l.b16 %v5509
      %v5574 = vunpack.c.l.b16 %v5510
      %v5575 = vunpack.c.l.b16 %v5511
      %v5576 = vunpack.c.l.b16 %v5512
      %v5577 = vunpack.c.l.b16 %v5513
      %v5578 = vunpack.c.l.b16 %v5514
      %v5579 = vunpack.c.l.b16 %v5515
      %v5580 = vunpack.c.l.b16 %v5516
      %v5581 = vunpack.c.l.b16 %v5517
      %v5582 = vunpack.c.l.b16 %v5518
      %v5583 = vunpack.c.l.b16 %v5519
      %v5584 = vunpack.c.l.b16 %v5520
      %v5585 = vunpack.c.l.b16 %v5521
      %v5586 = vunpack.c.l.b16 %v5522
      %v5587 = vunpack.c.l.b16 %v5523
      %v5588 = vunpack.c.l.b16 %v5524
      %v5589 = vunpack.c.l.b16 %v5525
      %v5590 = vunpack.c.l.b16 %v5526
      %v5591 = vunpack.c.l.b16 %v5527
      %v5592 = vunpack.c.l.b16 %v5528
      %v5593 = vunpack.c.l.b16 %v5529
      %v5594 = vunpack.c.l.b16 %v5530
      %v5595 = vunpack.c.l.b16 %v5531
      %v5596 = vpack.c.b16 %v5565, %v5564
      %v5597 = vpack.c.b16 %v5567, %v5566
      %v5598 = vpack.c.b16 %v5569, %v5568
      %v5599 = vpack.c.b16 %v5571, %v5570
      %v5600 = vpack.c.b16 %v5573, %v5572
      %v5601 = vpack.c.b16 %v5575, %v5574
      %v5602 = vpack.c.b16 %v5577, %v5576
      %v5603 = vpack.c.b16 %v5579, %v5578
      %v5604 = vpack.c.b16 %v5581, %v5580
      %v5605 = vpack.c.b16 %v5583, %v5582
      %v5606 = vpack.c.b16 %v5585, %v5584
      %v5607 = vpack.c.b16 %v5587, %v5586
      %v5608 = vpack.c.b16 %v5589, %v5588
      %v5609 = vpack.c.b16 %v5591, %v5590
      %v5610 = vpack.c.b16 %v5593, %v5592
      %v5611 = vpack.c.b16 %v5595, %v5594
      %5628 = vmatprep.subr.bf16.mxu0 0
      %5629 = vmatpush1.bf16.msra.mxu0 %v5596
      %5630 = vmatprep.subr.bf16.mxu0 0
      %5631 = vmatpush1.bf16.msra.mxu0 %v5597
      %5632 = vmatprep.subr.bf16.mxu0 0
      %5633 = vmatpush1.bf16.msra.mxu0 %v5598
      %5634 = vmatprep.subr.bf16.mxu0 0
      %5635 = vmatpush1.bf16.msra.mxu0 %v5599
      %5636 = vmatprep.subr.bf16.mxu0 0
      %5637 = vmatpush1.bf16.msra.mxu0 %v5600
      %5638 = vmatprep.subr.bf16.mxu0 0
      %5639 = vmatpush1.bf16.msra.mxu0 %v5601
      %5640 = vmatprep.subr.bf16.mxu0 0
      %5641 = vmatpush1.bf16.msra.mxu0 %v5602
      %5642 = vmatprep.subr.bf16.mxu0 0
      %5643 = vmatpush1.bf16.msra.mxu0 %v5603
      %5644 = vmatprep.subr.bf16.mxu0 0
      %5645 = vmatpush1.bf16.msra.mxu0 %v5604
      %5646 = vmatprep.subr.bf16.mxu0 0
      %5647 = vmatpush1.bf16.msra.mxu0 %v5605
      %5648 = vmatprep.subr.bf16.mxu0 0
      %5649 = vmatpush1.bf16.msra.mxu0 %v5606
      %5650 = vmatprep.subr.bf16.mxu0 0
      %5651 = vmatpush1.bf16.msra.mxu0 %v5607
      %5652 = vmatprep.subr.bf16.mxu0 0
      %5653 = vmatpush1.bf16.msra.mxu0 %v5608
      %5654 = vmatprep.subr.bf16.mxu0 0
      %5655 = vmatpush1.bf16.msra.mxu0 %v5609
      %5656 = vmatprep.subr.bf16.mxu0 0
      %5657 = vmatpush1.bf16.msra.mxu0 %v5610
      %5658 = vmatprep.subr.bf16.mxu0 0
      %5659 = vmatpush1.bf16.msra.mxu0 %v5611
      %5660 = vmatprep.mubr.bf16.mxu0 %v5489
      %5661 = vmatmul.mubr.bf16.gmra.mrb[0].mxu0 %v5488
      %v5662 = vpop.f32.mrb[0].mxu0
      %v5663 = vadd.f32 0.0, %v5662
      %v5664 = vpop.f32.mrb[0].mxu0
      %v5665 = vpop.f32.mrb[0].mxu0
      %v5666 = vadd.f32 0.0, %v5665
      %v5667 = vpop.f32.mrb[0].mxu0
      %5668 = vmatprep.mubr.bf16.mxu0 %v5491
      %5669 = vmatmul.mubr.bf16.gmra.mrb[0].mxu0 %v5490
      %v5670 = vpop.f32.mrb[0].mxu0
      %v5671 = vadd.f32 0.0, %v5670
      %v5672 = vpop.f32.mrb[0].mxu0
      %v5673 = vpop.f32.mrb[0].mxu0
      %v5674 = vadd.f32 0.0, %v5673
      %v5675 = vpop.f32.mrb[0].mxu0
      %5676 = vmatprep.mubr.bf16.mxu0 %v5493
      %5677 = vmatmul.mubr.bf16.gmra.mrb[0].mxu0 %v5492
      %v5678 = vpop.f32.mrb[0].mxu0
      %v5679 = vadd.f32 0.0, %v5678
      %v5680 = vpop.f32.mrb[0].mxu0
      %v5681 = vpop.f32.mrb[0].mxu0
      %v5682 = vadd.f32 0.0, %v5681
      %v5683 = vpop.f32.mrb[0].mxu0
      %5684 = vmatprep.mubr.bf16.mxu0 %v5495
      %5685 = vmatmul.mubr.bf16.gmra.mrb[0].mxu0 %v5494
      %v5686 = vpop.f32.mrb[0].mxu0
      %v5687 = vadd.f32 0.0, %v5686
      %v5688 = vpop.f32.mrb[0].mxu0
      %v5689 = vpop.f32.mrb[0].mxu0
      %v5690 = vadd.f32 0.0, %v5689
      %v5691 = vpop.f32.mrb[0].mxu0
      %5692 = vmatprep.mubr.bf16.mxu0 %v5497
      %5693 = vmatmul.mubr.bf16.gmra.mrb[0].mxu0 %v5496
      %v5694 = vpop.f32.mrb[0].mxu0
      %v5695 = vadd.f32 0.0, %v5694
      %v5696 = vpop.f32.mrb[0].mxu0
      %v5697 = vpop.f32.mrb[0].mxu0
      %v5698 = vadd.f32 0.0, %v5697
      %v5699 = vpop.f32.mrb[0].mxu0
      %5700 = vmatprep.mubr.bf16.mxu0 %v5499
      %5701 = vmatmul.mubr.bf16.gmra.mrb[0].mxu0 %v5498
      %v5702 = vpop.f32.mrb[0].mxu0
      %v5703 = vadd.f32 0.0, %v5702
      %v5704 = vpop.f32.mrb[0].mxu0
      %v5705 = vpop.f32.mrb[0].mxu0
      %v5706 = vadd.f32 0.0, %v5705
      %v5707 = vpop.f32.mrb[0].mxu0
      %5708 = vdwg.mxu0
      %v5709 = vadd.f32 %v5323, %v5663
      %v5710 = vadd.f32 %v5324, %v5666
      %v5711 = vadd.f32 %v5325, %v5671
      %v5712 = vadd.f32 %v5326, %v5674
      %v5713 = vadd.f32 %v5327, %v5679
      %v5714 = vadd.f32 %v5328, %v5682
      %v5715 = vadd.f32 %v5329, %v5687
      %v5716 = vadd.f32 %v5330, %v5690
      %v5717 = vadd.f32 %v5331, %v5695
      %v5718 = vadd.f32 %v5332, %v5698
      %v5719 = vadd.f32 %v5333, %v5703
      %v5720 = vadd.f32 %v5334, %v5706
      %v5721 = vld [vmem:[%s4 + $0x28] sm:$0xff]
      %v5722 = vld [vmem:[%s4 + $0x68] sm:$0xff]
      %v5723 = vld [vmem:[%s4 + $0xa8] sm:$0xff]
      %v5724 = vld [vmem:[%s4 + $0xe8] sm:$0xff]
      %v5725 = vld [vmem:[%s5 + $0xa] sm:$0x3]
      %v5727 = vlaneseq
      %v5728 = vshrl.u32 %v5727, 7
      %v5729 = vsub.s32 0, %v5728
      %v5730 = vrot.slane %v5725, %v5729
      %v5731 = vlaneseq
      %v5732 = vshrl.u32 %v5731, 7
      %v5733 = vsub.s32 1, %v5732
      %v5734 = vrot.slane %v5725, %v5733
      %v5741 = vunpack.c.l.b16 %v5721
      %v5742 = vunpack.c.h.b16 %v5721
      %v5743 = vunpack.c.l.b16 %v5722
      %v5744 = vunpack.c.h.b16 %v5722
      %v5745 = vunpack.c.l.b16 %v5723
      %v5746 = vunpack.c.h.b16 %v5723
      %v5747 = vunpack.c.l.b16 %v5724
      %v5748 = vunpack.c.h.b16 %v5724
      %v5749 = vpack.c.b16 %v5743, %v5741
      %v5750 = vpack.c.b16 %v5744, %v5742
      %v5751 = vpack.c.b16 %v5747, %v5745
      %v5752 = vpack.c.b16 %v5748, %v5746
      %5757 = vmatprep.subr.bf16.mxu0 %v5750
      %5758 = vmatpush1.bf16.msra.mxu0 %v5749
      %5759 = vmatprep.subr.bf16.mxu0 %v5752
      %5760 = vmatpush1.bf16.msra.mxu0 %v5751
      %5761 = vmatprep.subr.bf16.mxu0 0
      %5762 = vmatpush1.bf16.msra.mxu0 0
      %5763 = vmatprep.subr.bf16.mxu0 0
      %5764 = vmatpush1.bf16.msra.mxu0 0
      %5765 = vmatprep.subr.bf16.mxu0 0
      %5766 = vmatpush1.bf16.msra.mxu0 0
      %5767 = vmatprep.subr.bf16.mxu0 0
      %5768 = vmatpush1.bf16.msra.mxu0 0
      %5769 = vmatprep.subr.bf16.mxu0 0
      %5770 = vmatpush1.bf16.msra.mxu0 0
      %5771 = vmatprep.subr.bf16.mxu0 0
      %5772 = vmatpush1.bf16.msra.mxu0 0
      %5773 = vmatprep.subr.bf16.mxu0 0
      %5774 = vmatpush1.bf16.msra.mxu0 0
      %5775 = vmatprep.subr.bf16.mxu0 0
      %5776 = vmatpush1.bf16.msra.mxu0 0
      %5777 = vmatprep.subr.bf16.mxu0 0
      %5778 = vmatpush1.bf16.msra.mxu0 0
      %5779 = vmatprep.subr.bf16.mxu0 0
      %5780 = vmatpush1.bf16.msra.mxu0 0
      %5781 = vmatprep.subr.bf16.mxu0 0
      %5782 = vmatpush1.bf16.msra.mxu0 0
      %5783 = vmatprep.subr.bf16.mxu0 0
      %5784 = vmatpush1.bf16.msra.mxu0 0
      %5785 = vmatprep.subr.bf16.mxu0 0
      %5786 = vmatpush1.bf16.msra.mxu0 0
      %5787 = vmatprep.subr.bf16.mxu0 0
      %5788 = vmatpush1.bf16.msra.mxu0 0
      %5789 = vmatprep.mubr.bf16.mxu0 0
      %5790 = vmatmul.mubr.bf16.gmra.mrb[0].mxu0 %v3834
      %v5791 = vpop.f32.mrb[0].mxu0
      %v5792 = vadd.f32 %v5730, %v5791
      %v5793 = vpop.f32.mrb[0].mxu0
      %v5794 = vadd.f32 %v5734, %v5793
      %v5795 = vpop.f32.mrb[0].mxu0
      %v5796 = vadd.f32 %v5730, %v5795
      %v5797 = vpop.f32.mrb[0].mxu0
      %v5798 = vadd.f32 %v5734, %v5797
      %5799 = vmatprep.mubr.bf16.mxu0 0
      %5800 = vmatmul.mubr.bf16.gmra.mrb[0].mxu0 %v3837
      %v5801 = vpop.f32.mrb[0].mxu0
      %v5802 = vadd.f32 %v5730, %v5801
      %v5803 = vpop.f32.mrb[0].mxu0
      %v5804 = vadd.f32 %v5734, %v5803
      %v5805 = vpop.f32.mrb[0].mxu0
      %v5806 = vadd.f32 %v5730, %v5805
      %v5807 = vpop.f32.mrb[0].mxu0
      %v5808 = vadd.f32 %v5734, %v5807
      %5809 = vmatprep.mubr.bf16.mxu0 0
      %5810 = vmatmul.mubr.bf16.gmra.mrb[0].mxu0 %v3840
      %v5811 = vpop.f32.mrb[0].mxu0
      %v5812 = vadd.f32 %v5730, %v5811
      %v5813 = vpop.f32.mrb[0].mxu0
      %v5814 = vadd.f32 %v5734, %v5813
      %v5815 = vpop.f32.mrb[0].mxu0
      %v5816 = vadd.f32 %v5730, %v5815
      %v5817 = vpop.f32.mrb[0].mxu0
      %v5818 = vadd.f32 %v5734, %v5817
      %5819 = vmatprep.mubr.bf16.mxu0 0
      %5820 = vmatmul.mubr.bf16.gmra.mrb[0].mxu0 %v3843
      %v5821 = vpop.f32.mrb[0].mxu0
      %v5822 = vadd.f32 %v5730, %v5821
      %v5823 = vpop.f32.mrb[0].mxu0
      %v5824 = vadd.f32 %v5734, %v5823
      %v5825 = vpop.f32.mrb[0].mxu0
      %v5826 = vadd.f32 %v5730, %v5825
      %v5827 = vpop.f32.mrb[0].mxu0
      %v5828 = vadd.f32 %v5734, %v5827
      %5829 = vmatprep.mubr.bf16.mxu0 0
      %5830 = vmatmul.mubr.bf16.gmra.mrb[0].mxu0 %v3846
      %v5831 = vpop.f32.mrb[0].mxu0
      %v5832 = vadd.f32 %v5730, %v5831
      %v5833 = vpop.f32.mrb[0].mxu0
      %v5834 = vadd.f32 %v5734, %v5833
      %v5835 = vpop.f32.mrb[0].mxu0
      %v5836 = vadd.f32 %v5730, %v5835
      %v5837 = vpop.f32.mrb[0].mxu0
      %v5838 = vadd.f32 %v5734, %v5837
      %5839 = vmatprep.mubr.bf16.mxu0 0
      %5840 = vmatmul.mubr.bf16.gmra.mrb[0].mxu0 %v3849
      %v5841 = vpop.f32.mrb[0].mxu0
      %v5842 = vadd.f32 %v5730, %v5841
      %v5843 = vpop.f32.mrb[0].mxu0
      %v5844 = vadd.f32 %v5734, %v5843
      %v5845 = vpop.f32.mrb[0].mxu0
      %v5846 = vadd.f32 %v5730, %v5845
      %v5847 = vpop.f32.mrb[0].mxu0
      %v5848 = vadd.f32 %v5734, %v5847
      %5849 = vdwg.mxu0
      %v5850 = vmax.f32 %v5792, 0.0
      %v5851 = vmax.f32 %v5794, 0.0
      %v5852 = vmax.f32 %v5796, 0.0
      %v5853 = vmax.f32 %v5798, 0.0
      %v5854 = vmax.f32 %v5802, 0.0
      %v5855 = vmax.f32 %v5804, 0.0
      %v5856 = vmax.f32 %v5806, 0.0
      %v5857 = vmax.f32 %v5808, 0.0
      %v5858 = vmax.f32 %v5812, 0.0
      %v5859 = vmax.f32 %v5814, 0.0
      %v5860 = vmax.f32 %v5816, 0.0
      %v5861 = vmax.f32 %v5818, 0.0
      %v5862 = vmax.f32 %v5822, 0.0
      %v5863 = vmax.f32 %v5824, 0.0
      %v5864 = vmax.f32 %v5826, 0.0
      %v5865 = vmax.f32 %v5828, 0.0
      %v5866 = vmax.f32 %v5832, 0.0
      %v5867 = vmax.f32 %v5834, 0.0
      %v5868 = vmax.f32 %v5836, 0.0
      %v5869 = vmax.f32 %v5838, 0.0
      %v5870 = vmax.f32 %v5842, 0.0
      %v5871 = vmax.f32 %v5844, 0.0
      %v5872 = vmax.f32 %v5846, 0.0
      %v5873 = vmax.f32 %v5848, 0.0
      %v5874 = vpack.c.bf16 %v5852, %v5850
      %v5875 = vpack.c.bf16 %v5853, %v5851
      %v5876 = vpack.c.bf16 %v5856, %v5854
      %v5877 = vpack.c.bf16 %v5857, %v5855
      %v5878 = vpack.c.bf16 %v5860, %v5858
      %v5879 = vpack.c.bf16 %v5861, %v5859
      %v5880 = vpack.c.bf16 %v5864, %v5862
      %v5881 = vpack.c.bf16 %v5865, %v5863
      %v5882 = vpack.c.bf16 %v5868, %v5866
      %v5883 = vpack.c.bf16 %v5869, %v5867
      %v5884 = vpack.c.bf16 %v5872, %v5870
      %v5885 = vpack.c.bf16 %v5873, %v5871
      %v5886 = vld [vmem:[%s6 + $0x280] sm:$0xf]
      %v5887 = vld [vmem:[%s6 + $0x284] sm:$0xf]
      %v5888 = vld [vmem:[%s6 + $0x288] sm:$0xf]
      %v5889 = vld [vmem:[%s6 + $0x28c] sm:$0xf]
      %v5890 = vld [vmem:[%s6 + $0x290] sm:$0xf]
      %v5891 = vld [vmem:[%s6 + $0x294] sm:$0xf]
      %v5892 = vld [vmem:[%s6 + $0x298] sm:$0xf]
      %v5893 = vld [vmem:[%s6 + $0x29c] sm:$0xf]
      %v5894 = vld [vmem:[%s6 + $0x2a0] sm:$0xf]
      %v5895 = vld [vmem:[%s6 + $0x2a4] sm:$0xf]
      %v5896 = vld [vmem:[%s6 + $0x2a8] sm:$0xf]
      %v5897 = vld [vmem:[%s6 + $0x2ac] sm:$0xf]
      %v5898 = vld [vmem:[%s6 + $0x2b0] sm:$0xf]
      %v5899 = vld [vmem:[%s6 + $0x2b4] sm:$0xf]
      %v5900 = vld [vmem:[%s6 + $0x2b8] sm:$0xf]
      %v5901 = vld [vmem:[%s6 + $0x2bc] sm:$0xf]
      %v5902 = vld [vmem:[%s6 + $0x2c0] sm:$0xf]
      %v5903 = vld [vmem:[%s6 + $0x2c4] sm:$0xf]
      %v5904 = vld [vmem:[%s6 + $0x2c8] sm:$0xf]
      %v5905 = vld [vmem:[%s6 + $0x2cc] sm:$0xf]
      %v5906 = vld [vmem:[%s6 + $0x2d0] sm:$0xf]
      %v5907 = vld [vmem:[%s6 + $0x2d4] sm:$0xf]
      %v5908 = vld [vmem:[%s6 + $0x2d8] sm:$0xf]
      %v5909 = vld [vmem:[%s6 + $0x2dc] sm:$0xf]
      %v5910 = vld [vmem:[%s6 + $0x2e0] sm:$0xf]
      %v5911 = vld [vmem:[%s6 + $0x2e4] sm:$0xf]
      %v5912 = vld [vmem:[%s6 + $0x2e8] sm:$0xf]
      %v5913 = vld [vmem:[%s6 + $0x2ec] sm:$0xf]
      %v5914 = vld [vmem:[%s6 + $0x2f0] sm:$0xf]
      %v5915 = vld [vmem:[%s6 + $0x2f4] sm:$0xf]
      %v5916 = vld [vmem:[%s6 + $0x2f8] sm:$0xf]
      %v5917 = vld [vmem:[%s6 + $0x2fc] sm:$0xf]
      %v5950 = vunpack.c.l.b16 %v5886
      %v5951 = vunpack.c.l.b16 %v5887
      %v5952 = vunpack.c.l.b16 %v5888
      %v5953 = vunpack.c.l.b16 %v5889
      %v5954 = vunpack.c.l.b16 %v5890
      %v5955 = vunpack.c.l.b16 %v5891
      %v5956 = vunpack.c.l.b16 %v5892
      %v5957 = vunpack.c.l.b16 %v5893
      %v5958 = vunpack.c.l.b16 %v5894
      %v5959 = vunpack.c.l.b16 %v5895
      %v5960 = vunpack.c.l.b16 %v5896
      %v5961 = vunpack.c.l.b16 %v5897
      %v5962 = vunpack.c.l.b16 %v5898
      %v5963 = vunpack.c.l.b16 %v5899
      %v5964 = vunpack.c.l.b16 %v5900
      %v5965 = vunpack.c.l.b16 %v5901
      %v5966 = vunpack.c.l.b16 %v5902
      %v5967 = vunpack.c.l.b16 %v5903
      %v5968 = vunpack.c.l.b16 %v5904
      %v5969 = vunpack.c.l.b16 %v5905
      %v5970 = vunpack.c.l.b16 %v5906
      %v5971 = vunpack.c.l.b16 %v5907
      %v5972 = vunpack.c.l.b16 %v5908
      %v5973 = vunpack.c.l.b16 %v5909
      %v5974 = vunpack.c.l.b16 %v5910
      %v5975 = vunpack.c.l.b16 %v5911
      %v5976 = vunpack.c.l.b16 %v5912
      %v5977 = vunpack.c.l.b16 %v5913
      %v5978 = vunpack.c.l.b16 %v5914
      %v5979 = vunpack.c.l.b16 %v5915
      %v5980 = vunpack.c.l.b16 %v5916
      %v5981 = vunpack.c.l.b16 %v5917
      %v5982 = vpack.c.b16 %v5951, %v5950
      %v5983 = vpack.c.b16 %v5953, %v5952
      %v5984 = vpack.c.b16 %v5955, %v5954
      %v5985 = vpack.c.b16 %v5957, %v5956
      %v5986 = vpack.c.b16 %v5959, %v5958
      %v5987 = vpack.c.b16 %v5961, %v5960
      %v5988 = vpack.c.b16 %v5963, %v5962
      %v5989 = vpack.c.b16 %v5965, %v5964
      %v5990 = vpack.c.b16 %v5967, %v5966
      %v5991 = vpack.c.b16 %v5969, %v5968
      %v5992 = vpack.c.b16 %v5971, %v5970
      %v5993 = vpack.c.b16 %v5973, %v5972
      %v5994 = vpack.c.b16 %v5975, %v5974
      %v5995 = vpack.c.b16 %v5977, %v5976
      %v5996 = vpack.c.b16 %v5979, %v5978
      %v5997 = vpack.c.b16 %v5981, %v5980
      %6014 = vmatprep.subr.bf16.mxu0 0
      %6015 = vmatpush1.bf16.msra.mxu0 %v5982
      %6016 = vmatprep.subr.bf16.mxu0 0
      %6017 = vmatpush1.bf16.msra.mxu0 %v5983
      %6018 = vmatprep.subr.bf16.mxu0 0
      %6019 = vmatpush1.bf16.msra.mxu0 %v5984
      %6020 = vmatprep.subr.bf16.mxu0 0
      %6021 = vmatpush1.bf16.msra.mxu0 %v5985
      %6022 = vmatprep.subr.bf16.mxu0 0
      %6023 = vmatpush1.bf16.msra.mxu0 %v5986
      %6024 = vmatprep.subr.bf16.mxu0 0
      %6025 = vmatpush1.bf16.msra.mxu0 %v5987
      %6026 = vmatprep.subr.bf16.mxu0 0
      %6027 = vmatpush1.bf16.msra.mxu0 %v5988
      %6028 = vmatprep.subr.bf16.mxu0 0
      %6029 = vmatpush1.bf16.msra.mxu0 %v5989
      %6030 = vmatprep.subr.bf16.mxu0 0
      %6031 = vmatpush1.bf16.msra.mxu0 %v5990
      %6032 = vmatprep.subr.bf16.mxu0 0
      %6033 = vmatpush1.bf16.msra.mxu0 %v5991
      %6034 = vmatprep.subr.bf16.mxu0 0
      %6035 = vmatpush1.bf16.msra.mxu0 %v5992
      %6036 = vmatprep.subr.bf16.mxu0 0
      %6037 = vmatpush1.bf16.msra.mxu0 %v5993
      %6038 = vmatprep.subr.bf16.mxu0 0
      %6039 = vmatpush1.bf16.msra.mxu0 %v5994
      %6040 = vmatprep.subr.bf16.mxu0 0
      %6041 = vmatpush1.bf16.msra.mxu0 %v5995
      %6042 = vmatprep.subr.bf16.mxu0 0
      %6043 = vmatpush1.bf16.msra.mxu0 %v5996
      %6044 = vmatprep.subr.bf16.mxu0 0
      %6045 = vmatpush1.bf16.msra.mxu0 %v5997
      %6046 = vmatprep.mubr.bf16.mxu0 %v5875
      %6047 = vmatmul.mubr.bf16.gmra.mrb[0].mxu0 %v5874
      %v6048 = vpop.f32.mrb[0].mxu0
      %v6049 = vadd.f32 0.0, %v6048
      %v6050 = vpop.f32.mrb[0].mxu0
      %v6051 = vpop.f32.mrb[0].mxu0
      %v6052 = vadd.f32 0.0, %v6051
      %v6053 = vpop.f32.mrb[0].mxu0
      %6054 = vmatprep.mubr.bf16.mxu0 %v5877
      %6055 = vmatmul.mubr.bf16.gmra.mrb[0].mxu0 %v5876
      %v6056 = vpop.f32.mrb[0].mxu0
      %v6057 = vadd.f32 0.0, %v6056
      %v6058 = vpop.f32.mrb[0].mxu0
      %v6059 = vpop.f32.mrb[0].mxu0
      %v6060 = vadd.f32 0.0, %v6059
      %v6061 = vpop.f32.mrb[0].mxu0
      %6062 = vmatprep.mubr.bf16.mxu0 %v5879
      %6063 = vmatmul.mubr.bf16.gmra.mrb[0].mxu0 %v5878
      %v6064 = vpop.f32.mrb[0].mxu0
      %v6065 = vadd.f32 0.0, %v6064
      %v6066 = vpop.f32.mrb[0].mxu0
      %v6067 = vpop.f32.mrb[0].mxu0
      %v6068 = vadd.f32 0.0, %v6067
      %v6069 = vpop.f32.mrb[0].mxu0
      %6070 = vmatprep.mubr.bf16.mxu0 %v5881
      %6071 = vmatmul.mubr.bf16.gmra.mrb[0].mxu0 %v5880
      %v6072 = vpop.f32.mrb[0].mxu0
      %v6073 = vadd.f32 0.0, %v6072
      %v6074 = vpop.f32.mrb[0].mxu0
      %v6075 = vpop.f32.mrb[0].mxu0
      %v6076 = vadd.f32 0.0, %v6075
      %v6077 = vpop.f32.mrb[0].mxu0
      %6078 = vmatprep.mubr.bf16.mxu0 %v5883
      %6079 = vmatmul.mubr.bf16.gmra.mrb[0].mxu0 %v5882
      %v6080 = vpop.f32.mrb[0].mxu0
      %v6081 = vadd.f32 0.0, %v6080
      %v6082 = vpop.f32.mrb[0].mxu0
      %v6083 = vpop.f32.mrb[0].mxu0
      %v6084 = vadd.f32 0.0, %v6083
      %v6085 = vpop.f32.mrb[0].mxu0
      %6086 = vmatprep.mubr.bf16.mxu0 %v5885
      %6087 = vmatmul.mubr.bf16.gmra.mrb[0].mxu0 %v5884
      %v6088 = vpop.f32.mrb[0].mxu0
      %v6089 = vadd.f32 0.0, %v6088
      %v6090 = vpop.f32.mrb[0].mxu0
      %v6091 = vpop.f32.mrb[0].mxu0
      %v6092 = vadd.f32 0.0, %v6091
      %v6093 = vpop.f32.mrb[0].mxu0
      %6094 = vdwg.mxu0
      %v6095 = vadd.f32 %v5709, %v6049
      %v6096 = vadd.f32 %v5710, %v6052
      %v6097 = vadd.f32 %v5711, %v6057
      %v6098 = vadd.f32 %v5712, %v6060
      %v6099 = vadd.f32 %v5713, %v6065
      %v6100 = vadd.f32 %v5714, %v6068
      %v6101 = vadd.f32 %v5715, %v6073
      %v6102 = vadd.f32 %v5716, %v6076
      %v6103 = vadd.f32 %v5717, %v6081
      %v6104 = vadd.f32 %v5718, %v6084
      %v6105 = vadd.f32 %v5719, %v6089
      %v6106 = vadd.f32 %v5720, %v6092
      %v6107 = vld [vmem:[%s4 + $0x30] sm:$0xff]
      %v6108 = vld [vmem:[%s4 + $0x70] sm:$0xff]
      %v6109 = vld [vmem:[%s4 + $0xb0] sm:$0xff]
      %v6110 = vld [vmem:[%s4 + $0xf0] sm:$0xff]
      %v6111 = vld [vmem:[%s5 + $0xc] sm:$0x3]
      %v6113 = vlaneseq
      %v6114 = vshrl.u32 %v6113, 7
      %v6115 = vsub.s32 0, %v6114
      %v6116 = vrot.slane %v6111, %v6115
      %v6117 = vlaneseq
      %v6118 = vshrl.u32 %v6117, 7
      %v6119 = vsub.s32 1, %v6118
      %v6120 = vrot.slane %v6111, %v6119
      %v6127 = vunpack.c.l.b16 %v6107
      %v6128 = vunpack.c.h.b16 %v6107
      %v6129 = vunpack.c.l.b16 %v6108
      %v6130 = vunpack.c.h.b16 %v6108
      %v6131 = vunpack.c.l.b16 %v6109
      %v6132 = vunpack.c.h.b16 %v6109
      %v6133 = vunpack.c.l.b16 %v6110
      %v6134 = vunpack.c.h.b16 %v6110
      %v6135 = vpack.c.b16 %v6129, %v6127
      %v6136 = vpack.c.b16 %v6130, %v6128
      %v6137 = vpack.c.b16 %v6133, %v6131
      %v6138 = vpack.c.b16 %v6134, %v6132
      %6143 = vmatprep.subr.bf16.mxu0 %v6136
      %6144 = vmatpush1.bf16.msra.mxu0 %v6135
      %6145 = vmatprep.subr.bf16.mxu0 %v6138
      %6146 = vmatpush1.bf16.msra.mxu0 %v6137
      %6147 = vmatprep.subr.bf16.mxu0 0
      %6148 = vmatpush1.bf16.msra.mxu0 0
      %6149 = vmatprep.subr.bf16.mxu0 0
      %6150 = vmatpush1.bf16.msra.mxu0 0
      %6151 = vmatprep.subr.bf16.mxu0 0
      %6152 = vmatpush1.bf16.msra.mxu0 0
      %6153 = vmatprep.subr.bf16.mxu0 0
      %6154 = vmatpush1.bf16.msra.mxu0 0
      %6155 = vmatprep.subr.bf16.mxu0 0
      %6156 = vmatpush1.bf16.msra.mxu0 0
      %6157 = vmatprep.subr.bf16.mxu0 0
      %6158 = vmatpush1.bf16.msra.mxu0 0
      %6159 = vmatprep.subr.bf16.mxu0 0
      %6160 = vmatpush1.bf16.msra.mxu0 0
      %6161 = vmatprep.subr.bf16.mxu0 0
      %6162 = vmatpush1.bf16.msra.mxu0 0
      %6163 = vmatprep.subr.bf16.mxu0 0
      %6164 = vmatpush1.bf16.msra.mxu0 0
      %6165 = vmatprep.subr.bf16.mxu0 0
      %6166 = vmatpush1.bf16.msra.mxu0 0
      %6167 = vmatprep.subr.bf16.mxu0 0
      %6168 = vmatpush1.bf16.msra.mxu0 0
      %6169 = vmatprep.subr.bf16.mxu0 0
      %6170 = vmatpush1.bf16.msra.mxu0 0
      %6171 = vmatprep.subr.bf16.mxu0 0
      %6172 = vmatpush1.bf16.msra.mxu0 0
      %6173 = vmatprep.subr.bf16.mxu0 0
      %6174 = vmatpush1.bf16.msra.mxu0 0
      %6175 = vmatprep.mubr.bf16.mxu0 0
      %6176 = vmatmul.mubr.bf16.gmra.mrb[0].mxu0 %v3834
      %v6177 = vpop.f32.mrb[0].mxu0
      %v6178 = vadd.f32 %v6116, %v6177
      %v6179 = vpop.f32.mrb[0].mxu0
      %v6180 = vadd.f32 %v6120, %v6179
      %v6181 = vpop.f32.mrb[0].mxu0
      %v6182 = vadd.f32 %v6116, %v6181
      %v6183 = vpop.f32.mrb[0].mxu0
      %v6184 = vadd.f32 %v6120, %v6183
      %6185 = vmatprep.mubr.bf16.mxu0 0
      %6186 = vmatmul.mubr.bf16.gmra.mrb[0].mxu0 %v3837
      %v6187 = vpop.f32.mrb[0].mxu0
      %v6188 = vadd.f32 %v6116, %v6187
      %v6189 = vpop.f32.mrb[0].mxu0
      %v6190 = vadd.f32 %v6120, %v6189
      %v6191 = vpop.f32.mrb[0].mxu0
      %v6192 = vadd.f32 %v6116, %v6191
      %v6193 = vpop.f32.mrb[0].mxu0
      %v6194 = vadd.f32 %v6120, %v6193
      %6195 = vmatprep.mubr.bf16.mxu0 0
      %6196 = vmatmul.mubr.bf16.gmra.mrb[0].mxu0 %v3840
      %v6197 = vpop.f32.mrb[0].mxu0
      %v6198 = vadd.f32 %v6116, %v6197
      %v6199 = vpop.f32.mrb[0].mxu0
      %v6200 = vadd.f32 %v6120, %v6199
      %v6201 = vpop.f32.mrb[0].mxu0
      %v6202 = vadd.f32 %v6116, %v6201
      %v6203 = vpop.f32.mrb[0].mxu0
      %v6204 = vadd.f32 %v6120, %v6203
      %6205 = vmatprep.mubr.bf16.mxu0 0
      %6206 = vmatmul.mubr.bf16.gmra.mrb[0].mxu0 %v3843
      %v6207 = vpop.f32.mrb[0].mxu0
      %v6208 = vadd.f32 %v6116, %v6207
      %v6209 = vpop.f32.mrb[0].mxu0
      %v6210 = vadd.f32 %v6120, %v6209
      %v6211 = vpop.f32.mrb[0].mxu0
      %v6212 = vadd.f32 %v6116, %v6211
      %v6213 = vpop.f32.mrb[0].mxu0
      %v6214 = vadd.f32 %v6120, %v6213
      %6215 = vmatprep.mubr.bf16.mxu0 0
      %6216 = vmatmul.mubr.bf16.gmra.mrb[0].mxu0 %v3846
      %v6217 = vpop.f32.mrb[0].mxu0
      %v6218 = vadd.f32 %v6116, %v6217
      %v6219 = vpop.f32.mrb[0].mxu0
      %v6220 = vadd.f32 %v6120, %v6219
      %v6221 = vpop.f32.mrb[0].mxu0
      %v6222 = vadd.f32 %v6116, %v6221
      %v6223 = vpop.f32.mrb[0].mxu0
      %v6224 = vadd.f32 %v6120, %v6223
      %6225 = vmatprep.mubr.bf16.mxu0 0
      %6226 = vmatmul.mubr.bf16.gmra.mrb[0].mxu0 %v3849
      %v6227 = vpop.f32.mrb[0].mxu0
      %v6228 = vadd.f32 %v6116, %v6227
      %v6229 = vpop.f32.mrb[0].mxu0
      %v6230 = vadd.f32 %v6120, %v6229
      %v6231 = vpop.f32.mrb[0].mxu0
      %v6232 = vadd.f32 %v6116, %v6231
      %v6233 = vpop.f32.mrb[0].mxu0
      %v6234 = vadd.f32 %v6120, %v6233
      %6235 = vdwg.mxu0
      %v6236 = vmax.f32 %v6178, 0.0
      %v6237 = vmax.f32 %v6180, 0.0
      %v6238 = vmax.f32 %v6182, 0.0
      %v6239 = vmax.f32 %v6184, 0.0
      %v6240 = vmax.f32 %v6188, 0.0
      %v6241 = vmax.f32 %v6190, 0.0
      %v6242 = vmax.f32 %v6192, 0.0
      %v6243 = vmax.f32 %v6194, 0.0
      %v6244 = vmax.f32 %v6198, 0.0
      %v6245 = vmax.f32 %v6200, 0.0
      %v6246 = vmax.f32 %v6202, 0.0
      %v6247 = vmax.f32 %v6204, 0.0
      %v6248 = vmax.f32 %v6208, 0.0
      %v6249 = vmax.f32 %v6210, 0.0
      %v6250 = vmax.f32 %v6212, 0.0
      %v6251 = vmax.f32 %v6214, 0.0
      %v6252 = vmax.f32 %v6218, 0.0
      %v6253 = vmax.f32 %v6220, 0.0
      %v6254 = vmax.f32 %v6222, 0.0
      %v6255 = vmax.f32 %v6224, 0.0
      %v6256 = vmax.f32 %v6228, 0.0
      %v6257 = vmax.f32 %v6230, 0.0
      %v6258 = vmax.f32 %v6232, 0.0
      %v6259 = vmax.f32 %v6234, 0.0
      %v6260 = vpack.c.bf16 %v6238, %v6236
      %v6261 = vpack.c.bf16 %v6239, %v6237
      %v6262 = vpack.c.bf16 %v6242, %v6240
      %v6263 = vpack.c.bf16 %v6243, %v6241
      %v6264 = vpack.c.bf16 %v6246, %v6244
      %v6265 = vpack.c.bf16 %v6247, %v6245
      %v6266 = vpack.c.bf16 %v6250, %v6248
      %v6267 = vpack.c.bf16 %v6251, %v6249
      %v6268 = vpack.c.bf16 %v6254, %v6252
      %v6269 = vpack.c.bf16 %v6255, %v6253
      %v6270 = vpack.c.bf16 %v6258, %v6256
      %v6271 = vpack.c.bf16 %v6259, %v6257
      %v6272 = vld [vmem:[%s6 + $0x300] sm:$0xf]
      %v6273 = vld [vmem:[%s6 + $0x304] sm:$0xf]
      %v6274 = vld [vmem:[%s6 + $0x308] sm:$0xf]
      %v6275 = vld [vmem:[%s6 + $0x30c] sm:$0xf]
      %v6276 = vld [vmem:[%s6 + $0x310] sm:$0xf]
      %v6277 = vld [vmem:[%s6 + $0x314] sm:$0xf]
      %v6278 = vld [vmem:[%s6 + $0x318] sm:$0xf]
      %v6279 = vld [vmem:[%s6 + $0x31c] sm:$0xf]
      %v6280 = vld [vmem:[%s6 + $0x320] sm:$0xf]
      %v6281 = vld [vmem:[%s6 + $0x324] sm:$0xf]
      %v6282 = vld [vmem:[%s6 + $0x328] sm:$0xf]
      %v6283 = vld [vmem:[%s6 + $0x32c] sm:$0xf]
      %v6284 = vld [vmem:[%s6 + $0x330] sm:$0xf]
      %v6285 = vld [vmem:[%s6 + $0x334] sm:$0xf]
      %v6286 = vld [vmem:[%s6 + $0x338] sm:$0xf]
      %v6287 = vld [vmem:[%s6 + $0x33c] sm:$0xf]
      %v6288 = vld [vmem:[%s6 + $0x340] sm:$0xf]
      %v6289 = vld [vmem:[%s6 + $0x344] sm:$0xf]
      %v6290 = vld [vmem:[%s6 + $0x348] sm:$0xf]
      %v6291 = vld [vmem:[%s6 + $0x34c] sm:$0xf]
      %v6292 = vld [vmem:[%s6 + $0x350] sm:$0xf]
      %v6293 = vld [vmem:[%s6 + $0x354] sm:$0xf]
      %v6294 = vld [vmem:[%s6 + $0x358] sm:$0xf]
      %v6295 = vld [vmem:[%s6 + $0x35c] sm:$0xf]
      %v6296 = vld [vmem:[%s6 + $0x360] sm:$0xf]
      %v6297 = vld [vmem:[%s6 + $0x364] sm:$0xf]
      %v6298 = vld [vmem:[%s6 + $0x368] sm:$0xf]
      %v6299 = vld [vmem:[%s6 + $0x36c] sm:$0xf]
      %v6300 = vld [vmem:[%s6 + $0x370] sm:$0xf]
      %v6301 = vld [vmem:[%s6 + $0x374] sm:$0xf]
      %v6302 = vld [vmem:[%s6 + $0x378] sm:$0xf]
      %v6303 = vld [vmem:[%s6 + $0x37c] sm:$0xf]
      %v6336 = vunpack.c.l.b16 %v6272
      %v6337 = vunpack.c.l.b16 %v6273
      %v6338 = vunpack.c.l.b16 %v6274
      %v6339 = vunpack.c.l.b16 %v6275
      %v6340 = vunpack.c.l.b16 %v6276
      %v6341 = vunpack.c.l.b16 %v6277
      %v6342 = vunpack.c.l.b16 %v6278
      %v6343 = vunpack.c.l.b16 %v6279
      %v6344 = vunpack.c.l.b16 %v6280
      %v6345 = vunpack.c.l.b16 %v6281
      %v6346 = vunpack.c.l.b16 %v6282
      %v6347 = vunpack.c.l.b16 %v6283
      %v6348 = vunpack.c.l.b16 %v6284
      %v6349 = vunpack.c.l.b16 %v6285
      %v6350 = vunpack.c.l.b16 %v6286
      %v6351 = vunpack.c.l.b16 %v6287
      %v6352 = vunpack.c.l.b16 %v6288
      %v6353 = vunpack.c.l.b16 %v6289
      %v6354 = vunpack.c.l.b16 %v6290
      %v6355 = vunpack.c.l.b16 %v6291
      %v6356 = vunpack.c.l.b16 %v6292
      %v6357 = vunpack.c.l.b16 %v6293
      %v6358 = vunpack.c.l.b16 %v6294
      %v6359 = vunpack.c.l.b16 %v6295
      %v6360 = vunpack.c.l.b16 %v6296
      %v6361 = vunpack.c.l.b16 %v6297
      %v6362 = vunpack.c.l.b16 %v6298
      %v6363 = vunpack.c.l.b16 %v6299
      %v6364 = vunpack.c.l.b16 %v6300
      %v6365 = vunpack.c.l.b16 %v6301
      %v6366 = vunpack.c.l.b16 %v6302
      %v6367 = vunpack.c.l.b16 %v6303
      %v6368 = vpack.c.b16 %v6337, %v6336
      %v6369 = vpack.c.b16 %v6339, %v6338
      %v6370 = vpack.c.b16 %v6341, %v6340
      %v6371 = vpack.c.b16 %v6343, %v6342
      %v6372 = vpack.c.b16 %v6345, %v6344
      %v6373 = vpack.c.b16 %v6347, %v6346
      %v6374 = vpack.c.b16 %v6349, %v6348
      %v6375 = vpack.c.b16 %v6351, %v6350
      %v6376 = vpack.c.b16 %v6353, %v6352
      %v6377 = vpack.c.b16 %v6355, %v6354
      %v6378 = vpack.c.b16 %v6357, %v6356
      %v6379 = vpack.c.b16 %v6359, %v6358
      %v6380 = vpack.c.b16 %v6361, %v6360
      %v6381 = vpack.c.b16 %v6363, %v6362
      %v6382 = vpack.c.b16 %v6365, %v6364
      %v6383 = vpack.c.b16 %v6367, %v6366
      %6400 = vmatprep.subr.bf16.mxu0 0
      %6401 = vmatpush1.bf16.msra.mxu0 %v6368
      %6402 = vmatprep.subr.bf16.mxu0 0
      %6403 = vmatpush1.bf16.msra.mxu0 %v6369
      %6404 = vmatprep.subr.bf16.mxu0 0
      %6405 = vmatpush1.bf16.msra.mxu0 %v6370
      %6406 = vmatprep.subr.bf16.mxu0 0
      %6407 = vmatpush1.bf16.msra.mxu0 %v6371
      %6408 = vmatprep.subr.bf16.mxu0 0
      %6409 = vmatpush1.bf16.msra.mxu0 %v6372
      %6410 = vmatprep.subr.bf16.mxu0 0
      %6411 = vmatpush1.bf16.msra.mxu0 %v6373
      %6412 = vmatprep.subr.bf16.mxu0 0
      %6413 = vmatpush1.bf16.msra.mxu0 %v6374
      %6414 = vmatprep.subr.bf16.mxu0 0
      %6415 = vmatpush1.bf16.msra.mxu0 %v6375
      %6416 = vmatprep.subr.bf16.mxu0 0
      %6417 = vmatpush1.bf16.msra.mxu0 %v6376
      %6418 = vmatprep.subr.bf16.mxu0 0
      %6419 = vmatpush1.bf16.msra.mxu0 %v6377
      %6420 = vmatprep.subr.bf16.mxu0 0
      %6421 = vmatpush1.bf16.msra.mxu0 %v6378
      %6422 = vmatprep.subr.bf16.mxu0 0
      %6423 = vmatpush1.bf16.msra.mxu0 %v6379
      %6424 = vmatprep.subr.bf16.mxu0 0
      %6425 = vmatpush1.bf16.msra.mxu0 %v6380
      %6426 = vmatprep.subr.bf16.mxu0 0
      %6427 = vmatpush1.bf16.msra.mxu0 %v6381
      %6428 = vmatprep.subr.bf16.mxu0 0
      %6429 = vmatpush1.bf16.msra.mxu0 %v6382
      %6430 = vmatprep.subr.bf16.mxu0 0
      %6431 = vmatpush1.bf16.msra.mxu0 %v6383
      %6432 = vmatprep.mubr.bf16.mxu0 %v6261
      %6433 = vmatmul.mubr.bf16.gmra.mrb[0].mxu0 %v6260
      %v6434 = vpop.f32.mrb[0].mxu0
      %v6435 = vadd.f32 0.0, %v6434
      %v6436 = vpop.f32.mrb[0].mxu0
      %v6437 = vpop.f32.mrb[0].mxu0
      %v6438 = vadd.f32 0.0, %v6437
      %v6439 = vpop.f32.mrb[0].mxu0
      %6440 = vmatprep.mubr.bf16.mxu0 %v6263
      %6441 = vmatmul.mubr.bf16.gmra.mrb[0].mxu0 %v6262
      %v6442 = vpop.f32.mrb[0].mxu0
      %v6443 = vadd.f32 0.0, %v6442
      %v6444 = vpop.f32.mrb[0].mxu0
      %v6445 = vpop.f32.mrb[0].mxu0
      %v6446 = vadd.f32 0.0, %v6445
      %v6447 = vpop.f32.mrb[0].mxu0
      %6448 = vmatprep.mubr.bf16.mxu0 %v6265
      %6449 = vmatmul.mubr.bf16.gmra.mrb[0].mxu0 %v6264
      %v6450 = vpop.f32.mrb[0].mxu0
      %v6451 = vadd.f32 0.0, %v6450
      %v6452 = vpop.f32.mrb[0].mxu0
      %v6453 = vpop.f32.mrb[0].mxu0
      %v6454 = vadd.f32 0.0, %v6453
      %v6455 = vpop.f32.mrb[0].mxu0
      %6456 = vmatprep.mubr.bf16.mxu0 %v6267
      %6457 = vmatmul.mubr.bf16.gmra.mrb[0].mxu0 %v6266
      %v6458 = vpop.f32.mrb[0].mxu0
      %v6459 = vadd.f32 0.0, %v6458
      %v6460 = vpop.f32.mrb[0].mxu0
      %v6461 = vpop.f32.mrb[0].mxu0
      %v6462 = vadd.f32 0.0, %v6461
      %v6463 = vpop.f32.mrb[0].mxu0
      %6464 = vmatprep.mubr.bf16.mxu0 %v6269
      %6465 = vmatmul.mubr.bf16.gmra.mrb[0].mxu0 %v6268
      %v6466 = vpop.f32.mrb[0].mxu0
      %v6467 = vadd.f32 0.0, %v6466
      %v6468 = vpop.f32.mrb[0].mxu0
      %v6469 = vpop.f32.mrb[0].mxu0
      %v6470 = vadd.f32 0.0, %v6469
      %v6471 = vpop.f32.mrb[0].mxu0
      %6472 = vmatprep.mubr.bf16.mxu0 %v6271
      %6473 = vmatmul.mubr.bf16.gmra.mrb[0].mxu0 %v6270
      %v6474 = vpop.f32.mrb[0].mxu0
      %v6475 = vadd.f32 0.0, %v6474
      %v6476 = vpop.f32.mrb[0].mxu0
      %v6477 = vpop.f32.mrb[0].mxu0
      %v6478 = vadd.f32 0.0, %v6477
      %v6479 = vpop.f32.mrb[0].mxu0
      %6480 = vdwg.mxu0
      %v6481 = vadd.f32 %v6095, %v6435
      %v6482 = vadd.f32 %v6096, %v6438
      %v6483 = vadd.f32 %v6097, %v6443
      %v6484 = vadd.f32 %v6098, %v6446
      %v6485 = vadd.f32 %v6099, %v6451
      %v6486 = vadd.f32 %v6100, %v6454
      %v6487 = vadd.f32 %v6101, %v6459
      %v6488 = vadd.f32 %v6102, %v6462
      %v6489 = vadd.f32 %v6103, %v6467
      %v6490 = vadd.f32 %v6104, %v6470
      %v6491 = vadd.f32 %v6105, %v6475
      %v6492 = vadd.f32 %v6106, %v6478
      %v6493 = vld [vmem:[%s4 + $0x38] sm:$0xff]
      %v6494 = vld [vmem:[%s4 + $0x78] sm:$0xff]
      %v6495 = vld [vmem:[%s4 + $0xb8] sm:$0xff]
      %v6496 = vld [vmem:[%s4 + $0xf8] sm:$0xff]
      %v6497 = vld [vmem:[%s5 + $0xe] sm:$0x3]
      %v6499 = vlaneseq
      %v6500 = vshrl.u32 %v6499, 7
      %v6501 = vsub.s32 0, %v6500
      %v6502 = vrot.slane %v6497, %v6501
      %v6503 = vlaneseq
      %v6504 = vshrl.u32 %v6503, 7
      %v6505 = vsub.s32 1, %v6504
      %v6506 = vrot.slane %v6497, %v6505
      %v6513 = vunpack.c.l.b16 %v6493
      %v6514 = vunpack.c.h.b16 %v6493
      %v6515 = vunpack.c.l.b16 %v6494
      %v6516 = vunpack.c.h.b16 %v6494
      %v6517 = vunpack.c.l.b16 %v6495
      %v6518 = vunpack.c.h.b16 %v6495
      %v6519 = vunpack.c.l.b16 %v6496
      %v6520 = vunpack.c.h.b16 %v6496
      %v6521 = vpack.c.b16 %v6515, %v6513
      %v6522 = vpack.c.b16 %v6516, %v6514
      %v6523 = vpack.c.b16 %v6519, %v6517
      %v6524 = vpack.c.b16 %v6520, %v6518
      %6529 = vmatprep.subr.bf16.mxu0 %v6522
      %6530 = vmatpush1.bf16.msra.mxu0 %v6521
      %6531 = vmatprep.subr.bf16.mxu0 %v6524
      %6532 = vmatpush1.bf16.msra.mxu0 %v6523
      %6533 = vmatprep.subr.bf16.mxu0 0
      %6534 = vmatpush1.bf16.msra.mxu0 0
      %6535 = vmatprep.subr.bf16.mxu0 0
      %6536 = vmatpush1.bf16.msra.mxu0 0
      %6537 = vmatprep.subr.bf16.mxu0 0
      %6538 = vmatpush1.bf16.msra.mxu0 0
      %6539 = vmatprep.subr.bf16.mxu0 0
      %6540 = vmatpush1.bf16.msra.mxu0 0
      %6541 = vmatprep.subr.bf16.mxu0 0
      %6542 = vmatpush1.bf16.msra.mxu0 0
      %6543 = vmatprep.subr.bf16.mxu0 0
      %6544 = vmatpush1.bf16.msra.mxu0 0
      %6545 = vmatprep.subr.bf16.mxu0 0
      %6546 = vmatpush1.bf16.msra.mxu0 0
      %6547 = vmatprep.subr.bf16.mxu0 0
      %6548 = vmatpush1.bf16.msra.mxu0 0
      %6549 = vmatprep.subr.bf16.mxu0 0
      %6550 = vmatpush1.bf16.msra.mxu0 0
      %6551 = vmatprep.subr.bf16.mxu0 0
      %6552 = vmatpush1.bf16.msra.mxu0 0
      %6553 = vmatprep.subr.bf16.mxu0 0
      %6554 = vmatpush1.bf16.msra.mxu0 0
      %6555 = vmatprep.subr.bf16.mxu0 0
      %6556 = vmatpush1.bf16.msra.mxu0 0
      %6557 = vmatprep.subr.bf16.mxu0 0
      %6558 = vmatpush1.bf16.msra.mxu0 0
      %6559 = vmatprep.subr.bf16.mxu0 0
      %6560 = vmatpush1.bf16.msra.mxu0 0
      %6561 = vmatprep.mubr.bf16.mxu0 0
      %6562 = vmatmul.mubr.bf16.gmra.mrb[0].mxu0 %v3834
      %v6563 = vpop.f32.mrb[0].mxu0
      %v6564 = vadd.f32 %v6502, %v6563
      %v6565 = vpop.f32.mrb[0].mxu0
      %v6566 = vadd.f32 %v6506, %v6565
      %v6567 = vpop.f32.mrb[0].mxu0
      %v6568 = vadd.f32 %v6502, %v6567
      %v6569 = vpop.f32.mrb[0].mxu0
      %v6570 = vadd.f32 %v6506, %v6569
      %6571 = vmatprep.mubr.bf16.mxu0 0
      %6572 = vmatmul.mubr.bf16.gmra.mrb[0].mxu0 %v3837
      %v6573 = vpop.f32.mrb[0].mxu0
      %v6574 = vadd.f32 %v6502, %v6573
      %v6575 = vpop.f32.mrb[0].mxu0
      %v6576 = vadd.f32 %v6506, %v6575
      %v6577 = vpop.f32.mrb[0].mxu0
      %v6578 = vadd.f32 %v6502, %v6577
      %v6579 = vpop.f32.mrb[0].mxu0
      %v6580 = vadd.f32 %v6506, %v6579
      %6581 = vmatprep.mubr.bf16.mxu0 0
      %6582 = vmatmul.mubr.bf16.gmra.mrb[0].mxu0 %v3840
      %v6583 = vpop.f32.mrb[0].mxu0
      %v6584 = vadd.f32 %v6502, %v6583
      %v6585 = vpop.f32.mrb[0].mxu0
      %v6586 = vadd.f32 %v6506, %v6585
      %v6587 = vpop.f32.mrb[0].mxu0
      %v6588 = vadd.f32 %v6502, %v6587
      %v6589 = vpop.f32.mrb[0].mxu0
      %v6590 = vadd.f32 %v6506, %v6589
      %6591 = vmatprep.mubr.bf16.mxu0 0
      %6592 = vmatmul.mubr.bf16.gmra.mrb[0].mxu0 %v3843
      %v6593 = vpop.f32.mrb[0].mxu0
      %v6594 = vadd.f32 %v6502, %v6593
      %v6595 = vpop.f32.mrb[0].mxu0
      %v6596 = vadd.f32 %v6506, %v6595
      %v6597 = vpop.f32.mrb[0].mxu0
      %v6598 = vadd.f32 %v6502, %v6597
      %v6599 = vpop.f32.mrb[0].mxu0
      %v6600 = vadd.f32 %v6506, %v6599
      %6601 = vmatprep.mubr.bf16.mxu0 0
      %6602 = vmatmul.mubr.bf16.gmra.mrb[0].mxu0 %v3846
      %v6603 = vpop.f32.mrb[0].mxu0
      %v6604 = vadd.f32 %v6502, %v6603
      %v6605 = vpop.f32.mrb[0].mxu0
      %v6606 = vadd.f32 %v6506, %v6605
      %v6607 = vpop.f32.mrb[0].mxu0
      %v6608 = vadd.f32 %v6502, %v6607
      %v6609 = vpop.f32.mrb[0].mxu0
      %v6610 = vadd.f32 %v6506, %v6609
      %6611 = vmatprep.mubr.bf16.mxu0 0
      %6612 = vmatmul.mubr.bf16.gmra.mrb[0].mxu0 %v3849
      %v6613 = vpop.f32.mrb[0].mxu0
      %v6614 = vadd.f32 %v6502, %v6613
      %v6615 = vpop.f32.mrb[0].mxu0
      %v6616 = vadd.f32 %v6506, %v6615
      %v6617 = vpop.f32.mrb[0].mxu0
      %v6618 = vadd.f32 %v6502, %v6617
      %v6619 = vpop.f32.mrb[0].mxu0
      %v6620 = vadd.f32 %v6506, %v6619
      %6621 = vdwg.mxu0
      %v6622 = vmax.f32 %v6564, 0.0
      %v6623 = vmax.f32 %v6566, 0.0
      %v6624 = vmax.f32 %v6568, 0.0
      %v6625 = vmax.f32 %v6570, 0.0
      %v6626 = vmax.f32 %v6574, 0.0
      %v6627 = vmax.f32 %v6576, 0.0
      %v6628 = vmax.f32 %v6578, 0.0
      %v6629 = vmax.f32 %v6580, 0.0
      %v6630 = vmax.f32 %v6584, 0.0
      %v6631 = vmax.f32 %v6586, 0.0
      %v6632 = vmax.f32 %v6588, 0.0
      %v6633 = vmax.f32 %v6590, 0.0
      %v6634 = vmax.f32 %v6594, 0.0
      %v6635 = vmax.f32 %v6596, 0.0
      %v6636 = vmax.f32 %v6598, 0.0
      %v6637 = vmax.f32 %v6600, 0.0
      %v6638 = vmax.f32 %v6604, 0.0
      %v6639 = vmax.f32 %v6606, 0.0
      %v6640 = vmax.f32 %v6608, 0.0
      %v6641 = vmax.f32 %v6610, 0.0
      %v6642 = vmax.f32 %v6614, 0.0
      %v6643 = vmax.f32 %v6616, 0.0
      %v6644 = vmax.f32 %v6618, 0.0
      %v6645 = vmax.f32 %v6620, 0.0
      %v6646 = vpack.c.bf16 %v6624, %v6622
      %v6647 = vpack.c.bf16 %v6625, %v6623
      %v6648 = vpack.c.bf16 %v6628, %v6626
      %v6649 = vpack.c.bf16 %v6629, %v6627
      %v6650 = vpack.c.bf16 %v6632, %v6630
      %v6651 = vpack.c.bf16 %v6633, %v6631
      %v6652 = vpack.c.bf16 %v6636, %v6634
      %v6653 = vpack.c.bf16 %v6637, %v6635
      %v6654 = vpack.c.bf16 %v6640, %v6638
      %v6655 = vpack.c.bf16 %v6641, %v6639
      %v6656 = vpack.c.bf16 %v6644, %v6642
      %v6657 = vpack.c.bf16 %v6645, %v6643
      %v6658 = vld [vmem:[%s6 + $0x380] sm:$0xf]
      %v6659 = vld [vmem:[%s6 + $0x384] sm:$0xf]
      %v6660 = vld [vmem:[%s6 + $0x388] sm:$0xf]
      %v6661 = vld [vmem:[%s6 + $0x38c] sm:$0xf]
      %v6662 = vld [vmem:[%s6 + $0x390] sm:$0xf]
      %v6663 = vld [vmem:[%s6 + $0x394] sm:$0xf]
      %v6664 = vld [vmem:[%s6 + $0x398] sm:$0xf]
      %v6665 = vld [vmem:[%s6 + $0x39c] sm:$0xf]
      %v6666 = vld [vmem:[%s6 + $0x3a0] sm:$0xf]
      %v6667 = vld [vmem:[%s6 + $0x3a4] sm:$0xf]
      %v6668 = vld [vmem:[%s6 + $0x3a8] sm:$0xf]
      %v6669 = vld [vmem:[%s6 + $0x3ac] sm:$0xf]
      %v6670 = vld [vmem:[%s6 + $0x3b0] sm:$0xf]
      %v6671 = vld [vmem:[%s6 + $0x3b4] sm:$0xf]
      %v6672 = vld [vmem:[%s6 + $0x3b8] sm:$0xf]
      %v6673 = vld [vmem:[%s6 + $0x3bc] sm:$0xf]
      %v6674 = vld [vmem:[%s6 + $0x3c0] sm:$0xf]
      %v6675 = vld [vmem:[%s6 + $0x3c4] sm:$0xf]
      %v6676 = vld [vmem:[%s6 + $0x3c8] sm:$0xf]
      %v6677 = vld [vmem:[%s6 + $0x3cc] sm:$0xf]
      %v6678 = vld [vmem:[%s6 + $0x3d0] sm:$0xf]
      %v6679 = vld [vmem:[%s6 + $0x3d4] sm:$0xf]
      %v6680 = vld [vmem:[%s6 + $0x3d8] sm:$0xf]
      %v6681 = vld [vmem:[%s6 + $0x3dc] sm:$0xf]
      %v6682 = vld [vmem:[%s6 + $0x3e0] sm:$0xf]
      %v6683 = vld [vmem:[%s6 + $0x3e4] sm:$0xf]
      %v6684 = vld [vmem:[%s6 + $0x3e8] sm:$0xf]
      %v6685 = vld [vmem:[%s6 + $0x3ec] sm:$0xf]
      %v6686 = vld [vmem:[%s6 + $0x3f0] sm:$0xf]
      %v6687 = vld [vmem:[%s6 + $0x3f4] sm:$0xf]
      %v6688 = vld [vmem:[%s6 + $0x3f8] sm:$0xf]
      %v6689 = vld [vmem:[%s6 + $0x3fc] sm:$0xf]
      %v6722 = vunpack.c.l.b16 %v6658
      %v6723 = vunpack.c.l.b16 %v6659
      %v6724 = vunpack.c.l.b16 %v6660
      %v6725 = vunpack.c.l.b16 %v6661
      %v6726 = vunpack.c.l.b16 %v6662
      %v6727 = vunpack.c.l.b16 %v6663
      %v6728 = vunpack.c.l.b16 %v6664
      %v6729 = vunpack.c.l.b16 %v6665
      %v6730 = vunpack.c.l.b16 %v6666
      %v6731 = vunpack.c.l.b16 %v6667
      %v6732 = vunpack.c.l.b16 %v6668
      %v6733 = vunpack.c.l.b16 %v6669
      %v6734 = vunpack.c.l.b16 %v6670
      %v6735 = vunpack.c.l.b16 %v6671
      %v6736 = vunpack.c.l.b16 %v6672
      %v6737 = vunpack.c.l.b16 %v6673
      %v6738 = vunpack.c.l.b16 %v6674
      %v6739 = vunpack.c.l.b16 %v6675
      %v6740 = vunpack.c.l.b16 %v6676
      %v6741 = vunpack.c.l.b16 %v6677
      %v6742 = vunpack.c.l.b16 %v6678
      %v6743 = vunpack.c.l.b16 %v6679
      %v6744 = vunpack.c.l.b16 %v6680
      %v6745 = vunpack.c.l.b16 %v6681
      %v6746 = vunpack.c.l.b16 %v6682
      %v6747 = vunpack.c.l.b16 %v6683
      %v6748 = vunpack.c.l.b16 %v6684
      %v6749 = vunpack.c.l.b16 %v6685
      %v6750 = vunpack.c.l.b16 %v6686
      %v6751 = vunpack.c.l.b16 %v6687
      %v6752 = vunpack.c.l.b16 %v6688
      %v6753 = vunpack.c.l.b16 %v6689
      %v6754 = vpack.c.b16 %v6723, %v6722
      %v6755 = vpack.c.b16 %v6725, %v6724
      %v6756 = vpack.c.b16 %v6727, %v6726
      %v6757 = vpack.c.b16 %v6729, %v6728
      %v6758 = vpack.c.b16 %v6731, %v6730
      %v6759 = vpack.c.b16 %v6733, %v6732
      %v6760 = vpack.c.b16 %v6735, %v6734
      %v6761 = vpack.c.b16 %v6737, %v6736
      %v6762 = vpack.c.b16 %v6739, %v6738
      %v6763 = vpack.c.b16 %v6741, %v6740
      %v6764 = vpack.c.b16 %v6743, %v6742
      %v6765 = vpack.c.b16 %v6745, %v6744
      %v6766 = vpack.c.b16 %v6747, %v6746
      %v6767 = vpack.c.b16 %v6749, %v6748
      %v6768 = vpack.c.b16 %v6751, %v6750
      %v6769 = vpack.c.b16 %v6753, %v6752
      %6786 = vmatprep.subr.bf16.mxu0 0
      %6787 = vmatpush1.bf16.msra.mxu0 %v6754
      %6788 = vmatprep.subr.bf16.mxu0 0
      %6789 = vmatpush1.bf16.msra.mxu0 %v6755
      %6790 = vmatprep.subr.bf16.mxu0 0
      %6791 = vmatpush1.bf16.msra.mxu0 %v6756
      %6792 = vmatprep.subr.bf16.mxu0 0
      %6793 = vmatpush1.bf16.msra.mxu0 %v6757
      %6794 = vmatprep.subr.bf16.mxu0 0
      %6795 = vmatpush1.bf16.msra.mxu0 %v6758
      %6796 = vmatprep.subr.bf16.mxu0 0
      %6797 = vmatpush1.bf16.msra.mxu0 %v6759
      %6798 = vmatprep.subr.bf16.mxu0 0
      %6799 = vmatpush1.bf16.msra.mxu0 %v6760
      %6800 = vmatprep.subr.bf16.mxu0 0
      %6801 = vmatpush1.bf16.msra.mxu0 %v6761
      %6802 = vmatprep.subr.bf16.mxu0 0
      %6803 = vmatpush1.bf16.msra.mxu0 %v6762
      %6804 = vmatprep.subr.bf16.mxu0 0
      %6805 = vmatpush1.bf16.msra.mxu0 %v6763
      %6806 = vmatprep.subr.bf16.mxu0 0
      %6807 = vmatpush1.bf16.msra.mxu0 %v6764
      %6808 = vmatprep.subr.bf16.mxu0 0
      %6809 = vmatpush1.bf16.msra.mxu0 %v6765
      %6810 = vmatprep.subr.bf16.mxu0 0
      %6811 = vmatpush1.bf16.msra.mxu0 %v6766
      %6812 = vmatprep.subr.bf16.mxu0 0
      %6813 = vmatpush1.bf16.msra.mxu0 %v6767
      %6814 = vmatprep.subr.bf16.mxu0 0
      %6815 = vmatpush1.bf16.msra.mxu0 %v6768
      %6816 = vmatprep.subr.bf16.mxu0 0
      %6817 = vmatpush1.bf16.msra.mxu0 %v6769
      %6818 = vmatprep.mubr.bf16.mxu0 %v6647
      %6819 = vmatmul.mubr.bf16.gmra.mrb[0].mxu0 %v6646
      %v6820 = vpop.f32.mrb[0].mxu0
      %v6821 = vadd.f32 0.0, %v6820
      %v6822 = vpop.f32.mrb[0].mxu0
      %v6823 = vpop.f32.mrb[0].mxu0
      %v6824 = vadd.f32 0.0, %v6823
      %v6825 = vpop.f32.mrb[0].mxu0
      %6826 = vmatprep.mubr.bf16.mxu0 %v6649
      %6827 = vmatmul.mubr.bf16.gmra.mrb[0].mxu0 %v6648
      %v6828 = vpop.f32.mrb[0].mxu0
      %v6829 = vadd.f32 0.0, %v6828
      %v6830 = vpop.f32.mrb[0].mxu0
      %v6831 = vpop.f32.mrb[0].mxu0
      %v6832 = vadd.f32 0.0, %v6831
      %v6833 = vpop.f32.mrb[0].mxu0
      %6834 = vmatprep.mubr.bf16.mxu0 %v6651
      %6835 = vmatmul.mubr.bf16.gmra.mrb[0].mxu0 %v6650
      %v6836 = vpop.f32.mrb[0].mxu0
      %v6837 = vadd.f32 0.0, %v6836
      %v6838 = vpop.f32.mrb[0].mxu0
      %v6839 = vpop.f32.mrb[0].mxu0
      %v6840 = vadd.f32 0.0, %v6839
      %v6841 = vpop.f32.mrb[0].mxu0
      %6842 = vmatprep.mubr.bf16.mxu0 %v6653
      %6843 = vmatmul.mubr.bf16.gmra.mrb[0].mxu0 %v6652
      %v6844 = vpop.f32.mrb[0].mxu0
      %v6845 = vadd.f32 0.0, %v6844
      %v6846 = vpop.f32.mrb[0].mxu0
      %v6847 = vpop.f32.mrb[0].mxu0
      %v6848 = vadd.f32 0.0, %v6847
      %v6849 = vpop.f32.mrb[0].mxu0
      %6850 = vmatprep.mubr.bf16.mxu0 %v6655
      %6851 = vmatmul.mubr.bf16.gmra.mrb[0].mxu0 %v6654
      %v6852 = vpop.f32.mrb[0].mxu0
      %v6853 = vadd.f32 0.0, %v6852
      %v6854 = vpop.f32.mrb[0].mxu0
      %v6855 = vpop.f32.mrb[0].mxu0
      %v6856 = vadd.f32 0.0, %v6855
      %v6857 = vpop.f32.mrb[0].mxu0
      %6858 = vmatprep.mubr.bf16.mxu0 %v6657
      %6859 = vmatmul.mubr.bf16.gmra.mrb[0].mxu0 %v6656
      %v6860 = vpop.f32.mrb[0].mxu0
      %v6861 = vadd.f32 0.0, %v6860
      %v6862 = vpop.f32.mrb[0].mxu0
      %v6863 = vpop.f32.mrb[0].mxu0
      %v6864 = vadd.f32 0.0, %v6863
      %v6865 = vpop.f32.mrb[0].mxu0
      %6866 = vdwg.mxu0
      %v6867 = vadd.f32 %v6481, %v6821
      %v6868 = vadd.f32 %v6482, %v6824
      %v6869 = vadd.f32 %v6483, %v6829
      %v6870 = vadd.f32 %v6484, %v6832
      %v6871 = vadd.f32 %v6485, %v6837
      %v6872 = vadd.f32 %v6486, %v6840
      %v6873 = vadd.f32 %v6487, %v6845
      %v6874 = vadd.f32 %v6488, %v6848
      %v6875 = vadd.f32 %v6489, %v6853
      %v6876 = vadd.f32 %v6490, %v6856
      %v6877 = vadd.f32 %v6491, %v6861
      %v6878 = vadd.f32 %v6492, %v6864
      %v6879 = vadd.f32 %v3779, %v6867
      %v6880 = vadd.f32 %v3780, %v6868
      %v6881 = vadd.f32 %v3781, %v6869
      %v6882 = vadd.f32 %v3782, %v6870
      %v6883 = vadd.f32 %v3783, %v6871
      %v6884 = vadd.f32 %v3784, %v6872
      %v6885 = vadd.f32 %v3785, %v6873
      %v6886 = vadd.f32 %v3786, %v6874
      %v6887 = vadd.f32 %v3787, %v6875
      %v6888 = vadd.f32 %v3788, %v6876
      %v6889 = vadd.f32 %v3789, %v6877
      %v6890 = vadd.f32 %v3790, %v6878
      %v6891 = vlaneseq
      %v6892 = vshrl.u32 %v6891, 7
      %v6893 = vsub.s32 1, %v6892
      %v6894 = vrot.slane %v3561, %v6893
      %v6895 = vadd.f32 %v6879, %v6894
      %v6896 = vadd.f32 %v6880, %v6894
      %v6897 = vadd.f32 %v6881, %v6894
      %v6898 = vadd.f32 %v6882, %v6894
      %v6899 = vadd.f32 %v6883, %v6894
      %v6900 = vadd.f32 %v6884, %v6894
      %v6901 = vadd.f32 %v6885, %v6894
      %v6902 = vadd.f32 %v6886, %v6894
      %v6903 = vadd.f32 %v6887, %v6894
      %v6904 = vadd.f32 %v6888, %v6894
      %v6905 = vadd.f32 %v6889, %v6894
      %v6906 = vadd.f32 %v6890, %v6894
      %v6907 = vsel %vm391, %v6895, 0.0
      %6908 = vadd.xlane.f32.xlu0 %v6907
      %v6909 = vpop.xlane.xlu0 %6908
      %v6910 = vsel %vm391, %v6896, 0.0
      %6911 = vadd.xlane.f32.xlu0 %v6910
      %v6912 = vpop.xlane.xlu0 %6911
      %v6913 = vsel %vm391, %v6897, 0.0
      %6914 = vadd.xlane.f32.xlu0 %v6913
      %v6915 = vpop.xlane.xlu0 %6914
      %v6916 = vsel %vm391, %v6898, 0.0
      %6917 = vadd.xlane.f32.xlu0 %v6916
      %v6918 = vpop.xlane.xlu0 %6917
      %v6919 = vsel %vm391, %v6899, 0.0
      %6920 = vadd.xlane.f32.xlu0 %v6919
      %v6921 = vpop.xlane.xlu0 %6920
      %v6922 = vsel %vm391, %v6900, 0.0
      %6923 = vadd.xlane.f32.xlu0 %v6922
      %v6924 = vpop.xlane.xlu0 %6923
      %v6925 = vsel %vm391, %v6901, 0.0
      %6926 = vadd.xlane.f32.xlu0 %v6925
      %v6927 = vpop.xlane.xlu0 %6926
      %v6928 = vsel %vm391, %v6902, 0.0
      %6929 = vadd.xlane.f32.xlu0 %v6928
      %v6930 = vpop.xlane.xlu0 %6929
      %v6931 = vsel %vm391, %v6903, 0.0
      %6932 = vadd.xlane.f32.xlu0 %v6931
      %v6933 = vpop.xlane.xlu0 %6932
      %v6934 = vsel %vm391, %v6904, 0.0
      %6935 = vadd.xlane.f32.xlu0 %v6934
      %v6936 = vpop.xlane.xlu0 %6935
      %v6937 = vsel %vm391, %v6905, 0.0
      %6938 = vadd.xlane.f32.xlu0 %v6937
      %v6939 = vpop.xlane.xlu0 %6938
      %v6940 = vsel %vm391, %v6906, 0.0
      %6941 = vadd.xlane.f32.xlu0 %v6940
      %v6942 = vpop.xlane.xlu0 %6941
      %v6943 = vmul.f32 %v6909, %v3638
      %v6944 = vmul.f32 %v6912, %v3638
      %v6945 = vmul.f32 %v6915, %v3638
      %v6946 = vmul.f32 %v6918, %v3638
      %v6947 = vmul.f32 %v6921, %v3638
      %v6948 = vmul.f32 %v6924, %v3638
      %v6949 = vmul.f32 %v6927, %v3638
      %v6950 = vmul.f32 %v6930, %v3638
      %v6951 = vmul.f32 %v6933, %v3638
      %v6952 = vmul.f32 %v6936, %v3638
      %v6953 = vmul.f32 %v6939, %v3638
      %v6954 = vmul.f32 %v6942, %v3638
      %v6955 = vsub.f32 %v6895, %v6943
      %v6956 = vsub.f32 %v6896, %v6944
      %v6957 = vsub.f32 %v6897, %v6945
      %v6958 = vsub.f32 %v6898, %v6946
      %v6959 = vsub.f32 %v6899, %v6947
      %v6960 = vsub.f32 %v6900, %v6948
      %v6961 = vsub.f32 %v6901, %v6949
      %v6962 = vsub.f32 %v6902, %v6950
      %v6963 = vsub.f32 %v6903, %v6951
      %v6964 = vsub.f32 %v6904, %v6952
      %v6965 = vsub.f32 %v6905, %v6953
      %v6966 = vsub.f32 %v6906, %v6954
      %v6967 = vmul.f32 %v6955, %v6955
      %v6968 = vmul.f32 %v6956, %v6956
      %v6969 = vmul.f32 %v6957, %v6957
      %v6970 = vmul.f32 %v6958, %v6958
      %v6971 = vmul.f32 %v6959, %v6959
      %v6972 = vmul.f32 %v6960, %v6960
      %v6973 = vmul.f32 %v6961, %v6961
      %v6974 = vmul.f32 %v6962, %v6962
      %v6975 = vmul.f32 %v6963, %v6963
      %v6976 = vmul.f32 %v6964, %v6964
      %v6977 = vmul.f32 %v6965, %v6965
      %v6978 = vmul.f32 %v6966, %v6966
      %v6979 = vsel %vm391, %v6967, 0.0
      %6980 = vadd.xlane.f32.xlu0 %v6979
      %v6981 = vpop.xlane.xlu0 %6980
      %v6982 = vsel %vm391, %v6968, 0.0
      %6983 = vadd.xlane.f32.xlu0 %v6982
      %v6984 = vpop.xlane.xlu0 %6983
      %v6985 = vsel %vm391, %v6969, 0.0
      %6986 = vadd.xlane.f32.xlu0 %v6985
      %v6987 = vpop.xlane.xlu0 %6986
      %v6988 = vsel %vm391, %v6970, 0.0
      %6989 = vadd.xlane.f32.xlu0 %v6988
      %v6990 = vpop.xlane.xlu0 %6989
      %v6991 = vsel %vm391, %v6971, 0.0
      %6992 = vadd.xlane.f32.xlu0 %v6991
      %v6993 = vpop.xlane.xlu0 %6992
      %v6994 = vsel %vm391, %v6972, 0.0
      %6995 = vadd.xlane.f32.xlu0 %v6994
      %v6996 = vpop.xlane.xlu0 %6995
      %v6997 = vsel %vm391, %v6973, 0.0
      %6998 = vadd.xlane.f32.xlu0 %v6997
      %v6999 = vpop.xlane.xlu0 %6998
      %v7000 = vsel %vm391, %v6974, 0.0
      %7001 = vadd.xlane.f32.xlu0 %v7000
      %v7002 = vpop.xlane.xlu0 %7001
      %v7003 = vsel %vm391, %v6975, 0.0
      %7004 = vadd.xlane.f32.xlu0 %v7003
      %v7005 = vpop.xlane.xlu0 %7004
      %v7006 = vsel %vm391, %v6976, 0.0
      %7007 = vadd.xlane.f32.xlu0 %v7006
      %v7008 = vpop.xlane.xlu0 %7007
      %v7009 = vsel %vm391, %v6977, 0.0
      %7010 = vadd.xlane.f32.xlu0 %v7009
      %v7011 = vpop.xlane.xlu0 %7010
      %v7012 = vsel %vm391, %v6978, 0.0
      %7013 = vadd.xlane.f32.xlu0 %v7012
      %v7014 = vpop.xlane.xlu0 %7013
      %v7015 = vmul.f32 %v6981, %v3638
      %v7016 = vmul.f32 %v6984, %v3638
      %v7017 = vmul.f32 %v6987, %v3638
      %v7018 = vmul.f32 %v6990, %v3638
      %v7019 = vmul.f32 %v6993, %v3638
      %v7020 = vmul.f32 %v6996, %v3638
      %v7021 = vmul.f32 %v6999, %v3638
      %v7022 = vmul.f32 %v7002, %v3638
      %v7023 = vmul.f32 %v7005, %v3638
      %v7024 = vmul.f32 %v7008, %v3638
      %v7025 = vmul.f32 %v7011, %v3638
      %v7026 = vmul.f32 %v7014, %v3638
      %v7027 = vadd.f32 %v7015, 1e-05
      %v7028 = vadd.f32 %v7016, 1e-05
      %v7029 = vadd.f32 %v7017, 1e-05
      %v7030 = vadd.f32 %v7018, 1e-05
      %v7031 = vadd.f32 %v7019, 1e-05
      %v7032 = vadd.f32 %v7020, 1e-05
      %v7033 = vadd.f32 %v7021, 1e-05
      %v7034 = vadd.f32 %v7022, 1e-05
      %v7035 = vadd.f32 %v7023, 1e-05
      %v7036 = vadd.f32 %v7024, 1e-05
      %v7037 = vadd.f32 %v7025, 1e-05
      %v7038 = vadd.f32 %v7026, 1e-05
      %v7039 = vrsqrt.pop %v7027
      %v7040 = vrsqrt.pop %v7028
      %v7041 = vrsqrt.pop %v7029
      %v7042 = vrsqrt.pop %v7030
      %v7043 = vrsqrt.pop %v7031
      %v7044 = vrsqrt.pop %v7032
      %v7045 = vrsqrt.pop %v7033
      %v7046 = vrsqrt.pop %v7034
      %v7047 = vrsqrt.pop %v7035
      %v7048 = vrsqrt.pop %v7036
      %v7049 = vrsqrt.pop %v7037
      %v7050 = vrsqrt.pop %v7038
      %v7051 = vmul.f32 %v6955, %v7039
      %v7052 = vmul.f32 %v6956, %v7040
      %v7053 = vmul.f32 %v6957, %v7041
      %v7054 = vmul.f32 %v6958, %v7042
      %v7055 = vmul.f32 %v6959, %v7043
      %v7056 = vmul.f32 %v6960, %v7044
      %v7057 = vmul.f32 %v6961, %v7045
      %v7058 = vmul.f32 %v6962, %v7046
      %v7059 = vmul.f32 %v6963, %v7047
      %v7060 = vmul.f32 %v6964, %v7048
      %v7061 = vmul.f32 %v6965, %v7049
      %v7062 = vmul.f32 %v6966, %v7050
      %v7063 = vlaneseq
      %v7064 = vshrl.u32 %v7063, 7
      %v7065 = vsub.s32 4, %v7064
      %v7066 = vrot.slane %v3561, %v7065
      %v7067 = vmul.f32 %v7051, %v7066
      %v7068 = vmul.f32 %v7052, %v7066
      %v7069 = vmul.f32 %v7053, %v7066
      %v7070 = vmul.f32 %v7054, %v7066
      %v7071 = vmul.f32 %v7055, %v7066
      %v7072 = vmul.f32 %v7056, %v7066
      %v7073 = vmul.f32 %v7057, %v7066
      %v7074 = vmul.f32 %v7058, %v7066
      %v7075 = vmul.f32 %v7059, %v7066
      %v7076 = vmul.f32 %v7060, %v7066
      %v7077 = vmul.f32 %v7061, %v7066
      %v7078 = vmul.f32 %v7062, %v7066
      %v7079 = vlaneseq
      %v7080 = vshrl.u32 %v7079, 7
      %v7081 = vsub.s32 5, %v7080
      %v7082 = vrot.slane %v3561, %v7081
      %v7083 = vadd.f32 %v7067, %v7082
      %v7084 = vadd.f32 %v7068, %v7082
      %v7085 = vadd.f32 %v7069, %v7082
      %v7086 = vadd.f32 %v7070, %v7082
      %v7087 = vadd.f32 %v7071, %v7082
      %v7088 = vadd.f32 %v7072, %v7082
      %v7089 = vadd.f32 %v7073, %v7082
      %v7090 = vadd.f32 %v7074, %v7082
      %v7091 = vadd.f32 %v7075, %v7082
      %v7092 = vadd.f32 %v7076, %v7082
      %v7093 = vadd.f32 %v7077, %v7082
      %v7094 = vadd.f32 %v7078, %v7082
      %v7095 = vlaneseq
      %v7096 = vshrl.u32 %v7095, 7
      %v7097 = vmul.u32 %v7096, 48
      %v7098 = vsub.s32 %v505, %v7097
      %vm7099 = vcmp.ge.s32.totalorder %v7098, 0
      %vm7100 = vcmp.lt.s32.totalorder %v7098, 44
      %vm7101 = vmand %vm7099, %vm7100
      %v7102 = vsel %vm7101, 0.022727273, 0.0
      %v7104 = vsel %vm491, %v7102, 0
      %7106 = vmatprep.subr.mxu0 0.0
      %7107 = vmatpush1.msra.mxu0 %v7083
      %7108 = vmatprep.subr.mxu0 0.0
      %7109 = vmatpush1.msra.mxu0 %v7084
      %7110 = vmatprep.subr.mxu0 0.0
      %7111 = vmatpush1.msra.mxu0 %v7085
      %7112 = vmatprep.subr.mxu0 0.0
      %7113 = vmatpush1.msra.mxu0 %v7086
      %7114 = vmatprep.subr.mxu0 0.0
      %7115 = vmatpush1.msra.mxu0 %v7087
      %7116 = vmatprep.subr.mxu0 0.0
      %7117 = vmatpush1.msra.mxu0 %v7088
      %7118 = vmatprep.subr.mxu0 0.0
      %7119 = vmatpush1.msra.mxu0 %v7089
      %7120 = vmatprep.subr.mxu0 0.0
      %7121 = vmatpush1.msra.mxu0 %v7090
      %7122 = vmatprep.subr.mxu0 0.0
      %7123 = vmatpush1.msra.mxu0 %v7091
      %7124 = vmatprep.subr.mxu0 0.0
      %7125 = vmatpush1.msra.mxu0 %v7092
      %7126 = vmatprep.subr.mxu0 0.0
      %7127 = vmatpush1.msra.mxu0 %v7093
      %7128 = vmatprep.subr.mxu0 0.0
      %7129 = vmatpush1.msra.mxu0 %v7094
      %7130 = vmatprep.subr.mxu0 0.0
      %7131 = vmatpush1.msra.mxu0 0.0
      %7132 = vmatprep.subr.mxu0 0.0
      %7133 = vmatpush1.msra.mxu0 0.0
      %7134 = vmatprep.subr.mxu0 0.0
      %7135 = vmatpush1.msra.mxu0 0.0
      %7136 = vmatprep.subr.mxu0 0.0
      %7137 = vmatpush1.msra.mxu0 0.0
      %7138 = vmatprep.subr.mxu0 0.0
      %7139 = vmatpush1.msra.mxu0 0.0
      %7140 = vmatprep.subr.mxu0 0.0
      %7141 = vmatpush1.msra.mxu0 0.0
      %7142 = vmatprep.subr.mxu0 0.0
      %7143 = vmatpush1.msra.mxu0 0.0
      %7144 = vmatprep.subr.mxu0 0.0
      %7145 = vmatpush1.msra.mxu0 0.0
      %7146 = vmatprep.subr.mxu0 0.0
      %7147 = vmatpush1.msra.mxu0 0.0
      %7148 = vmatprep.subr.mxu0 0.0
      %7149 = vmatpush1.msra.mxu0 0.0
      %7150 = vmatprep.subr.mxu0 0.0
      %7151 = vmatpush1.msra.mxu0 0.0
      %7152 = vmatprep.subr.mxu0 0.0
      %7153 = vmatpush1.msra.mxu0 0.0
      %7154 = vmatprep.subr.mxu0 0.0
      %7155 = vmatpush1.msra.mxu0 0.0
      %7156 = vmatprep.subr.mxu0 0.0
      %7157 = vmatpush1.msra.mxu0 0.0
      %7158 = vmatprep.subr.mxu0 0.0
      %7159 = vmatpush1.msra.mxu0 0.0
      %7160 = vmatprep.subr.mxu0 0.0
      %7161 = vmatpush1.msra.mxu0 0.0
      %7162 = vmatprep.subr.mxu0 0.0
      %7163 = vmatpush1.msra.mxu0 0.0
      %7164 = vmatprep.subr.mxu0 0.0
      %7165 = vmatpush1.msra.mxu0 0.0
      %7166 = vmatprep.subr.mxu0 0.0
      %7167 = vmatpush1.msra.mxu0 0.0
      %7168 = vmatprep.subr.mxu0 0.0
      %7169 = vmatpush1.msra.mxu0 0.0
      %7170 = vmatprep.mubr.f32.mxu0 0.0
      %7171 = vmatmul.mubr.f32.gmra.mrb[0].mxu0 %v7104
      %v7172 = vpop.f32.mrb[0].mxu0
      %v7173 = vadd.f32 0.0, %v7172
      %v7174 = vpop.f32.mrb[0].mxu0
      %7175 = vdwg.mxu0
      %vm7176 = vcmask 254976
      %7177 = vst.msk [vmem:[%s348] sm:$0x3] %vm7176, %v7173
      %s7178 = smul.u32 2, %s21
      %p7179 = scmp.lt.s32.totalorder %s7178, 3
      %s7180 = scalar_select %p7179, %s7178, 3
      %s7181 = smul.addr %s7180, 6
      %s7182 = smul.addr %s7181, 8
      %s7183 = scalar_lea.vmem %s8, %s7182
      %p7184 = scmp.lt.s32.totalorder %s21, 1
      %s7185 = scalar_select %p7184, %s21, 1
      %s7186 = smul.addr %s7185, 2
      %s7187 = scalar_lea.vmem %s9, %s7186
      // Predicated region
      $region53: #{idlmm_forward.2} parent=51 // pred_check
        %p7188 = pneg %p212
      $region54: #{idlmm_forward.2} parent=51 // pred_check_branch
        %7190 = sbr.rel (%p7188) target = $region56
      $region55: #{idlmm_forward.2} parent=51 // pred_region
        %s7191 = smul.u32 2, %s21
      $region56: #{idlmm_forward.2} parent=51 // pred_fallthru
        _
      // Predicated region
      $region57: #{idlmm_forward.2} parent=51 // pred_check
        %p7192 = pneg %p238
      $region58: #{idlmm_forward.2} parent=51 // pred_check_branch
        %7194 = sbr.rel (%p7192) target = $region60
      $region59: #{idlmm_forward.2} parent=51 // pred_region
        _
      $region60: #{idlmm_forward.2} parent=51 // pred_fallthru
        _
    $region52: #{idlmm_forward.2} parent=5 // pred_fallthru
      _
    %p7195 = scmp.le.s32.totalorder 2, %s16
    // Predicated region
    $region61: #{idlmm_forward.2} parent=5 // pred_check
      %p7196 = pneg %p7195
    $region62: #{idlmm_forward.2} parent=5 // pred_check_branch
      %7198 = sbr.rel (%p7196) target = $region64
    $region63: #{idlmm_forward.2} parent=5 // pred_region
      %s7199 = ssub.s32 %s16, 2
      // Predicated region
      $region65: #{idlmm_forward.2} parent=63 // pred_check
        %p7200 = pneg %p218
      $region66: #{idlmm_forward.2} parent=63 // pred_check_branch
        %7202 = sbr.rel (%p7200) target = $region68
      $region67: #{idlmm_forward.2} parent=63 // pred_region
        %s7203 = smul.u32 2, %s22
        %p7204 = scmp.lt.s32.totalorder %s7203, 3
        %s7205 = scalar_select %p7204, %s7203, 3
        %s7206 = smul.addr %s7205, 6
        %s7207 = smul.addr %s7206, 8
        %s7208 = scalar_lea.vmem %s8, %s7207
      $region68: #{idlmm_forward.2} parent=63 // pred_fallthru
        _
      // Predicated region
      $region69: #{idlmm_forward.2} parent=63 // pred_check
        %p7209 = pneg %p244
      $region70: #{idlmm_forward.2} parent=63 // pred_check_branch
        %7211 = sbr.rel (%p7209) target = $region72
      $region71: #{idlmm_forward.2} parent=63 // pred_region
        %p7212 = scmp.lt.s32.totalorder %s22, 1
        %s7213 = scalar_select %p7212, %s22, 1
        %s7214 = smul.addr %s7213, 2
        %s7215 = scalar_lea.vmem %s9, %s7214
      $region72: #{idlmm_forward.2} parent=63 // pred_fallthru
        _
    $region64: #{idlmm_forward.2} parent=5 // pred_fallthru
      _
  $region6: #{idlmm_forward.2} parent=0 // loop_footer
    %s20 = sadd.s32 1, %s16
  $region7: #{idlmm_forward.2} parent=0 // loop_footer_branch
    %15 = sbr.rel target = $region3
  $region8: #{idlmm_forward.2} parent=0 // loop_exit
    _

</llo_original>
